<compile_context>
chip_gen: v7x
topology: tpu7x:2x2x1
jax: 0.10.0
libtpu: 0.0.40
codegen_flags: <defaults>
</compile_context>

<pallas_src>
import functools

import jax
import jax.numpy as jnp
from jax.experimental import pallas as pl
from jax.experimental.pallas import tpu as pltpu

_LANE = 128        # hidden dim padded to a multiple of the TPU lane width
_BATCH_TILE = 16   # bf16 sublane packing


def _round_up(x, m):
    return ((x + m - 1) // m) * m


def _vmem_capacity_bytes():
    try:
        return int(pltpu.get_tpu_info().vmem_capacity_bytes)
    except Exception:
        return 64 * 1024 * 1024          # conservative fallback (v7x per-TC VMEM)


def _pick_time_chunk(b_pad, hp, seq_len):
    """Largest time chunk (8..32, multiple of 8) whose working set fits in VMEM."""
    g = 4 * hp
    budget = int(_vmem_capacity_bytes() * 0.55)      # headroom for compiler temps
    fixed = 2 * 2 * hp * g * 2                       # W_hh: 2 dirs, double-buffered, bf16
    fixed += 4 * b_pad * hp * 4                      # h/c scratch: 2 dirs, f32
    fixed += 2 * 2 * g * 4 + 2 * b_pad * 4           # biases + lengths (tiny)
    per_t = 2 * 2 * b_pad * g * 2                    # gx chunks: 2 dirs x 2 buffers, bf16
    per_t += 2 * 2 * b_pad * hp * 2                  # out chunks: 2 dirs x 2 buffers, bf16
    per_t += 2 * b_pad * g * 4                       # in-flight f32 gate temporaries
    fit = (budget - fixed) // max(per_t, 1)
    t = 8
    for cand in (32, 24, 16):
        if fit >= cand:
            t = cand
            break
    return min(t, _round_up(max(seq_len, 1), 8))     # don't overshoot short sequences


# ---------------------------------------------------------------------------
# Recurrent Pallas kernel: both directions interleaved, chunked time axis.
# ---------------------------------------------------------------------------
def _bilstm_recurrence(gx_f, gx_b, len2d, whh_f, whh_b, b_f, b_b, *, time_chunk,
                       vmem_limit):
    """gx_f/gx_b: (S_pad, B_pad, 4Hp) bf16 precomputed input gates (no bias),
       len2d: (B_pad, 1) int32, whh_*: (Hp, 4Hp) bf16 pre-transposed recurrent weights,
       b_*: (1, 4Hp) f32.  Returns (out_f, out_b), each (S_pad, B_pad, Hp) bf16."""
    S_pad, B_pad, G = gx_f.shape
    Hp = G // 4
    T = time_chunk
    assert S_pad % T == 0
    C = S_pad // T

    def kernel(len_ref, gxf_ref, gxb_ref, whhf_ref, whhb_ref, bf_ref, bb_ref,
               outf_ref, outb_ref, hf_sc, cf_sc, hb_sc, cb_sc):
        # NOTE: correctness of the h/c scratch carry relies on time being the ONLY
        # grid axis (marked "arbitrary"); both direction chains live in this one
        # kernel invocation, so no cross-core state issue on megacore chips.
        c_idx = pl.program_id(0)
        n_chunks = pl.num_programs(0)

        @pl.when(c_idx == 0)
        def _init():
            hf_sc[...] = jnp.zeros_like(hf_sc)
            cf_sc[...] = jnp.zeros_like(cf_sc)
            hb_sc[...] = jnp.zeros_like(hb_sc)
            cb_sc[...] = jnp.zeros_like(cb_sc)

        lengths = len_ref[...]                        # (B, 1) int32
        w_f = whhf_ref[...]                           # (Hp, 4Hp) bf16
        w_b = whhb_ref[...]
        bias_f = bf_ref[...]                          # (1, 4Hp) f32
        bias_b = bb_ref[...]

        t0_f = c_idx * T                              # fwd chunk = time block c_idx
        t0_b = (n_chunks - 1 - c_idx) * T             # bwd chunk = time block C-1-c_idx

        def lstm_cell(gates, c_prev):
            # gate order was permuted to [i, f, o, g] in prepare_params:
            sig = jax.nn.sigmoid(gates[:, :3 * Hp])   # one contiguous EUP slab
            i_g = sig[:, :Hp]
            f_g = sig[:, Hp:2 * Hp]
            o_g = sig[:, 2 * Hp:3 * Hp]
            g_g = jnp.tanh(gates[:, 3 * Hp:])
            c_new = f_g * c_prev + i_g * g_g
            h_new = o_g * jnp.tanh(c_new)
            return h_new, c_new

        def step(tt, carry):
            row_b = T - 1 - tt                        # bwd walks its chunk backwards
            # two INDEPENDENT chains -> the scheduler interleaves them, hiding the
            # latency of each tiny (B,Hp)x(Hp,4Hp) recurrent matmul.
            gates_f = (gxf_ref[tt].astype(jnp.float32) + bias_f
                       + jnp.dot(hf_sc[...].astype(jnp.bfloat16), w_f,
                                 preferred_element_type=jnp.float32))
            gates_b = (gxb_ref[row_b].astype(jnp.float32) + bias_b
                       + jnp.dot(hb_sc[...].astype(jnp.bfloat16), w_b,
                                 preferred_element_type=jnp.float32))
            hf_new, cf_new = lstm_cell(gates_f, cf_sc[...])
            hb_new, cb_new = lstm_cell(gates_b, cb_sc[...])
            mask_f = (t0_f + tt) < lengths            # (B,1) bool
            mask_b = (t0_b + row_b) < lengths
            hf_sc[...] = jnp.where(mask_f, hf_new, hf_sc[...])   # hold state past length
            cf_sc[...] = jnp.where(mask_f, cf_new, cf_sc[...])
            hb_sc[...] = jnp.where(mask_b, hb_new, hb_sc[...])
            cb_sc[...] = jnp.where(mask_b, cb_new, cb_sc[...])
            outf_ref[tt] = jnp.where(mask_f, hf_new, 0.0).astype(outf_ref.dtype)
            outb_ref[row_b] = jnp.where(mask_b, hb_new, 0.0).astype(outb_ref.dtype)
            return carry

        if T <= 16:
            for tt in range(T):                       # fully static time indices
                step(tt, 0)
        else:
            # cap the unroll to bound vreg pressure for large time chunks
            jax.lax.fori_loop(0, T, step, 0, unroll=8)

    grid_spec = pltpu.PrefetchScalarGridSpec(
        num_scalar_prefetch=0,
        grid=(C,),
        in_specs=[
            pl.BlockSpec((B_pad, 1), lambda c: (0, 0)),                 # lengths
            pl.BlockSpec((T, B_pad, G), lambda c: (c, 0, 0)),           # gx forward
            pl.BlockSpec((T, B_pad, G), lambda c: (C - 1 - c, 0, 0)),   # gx backward
            pl.BlockSpec((Hp, G), lambda c: (0, 0)),                    # W_hh fwd (bf16)
            pl.BlockSpec((Hp, G), lambda c: (0, 0)),                    # W_hh bwd (bf16)
            pl.BlockSpec((1, G), lambda c: (0, 0)),                     # bias fwd (f32)
            pl.BlockSpec((1, G), lambda c: (0, 0)),                     # bias bwd (f32)
        ],
        out_specs=[
            pl.BlockSpec((T, B_pad, Hp), lambda c: (c, 0, 0)),          # out forward
            pl.BlockSpec((T, B_pad, Hp), lambda c: (C - 1 - c, 0, 0)),  # out backward
        ],
        scratch_shapes=[pltpu.VMEM((B_pad, Hp), jnp.float32)] * 4,      # h_f, c_f, h_b, c_b
    )

    return pl.pallas_call(
        kernel,
        out_shape=(jax.ShapeDtypeStruct((S_pad, B_pad, Hp), jnp.bfloat16),
                   jax.ShapeDtypeStruct((S_pad, B_pad, Hp), jnp.bfloat16)),
        grid_spec=grid_spec,
        compiler_params=pltpu.CompilerParams(
            dimension_semantics=("arbitrary",),        # time = recurrence
            vmem_limit_bytes=vmem_limit),
    )(len2d, gx_f, gx_b, whh_f, whh_b, b_f, b_b)


# ---------------------------------------------------------------------------
# Public forward (eval mode): x (B, S, D), lengths (B,) -> (B, S, 2H)
# ---------------------------------------------------------------------------
def rnn_encoder_forward(x, lengths, kparams, hidden_size, drop_prob=0.0):
    B, S, _ = x.shape
    H = hidden_size
    Hp = kparams[0]["whh_f"].shape[0]                 # lane-padded hidden size
    B_pad = max(_BATCH_TILE, _round_up(B, _BATCH_TILE))
    T = _pick_time_chunk(B_pad, Hp, S)
    S_pad = _round_up(S, T)
    vmem_limit = max(32 * 1024 * 1024,
                     min(int(_vmem_capacity_bytes() * 0.75), 96 * 1024 * 1024))
    f32 = jnp.float32

    x_t = jnp.transpose(x, (1, 0, 2)).astype(f32)                 # (S, B, D)
    x_t = jnp.pad(x_t, ((0, S_pad - S), (0, B_pad - B), (0, 0))).astype(jnp.bfloat16)
    len2d = jnp.pad(lengths.astype(jnp.int32),
                    (0, B_pad - B)).reshape(B_pad, 1)

    prev_f = prev_b = None                                        # (S_pad, B_pad, Hp) bf16
    for li, lp in enumerate(kparams):
        if li == 0:
            # one big MXU matmul per direction over ALL timesteps (bf16 x bf16 -> f32)
            gx_f = jnp.einsum("sbd,dg->sbg", x_t, lp["wih_f"], preferred_element_type=f32)
            gx_b = jnp.einsum("sbd,dg->sbg", x_t, lp["wih_b"], preferred_element_type=f32)
        else:
            # consume the previous layer's direction-split outputs directly (no HBM concat)
            gx_f = (jnp.einsum("sbh,hg->sbg", prev_f, lp["wih_f"][0], preferred_element_type=f32)
                    + jnp.einsum("sbh,hg->sbg", prev_b, lp["wih_f"][1], preferred_element_type=f32))
            gx_b = (jnp.einsum("sbh,hg->sbg", prev_f, lp["wih_b"][0], preferred_element_type=f32)
                    + jnp.einsum("sbh,hg->sbg", prev_b, lp["wih_b"][1], preferred_element_type=f32))
        gx_f = gx_f.astype(jnp.bfloat16)                          # bf16 storage (f32 accum done)
        gx_b = gx_b.astype(jnp.bfloat16)
        prev_f, prev_b = _bilstm_recurrence(
            gx_f, gx_b, len2d, lp["whh_f"], lp["whh_b"], lp["b_f"], lp["b_b"],
            time_chunk=T, vmem_limit=vmem_limit)
        # TODO(synk): training-mode dropout between layers (eval -> identity).

    # merge fwd/bwd halves once at the very end, drop lane/batch/time padding
    out = jnp.concatenate([prev_f[:, :, :H], prev_b[:, :, :H]], axis=-1)  # (S_pad, B_pad, 2H)
    out = jnp.transpose(out, (1, 0, 2))[:B, :S]
    return out.astype(f32)


# ---------------------------------------------------------------------------
# Parameters: PyTorch-layout init + one-time conversion to kernel layout.
# ---------------------------------------------------------------------------
def init_params(key, input_size, hidden_size, num_layers):
    """nn.LSTM-style params: W_ih (4H,D_in), W_hh (4H,H), bias folded, gates [i,f,g,o]."""
    params = []
    k = 1.0 / jnp.sqrt(jnp.float32(hidden_size))
    for layer in range(num_layers):
        in_dim = input_size if layer == 0 else 2 * hidden_size
        layer_p = {}
        for direction in ("f", "b"):
            key, k1, k2, k3, k4 = jax.random.split(key, 5)
            layer_p[f"wih_{direction}"] = jax.random.uniform(
                k1, (4 * hidden_size, in_dim), jnp.float32, -k, k)
            layer_p[f"whh_{direction}"] = jax.random.uniform(
                k2, (4 * hidden_size, hidden_size), jnp.float32, -k, k)
            b_ih = jax.random.uniform(k3, (4 * hidden_size,), jnp.float32, -k, k)
            b_hh = jax.random.uniform(k4, (4 * hidden_size,), jnp.float32, -k, k)
            layer_p[f"b_{direction}"] = (b_ih + b_hh).reshape(1, 4 * hidden_size)
        params.append(layer_p)
    return params


def prepare_params(params, hidden_size):
    """One-time conversion to kernel layout:
       * gate order [i,f,g,o] -> [i,f,o,g]
       * every gate block zero-padded to Hp = round_up(H, 128) rows (zero-preserving:
         padded lanes give i=f=o=0.5, g=0 => h=c=0 forever)
       * weights transposed (W_hh stored (Hp,4Hp)) and cast to bf16; biases kept f32.
       Layer 0 wih_*: (D, 4Hp); layers>0 wih_*: (2, Hp, 4Hp) = [from_fwd^T, from_bwd^T]."""
    H = hidden_size
    Hp = _round_up(max(H, _LANE), _LANE)
    G = 4 * Hp

    def permute_pad_rows(w):
        # w: (4H, ...) in gate order [i,f,g,o] -> [i,f,o,g], each block padded to Hp rows
        i, f, g, o = (w[kk * H:(kk + 1) * H] for kk in range(4))
        pad = [(0, Hp - H)] + [(0, 0)] * (w.ndim - 1)
        return jnp.concatenate([jnp.pad(blk, pad) for blk in (i, f, o, g)], axis=0)

    def pad_cols(w):
        # zero-pad a (4Hp, H) column block to (4Hp, Hp)
        return jnp.pad(w, ((0, 0), (0, Hp - H)))

    prepped = []
    for li, lp in enumerate(params):
        out = {}
        for d in ("f", "b"):
            wih = permute_pad_rows(lp[f"wih_{d}"])                    # (4Hp, D_in)
            if li == 0:
                out[f"wih_{d}"] = wih.T.astype(jnp.bfloat16)          # (D, 4Hp)
            else:
                w_from_f = pad_cols(wih[:, :H]).T                     # (Hp, 4Hp)
                w_from_b = pad_cols(wih[:, H:2 * H]).T                # (Hp, 4Hp)
                out[f"wih_{d}"] = jnp.stack([w_from_f, w_from_b]).astype(jnp.bfloat16)
            whh = pad_cols(permute_pad_rows(lp[f"whh_{d}"])).T        # (Hp, 4Hp)
            out[f"whh_{d}"] = whh.astype(jnp.bfloat16)
            bvec = permute_pad_rows(lp[f"b_{d}"].reshape(4 * H))      # (4Hp,)
            out[f"b_{d}"] = bvec.reshape(1, G).astype(jnp.float32)
        prepped.append(out)
    return prepped


# ---------------------------------------------------------------------------
# Pure-JAX f32 reference (masked packed-sequence semantics) for verification.
# ---------------------------------------------------------------------------
def _ref_layer(x_tbd, lengths, lp, H):
    S, B, _ = x_tbd.shape
    HI = jax.lax.Precision.HIGHEST

    def cell(xt, h, c, wih, whh, b):
        gates = (jnp.dot(xt, wih.T, precision=HI)
                 + jnp.dot(h, whh.T, precision=HI) + b)
        i = jax.nn.sigmoid(gates[:, :H])
        f = jax.nn.sigmoid(gates[:, H:2 * H])
        g = jnp.tanh(gates[:, 2 * H:3 * H])
        o = jax.nn.sigmoid(gates[:, 3 * H:])
        c2 = f * c + i * g
        return o * jnp.tanh(c2), c2

    len_col = lengths.reshape(B, 1)
    h = jnp.zeros((B, H)); c = jnp.zeros((B, H)); out_f = []
    for t in range(S):
        m = t < len_col
        h2, c2 = cell(x_tbd[t], h, c, lp["wih_f"], lp["whh_f"], lp["b_f"])
        h = jnp.where(m, h2, h); c = jnp.where(m, c2, c)
        out_f.append(jnp.where(m, h2, 0.0))
    h = jnp.zeros((B, H)); c = jnp.zeros((B, H)); out_b = [None] * S
    for t in reversed(range(S)):
        m = t < len_col
        h2, c2 = cell(x_tbd[t], h, c, lp["wih_b"], lp["whh_b"], lp["b_b"])
        h = jnp.where(m, h2, h); c = jnp.where(m, c2, c)
        out_b[t] = jnp.where(m, h2, 0.0)
    return jnp.concatenate([jnp.stack(out_f), jnp.stack(out_b)], axis=-1)


def rnn_encoder_reference(x, lengths, params, hidden_size):
    h = jnp.transpose(x, (1, 0, 2)).astype(jnp.float32)
    for lp in params:
        h = _ref_layer(h, lengths.astype(jnp.int32), lp, hidden_size)
    return jnp.transpose(h, (1, 0, 2))


if __name__ == "__main__":
    batch, seq_len, input_size, hidden_size, num_layers = 2, 8, 16, 32, 2

    key = jax.random.PRNGKey(0)
    key, kx = jax.random.split(key)
    x = jax.random.normal(kx, (batch, seq_len, input_size), jnp.float32)
    lengths = jnp.array([8, 5], dtype=jnp.int32)   # second sequence is padded

    params = init_params(key, input_size, hidden_size, num_layers)
    kparams = prepare_params(params, hidden_size)  # one-time layout transform

    fwd = jax.jit(functools.partial(rnn_encoder_forward,
                                    hidden_size=hidden_size, drop_prob=0.0))
    out = jax.block_until_ready(fwd(x, lengths, kparams))

    assert out.shape == (batch, seq_len, 2 * hidden_size)

    ref = rnn_encoder_reference(x, lengths, params, hidden_size)
    # bf16 storage of gx / W_hh / layer outputs (f32 accumulation) => loose tolerance
    assert jnp.allclose(out, ref, rtol=4e-2, atol=4e-2), "mismatch vs. reference"
    # padded positions of sequence 1 (len=5) must be exactly zero
    assert jnp.all(out[1, 5:, :] == 0.0)

    print("KERNEL_OK")
</pallas_src>

<mosaic_0001>
module attributes {stable_mosaic.version = 11 : i64} {
  func.func @kernel(%arg0: i32, %arg1: memref<16x1xi32, #tpu.memory_space<vmem>>, %arg2: memref<8x16x512xbf16, #tpu.memory_space<vmem>>, %arg3: memref<8x16x512xbf16, #tpu.memory_space<vmem>>, %arg4: memref<128x512xbf16, #tpu.memory_space<vmem>>, %arg5: memref<128x512xbf16, #tpu.memory_space<vmem>>, %arg6: memref<1x512xf32, #tpu.memory_space<vmem>>, %arg7: memref<1x512xf32, #tpu.memory_space<vmem>>, %arg8: memref<8x16x128xbf16, #tpu.memory_space<vmem>>, %arg9: memref<8x16x128xbf16, #tpu.memory_space<vmem>>, %arg10: memref<16x128xf32, #tpu.memory_space<vmem>>, %arg11: memref<16x128xf32, #tpu.memory_space<vmem>>, %arg12: memref<16x128xf32, #tpu.memory_space<vmem>>, %arg13: memref<16x128xf32, #tpu.memory_space<vmem>>) attributes {dimension_semantics = [#tpu.dimension_semantics<arbitrary>], iteration_bounds = array<i64: 1>, scalar_prefetch = 0 : i64, scratch_operands = 4 : i64, tpu.core_type = #tpu.core_type<tc>, window_params = [{pipeline_mode = #tpu.pipeline_mode<synchronous>, transform_indices = @transform_0, window_bounds = array<i64: 16, 1>}, {transform_indices = @transform_1, window_bounds = array<i64: 8, 16, 512>}, {transform_indices = @transform_2, window_bounds = array<i64: 8, 16, 512>}, {pipeline_mode = #tpu.pipeline_mode<synchronous>, transform_indices = @transform_3, window_bounds = array<i64: 128, 512>}, {pipeline_mode = #tpu.pipeline_mode<synchronous>, transform_indices = @transform_4, window_bounds = array<i64: 128, 512>}, {pipeline_mode = #tpu.pipeline_mode<synchronous>, transform_indices = @transform_5, window_bounds = array<i64: 1, 512>}, {pipeline_mode = #tpu.pipeline_mode<synchronous>, transform_indices = @transform_6, window_bounds = array<i64: 1, 512>}, {transform_indices = @transform_7, window_bounds = array<i64: 8, 16, 128>}, {transform_indices = @transform_8, window_bounds = array<i64: 8, 16, 128>}]} {
    %c0_i32 = arith.constant 0 : i32
    %0 = arith.cmpi eq, %arg0, %c0_i32 : i32
    %1 = arith.extui %0 : i1 to i32
    %c0_i32_0 = arith.constant 0 : i32
    %2 = arith.cmpi ne, %1, %c0_i32_0 : i32
    scf.if %2 {
      %cst_349 = arith.constant 0.000000e+00 : f32
      %763 = vector.broadcast %cst_349 : f32 to vector<16x128xf32>
      %c0_350 = arith.constant 0 : index
      %c0_351 = arith.constant 0 : index
      %764 = vector.load %arg10[%c0_350, %c0_351] : memref<16x128xf32, #tpu.memory_space<vmem>>, vector<16x128xf32>
      tpu.vector_store %arg10[%c0_350, %c0_351], %763 {strides = array<i32>} : memref<16x128xf32, #tpu.memory_space<vmem>>, vector<16x128xf32>,
      %cst_352 = arith.constant 0.000000e+00 : f32
      %765 = vector.broadcast %cst_352 : f32 to vector<16x128xf32>
      %c0_353 = arith.constant 0 : index
      %c0_354 = arith.constant 0 : index
      %766 = vector.load %arg11[%c0_353, %c0_354] : memref<16x128xf32, #tpu.memory_space<vmem>>, vector<16x128xf32>
      tpu.vector_store %arg11[%c0_353, %c0_354], %765 {strides = array<i32>} : memref<16x128xf32, #tpu.memory_space<vmem>>, vector<16x128xf32>,
      %cst_355 = arith.constant 0.000000e+00 : f32
      %767 = vector.broadcast %cst_355 : f32 to vector<16x128xf32>
      %c0_356 = arith.constant 0 : index
      %c0_357 = arith.constant 0 : index
      %768 = vector.load %arg12[%c0_356, %c0_357] : memref<16x128xf32, #tpu.memory_space<vmem>>, vector<16x128xf32>
      tpu.vector_store %arg12[%c0_356, %c0_357], %767 {strides = array<i32>} : memref<16x128xf32, #tpu.memory_space<vmem>>, vector<16x128xf32>,
      %cst_358 = arith.constant 0.000000e+00 : f32
      %769 = vector.broadcast %cst_358 : f32 to vector<16x128xf32>
      %c0_359 = arith.constant 0 : index
      %c0_360 = arith.constant 0 : index
      %770 = vector.load %arg13[%c0_359, %c0_360] : memref<16x128xf32, #tpu.memory_space<vmem>>, vector<16x128xf32>
      tpu.vector_store %arg13[%c0_359, %c0_360], %769 {strides = array<i32>} : memref<16x128xf32, #tpu.memory_space<vmem>>, vector<16x128xf32>,
    } else {
    }
    %c0 = arith.constant 0 : index
    %c0_1 = arith.constant 0 : index
    %3 = vector.load %arg1[%c0, %c0_1] : memref<16x1xi32, #tpu.memory_space<vmem>>, vector<16x1xi32>
    %c0_2 = arith.constant 0 : index
    %c0_3 = arith.constant 0 : index
    %4 = vector.load %arg4[%c0_2, %c0_3] : memref<128x512xbf16, #tpu.memory_space<vmem>>, vector<128x512xbf16>
    %c0_4 = arith.constant 0 : index
    %c0_5 = arith.constant 0 : index
    %5 = vector.load %arg5[%c0_4, %c0_5] : memref<128x512xbf16, #tpu.memory_space<vmem>>, vector<128x512xbf16>
    %c0_6 = arith.constant 0 : index
    %c0_7 = arith.constant 0 : index
    %6 = vector.load %arg6[%c0_6, %c0_7] : memref<1x512xf32, #tpu.memory_space<vmem>>, vector<1x512xf32>
    %c0_8 = arith.constant 0 : index
    %c0_9 = arith.constant 0 : index
    %7 = vector.load %arg7[%c0_8, %c0_9] : memref<1x512xf32, #tpu.memory_space<vmem>>, vector<1x512xf32>
    %c8_i32 = arith.constant 8 : i32
    %8 = arith.muli %arg0, %c8_i32 : i32
    %c0_i32_10 = arith.constant 0 : i32
    %9 = arith.subi %c0_i32_10, %arg0 : i32
    %c8_i32_11 = arith.constant 8 : i32
    %10 = arith.muli %9, %c8_i32_11 : i32
    %c0_12 = arith.constant 0 : index
    %c0_13 = arith.constant 0 : index
    %c0_14 = arith.constant 0 : index
    %11 = vector.load %arg2[%c0_12, %c0_13, %c0_14] : memref<8x16x512xbf16, #tpu.memory_space<vmem>>, vector<1x16x512xbf16>
    %12 = vector.shape_cast %11 : vector<1x16x512xbf16> to vector<16x512xbf16>
    %13 = arith.extf %12 : vector<16x512xbf16> to vector<16x512xf32>
    %14 = vector.broadcast %6 : vector<1x512xf32> to vector<16x512xf32>
    %15 = arith.addf %13, %14 : vector<16x512xf32>
    %c0_15 = arith.constant 0 : index
    %c0_16 = arith.constant 0 : index
    %16 = vector.load %arg10[%c0_15, %c0_16] : memref<16x128xf32, #tpu.memory_space<vmem>>, vector<16x128xf32>
    %17 = arith.truncf %16 : vector<16x128xf32> to vector<16x128xbf16>
    %cst = arith.constant dense<0.000000e+00> : vector<16x512xf32>
    %18 = tpu.matmul %17, %4, %cst {dimension_numbers = #tpu.dot_dimension_numbers<[1], [0], [0], [1], [0, 0, 1, 1], [], []>} : vector<16x128xbf16>, vector<128x512xbf16>, vector<16x512xf32> -> vector<16x512xf32>
    %19 = arith.addf %15, %18 : vector<16x512xf32>
    %c7 = arith.constant 7 : index
    %c0_17 = arith.constant 0 : index
    %c0_18 = arith.constant 0 : index
    %20 = vector.load %arg3[%c7, %c0_17, %c0_18] : memref<8x16x512xbf16, #tpu.memory_space<vmem>>, vector<1x16x512xbf16>
    %21 = vector.shape_cast %20 : vector<1x16x512xbf16> to vector<16x512xbf16>
    %22 = arith.extf %21 : vector<16x512xbf16> to vector<16x512xf32>
    %23 = vector.broadcast %7 : vector<1x512xf32> to vector<16x512xf32>
    %24 = arith.addf %22, %23 : vector<16x512xf32>
    %c0_19 = arith.constant 0 : index
    %c0_20 = arith.constant 0 : index
    %25 = vector.load %arg12[%c0_19, %c0_20] : memref<16x128xf32, #tpu.memory_space<vmem>>, vector<16x128xf32>
    %26 = arith.truncf %25 : vector<16x128xf32> to vector<16x128xbf16>
    %cst_21 = arith.constant dense<0.000000e+00> : vector<16x512xf32>
    %27 = tpu.matmul %26, %5, %cst_21 {dimension_numbers = #tpu.dot_dimension_numbers<[1], [0], [0], [1], [0, 0, 1, 1], [], []>} : vector<16x128xbf16>, vector<128x512xbf16>, vector<16x512xf32> -> vector<16x512xf32>
    %28 = arith.addf %24, %27 : vector<16x512xf32>
    %c0_22 = arith.constant 0 : index
    %c0_23 = arith.constant 0 : index
    %29 = vector.load %arg11[%c0_22, %c0_23] : memref<16x128xf32, #tpu.memory_space<vmem>>, vector<16x128xf32>
    %30 = vector.extract_strided_slice %19 {offsets = [0, 0], sizes = [16, 384], strides = [1, 1]} : vector<16x512xf32> to vector<16x384xf32>
    %31 = arith.negf %30 : vector<16x384xf32>
    %32 = math.exp %31 : vector<16x384xf32>
    %cst_24 = arith.constant 1.000000e+00 : f32
    %33 = vector.broadcast %cst_24 : f32 to vector<16x384xf32>
    %34 = arith.addf %33, %32 : vector<16x384xf32>
    %35 = arith.divf %33, %34 : vector<16x384xf32>
    %36 = vector.extract_strided_slice %35 {offsets = [0, 0], sizes = [16, 128], strides = [1, 1]} : vector<16x384xf32> to vector<16x128xf32>
    %37 = vector.extract_strided_slice %35 {offsets = [0, 128], sizes = [16, 128], strides = [1, 1]} : vector<16x384xf32> to vector<16x128xf32>
    %38 = vector.extract_strided_slice %35 {offsets = [0, 256], sizes = [16, 128], strides = [1, 1]} : vector<16x384xf32> to vector<16x128xf32>
    %39 = vector.extract_strided_slice %19 {offsets = [0, 384], sizes = [16, 128], strides = [1, 1]} : vector<16x512xf32> to vector<16x128xf32>
    %40 = math.tanh %39 : vector<16x128xf32>
    %41 = arith.mulf %37, %29 : vector<16x128xf32>
    %42 = arith.mulf %36, %40 : vector<16x128xf32>
    %43 = arith.addf %41, %42 : vector<16x128xf32>
    %44 = math.tanh %43 : vector<16x128xf32>
    %45 = arith.mulf %38, %44 : vector<16x128xf32>
    %c0_25 = arith.constant 0 : index
    %c0_26 = arith.constant 0 : index
    %46 = vector.load %arg13[%c0_25, %c0_26] : memref<16x128xf32, #tpu.memory_space<vmem>>, vector<16x128xf32>
    %47 = vector.extract_strided_slice %28 {offsets = [0, 0], sizes = [16, 384], strides = [1, 1]} : vector<16x512xf32> to vector<16x384xf32>
    %48 = arith.negf %47 : vector<16x384xf32>
    %49 = math.exp %48 : vector<16x384xf32>
    %cst_27 = arith.constant 1.000000e+00 : f32
    %50 = vector.broadcast %cst_27 : f32 to vector<16x384xf32>
    %51 = arith.addf %50, %49 : vector<16x384xf32>
    %52 = arith.divf %50, %51 : vector<16x384xf32>
    %53 = vector.extract_strided_slice %52 {offsets = [0, 0], sizes = [16, 128], strides = [1, 1]} : vector<16x384xf32> to vector<16x128xf32>
    %54 = vector.extract_strided_slice %52 {offsets = [0, 128], sizes = [16, 128], strides = [1, 1]} : vector<16x384xf32> to vector<16x128xf32>
    %55 = vector.extract_strided_slice %52 {offsets = [0, 256], sizes = [16, 128], strides = [1, 1]} : vector<16x384xf32> to vector<16x128xf32>
    %56 = vector.extract_strided_slice %28 {offsets = [0, 384], sizes = [16, 128], strides = [1, 1]} : vector<16x512xf32> to vector<16x128xf32>
    %57 = math.tanh %56 : vector<16x128xf32>
    %58 = arith.mulf %54, %46 : vector<16x128xf32>
    %59 = arith.mulf %53, %57 : vector<16x128xf32>
    %60 = arith.addf %58, %59 : vector<16x128xf32>
    %61 = math.tanh %60 : vector<16x128xf32>
    %62 = arith.mulf %55, %61 : vector<16x128xf32>
    %c0_i32_28 = arith.constant 0 : i32
    %63 = arith.addi %8, %c0_i32_28 : i32
    %64 = vector.broadcast %63 : i32 to vector<16x1xi32>
    %65 = arith.cmpi slt, %64, %3 : vector<16x1xi32>
    %c7_i32 = arith.constant 7 : i32
    %66 = arith.addi %10, %c7_i32 : i32
    %67 = vector.broadcast %66 : i32 to vector<16x1xi32>
    %68 = arith.cmpi slt, %67, %3 : vector<16x1xi32>
    %c0_29 = arith.constant 0 : index
    %c0_30 = arith.constant 0 : index
    %69 = vector.load %arg10[%c0_29, %c0_30] : memref<16x128xf32, #tpu.memory_space<vmem>>, vector<16x128xf32>
    %70 = vector.shape_cast %65 : vector<16x1xi1> to vector<16x1xi1>
    %71 = vector.broadcast %70 : vector<16x1xi1> to vector<16x128xi1>
    %72 = arith.select %71, %45, %69 : vector<16x128xi1>, vector<16x128xf32>
    %c0_31 = arith.constant 0 : index
    %c0_32 = arith.constant 0 : index
    %73 = vector.load %arg10[%c0_31, %c0_32] : memref<16x128xf32, #tpu.memory_space<vmem>>, vector<16x128xf32>
    tpu.vector_store %arg10[%c0_31, %c0_32], %72 {strides = array<i32>} : memref<16x128xf32, #tpu.memory_space<vmem>>, vector<16x128xf32>,
    %c0_33 = arith.constant 0 : index
    %c0_34 = arith.constant 0 : index
    %74 = vector.load %arg11[%c0_33, %c0_34] : memref<16x128xf32, #tpu.memory_space<vmem>>, vector<16x128xf32>
    %75 = vector.shape_cast %65 : vector<16x1xi1> to vector<16x1xi1>
    %76 = vector.broadcast %75 : vector<16x1xi1> to vector<16x128xi1>
    %77 = arith.select %76, %43, %74 : vector<16x128xi1>, vector<16x128xf32>
    %c0_35 = arith.constant 0 : index
    %c0_36 = arith.constant 0 : index
    %78 = vector.load %arg11[%c0_35, %c0_36] : memref<16x128xf32, #tpu.memory_space<vmem>>, vector<16x128xf32>
    tpu.vector_store %arg11[%c0_35, %c0_36], %77 {strides = array<i32>} : memref<16x128xf32, #tpu.memory_space<vmem>>, vector<16x128xf32>,
    %c0_37 = arith.constant 0 : index
    %c0_38 = arith.constant 0 : index
    %79 = vector.load %arg12[%c0_37, %c0_38] : memref<16x128xf32, #tpu.memory_space<vmem>>, vector<16x128xf32>
    %80 = vector.shape_cast %68 : vector<16x1xi1> to vector<16x1xi1>
    %81 = vector.broadcast %80 : vector<16x1xi1> to vector<16x128xi1>
    %82 = arith.select %81, %62, %79 : vector<16x128xi1>, vector<16x128xf32>
    %c0_39 = arith.constant 0 : index
    %c0_40 = arith.constant 0 : index
    %83 = vector.load %arg12[%c0_39, %c0_40] : memref<16x128xf32, #tpu.memory_space<vmem>>, vector<16x128xf32>
    tpu.vector_store %arg12[%c0_39, %c0_40], %82 {strides = array<i32>} : memref<16x128xf32, #tpu.memory_space<vmem>>, vector<16x128xf32>,
    %c0_41 = arith.constant 0 : index
    %c0_42 = arith.constant 0 : index
    %84 = vector.load %arg13[%c0_41, %c0_42] : memref<16x128xf32, #tpu.memory_space<vmem>>, vector<16x128xf32>
    %85 = vector.shape_cast %68 : vector<16x1xi1> to vector<16x1xi1>
    %86 = vector.broadcast %85 : vector<16x1xi1> to vector<16x128xi1>
    %87 = arith.select %86, %60, %84 : vector<16x128xi1>, vector<16x128xf32>
    %c0_43 = arith.constant 0 : index
    %c0_44 = arith.constant 0 : index
    %88 = vector.load %arg13[%c0_43, %c0_44] : memref<16x128xf32, #tpu.memory_space<vmem>>, vector<16x128xf32>
    tpu.vector_store %arg13[%c0_43, %c0_44], %87 {strides = array<i32>} : memref<16x128xf32, #tpu.memory_space<vmem>>, vector<16x128xf32>,
    %cst_45 = arith.constant 0.000000e+00 : f32
    %89 = vector.shape_cast %65 : vector<16x1xi1> to vector<16x1xi1>
    %90 = vector.broadcast %89 : vector<16x1xi1> to vector<16x128xi1>
    %91 = vector.broadcast %cst_45 : f32 to vector<16x128xf32>
    %92 = arith.select %90, %45, %91 : vector<16x128xi1>, vector<16x128xf32>
    %93 = arith.truncf %92 : vector<16x128xf32> to vector<16x128xbf16>
    %c0_46 = arith.constant 0 : index
    %c0_47 = arith.constant 0 : index
    %c0_48 = arith.constant 0 : index
    %94 = vector.load %arg8[%c0_46, %c0_47, %c0_48] : memref<8x16x128xbf16, #tpu.memory_space<vmem>>, vector<1x16x128xbf16>
    %95 = vector.shape_cast %94 : vector<1x16x128xbf16> to vector<16x128xbf16>
    %96 = vector.shape_cast %93 : vector<16x128xbf16> to vector<1x16x128xbf16>
    tpu.vector_store %arg8[%c0_46, %c0_47, %c0_48], %96 {strides = array<i32>} : memref<8x16x128xbf16, #tpu.memory_space<vmem>>, vector<1x16x128xbf16>,
    %cst_49 = arith.constant 0.000000e+00 : f32
    %97 = vector.shape_cast %68 : vector<16x1xi1> to vector<16x1xi1>
    %98 = vector.broadcast %97 : vector<16x1xi1> to vector<16x128xi1>
    %99 = vector.broadcast %cst_49 : f32 to vector<16x128xf32>
    %100 = arith.select %98, %62, %99 : vector<16x128xi1>, vector<16x128xf32>
    %101 = arith.truncf %100 : vector<16x128xf32> to vector<16x128xbf16>
    %c7_50 = arith.constant 7 : index
    %c0_51 = arith.constant 0 : index
    %c0_52 = arith.constant 0 : index
    %102 = vector.load %arg9[%c7_50, %c0_51, %c0_52] : memref<8x16x128xbf16, #tpu.memory_space<vmem>>, vector<1x16x128xbf16>
    %103 = vector.shape_cast %102 : vector<1x16x128xbf16> to vector<16x128xbf16>
    %104 = vector.shape_cast %101 : vector<16x128xbf16> to vector<1x16x128xbf16>
    tpu.vector_store %arg9[%c7_50, %c0_51, %c0_52], %104 {strides = array<i32>} : memref<8x16x128xbf16, #tpu.memory_space<vmem>>, vector<1x16x128xbf16>,
    %c1 = arith.constant 1 : index
    %c0_53 = arith.constant 0 : index
    %c0_54 = arith.constant 0 : index
    %105 = vector.load %arg2[%c1, %c0_53, %c0_54] : memref<8x16x512xbf16, #tpu.memory_space<vmem>>, vector<1x16x512xbf16>
    %106 = vector.shape_cast %105 : vector<1x16x512xbf16> to vector<16x512xbf16>
    %107 = arith.extf %106 : vector<16x512xbf16> to vector<16x512xf32>
    %108 = vector.broadcast %6 : vector<1x512xf32> to vector<16x512xf32>
    %109 = arith.addf %107, %108 : vector<16x512xf32>
    %c0_55 = arith.constant 0 : index
    %c0_56 = arith.constant 0 : index
    %110 = vector.load %arg10[%c0_55, %c0_56] : memref<16x128xf32, #tpu.memory_space<vmem>>, vector<16x128xf32>
    %111 = arith.truncf %110 : vector<16x128xf32> to vector<16x128xbf16>
    %cst_57 = arith.constant dense<0.000000e+00> : vector<16x512xf32>
    %112 = tpu.matmul %111, %4, %cst_57 {dimension_numbers = #tpu.dot_dimension_numbers<[1], [0], [0], [1], [0, 0, 1, 1], [], []>} : vector<16x128xbf16>, vector<128x512xbf16>, vector<16x512xf32> -> vector<16x512xf32>
    %113 = arith.addf %109, %112 : vector<16x512xf32>
    %c6 = arith.constant 6 : index
    %c0_58 = arith.constant 0 : index
    %c0_59 = arith.constant 0 : index
    %114 = vector.load %arg3[%c6, %c0_58, %c0_59] : memref<8x16x512xbf16, #tpu.memory_space<vmem>>, vector<1x16x512xbf16>
    %115 = vector.shape_cast %114 : vector<1x16x512xbf16> to vector<16x512xbf16>
    %116 = arith.extf %115 : vector<16x512xbf16> to vector<16x512xf32>
    %117 = vector.broadcast %7 : vector<1x512xf32> to vector<16x512xf32>
    %118 = arith.addf %116, %117 : vector<16x512xf32>
    %c0_60 = arith.constant 0 : index
    %c0_61 = arith.constant 0 : index
    %119 = vector.load %arg12[%c0_60, %c0_61] : memref<16x128xf32, #tpu.memory_space<vmem>>, vector<16x128xf32>
    %120 = arith.truncf %119 : vector<16x128xf32> to vector<16x128xbf16>
    %cst_62 = arith.constant dense<0.000000e+00> : vector<16x512xf32>
    %121 = tpu.matmul %120, %5, %cst_62 {dimension_numbers = #tpu.dot_dimension_numbers<[1], [0], [0], [1], [0, 0, 1, 1], [], []>} : vector<16x128xbf16>, vector<128x512xbf16>, vector<16x512xf32> -> vector<16x512xf32>
    %122 = arith.addf %118, %121 : vector<16x512xf32>
    %c0_63 = arith.constant 0 : index
    %c0_64 = arith.constant 0 : index
    %123 = vector.load %arg11[%c0_63, %c0_64] : memref<16x128xf32, #tpu.memory_space<vmem>>, vector<16x128xf32>
    %124 = vector.extract_strided_slice %113 {offsets = [0, 0], sizes = [16, 384], strides = [1, 1]} : vector<16x512xf32> to vector<16x384xf32>
    %125 = arith.negf %124 : vector<16x384xf32>
    %126 = math.exp %125 : vector<16x384xf32>
    %cst_65 = arith.constant 1.000000e+00 : f32
    %127 = vector.broadcast %cst_65 : f32 to vector<16x384xf32>
    %128 = arith.addf %127, %126 : vector<16x384xf32>
    %129 = arith.divf %127, %128 : vector<16x384xf32>
    %130 = vector.extract_strided_slice %129 {offsets = [0, 0], sizes = [16, 128], strides = [1, 1]} : vector<16x384xf32> to vector<16x128xf32>
    %131 = vector.extract_strided_slice %129 {offsets = [0, 128], sizes = [16, 128], strides = [1, 1]} : vector<16x384xf32> to vector<16x128xf32>
    %132 = vector.extract_strided_slice %129 {offsets = [0, 256], sizes = [16, 128], strides = [1, 1]} : vector<16x384xf32> to vector<16x128xf32>
    %133 = vector.extract_strided_slice %113 {offsets = [0, 384], sizes = [16, 128], strides = [1, 1]} : vector<16x512xf32> to vector<16x128xf32>
    %134 = math.tanh %133 : vector<16x128xf32>
    %135 = arith.mulf %131, %123 : vector<16x128xf32>
    %136 = arith.mulf %130, %134 : vector<16x128xf32>
    %137 = arith.addf %135, %136 : vector<16x128xf32>
    %138 = math.tanh %137 : vector<16x128xf32>
    %139 = arith.mulf %132, %138 : vector<16x128xf32>
    %c0_66 = arith.constant 0 : index
    %c0_67 = arith.constant 0 : index
    %140 = vector.load %arg13[%c0_66, %c0_67] : memref<16x128xf32, #tpu.memory_space<vmem>>, vector<16x128xf32>
    %141 = vector.extract_strided_slice %122 {offsets = [0, 0], sizes = [16, 384], strides = [1, 1]} : vector<16x512xf32> to vector<16x384xf32>
    %142 = arith.negf %141 : vector<16x384xf32>
    %143 = math.exp %142 : vector<16x384xf32>
    %cst_68 = arith.constant 1.000000e+00 : f32
    %144 = vector.broadcast %cst_68 : f32 to vector<16x384xf32>
    %145 = arith.addf %144, %143 : vector<16x384xf32>
    %146 = arith.divf %144, %145 : vector<16x384xf32>
    %147 = vector.extract_strided_slice %146 {offsets = [0, 0], sizes = [16, 128], strides = [1, 1]} : vector<16x384xf32> to vector<16x128xf32>
    %148 = vector.extract_strided_slice %146 {offsets = [0, 128], sizes = [16, 128], strides = [1, 1]} : vector<16x384xf32> to vector<16x128xf32>
    %149 = vector.extract_strided_slice %146 {offsets = [0, 256], sizes = [16, 128], strides = [1, 1]} : vector<16x384xf32> to vector<16x128xf32>
    %150 = vector.extract_strided_slice %122 {offsets = [0, 384], sizes = [16, 128], strides = [1, 1]} : vector<16x512xf32> to vector<16x128xf32>
    %151 = math.tanh %150 : vector<16x128xf32>
    %152 = arith.mulf %148, %140 : vector<16x128xf32>
    %153 = arith.mulf %147, %151 : vector<16x128xf32>
    %154 = arith.addf %152, %153 : vector<16x128xf32>
    %155 = math.tanh %154 : vector<16x128xf32>
    %156 = arith.mulf %149, %155 : vector<16x128xf32>
    %c1_i32 = arith.constant 1 : i32
    %157 = arith.addi %8, %c1_i32 : i32
    %158 = vector.broadcast %157 : i32 to vector<16x1xi32>
    %159 = arith.cmpi slt, %158, %3 : vector<16x1xi32>
    %c6_i32 = arith.constant 6 : i32
    %160 = arith.addi %10, %c6_i32 : i32
    %161 = vector.broadcast %160 : i32 to vector<16x1xi32>
    %162 = arith.cmpi slt, %161, %3 : vector<16x1xi32>
    %c0_69 = arith.constant 0 : index
    %c0_70 = arith.constant 0 : index
    %163 = vector.load %arg10[%c0_69, %c0_70] : memref<16x128xf32, #tpu.memory_space<vmem>>, vector<16x128xf32>
    %164 = vector.shape_cast %159 : vector<16x1xi1> to vector<16x1xi1>
    %165 = vector.broadcast %164 : vector<16x1xi1> to vector<16x128xi1>
    %166 = arith.select %165, %139, %163 : vector<16x128xi1>, vector<16x128xf32>
    %c0_71 = arith.constant 0 : index
    %c0_72 = arith.constant 0 : index
    %167 = vector.load %arg10[%c0_71, %c0_72] : memref<16x128xf32, #tpu.memory_space<vmem>>, vector<16x128xf32>
    tpu.vector_store %arg10[%c0_71, %c0_72], %166 {strides = array<i32>} : memref<16x128xf32, #tpu.memory_space<vmem>>, vector<16x128xf32>,
    %c0_73 = arith.constant 0 : index
    %c0_74 = arith.constant 0 : index
    %168 = vector.load %arg11[%c0_73, %c0_74] : memref<16x128xf32, #tpu.memory_space<vmem>>, vector<16x128xf32>
    %169 = vector.shape_cast %159 : vector<16x1xi1> to vector<16x1xi1>
    %170 = vector.broadcast %169 : vector<16x1xi1> to vector<16x128xi1>
    %171 = arith.select %170, %137, %168 : vector<16x128xi1>, vector<16x128xf32>
    %c0_75 = arith.constant 0 : index
    %c0_76 = arith.constant 0 : index
    %172 = vector.load %arg11[%c0_75, %c0_76] : memref<16x128xf32, #tpu.memory_space<vmem>>, vector<16x128xf32>
    tpu.vector_store %arg11[%c0_75, %c0_76], %171 {strides = array<i32>} : memref<16x128xf32, #tpu.memory_space<vmem>>, vector<16x128xf32>,
    %c0_77 = arith.constant 0 : index
    %c0_78 = arith.constant 0 : index
    %173 = vector.load %arg12[%c0_77, %c0_78] : memref<16x128xf32, #tpu.memory_space<vmem>>, vector<16x128xf32>
    %174 = vector.shape_cast %162 : vector<16x1xi1> to vector<16x1xi1>
    %175 = vector.broadcast %174 : vector<16x1xi1> to vector<16x128xi1>
    %176 = arith.select %175, %156, %173 : vector<16x128xi1>, vector<16x128xf32>
    %c0_79 = arith.constant 0 : index
    %c0_80 = arith.constant 0 : index
    %177 = vector.load %arg12[%c0_79, %c0_80] : memref<16x128xf32, #tpu.memory_space<vmem>>, vector<16x128xf32>
    tpu.vector_store %arg12[%c0_79, %c0_80], %176 {strides = array<i32>} : memref<16x128xf32, #tpu.memory_space<vmem>>, vector<16x128xf32>,
    %c0_81 = arith.constant 0 : index
    %c0_82 = arith.constant 0 : index
    %178 = vector.load %arg13[%c0_81, %c0_82] : memref<16x128xf32, #tpu.memory_space<vmem>>, vector<16x128xf32>
    %179 = vector.shape_cast %162 : vector<16x1xi1> to vector<16x1xi1>
    %180 = vector.broadcast %179 : vector<16x1xi1> to vector<16x128xi1>
    %181 = arith.select %180, %154, %178 : vector<16x128xi1>, vector<16x128xf32>
    %c0_83 = arith.constant 0 : index
    %c0_84 = arith.constant 0 : index
    %182 = vector.load %arg13[%c0_83, %c0_84] : memref<16x128xf32, #tpu.memory_space<vmem>>, vector<16x128xf32>
    tpu.vector_store %arg13[%c0_83, %c0_84], %181 {strides = array<i32>} : memref<16x128xf32, #tpu.memory_space<vmem>>, vector<16x128xf32>,
    %cst_85 = arith.constant 0.000000e+00 : f32
    %183 = vector.shape_cast %159 : vector<16x1xi1> to vector<16x1xi1>
    %184 = vector.broadcast %183 : vector<16x1xi1> to vector<16x128xi1>
    %185 = vector.broadcast %cst_85 : f32 to vector<16x128xf32>
    %186 = arith.select %184, %139, %185 : vector<16x128xi1>, vector<16x128xf32>
    %187 = arith.truncf %186 : vector<16x128xf32> to vector<16x128xbf16>
    %c1_86 = arith.constant 1 : index
    %c0_87 = arith.constant 0 : index
    %c0_88 = arith.constant 0 : index
    %188 = vector.load %arg8[%c1_86, %c0_87, %c0_88] : memref<8x16x128xbf16, #tpu.memory_space<vmem>>, vector<1x16x128xbf16>
    %189 = vector.shape_cast %188 : vector<1x16x128xbf16> to vector<16x128xbf16>
    %190 = vector.shape_cast %187 : vector<16x128xbf16> to vector<1x16x128xbf16>
    tpu.vector_store %arg8[%c1_86, %c0_87, %c0_88], %190 {strides = array<i32>} : memref<8x16x128xbf16, #tpu.memory_space<vmem>>, vector<1x16x128xbf16>,
    %cst_89 = arith.constant 0.000000e+00 : f32
    %191 = vector.shape_cast %162 : vector<16x1xi1> to vector<16x1xi1>
    %192 = vector.broadcast %191 : vector<16x1xi1> to vector<16x128xi1>
    %193 = vector.broadcast %cst_89 : f32 to vector<16x128xf32>
    %194 = arith.select %192, %156, %193 : vector<16x128xi1>, vector<16x128xf32>
    %195 = arith.truncf %194 : vector<16x128xf32> to vector<16x128xbf16>
    %c6_90 = arith.constant 6 : index
    %c0_91 = arith.constant 0 : index
    %c0_92 = arith.constant 0 : index
    %196 = vector.load %arg9[%c6_90, %c0_91, %c0_92] : memref<8x16x128xbf16, #tpu.memory_space<vmem>>, vector<1x16x128xbf16>
    %197 = vector.shape_cast %196 : vector<1x16x128xbf16> to vector<16x128xbf16>
    %198 = vector.shape_cast %195 : vector<16x128xbf16> to vector<1x16x128xbf16>
    tpu.vector_store %arg9[%c6_90, %c0_91, %c0_92], %198 {strides = array<i32>} : memref<8x16x128xbf16, #tpu.memory_space<vmem>>, vector<1x16x128xbf16>,
    %c2 = arith.constant 2 : index
    %c0_93 = arith.constant 0 : index
    %c0_94 = arith.constant 0 : index
    %199 = vector.load %arg2[%c2, %c0_93, %c0_94] : memref<8x16x512xbf16, #tpu.memory_space<vmem>>, vector<1x16x512xbf16>
    %200 = vector.shape_cast %199 : vector<1x16x512xbf16> to vector<16x512xbf16>
    %201 = arith.extf %200 : vector<16x512xbf16> to vector<16x512xf32>
    %202 = vector.broadcast %6 : vector<1x512xf32> to vector<16x512xf32>
    %203 = arith.addf %201, %202 : vector<16x512xf32>
    %c0_95 = arith.constant 0 : index
    %c0_96 = arith.constant 0 : index
    %204 = vector.load %arg10[%c0_95, %c0_96] : memref<16x128xf32, #tpu.memory_space<vmem>>, vector<16x128xf32>
    %205 = arith.truncf %204 : vector<16x128xf32> to vector<16x128xbf16>
    %cst_97 = arith.constant dense<0.000000e+00> : vector<16x512xf32>
    %206 = tpu.matmul %205, %4, %cst_97 {dimension_numbers = #tpu.dot_dimension_numbers<[1], [0], [0], [1], [0, 0, 1, 1], [], []>} : vector<16x128xbf16>, vector<128x512xbf16>, vector<16x512xf32> -> vector<16x512xf32>
    %207 = arith.addf %203, %206 : vector<16x512xf32>
    %c5 = arith.constant 5 : index
    %c0_98 = arith.constant 0 : index
    %c0_99 = arith.constant 0 : index
    %208 = vector.load %arg3[%c5, %c0_98, %c0_99] : memref<8x16x512xbf16, #tpu.memory_space<vmem>>, vector<1x16x512xbf16>
    %209 = vector.shape_cast %208 : vector<1x16x512xbf16> to vector<16x512xbf16>
    %210 = arith.extf %209 : vector<16x512xbf16> to vector<16x512xf32>
    %211 = vector.broadcast %7 : vector<1x512xf32> to vector<16x512xf32>
    %212 = arith.addf %210, %211 : vector<16x512xf32>
    %c0_100 = arith.constant 0 : index
    %c0_101 = arith.constant 0 : index
    %213 = vector.load %arg12[%c0_100, %c0_101] : memref<16x128xf32, #tpu.memory_space<vmem>>, vector<16x128xf32>
    %214 = arith.truncf %213 : vector<16x128xf32> to vector<16x128xbf16>
    %cst_102 = arith.constant dense<0.000000e+00> : vector<16x512xf32>
    %215 = tpu.matmul %214, %5, %cst_102 {dimension_numbers = #tpu.dot_dimension_numbers<[1], [0], [0], [1], [0, 0, 1, 1], [], []>} : vector<16x128xbf16>, vector<128x512xbf16>, vector<16x512xf32> -> vector<16x512xf32>
    %216 = arith.addf %212, %215 : vector<16x512xf32>
    %c0_103 = arith.constant 0 : index
    %c0_104 = arith.constant 0 : index
    %217 = vector.load %arg11[%c0_103, %c0_104] : memref<16x128xf32, #tpu.memory_space<vmem>>, vector<16x128xf32>
    %218 = vector.extract_strided_slice %207 {offsets = [0, 0], sizes = [16, 384], strides = [1, 1]} : vector<16x512xf32> to vector<16x384xf32>
    %219 = arith.negf %218 : vector<16x384xf32>
    %220 = math.exp %219 : vector<16x384xf32>
    %cst_105 = arith.constant 1.000000e+00 : f32
    %221 = vector.broadcast %cst_105 : f32 to vector<16x384xf32>
    %222 = arith.addf %221, %220 : vector<16x384xf32>
    %223 = arith.divf %221, %222 : vector<16x384xf32>
    %224 = vector.extract_strided_slice %223 {offsets = [0, 0], sizes = [16, 128], strides = [1, 1]} : vector<16x384xf32> to vector<16x128xf32>
    %225 = vector.extract_strided_slice %223 {offsets = [0, 128], sizes = [16, 128], strides = [1, 1]} : vector<16x384xf32> to vector<16x128xf32>
    %226 = vector.extract_strided_slice %223 {offsets = [0, 256], sizes = [16, 128], strides = [1, 1]} : vector<16x384xf32> to vector<16x128xf32>
    %227 = vector.extract_strided_slice %207 {offsets = [0, 384], sizes = [16, 128], strides = [1, 1]} : vector<16x512xf32> to vector<16x128xf32>
    %228 = math.tanh %227 : vector<16x128xf32>
    %229 = arith.mulf %225, %217 : vector<16x128xf32>
    %230 = arith.mulf %224, %228 : vector<16x128xf32>
    %231 = arith.addf %229, %230 : vector<16x128xf32>
    %232 = math.tanh %231 : vector<16x128xf32>
    %233 = arith.mulf %226, %232 : vector<16x128xf32>
    %c0_106 = arith.constant 0 : index
    %c0_107 = arith.constant 0 : index
    %234 = vector.load %arg13[%c0_106, %c0_107] : memref<16x128xf32, #tpu.memory_space<vmem>>, vector<16x128xf32>
    %235 = vector.extract_strided_slice %216 {offsets = [0, 0], sizes = [16, 384], strides = [1, 1]} : vector<16x512xf32> to vector<16x384xf32>
    %236 = arith.negf %235 : vector<16x384xf32>
    %237 = math.exp %236 : vector<16x384xf32>
    %cst_108 = arith.constant 1.000000e+00 : f32
    %238 = vector.broadcast %cst_108 : f32 to vector<16x384xf32>
    %239 = arith.addf %238, %237 : vector<16x384xf32>
    %240 = arith.divf %238, %239 : vector<16x384xf32>
    %241 = vector.extract_strided_slice %240 {offsets = [0, 0], sizes = [16, 128], strides = [1, 1]} : vector<16x384xf32> to vector<16x128xf32>
    %242 = vector.extract_strided_slice %240 {offsets = [0, 128], sizes = [16, 128], strides = [1, 1]} : vector<16x384xf32> to vector<16x128xf32>
    %243 = vector.extract_strided_slice %240 {offsets = [0, 256], sizes = [16, 128], strides = [1, 1]} : vector<16x384xf32> to vector<16x128xf32>
    %244 = vector.extract_strided_slice %216 {offsets = [0, 384], sizes = [16, 128], strides = [1, 1]} : vector<16x512xf32> to vector<16x128xf32>
    %245 = math.tanh %244 : vector<16x128xf32>
    %246 = arith.mulf %242, %234 : vector<16x128xf32>
    %247 = arith.mulf %241, %245 : vector<16x128xf32>
    %248 = arith.addf %246, %247 : vector<16x128xf32>
    %249 = math.tanh %248 : vector<16x128xf32>
    %250 = arith.mulf %243, %249 : vector<16x128xf32>
    %c2_i32 = arith.constant 2 : i32
    %251 = arith.addi %8, %c2_i32 : i32
    %252 = vector.broadcast %251 : i32 to vector<16x1xi32>
    %253 = arith.cmpi slt, %252, %3 : vector<16x1xi32>
    %c5_i32 = arith.constant 5 : i32
    %254 = arith.addi %10, %c5_i32 : i32
    %255 = vector.broadcast %254 : i32 to vector<16x1xi32>
    %256 = arith.cmpi slt, %255, %3 : vector<16x1xi32>
    %c0_109 = arith.constant 0 : index
    %c0_110 = arith.constant 0 : index
    %257 = vector.load %arg10[%c0_109, %c0_110] : memref<16x128xf32, #tpu.memory_space<vmem>>, vector<16x128xf32>
    %258 = vector.shape_cast %253 : vector<16x1xi1> to vector<16x1xi1>
    %259 = vector.broadcast %258 : vector<16x1xi1> to vector<16x128xi1>
    %260 = arith.select %259, %233, %257 : vector<16x128xi1>, vector<16x128xf32>
    %c0_111 = arith.constant 0 : index
    %c0_112 = arith.constant 0 : index
    %261 = vector.load %arg10[%c0_111, %c0_112] : memref<16x128xf32, #tpu.memory_space<vmem>>, vector<16x128xf32>
    tpu.vector_store %arg10[%c0_111, %c0_112], %260 {strides = array<i32>} : memref<16x128xf32, #tpu.memory_space<vmem>>, vector<16x128xf32>,
    %c0_113 = arith.constant 0 : index
    %c0_114 = arith.constant 0 : index
    %262 = vector.load %arg11[%c0_113, %c0_114] : memref<16x128xf32, #tpu.memory_space<vmem>>, vector<16x128xf32>
    %263 = vector.shape_cast %253 : vector<16x1xi1> to vector<16x1xi1>
    %264 = vector.broadcast %263 : vector<16x1xi1> to vector<16x128xi1>
    %265 = arith.select %264, %231, %262 : vector<16x128xi1>, vector<16x128xf32>
    %c0_115 = arith.constant 0 : index
    %c0_116 = arith.constant 0 : index
    %266 = vector.load %arg11[%c0_115, %c0_116] : memref<16x128xf32, #tpu.memory_space<vmem>>, vector<16x128xf32>
    tpu.vector_store %arg11[%c0_115, %c0_116], %265 {strides = array<i32>} : memref<16x128xf32, #tpu.memory_space<vmem>>, vector<16x128xf32>,
    %c0_117 = arith.constant 0 : index
    %c0_118 = arith.constant 0 : index
    %267 = vector.load %arg12[%c0_117, %c0_118] : memref<16x128xf32, #tpu.memory_space<vmem>>, vector<16x128xf32>
    %268 = vector.shape_cast %256 : vector<16x1xi1> to vector<16x1xi1>
    %269 = vector.broadcast %268 : vector<16x1xi1> to vector<16x128xi1>
    %270 = arith.select %269, %250, %267 : vector<16x128xi1>, vector<16x128xf32>
    %c0_119 = arith.constant 0 : index
    %c0_120 = arith.constant 0 : index
    %271 = vector.load %arg12[%c0_119, %c0_120] : memref<16x128xf32, #tpu.memory_space<vmem>>, vector<16x128xf32>
    tpu.vector_store %arg12[%c0_119, %c0_120], %270 {strides = array<i32>} : memref<16x128xf32, #tpu.memory_space<vmem>>, vector<16x128xf32>,
    %c0_121 = arith.constant 0 : index
    %c0_122 = arith.constant 0 : index
    %272 = vector.load %arg13[%c0_121, %c0_122] : memref<16x128xf32, #tpu.memory_space<vmem>>, vector<16x128xf32>
    %273 = vector.shape_cast %256 : vector<16x1xi1> to vector<16x1xi1>
    %274 = vector.broadcast %273 : vector<16x1xi1> to vector<16x128xi1>
    %275 = arith.select %274, %248, %272 : vector<16x128xi1>, vector<16x128xf32>
    %c0_123 = arith.constant 0 : index
    %c0_124 = arith.constant 0 : index
    %276 = vector.load %arg13[%c0_123, %c0_124] : memref<16x128xf32, #tpu.memory_space<vmem>>, vector<16x128xf32>
    tpu.vector_store %arg13[%c0_123, %c0_124], %275 {strides = array<i32>} : memref<16x128xf32, #tpu.memory_space<vmem>>, vector<16x128xf32>,
    %cst_125 = arith.constant 0.000000e+00 : f32
    %277 = vector.shape_cast %253 : vector<16x1xi1> to vector<16x1xi1>
    %278 = vector.broadcast %277 : vector<16x1xi1> to vector<16x128xi1>
    %279 = vector.broadcast %cst_125 : f32 to vector<16x128xf32>
    %280 = arith.select %278, %233, %279 : vector<16x128xi1>, vector<16x128xf32>
    %281 = arith.truncf %280 : vector<16x128xf32> to vector<16x128xbf16>
    %c2_126 = arith.constant 2 : index
    %c0_127 = arith.constant 0 : index
    %c0_128 = arith.constant 0 : index
    %282 = vector.load %arg8[%c2_126, %c0_127, %c0_128] : memref<8x16x128xbf16, #tpu.memory_space<vmem>>, vector<1x16x128xbf16>
    %283 = vector.shape_cast %282 : vector<1x16x128xbf16> to vector<16x128xbf16>
    %284 = vector.shape_cast %281 : vector<16x128xbf16> to vector<1x16x128xbf16>
    tpu.vector_store %arg8[%c2_126, %c0_127, %c0_128], %284 {strides = array<i32>} : memref<8x16x128xbf16, #tpu.memory_space<vmem>>, vector<1x16x128xbf16>,
    %cst_129 = arith.constant 0.000000e+00 : f32
    %285 = vector.shape_cast %256 : vector<16x1xi1> to vector<16x1xi1>
    %286 = vector.broadcast %285 : vector<16x1xi1> to vector<16x128xi1>
    %287 = vector.broadcast %cst_129 : f32 to vector<16x128xf32>
    %288 = arith.select %286, %250, %287 : vector<16x128xi1>, vector<16x128xf32>
    %289 = arith.truncf %288 : vector<16x128xf32> to vector<16x128xbf16>
    %c5_130 = arith.constant 5 : index
    %c0_131 = arith.constant 0 : index
    %c0_132 = arith.constant 0 : index
    %290 = vector.load %arg9[%c5_130, %c0_131, %c0_132] : memref<8x16x128xbf16, #tpu.memory_space<vmem>>, vector<1x16x128xbf16>
    %291 = vector.shape_cast %290 : vector<1x16x128xbf16> to vector<16x128xbf16>
    %292 = vector.shape_cast %289 : vector<16x128xbf16> to vector<1x16x128xbf16>
    tpu.vector_store %arg9[%c5_130, %c0_131, %c0_132], %292 {strides = array<i32>} : memref<8x16x128xbf16, #tpu.memory_space<vmem>>, vector<1x16x128xbf16>,
    %c3 = arith.constant 3 : index
    %c0_133 = arith.constant 0 : index
    %c0_134 = arith.constant 0 : index
    %293 = vector.load %arg2[%c3, %c0_133, %c0_134] : memref<8x16x512xbf16, #tpu.memory_space<vmem>>, vector<1x16x512xbf16>
    %294 = vector.shape_cast %293 : vector<1x16x512xbf16> to vector<16x512xbf16>
    %295 = arith.extf %294 : vector<16x512xbf16> to vector<16x512xf32>
    %296 = vector.broadcast %6 : vector<1x512xf32> to vector<16x512xf32>
    %297 = arith.addf %295, %296 : vector<16x512xf32>
    %c0_135 = arith.constant 0 : index
    %c0_136 = arith.constant 0 : index
    %298 = vector.load %arg10[%c0_135, %c0_136] : memref<16x128xf32, #tpu.memory_space<vmem>>, vector<16x128xf32>
    %299 = arith.truncf %298 : vector<16x128xf32> to vector<16x128xbf16>
    %cst_137 = arith.constant dense<0.000000e+00> : vector<16x512xf32>
    %300 = tpu.matmul %299, %4, %cst_137 {dimension_numbers = #tpu.dot_dimension_numbers<[1], [0], [0], [1], [0, 0, 1, 1], [], []>} : vector<16x128xbf16>, vector<128x512xbf16>, vector<16x512xf32> -> vector<16x512xf32>
    %301 = arith.addf %297, %300 : vector<16x512xf32>
    %c4 = arith.constant 4 : index
    %c0_138 = arith.constant 0 : index
    %c0_139 = arith.constant 0 : index
    %302 = vector.load %arg3[%c4, %c0_138, %c0_139] : memref<8x16x512xbf16, #tpu.memory_space<vmem>>, vector<1x16x512xbf16>
    %303 = vector.shape_cast %302 : vector<1x16x512xbf16> to vector<16x512xbf16>
    %304 = arith.extf %303 : vector<16x512xbf16> to vector<16x512xf32>
    %305 = vector.broadcast %7 : vector<1x512xf32> to vector<16x512xf32>
    %306 = arith.addf %304, %305 : vector<16x512xf32>
    %c0_140 = arith.constant 0 : index
    %c0_141 = arith.constant 0 : index
    %307 = vector.load %arg12[%c0_140, %c0_141] : memref<16x128xf32, #tpu.memory_space<vmem>>, vector<16x128xf32>
    %308 = arith.truncf %307 : vector<16x128xf32> to vector<16x128xbf16>
    %cst_142 = arith.constant dense<0.000000e+00> : vector<16x512xf32>
    %309 = tpu.matmul %308, %5, %cst_142 {dimension_numbers = #tpu.dot_dimension_numbers<[1], [0], [0], [1], [0, 0, 1, 1], [], []>} : vector<16x128xbf16>, vector<128x512xbf16>, vector<16x512xf32> -> vector<16x512xf32>
    %310 = arith.addf %306, %309 : vector<16x512xf32>
    %c0_143 = arith.constant 0 : index
    %c0_144 = arith.constant 0 : index
    %311 = vector.load %arg11[%c0_143, %c0_144] : memref<16x128xf32, #tpu.memory_space<vmem>>, vector<16x128xf32>
    %312 = vector.extract_strided_slice %301 {offsets = [0, 0], sizes = [16, 384], strides = [1, 1]} : vector<16x512xf32> to vector<16x384xf32>
    %313 = arith.negf %312 : vector<16x384xf32>
    %314 = math.exp %313 : vector<16x384xf32>
    %cst_145 = arith.constant 1.000000e+00 : f32
    %315 = vector.broadcast %cst_145 : f32 to vector<16x384xf32>
    %316 = arith.addf %315, %314 : vector<16x384xf32>
    %317 = arith.divf %315, %316 : vector<16x384xf32>
    %318 = vector.extract_strided_slice %317 {offsets = [0, 0], sizes = [16, 128], strides = [1, 1]} : vector<16x384xf32> to vector<16x128xf32>
    %319 = vector.extract_strided_slice %317 {offsets = [0, 128], sizes = [16, 128], strides = [1, 1]} : vector<16x384xf32> to vector<16x128xf32>
    %320 = vector.extract_strided_slice %317 {offsets = [0, 256], sizes = [16, 128], strides = [1, 1]} : vector<16x384xf32> to vector<16x128xf32>
    %321 = vector.extract_strided_slice %301 {offsets = [0, 384], sizes = [16, 128], strides = [1, 1]} : vector<16x512xf32> to vector<16x128xf32>
    %322 = math.tanh %321 : vector<16x128xf32>
    %323 = arith.mulf %319, %311 : vector<16x128xf32>
    %324 = arith.mulf %318, %322 : vector<16x128xf32>
    %325 = arith.addf %323, %324 : vector<16x128xf32>
    %326 = math.tanh %325 : vector<16x128xf32>
    %327 = arith.mulf %320, %326 : vector<16x128xf32>
    %c0_146 = arith.constant 0 : index
    %c0_147 = arith.constant 0 : index
    %328 = vector.load %arg13[%c0_146, %c0_147] : memref<16x128xf32, #tpu.memory_space<vmem>>, vector<16x128xf32>
    %329 = vector.extract_strided_slice %310 {offsets = [0, 0], sizes = [16, 384], strides = [1, 1]} : vector<16x512xf32> to vector<16x384xf32>
    %330 = arith.negf %329 : vector<16x384xf32>
    %331 = math.exp %330 : vector<16x384xf32>
    %cst_148 = arith.constant 1.000000e+00 : f32
    %332 = vector.broadcast %cst_148 : f32 to vector<16x384xf32>
    %333 = arith.addf %332, %331 : vector<16x384xf32>
    %334 = arith.divf %332, %333 : vector<16x384xf32>
    %335 = vector.extract_strided_slice %334 {offsets = [0, 0], sizes = [16, 128], strides = [1, 1]} : vector<16x384xf32> to vector<16x128xf32>
    %336 = vector.extract_strided_slice %334 {offsets = [0, 128], sizes = [16, 128], strides = [1, 1]} : vector<16x384xf32> to vector<16x128xf32>
    %337 = vector.extract_strided_slice %334 {offsets = [0, 256], sizes = [16, 128], strides = [1, 1]} : vector<16x384xf32> to vector<16x128xf32>
    %338 = vector.extract_strided_slice %310 {offsets = [0, 384], sizes = [16, 128], strides = [1, 1]} : vector<16x512xf32> to vector<16x128xf32>
    %339 = math.tanh %338 : vector<16x128xf32>
    %340 = arith.mulf %336, %328 : vector<16x128xf32>
    %341 = arith.mulf %335, %339 : vector<16x128xf32>
    %342 = arith.addf %340, %341 : vector<16x128xf32>
    %343 = math.tanh %342 : vector<16x128xf32>
    %344 = arith.mulf %337, %343 : vector<16x128xf32>
    %c3_i32 = arith.constant 3 : i32
    %345 = arith.addi %8, %c3_i32 : i32
    %346 = vector.broadcast %345 : i32 to vector<16x1xi32>
    %347 = arith.cmpi slt, %346, %3 : vector<16x1xi32>
    %c4_i32 = arith.constant 4 : i32
    %348 = arith.addi %10, %c4_i32 : i32
    %349 = vector.broadcast %348 : i32 to vector<16x1xi32>
    %350 = arith.cmpi slt, %349, %3 : vector<16x1xi32>
    %c0_149 = arith.constant 0 : index
    %c0_150 = arith.constant 0 : index
    %351 = vector.load %arg10[%c0_149, %c0_150] : memref<16x128xf32, #tpu.memory_space<vmem>>, vector<16x128xf32>
    %352 = vector.shape_cast %347 : vector<16x1xi1> to vector<16x1xi1>
    %353 = vector.broadcast %352 : vector<16x1xi1> to vector<16x128xi1>
    %354 = arith.select %353, %327, %351 : vector<16x128xi1>, vector<16x128xf32>
    %c0_151 = arith.constant 0 : index
    %c0_152 = arith.constant 0 : index
    %355 = vector.load %arg10[%c0_151, %c0_152] : memref<16x128xf32, #tpu.memory_space<vmem>>, vector<16x128xf32>
    tpu.vector_store %arg10[%c0_151, %c0_152], %354 {strides = array<i32>} : memref<16x128xf32, #tpu.memory_space<vmem>>, vector<16x128xf32>,
    %c0_153 = arith.constant 0 : index
    %c0_154 = arith.constant 0 : index
    %356 = vector.load %arg11[%c0_153, %c0_154] : memref<16x128xf32, #tpu.memory_space<vmem>>, vector<16x128xf32>
    %357 = vector.shape_cast %347 : vector<16x1xi1> to vector<16x1xi1>
    %358 = vector.broadcast %357 : vector<16x1xi1> to vector<16x128xi1>
    %359 = arith.select %358, %325, %356 : vector<16x128xi1>, vector<16x128xf32>
    %c0_155 = arith.constant 0 : index
    %c0_156 = arith.constant 0 : index
    %360 = vector.load %arg11[%c0_155, %c0_156] : memref<16x128xf32, #tpu.memory_space<vmem>>, vector<16x128xf32>
    tpu.vector_store %arg11[%c0_155, %c0_156], %359 {strides = array<i32>} : memref<16x128xf32, #tpu.memory_space<vmem>>, vector<16x128xf32>,
    %c0_157 = arith.constant 0 : index
    %c0_158 = arith.constant 0 : index
    %361 = vector.load %arg12[%c0_157, %c0_158] : memref<16x128xf32, #tpu.memory_space<vmem>>, vector<16x128xf32>
    %362 = vector.shape_cast %350 : vector<16x1xi1> to vector<16x1xi1>
    %363 = vector.broadcast %362 : vector<16x1xi1> to vector<16x128xi1>
    %364 = arith.select %363, %344, %361 : vector<16x128xi1>, vector<16x128xf32>
    %c0_159 = arith.constant 0 : index
    %c0_160 = arith.constant 0 : index
    %365 = vector.load %arg12[%c0_159, %c0_160] : memref<16x128xf32, #tpu.memory_space<vmem>>, vector<16x128xf32>
    tpu.vector_store %arg12[%c0_159, %c0_160], %364 {strides = array<i32>} : memref<16x128xf32, #tpu.memory_space<vmem>>, vector<16x128xf32>,
    %c0_161 = arith.constant 0 : index
    %c0_162 = arith.constant 0 : index
    %366 = vector.load %arg13[%c0_161, %c0_162] : memref<16x128xf32, #tpu.memory_space<vmem>>, vector<16x128xf32>
    %367 = vector.shape_cast %350 : vector<16x1xi1> to vector<16x1xi1>
    %368 = vector.broadcast %367 : vector<16x1xi1> to vector<16x128xi1>
    %369 = arith.select %368, %342, %366 : vector<16x128xi1>, vector<16x128xf32>
    %c0_163 = arith.constant 0 : index
    %c0_164 = arith.constant 0 : index
    %370 = vector.load %arg13[%c0_163, %c0_164] : memref<16x128xf32, #tpu.memory_space<vmem>>, vector<16x128xf32>
    tpu.vector_store %arg13[%c0_163, %c0_164], %369 {strides = array<i32>} : memref<16x128xf32, #tpu.memory_space<vmem>>, vector<16x128xf32>,
    %cst_165 = arith.constant 0.000000e+00 : f32
    %371 = vector.shape_cast %347 : vector<16x1xi1> to vector<16x1xi1>
    %372 = vector.broadcast %371 : vector<16x1xi1> to vector<16x128xi1>
    %373 = vector.broadcast %cst_165 : f32 to vector<16x128xf32>
    %374 = arith.select %372, %327, %373 : vector<16x128xi1>, vector<16x128xf32>
    %375 = arith.truncf %374 : vector<16x128xf32> to vector<16x128xbf16>
    %c3_166 = arith.constant 3 : index
    %c0_167 = arith.constant 0 : index
    %c0_168 = arith.constant 0 : index
    %376 = vector.load %arg8[%c3_166, %c0_167, %c0_168] : memref<8x16x128xbf16, #tpu.memory_space<vmem>>, vector<1x16x128xbf16>
    %377 = vector.shape_cast %376 : vector<1x16x128xbf16> to vector<16x128xbf16>
    %378 = vector.shape_cast %375 : vector<16x128xbf16> to vector<1x16x128xbf16>
    tpu.vector_store %arg8[%c3_166, %c0_167, %c0_168], %378 {strides = array<i32>} : memref<8x16x128xbf16, #tpu.memory_space<vmem>>, vector<1x16x128xbf16>,
    %cst_169 = arith.constant 0.000000e+00 : f32
    %379 = vector.shape_cast %350 : vector<16x1xi1> to vector<16x1xi1>
    %380 = vector.broadcast %379 : vector<16x1xi1> to vector<16x128xi1>
    %381 = vector.broadcast %cst_169 : f32 to vector<16x128xf32>
    %382 = arith.select %380, %344, %381 : vector<16x128xi1>, vector<16x128xf32>
    %383 = arith.truncf %382 : vector<16x128xf32> to vector<16x128xbf16>
    %c4_170 = arith.constant 4 : index
    %c0_171 = arith.constant 0 : index
    %c0_172 = arith.constant 0 : index
    %384 = vector.load %arg9[%c4_170, %c0_171, %c0_172] : memref<8x16x128xbf16, #tpu.memory_space<vmem>>, vector<1x16x128xbf16>
    %385 = vector.shape_cast %384 : vector<1x16x128xbf16> to vector<16x128xbf16>
    %386 = vector.shape_cast %383 : vector<16x128xbf16> to vector<1x16x128xbf16>
    tpu.vector_store %arg9[%c4_170, %c0_171, %c0_172], %386 {strides = array<i32>} : memref<8x16x128xbf16, #tpu.memory_space<vmem>>, vector<1x16x128xbf16>,
    %c4_173 = arith.constant 4 : index
    %c0_174 = arith.constant 0 : index
    %c0_175 = arith.constant 0 : index
    %387 = vector.load %arg2[%c4_173, %c0_174, %c0_175] : memref<8x16x512xbf16, #tpu.memory_space<vmem>>, vector<1x16x512xbf16>
    %388 = vector.shape_cast %387 : vector<1x16x512xbf16> to vector<16x512xbf16>
    %389 = arith.extf %388 : vector<16x512xbf16> to vector<16x512xf32>
    %390 = vector.broadcast %6 : vector<1x512xf32> to vector<16x512xf32>
    %391 = arith.addf %389, %390 : vector<16x512xf32>
    %c0_176 = arith.constant 0 : index
    %c0_177 = arith.constant 0 : index
    %392 = vector.load %arg10[%c0_176, %c0_177] : memref<16x128xf32, #tpu.memory_space<vmem>>, vector<16x128xf32>
    %393 = arith.truncf %392 : vector<16x128xf32> to vector<16x128xbf16>
    %cst_178 = arith.constant dense<0.000000e+00> : vector<16x512xf32>
    %394 = tpu.matmul %393, %4, %cst_178 {dimension_numbers = #tpu.dot_dimension_numbers<[1], [0], [0], [1], [0, 0, 1, 1], [], []>} : vector<16x128xbf16>, vector<128x512xbf16>, vector<16x512xf32> -> vector<16x512xf32>
    %395 = arith.addf %391, %394 : vector<16x512xf32>
    %c3_179 = arith.constant 3 : index
    %c0_180 = arith.constant 0 : index
    %c0_181 = arith.constant 0 : index
    %396 = vector.load %arg3[%c3_179, %c0_180, %c0_181] : memref<8x16x512xbf16, #tpu.memory_space<vmem>>, vector<1x16x512xbf16>
    %397 = vector.shape_cast %396 : vector<1x16x512xbf16> to vector<16x512xbf16>
    %398 = arith.extf %397 : vector<16x512xbf16> to vector<16x512xf32>
    %399 = vector.broadcast %7 : vector<1x512xf32> to vector<16x512xf32>
    %400 = arith.addf %398, %399 : vector<16x512xf32>
    %c0_182 = arith.constant 0 : index
    %c0_183 = arith.constant 0 : index
    %401 = vector.load %arg12[%c0_182, %c0_183] : memref<16x128xf32, #tpu.memory_space<vmem>>, vector<16x128xf32>
    %402 = arith.truncf %401 : vector<16x128xf32> to vector<16x128xbf16>
    %cst_184 = arith.constant dense<0.000000e+00> : vector<16x512xf32>
    %403 = tpu.matmul %402, %5, %cst_184 {dimension_numbers = #tpu.dot_dimension_numbers<[1], [0], [0], [1], [0, 0, 1, 1], [], []>} : vector<16x128xbf16>, vector<128x512xbf16>, vector<16x512xf32> -> vector<16x512xf32>
    %404 = arith.addf %400, %403 : vector<16x512xf32>
    %c0_185 = arith.constant 0 : index
    %c0_186 = arith.constant 0 : index
    %405 = vector.load %arg11[%c0_185, %c0_186] : memref<16x128xf32, #tpu.memory_space<vmem>>, vector<16x128xf32>
    %406 = vector.extract_strided_slice %395 {offsets = [0, 0], sizes = [16, 384], strides = [1, 1]} : vector<16x512xf32> to vector<16x384xf32>
    %407 = arith.negf %406 : vector<16x384xf32>
    %408 = math.exp %407 : vector<16x384xf32>
    %cst_187 = arith.constant 1.000000e+00 : f32
    %409 = vector.broadcast %cst_187 : f32 to vector<16x384xf32>
    %410 = arith.addf %409, %408 : vector<16x384xf32>
    %411 = arith.divf %409, %410 : vector<16x384xf32>
    %412 = vector.extract_strided_slice %411 {offsets = [0, 0], sizes = [16, 128], strides = [1, 1]} : vector<16x384xf32> to vector<16x128xf32>
    %413 = vector.extract_strided_slice %411 {offsets = [0, 128], sizes = [16, 128], strides = [1, 1]} : vector<16x384xf32> to vector<16x128xf32>
    %414 = vector.extract_strided_slice %411 {offsets = [0, 256], sizes = [16, 128], strides = [1, 1]} : vector<16x384xf32> to vector<16x128xf32>
    %415 = vector.extract_strided_slice %395 {offsets = [0, 384], sizes = [16, 128], strides = [1, 1]} : vector<16x512xf32> to vector<16x128xf32>
    %416 = math.tanh %415 : vector<16x128xf32>
    %417 = arith.mulf %413, %405 : vector<16x128xf32>
    %418 = arith.mulf %412, %416 : vector<16x128xf32>
    %419 = arith.addf %417, %418 : vector<16x128xf32>
    %420 = math.tanh %419 : vector<16x128xf32>
    %421 = arith.mulf %414, %420 : vector<16x128xf32>
    %c0_188 = arith.constant 0 : index
    %c0_189 = arith.constant 0 : index
    %422 = vector.load %arg13[%c0_188, %c0_189] : memref<16x128xf32, #tpu.memory_space<vmem>>, vector<16x128xf32>
    %423 = vector.extract_strided_slice %404 {offsets = [0, 0], sizes = [16, 384], strides = [1, 1]} : vector<16x512xf32> to vector<16x384xf32>
    %424 = arith.negf %423 : vector<16x384xf32>
    %425 = math.exp %424 : vector<16x384xf32>
    %cst_190 = arith.constant 1.000000e+00 : f32
    %426 = vector.broadcast %cst_190 : f32 to vector<16x384xf32>
    %427 = arith.addf %426, %425 : vector<16x384xf32>
    %428 = arith.divf %426, %427 : vector<16x384xf32>
    %429 = vector.extract_strided_slice %428 {offsets = [0, 0], sizes = [16, 128], strides = [1, 1]} : vector<16x384xf32> to vector<16x128xf32>
    %430 = vector.extract_strided_slice %428 {offsets = [0, 128], sizes = [16, 128], strides = [1, 1]} : vector<16x384xf32> to vector<16x128xf32>
    %431 = vector.extract_strided_slice %428 {offsets = [0, 256], sizes = [16, 128], strides = [1, 1]} : vector<16x384xf32> to vector<16x128xf32>
    %432 = vector.extract_strided_slice %404 {offsets = [0, 384], sizes = [16, 128], strides = [1, 1]} : vector<16x512xf32> to vector<16x128xf32>
    %433 = math.tanh %432 : vector<16x128xf32>
    %434 = arith.mulf %430, %422 : vector<16x128xf32>
    %435 = arith.mulf %429, %433 : vector<16x128xf32>
    %436 = arith.addf %434, %435 : vector<16x128xf32>
    %437 = math.tanh %436 : vector<16x128xf32>
    %438 = arith.mulf %431, %437 : vector<16x128xf32>
    %c4_i32_191 = arith.constant 4 : i32
    %439 = arith.addi %8, %c4_i32_191 : i32
    %440 = vector.broadcast %439 : i32 to vector<16x1xi32>
    %441 = arith.cmpi slt, %440, %3 : vector<16x1xi32>
    %c3_i32_192 = arith.constant 3 : i32
    %442 = arith.addi %10, %c3_i32_192 : i32
    %443 = vector.broadcast %442 : i32 to vector<16x1xi32>
    %444 = arith.cmpi slt, %443, %3 : vector<16x1xi32>
    %c0_193 = arith.constant 0 : index
    %c0_194 = arith.constant 0 : index
    %445 = vector.load %arg10[%c0_193, %c0_194] : memref<16x128xf32, #tpu.memory_space<vmem>>, vector<16x128xf32>
    %446 = vector.shape_cast %441 : vector<16x1xi1> to vector<16x1xi1>
    %447 = vector.broadcast %446 : vector<16x1xi1> to vector<16x128xi1>
    %448 = arith.select %447, %421, %445 : vector<16x128xi1>, vector<16x128xf32>
    %c0_195 = arith.constant 0 : index
    %c0_196 = arith.constant 0 : index
    %449 = vector.load %arg10[%c0_195, %c0_196] : memref<16x128xf32, #tpu.memory_space<vmem>>, vector<16x128xf32>
    tpu.vector_store %arg10[%c0_195, %c0_196], %448 {strides = array<i32>} : memref<16x128xf32, #tpu.memory_space<vmem>>, vector<16x128xf32>,
    %c0_197 = arith.constant 0 : index
    %c0_198 = arith.constant 0 : index
    %450 = vector.load %arg11[%c0_197, %c0_198] : memref<16x128xf32, #tpu.memory_space<vmem>>, vector<16x128xf32>
    %451 = vector.shape_cast %441 : vector<16x1xi1> to vector<16x1xi1>
    %452 = vector.broadcast %451 : vector<16x1xi1> to vector<16x128xi1>
    %453 = arith.select %452, %419, %450 : vector<16x128xi1>, vector<16x128xf32>
    %c0_199 = arith.constant 0 : index
    %c0_200 = arith.constant 0 : index
    %454 = vector.load %arg11[%c0_199, %c0_200] : memref<16x128xf32, #tpu.memory_space<vmem>>, vector<16x128xf32>
    tpu.vector_store %arg11[%c0_199, %c0_200], %453 {strides = array<i32>} : memref<16x128xf32, #tpu.memory_space<vmem>>, vector<16x128xf32>,
    %c0_201 = arith.constant 0 : index
    %c0_202 = arith.constant 0 : index
    %455 = vector.load %arg12[%c0_201, %c0_202] : memref<16x128xf32, #tpu.memory_space<vmem>>, vector<16x128xf32>
    %456 = vector.shape_cast %444 : vector<16x1xi1> to vector<16x1xi1>
    %457 = vector.broadcast %456 : vector<16x1xi1> to vector<16x128xi1>
    %458 = arith.select %457, %438, %455 : vector<16x128xi1>, vector<16x128xf32>
    %c0_203 = arith.constant 0 : index
    %c0_204 = arith.constant 0 : index
    %459 = vector.load %arg12[%c0_203, %c0_204] : memref<16x128xf32, #tpu.memory_space<vmem>>, vector<16x128xf32>
    tpu.vector_store %arg12[%c0_203, %c0_204], %458 {strides = array<i32>} : memref<16x128xf32, #tpu.memory_space<vmem>>, vector<16x128xf32>,
    %c0_205 = arith.constant 0 : index
    %c0_206 = arith.constant 0 : index
    %460 = vector.load %arg13[%c0_205, %c0_206] : memref<16x128xf32, #tpu.memory_space<vmem>>, vector<16x128xf32>
    %461 = vector.shape_cast %444 : vector<16x1xi1> to vector<16x1xi1>
    %462 = vector.broadcast %461 : vector<16x1xi1> to vector<16x128xi1>
    %463 = arith.select %462, %436, %460 : vector<16x128xi1>, vector<16x128xf32>
    %c0_207 = arith.constant 0 : index
    %c0_208 = arith.constant 0 : index
    %464 = vector.load %arg13[%c0_207, %c0_208] : memref<16x128xf32, #tpu.memory_space<vmem>>, vector<16x128xf32>
    tpu.vector_store %arg13[%c0_207, %c0_208], %463 {strides = array<i32>} : memref<16x128xf32, #tpu.memory_space<vmem>>, vector<16x128xf32>,
    %cst_209 = arith.constant 0.000000e+00 : f32
    %465 = vector.shape_cast %441 : vector<16x1xi1> to vector<16x1xi1>
    %466 = vector.broadcast %465 : vector<16x1xi1> to vector<16x128xi1>
    %467 = vector.broadcast %cst_209 : f32 to vector<16x128xf32>
    %468 = arith.select %466, %421, %467 : vector<16x128xi1>, vector<16x128xf32>
    %469 = arith.truncf %468 : vector<16x128xf32> to vector<16x128xbf16>
    %c4_210 = arith.constant 4 : index
    %c0_211 = arith.constant 0 : index
    %c0_212 = arith.constant 0 : index
    %470 = vector.load %arg8[%c4_210, %c0_211, %c0_212] : memref<8x16x128xbf16, #tpu.memory_space<vmem>>, vector<1x16x128xbf16>
    %471 = vector.shape_cast %470 : vector<1x16x128xbf16> to vector<16x128xbf16>
    %472 = vector.shape_cast %469 : vector<16x128xbf16> to vector<1x16x128xbf16>
    tpu.vector_store %arg8[%c4_210, %c0_211, %c0_212], %472 {strides = array<i32>} : memref<8x16x128xbf16, #tpu.memory_space<vmem>>, vector<1x16x128xbf16>,
    %cst_213 = arith.constant 0.000000e+00 : f32
    %473 = vector.shape_cast %444 : vector<16x1xi1> to vector<16x1xi1>
    %474 = vector.broadcast %473 : vector<16x1xi1> to vector<16x128xi1>
    %475 = vector.broadcast %cst_213 : f32 to vector<16x128xf32>
    %476 = arith.select %474, %438, %475 : vector<16x128xi1>, vector<16x128xf32>
    %477 = arith.truncf %476 : vector<16x128xf32> to vector<16x128xbf16>
    %c3_214 = arith.constant 3 : index
    %c0_215 = arith.constant 0 : index
    %c0_216 = arith.constant 0 : index
    %478 = vector.load %arg9[%c3_214, %c0_215, %c0_216] : memref<8x16x128xbf16, #tpu.memory_space<vmem>>, vector<1x16x128xbf16>
    %479 = vector.shape_cast %478 : vector<1x16x128xbf16> to vector<16x128xbf16>
    %480 = vector.shape_cast %477 : vector<16x128xbf16> to vector<1x16x128xbf16>
    tpu.vector_store %arg9[%c3_214, %c0_215, %c0_216], %480 {strides = array<i32>} : memref<8x16x128xbf16, #tpu.memory_space<vmem>>, vector<1x16x128xbf16>,
    %c5_217 = arith.constant 5 : index
    %c0_218 = arith.constant 0 : index
    %c0_219 = arith.constant 0 : index
    %481 = vector.load %arg2[%c5_217, %c0_218, %c0_219] : memref<8x16x512xbf16, #tpu.memory_space<vmem>>, vector<1x16x512xbf16>
    %482 = vector.shape_cast %481 : vector<1x16x512xbf16> to vector<16x512xbf16>
    %483 = arith.extf %482 : vector<16x512xbf16> to vector<16x512xf32>
    %484 = vector.broadcast %6 : vector<1x512xf32> to vector<16x512xf32>
    %485 = arith.addf %483, %484 : vector<16x512xf32>
    %c0_220 = arith.constant 0 : index
    %c0_221 = arith.constant 0 : index
    %486 = vector.load %arg10[%c0_220, %c0_221] : memref<16x128xf32, #tpu.memory_space<vmem>>, vector<16x128xf32>
    %487 = arith.truncf %486 : vector<16x128xf32> to vector<16x128xbf16>
    %cst_222 = arith.constant dense<0.000000e+00> : vector<16x512xf32>
    %488 = tpu.matmul %487, %4, %cst_222 {dimension_numbers = #tpu.dot_dimension_numbers<[1], [0], [0], [1], [0, 0, 1, 1], [], []>} : vector<16x128xbf16>, vector<128x512xbf16>, vector<16x512xf32> -> vector<16x512xf32>
    %489 = arith.addf %485, %488 : vector<16x512xf32>
    %c2_223 = arith.constant 2 : index
    %c0_224 = arith.constant 0 : index
    %c0_225 = arith.constant 0 : index
    %490 = vector.load %arg3[%c2_223, %c0_224, %c0_225] : memref<8x16x512xbf16, #tpu.memory_space<vmem>>, vector<1x16x512xbf16>
    %491 = vector.shape_cast %490 : vector<1x16x512xbf16> to vector<16x512xbf16>
    %492 = arith.extf %491 : vector<16x512xbf16> to vector<16x512xf32>
    %493 = vector.broadcast %7 : vector<1x512xf32> to vector<16x512xf32>
    %494 = arith.addf %492, %493 : vector<16x512xf32>
    %c0_226 = arith.constant 0 : index
    %c0_227 = arith.constant 0 : index
    %495 = vector.load %arg12[%c0_226, %c0_227] : memref<16x128xf32, #tpu.memory_space<vmem>>, vector<16x128xf32>
    %496 = arith.truncf %495 : vector<16x128xf32> to vector<16x128xbf16>
    %cst_228 = arith.constant dense<0.000000e+00> : vector<16x512xf32>
    %497 = tpu.matmul %496, %5, %cst_228 {dimension_numbers = #tpu.dot_dimension_numbers<[1], [0], [0], [1], [0, 0, 1, 1], [], []>} : vector<16x128xbf16>, vector<128x512xbf16>, vector<16x512xf32> -> vector<16x512xf32>
    %498 = arith.addf %494, %497 : vector<16x512xf32>
    %c0_229 = arith.constant 0 : index
    %c0_230 = arith.constant 0 : index
    %499 = vector.load %arg11[%c0_229, %c0_230] : memref<16x128xf32, #tpu.memory_space<vmem>>, vector<16x128xf32>
    %500 = vector.extract_strided_slice %489 {offsets = [0, 0], sizes = [16, 384], strides = [1, 1]} : vector<16x512xf32> to vector<16x384xf32>
    %501 = arith.negf %500 : vector<16x384xf32>
    %502 = math.exp %501 : vector<16x384xf32>
    %cst_231 = arith.constant 1.000000e+00 : f32
    %503 = vector.broadcast %cst_231 : f32 to vector<16x384xf32>
    %504 = arith.addf %503, %502 : vector<16x384xf32>
    %505 = arith.divf %503, %504 : vector<16x384xf32>
    %506 = vector.extract_strided_slice %505 {offsets = [0, 0], sizes = [16, 128], strides = [1, 1]} : vector<16x384xf32> to vector<16x128xf32>
    %507 = vector.extract_strided_slice %505 {offsets = [0, 128], sizes = [16, 128], strides = [1, 1]} : vector<16x384xf32> to vector<16x128xf32>
    %508 = vector.extract_strided_slice %505 {offsets = [0, 256], sizes = [16, 128], strides = [1, 1]} : vector<16x384xf32> to vector<16x128xf32>
    %509 = vector.extract_strided_slice %489 {offsets = [0, 384], sizes = [16, 128], strides = [1, 1]} : vector<16x512xf32> to vector<16x128xf32>
    %510 = math.tanh %509 : vector<16x128xf32>
    %511 = arith.mulf %507, %499 : vector<16x128xf32>
    %512 = arith.mulf %506, %510 : vector<16x128xf32>
    %513 = arith.addf %511, %512 : vector<16x128xf32>
    %514 = math.tanh %513 : vector<16x128xf32>
    %515 = arith.mulf %508, %514 : vector<16x128xf32>
    %c0_232 = arith.constant 0 : index
    %c0_233 = arith.constant 0 : index
    %516 = vector.load %arg13[%c0_232, %c0_233] : memref<16x128xf32, #tpu.memory_space<vmem>>, vector<16x128xf32>
    %517 = vector.extract_strided_slice %498 {offsets = [0, 0], sizes = [16, 384], strides = [1, 1]} : vector<16x512xf32> to vector<16x384xf32>
    %518 = arith.negf %517 : vector<16x384xf32>
    %519 = math.exp %518 : vector<16x384xf32>
    %cst_234 = arith.constant 1.000000e+00 : f32
    %520 = vector.broadcast %cst_234 : f32 to vector<16x384xf32>
    %521 = arith.addf %520, %519 : vector<16x384xf32>
    %522 = arith.divf %520, %521 : vector<16x384xf32>
    %523 = vector.extract_strided_slice %522 {offsets = [0, 0], sizes = [16, 128], strides = [1, 1]} : vector<16x384xf32> to vector<16x128xf32>
    %524 = vector.extract_strided_slice %522 {offsets = [0, 128], sizes = [16, 128], strides = [1, 1]} : vector<16x384xf32> to vector<16x128xf32>
    %525 = vector.extract_strided_slice %522 {offsets = [0, 256], sizes = [16, 128], strides = [1, 1]} : vector<16x384xf32> to vector<16x128xf32>
    %526 = vector.extract_strided_slice %498 {offsets = [0, 384], sizes = [16, 128], strides = [1, 1]} : vector<16x512xf32> to vector<16x128xf32>
    %527 = math.tanh %526 : vector<16x128xf32>
    %528 = arith.mulf %524, %516 : vector<16x128xf32>
    %529 = arith.mulf %523, %527 : vector<16x128xf32>
    %530 = arith.addf %528, %529 : vector<16x128xf32>
    %531 = math.tanh %530 : vector<16x128xf32>
    %532 = arith.mulf %525, %531 : vector<16x128xf32>
    %c5_i32_235 = arith.constant 5 : i32
    %533 = arith.addi %8, %c5_i32_235 : i32
    %534 = vector.broadcast %533 : i32 to vector<16x1xi32>
    %535 = arith.cmpi slt, %534, %3 : vector<16x1xi32>
    %c2_i32_236 = arith.constant 2 : i32
    %536 = arith.addi %10, %c2_i32_236 : i32
    %537 = vector.broadcast %536 : i32 to vector<16x1xi32>
    %538 = arith.cmpi slt, %537, %3 : vector<16x1xi32>
    %c0_237 = arith.constant 0 : index
    %c0_238 = arith.constant 0 : index
    %539 = vector.load %arg10[%c0_237, %c0_238] : memref<16x128xf32, #tpu.memory_space<vmem>>, vector<16x128xf32>
    %540 = vector.shape_cast %535 : vector<16x1xi1> to vector<16x1xi1>
    %541 = vector.broadcast %540 : vector<16x1xi1> to vector<16x128xi1>
    %542 = arith.select %541, %515, %539 : vector<16x128xi1>, vector<16x128xf32>
    %c0_239 = arith.constant 0 : index
    %c0_240 = arith.constant 0 : index
    %543 = vector.load %arg10[%c0_239, %c0_240] : memref<16x128xf32, #tpu.memory_space<vmem>>, vector<16x128xf32>
    tpu.vector_store %arg10[%c0_239, %c0_240], %542 {strides = array<i32>} : memref<16x128xf32, #tpu.memory_space<vmem>>, vector<16x128xf32>,
    %c0_241 = arith.constant 0 : index
    %c0_242 = arith.constant 0 : index
    %544 = vector.load %arg11[%c0_241, %c0_242] : memref<16x128xf32, #tpu.memory_space<vmem>>, vector<16x128xf32>
    %545 = vector.shape_cast %535 : vector<16x1xi1> to vector<16x1xi1>
    %546 = vector.broadcast %545 : vector<16x1xi1> to vector<16x128xi1>
    %547 = arith.select %546, %513, %544 : vector<16x128xi1>, vector<16x128xf32>
    %c0_243 = arith.constant 0 : index
    %c0_244 = arith.constant 0 : index
    %548 = vector.load %arg11[%c0_243, %c0_244] : memref<16x128xf32, #tpu.memory_space<vmem>>, vector<16x128xf32>
    tpu.vector_store %arg11[%c0_243, %c0_244], %547 {strides = array<i32>} : memref<16x128xf32, #tpu.memory_space<vmem>>, vector<16x128xf32>,
    %c0_245 = arith.constant 0 : index
    %c0_246 = arith.constant 0 : index
    %549 = vector.load %arg12[%c0_245, %c0_246] : memref<16x128xf32, #tpu.memory_space<vmem>>, vector<16x128xf32>
    %550 = vector.shape_cast %538 : vector<16x1xi1> to vector<16x1xi1>
    %551 = vector.broadcast %550 : vector<16x1xi1> to vector<16x128xi1>
    %552 = arith.select %551, %532, %549 : vector<16x128xi1>, vector<16x128xf32>
    %c0_247 = arith.constant 0 : index
    %c0_248 = arith.constant 0 : index
    %553 = vector.load %arg12[%c0_247, %c0_248] : memref<16x128xf32, #tpu.memory_space<vmem>>, vector<16x128xf32>
    tpu.vector_store %arg12[%c0_247, %c0_248], %552 {strides = array<i32>} : memref<16x128xf32, #tpu.memory_space<vmem>>, vector<16x128xf32>,
    %c0_249 = arith.constant 0 : index
    %c0_250 = arith.constant 0 : index
    %554 = vector.load %arg13[%c0_249, %c0_250] : memref<16x128xf32, #tpu.memory_space<vmem>>, vector<16x128xf32>
    %555 = vector.shape_cast %538 : vector<16x1xi1> to vector<16x1xi1>
    %556 = vector.broadcast %555 : vector<16x1xi1> to vector<16x128xi1>
    %557 = arith.select %556, %530, %554 : vector<16x128xi1>, vector<16x128xf32>
    %c0_251 = arith.constant 0 : index
    %c0_252 = arith.constant 0 : index
    %558 = vector.load %arg13[%c0_251, %c0_252] : memref<16x128xf32, #tpu.memory_space<vmem>>, vector<16x128xf32>
    tpu.vector_store %arg13[%c0_251, %c0_252], %557 {strides = array<i32>} : memref<16x128xf32, #tpu.memory_space<vmem>>, vector<16x128xf32>,
    %cst_253 = arith.constant 0.000000e+00 : f32
    %559 = vector.shape_cast %535 : vector<16x1xi1> to vector<16x1xi1>
    %560 = vector.broadcast %559 : vector<16x1xi1> to vector<16x128xi1>
    %561 = vector.broadcast %cst_253 : f32 to vector<16x128xf32>
    %562 = arith.select %560, %515, %561 : vector<16x128xi1>, vector<16x128xf32>
    %563 = arith.truncf %562 : vector<16x128xf32> to vector<16x128xbf16>
    %c5_254 = arith.constant 5 : index
    %c0_255 = arith.constant 0 : index
    %c0_256 = arith.constant 0 : index
    %564 = vector.load %arg8[%c5_254, %c0_255, %c0_256] : memref<8x16x128xbf16, #tpu.memory_space<vmem>>, vector<1x16x128xbf16>
    %565 = vector.shape_cast %564 : vector<1x16x128xbf16> to vector<16x128xbf16>
    %566 = vector.shape_cast %563 : vector<16x128xbf16> to vector<1x16x128xbf16>
    tpu.vector_store %arg8[%c5_254, %c0_255, %c0_256], %566 {strides = array<i32>} : memref<8x16x128xbf16, #tpu.memory_space<vmem>>, vector<1x16x128xbf16>,
    %cst_257 = arith.constant 0.000000e+00 : f32
    %567 = vector.shape_cast %538 : vector<16x1xi1> to vector<16x1xi1>
    %568 = vector.broadcast %567 : vector<16x1xi1> to vector<16x128xi1>
    %569 = vector.broadcast %cst_257 : f32 to vector<16x128xf32>
    %570 = arith.select %568, %532, %569 : vector<16x128xi1>, vector<16x128xf32>
    %571 = arith.truncf %570 : vector<16x128xf32> to vector<16x128xbf16>
    %c2_258 = arith.constant 2 : index
    %c0_259 = arith.constant 0 : index
    %c0_260 = arith.constant 0 : index
    %572 = vector.load %arg9[%c2_258, %c0_259, %c0_260] : memref<8x16x128xbf16, #tpu.memory_space<vmem>>, vector<1x16x128xbf16>
    %573 = vector.shape_cast %572 : vector<1x16x128xbf16> to vector<16x128xbf16>
    %574 = vector.shape_cast %571 : vector<16x128xbf16> to vector<1x16x128xbf16>
    tpu.vector_store %arg9[%c2_258, %c0_259, %c0_260], %574 {strides = array<i32>} : memref<8x16x128xbf16, #tpu.memory_space<vmem>>, vector<1x16x128xbf16>,
    %c6_261 = arith.constant 6 : index
    %c0_262 = arith.constant 0 : index
    %c0_263 = arith.constant 0 : index
    %575 = vector.load %arg2[%c6_261, %c0_262, %c0_263] : memref<8x16x512xbf16, #tpu.memory_space<vmem>>, vector<1x16x512xbf16>
    %576 = vector.shape_cast %575 : vector<1x16x512xbf16> to vector<16x512xbf16>
    %577 = arith.extf %576 : vector<16x512xbf16> to vector<16x512xf32>
    %578 = vector.broadcast %6 : vector<1x512xf32> to vector<16x512xf32>
    %579 = arith.addf %577, %578 : vector<16x512xf32>
    %c0_264 = arith.constant 0 : index
    %c0_265 = arith.constant 0 : index
    %580 = vector.load %arg10[%c0_264, %c0_265] : memref<16x128xf32, #tpu.memory_space<vmem>>, vector<16x128xf32>
    %581 = arith.truncf %580 : vector<16x128xf32> to vector<16x128xbf16>
    %cst_266 = arith.constant dense<0.000000e+00> : vector<16x512xf32>
    %582 = tpu.matmul %581, %4, %cst_266 {dimension_numbers = #tpu.dot_dimension_numbers<[1], [0], [0], [1], [0, 0, 1, 1], [], []>} : vector<16x128xbf16>, vector<128x512xbf16>, vector<16x512xf32> -> vector<16x512xf32>
    %583 = arith.addf %579, %582 : vector<16x512xf32>
    %c1_267 = arith.constant 1 : index
    %c0_268 = arith.constant 0 : index
    %c0_269 = arith.constant 0 : index
    %584 = vector.load %arg3[%c1_267, %c0_268, %c0_269] : memref<8x16x512xbf16, #tpu.memory_space<vmem>>, vector<1x16x512xbf16>
    %585 = vector.shape_cast %584 : vector<1x16x512xbf16> to vector<16x512xbf16>
    %586 = arith.extf %585 : vector<16x512xbf16> to vector<16x512xf32>
    %587 = vector.broadcast %7 : vector<1x512xf32> to vector<16x512xf32>
    %588 = arith.addf %586, %587 : vector<16x512xf32>
    %c0_270 = arith.constant 0 : index
    %c0_271 = arith.constant 0 : index
    %589 = vector.load %arg12[%c0_270, %c0_271] : memref<16x128xf32, #tpu.memory_space<vmem>>, vector<16x128xf32>
    %590 = arith.truncf %589 : vector<16x128xf32> to vector<16x128xbf16>
    %cst_272 = arith.constant dense<0.000000e+00> : vector<16x512xf32>
    %591 = tpu.matmul %590, %5, %cst_272 {dimension_numbers = #tpu.dot_dimension_numbers<[1], [0], [0], [1], [0, 0, 1, 1], [], []>} : vector<16x128xbf16>, vector<128x512xbf16>, vector<16x512xf32> -> vector<16x512xf32>
    %592 = arith.addf %588, %591 : vector<16x512xf32>
    %c0_273 = arith.constant 0 : index
    %c0_274 = arith.constant 0 : index
    %593 = vector.load %arg11[%c0_273, %c0_274] : memref<16x128xf32, #tpu.memory_space<vmem>>, vector<16x128xf32>
    %594 = vector.extract_strided_slice %583 {offsets = [0, 0], sizes = [16, 384], strides = [1, 1]} : vector<16x512xf32> to vector<16x384xf32>
    %595 = arith.negf %594 : vector<16x384xf32>
    %596 = math.exp %595 : vector<16x384xf32>
    %cst_275 = arith.constant 1.000000e+00 : f32
    %597 = vector.broadcast %cst_275 : f32 to vector<16x384xf32>
    %598 = arith.addf %597, %596 : vector<16x384xf32>
    %599 = arith.divf %597, %598 : vector<16x384xf32>
    %600 = vector.extract_strided_slice %599 {offsets = [0, 0], sizes = [16, 128], strides = [1, 1]} : vector<16x384xf32> to vector<16x128xf32>
    %601 = vector.extract_strided_slice %599 {offsets = [0, 128], sizes = [16, 128], strides = [1, 1]} : vector<16x384xf32> to vector<16x128xf32>
    %602 = vector.extract_strided_slice %599 {offsets = [0, 256], sizes = [16, 128], strides = [1, 1]} : vector<16x384xf32> to vector<16x128xf32>
    %603 = vector.extract_strided_slice %583 {offsets = [0, 384], sizes = [16, 128], strides = [1, 1]} : vector<16x512xf32> to vector<16x128xf32>
    %604 = math.tanh %603 : vector<16x128xf32>
    %605 = arith.mulf %601, %593 : vector<16x128xf32>
    %606 = arith.mulf %600, %604 : vector<16x128xf32>
    %607 = arith.addf %605, %606 : vector<16x128xf32>
    %608 = math.tanh %607 : vector<16x128xf32>
    %609 = arith.mulf %602, %608 : vector<16x128xf32>
    %c0_276 = arith.constant 0 : index
    %c0_277 = arith.constant 0 : index
    %610 = vector.load %arg13[%c0_276, %c0_277] : memref<16x128xf32, #tpu.memory_space<vmem>>, vector<16x128xf32>
    %611 = vector.extract_strided_slice %592 {offsets = [0, 0], sizes = [16, 384], strides = [1, 1]} : vector<16x512xf32> to vector<16x384xf32>
    %612 = arith.negf %611 : vector<16x384xf32>
    %613 = math.exp %612 : vector<16x384xf32>
    %cst_278 = arith.constant 1.000000e+00 : f32
    %614 = vector.broadcast %cst_278 : f32 to vector<16x384xf32>
    %615 = arith.addf %614, %613 : vector<16x384xf32>
    %616 = arith.divf %614, %615 : vector<16x384xf32>
    %617 = vector.extract_strided_slice %616 {offsets = [0, 0], sizes = [16, 128], strides = [1, 1]} : vector<16x384xf32> to vector<16x128xf32>
    %618 = vector.extract_strided_slice %616 {offsets = [0, 128], sizes = [16, 128], strides = [1, 1]} : vector<16x384xf32> to vector<16x128xf32>
    %619 = vector.extract_strided_slice %616 {offsets = [0, 256], sizes = [16, 128], strides = [1, 1]} : vector<16x384xf32> to vector<16x128xf32>
    %620 = vector.extract_strided_slice %592 {offsets = [0, 384], sizes = [16, 128], strides = [1, 1]} : vector<16x512xf32> to vector<16x128xf32>
    %621 = math.tanh %620 : vector<16x128xf32>
    %622 = arith.mulf %618, %610 : vector<16x128xf32>
    %623 = arith.mulf %617, %621 : vector<16x128xf32>
    %624 = arith.addf %622, %623 : vector<16x128xf32>
    %625 = math.tanh %624 : vector<16x128xf32>
    %626 = arith.mulf %619, %625 : vector<16x128xf32>
    %c6_i32_279 = arith.constant 6 : i32
    %627 = arith.addi %8, %c6_i32_279 : i32
    %628 = vector.broadcast %627 : i32 to vector<16x1xi32>
    %629 = arith.cmpi slt, %628, %3 : vector<16x1xi32>
    %c1_i32_280 = arith.constant 1 : i32
    %630 = arith.addi %10, %c1_i32_280 : i32
    %631 = vector.broadcast %630 : i32 to vector<16x1xi32>
    %632 = arith.cmpi slt, %631, %3 : vector<16x1xi32>
    %c0_281 = arith.constant 0 : index
    %c0_282 = arith.constant 0 : index
    %633 = vector.load %arg10[%c0_281, %c0_282] : memref<16x128xf32, #tpu.memory_space<vmem>>, vector<16x128xf32>
    %634 = vector.shape_cast %629 : vector<16x1xi1> to vector<16x1xi1>
    %635 = vector.broadcast %634 : vector<16x1xi1> to vector<16x128xi1>
    %636 = arith.select %635, %609, %633 : vector<16x128xi1>, vector<16x128xf32>
    %c0_283 = arith.constant 0 : index
    %c0_284 = arith.constant 0 : index
    %637 = vector.load %arg10[%c0_283, %c0_284] : memref<16x128xf32, #tpu.memory_space<vmem>>, vector<16x128xf32>
    tpu.vector_store %arg10[%c0_283, %c0_284], %636 {strides = array<i32>} : memref<16x128xf32, #tpu.memory_space<vmem>>, vector<16x128xf32>,
    %c0_285 = arith.constant 0 : index
    %c0_286 = arith.constant 0 : index
    %638 = vector.load %arg11[%c0_285, %c0_286] : memref<16x128xf32, #tpu.memory_space<vmem>>, vector<16x128xf32>
    %639 = vector.shape_cast %629 : vector<16x1xi1> to vector<16x1xi1>
    %640 = vector.broadcast %639 : vector<16x1xi1> to vector<16x128xi1>
    %641 = arith.select %640, %607, %638 : vector<16x128xi1>, vector<16x128xf32>
    %c0_287 = arith.constant 0 : index
    %c0_288 = arith.constant 0 : index
    %642 = vector.load %arg11[%c0_287, %c0_288] : memref<16x128xf32, #tpu.memory_space<vmem>>, vector<16x128xf32>
    tpu.vector_store %arg11[%c0_287, %c0_288], %641 {strides = array<i32>} : memref<16x128xf32, #tpu.memory_space<vmem>>, vector<16x128xf32>,
    %c0_289 = arith.constant 0 : index
    %c0_290 = arith.constant 0 : index
    %643 = vector.load %arg12[%c0_289, %c0_290] : memref<16x128xf32, #tpu.memory_space<vmem>>, vector<16x128xf32>
    %644 = vector.shape_cast %632 : vector<16x1xi1> to vector<16x1xi1>
    %645 = vector.broadcast %644 : vector<16x1xi1> to vector<16x128xi1>
    %646 = arith.select %645, %626, %643 : vector<16x128xi1>, vector<16x128xf32>
    %c0_291 = arith.constant 0 : index
    %c0_292 = arith.constant 0 : index
    %647 = vector.load %arg12[%c0_291, %c0_292] : memref<16x128xf32, #tpu.memory_space<vmem>>, vector<16x128xf32>
    tpu.vector_store %arg12[%c0_291, %c0_292], %646 {strides = array<i32>} : memref<16x128xf32, #tpu.memory_space<vmem>>, vector<16x128xf32>,
    %c0_293 = arith.constant 0 : index
    %c0_294 = arith.constant 0 : index
    %648 = vector.load %arg13[%c0_293, %c0_294] : memref<16x128xf32, #tpu.memory_space<vmem>>, vector<16x128xf32>
    %649 = vector.shape_cast %632 : vector<16x1xi1> to vector<16x1xi1>
    %650 = vector.broadcast %649 : vector<16x1xi1> to vector<16x128xi1>
    %651 = arith.select %650, %624, %648 : vector<16x128xi1>, vector<16x128xf32>
    %c0_295 = arith.constant 0 : index
    %c0_296 = arith.constant 0 : index
    %652 = vector.load %arg13[%c0_295, %c0_296] : memref<16x128xf32, #tpu.memory_space<vmem>>, vector<16x128xf32>
    tpu.vector_store %arg13[%c0_295, %c0_296], %651 {strides = array<i32>} : memref<16x128xf32, #tpu.memory_space<vmem>>, vector<16x128xf32>,
    %cst_297 = arith.constant 0.000000e+00 : f32
    %653 = vector.shape_cast %629 : vector<16x1xi1> to vector<16x1xi1>
    %654 = vector.broadcast %653 : vector<16x1xi1> to vector<16x128xi1>
    %655 = vector.broadcast %cst_297 : f32 to vector<16x128xf32>
    %656 = arith.select %654, %609, %655 : vector<16x128xi1>, vector<16x128xf32>
    %657 = arith.truncf %656 : vector<16x128xf32> to vector<16x128xbf16>
    %c6_298 = arith.constant 6 : index
    %c0_299 = arith.constant 0 : index
    %c0_300 = arith.constant 0 : index
    %658 = vector.load %arg8[%c6_298, %c0_299, %c0_300] : memref<8x16x128xbf16, #tpu.memory_space<vmem>>, vector<1x16x128xbf16>
    %659 = vector.shape_cast %658 : vector<1x16x128xbf16> to vector<16x128xbf16>
    %660 = vector.shape_cast %657 : vector<16x128xbf16> to vector<1x16x128xbf16>
    tpu.vector_store %arg8[%c6_298, %c0_299, %c0_300], %660 {strides = array<i32>} : memref<8x16x128xbf16, #tpu.memory_space<vmem>>, vector<1x16x128xbf16>,
    %cst_301 = arith.constant 0.000000e+00 : f32
    %661 = vector.shape_cast %632 : vector<16x1xi1> to vector<16x1xi1>
    %662 = vector.broadcast %661 : vector<16x1xi1> to vector<16x128xi1>
    %663 = vector.broadcast %cst_301 : f32 to vector<16x128xf32>
    %664 = arith.select %662, %626, %663 : vector<16x128xi1>, vector<16x128xf32>
    %665 = arith.truncf %664 : vector<16x128xf32> to vector<16x128xbf16>
    %c1_302 = arith.constant 1 : index
    %c0_303 = arith.constant 0 : index
    %c0_304 = arith.constant 0 : index
    %666 = vector.load %arg9[%c1_302, %c0_303, %c0_304] : memref<8x16x128xbf16, #tpu.memory_space<vmem>>, vector<1x16x128xbf16>
    %667 = vector.shape_cast %666 : vector<1x16x128xbf16> to vector<16x128xbf16>
    %668 = vector.shape_cast %665 : vector<16x128xbf16> to vector<1x16x128xbf16>
    tpu.vector_store %arg9[%c1_302, %c0_303, %c0_304], %668 {strides = array<i32>} : memref<8x16x128xbf16, #tpu.memory_space<vmem>>, vector<1x16x128xbf16>,
    %c7_305 = arith.constant 7 : index
    %c0_306 = arith.constant 0 : index
    %c0_307 = arith.constant 0 : index
    %669 = vector.load %arg2[%c7_305, %c0_306, %c0_307] : memref<8x16x512xbf16, #tpu.memory_space<vmem>>, vector<1x16x512xbf16>
    %670 = vector.shape_cast %669 : vector<1x16x512xbf16> to vector<16x512xbf16>
    %671 = arith.extf %670 : vector<16x512xbf16> to vector<16x512xf32>
    %672 = vector.broadcast %6 : vector<1x512xf32> to vector<16x512xf32>
    %673 = arith.addf %671, %672 : vector<16x512xf32>
    %c0_308 = arith.constant 0 : index
    %c0_309 = arith.constant 0 : index
    %674 = vector.load %arg10[%c0_308, %c0_309] : memref<16x128xf32, #tpu.memory_space<vmem>>, vector<16x128xf32>
    %675 = arith.truncf %674 : vector<16x128xf32> to vector<16x128xbf16>
    %cst_310 = arith.constant dense<0.000000e+00> : vector<16x512xf32>
    %676 = tpu.matmul %675, %4, %cst_310 {dimension_numbers = #tpu.dot_dimension_numbers<[1], [0], [0], [1], [0, 0, 1, 1], [], []>} : vector<16x128xbf16>, vector<128x512xbf16>, vector<16x512xf32> -> vector<16x512xf32>
    %677 = arith.addf %673, %676 : vector<16x512xf32>
    %c0_311 = arith.constant 0 : index
    %c0_312 = arith.constant 0 : index
    %c0_313 = arith.constant 0 : index
    %678 = vector.load %arg3[%c0_311, %c0_312, %c0_313] : memref<8x16x512xbf16, #tpu.memory_space<vmem>>, vector<1x16x512xbf16>
    %679 = vector.shape_cast %678 : vector<1x16x512xbf16> to vector<16x512xbf16>
    %680 = arith.extf %679 : vector<16x512xbf16> to vector<16x512xf32>
    %681 = vector.broadcast %7 : vector<1x512xf32> to vector<16x512xf32>
    %682 = arith.addf %680, %681 : vector<16x512xf32>
    %c0_314 = arith.constant 0 : index
    %c0_315 = arith.constant 0 : index
    %683 = vector.load %arg12[%c0_314, %c0_315] : memref<16x128xf32, #tpu.memory_space<vmem>>, vector<16x128xf32>
    %684 = arith.truncf %683 : vector<16x128xf32> to vector<16x128xbf16>
    %cst_316 = arith.constant dense<0.000000e+00> : vector<16x512xf32>
    %685 = tpu.matmul %684, %5, %cst_316 {dimension_numbers = #tpu.dot_dimension_numbers<[1], [0], [0], [1], [0, 0, 1, 1], [], []>} : vector<16x128xbf16>, vector<128x512xbf16>, vector<16x512xf32> -> vector<16x512xf32>
    %686 = arith.addf %682, %685 : vector<16x512xf32>
    %c0_317 = arith.constant 0 : index
    %c0_318 = arith.constant 0 : index
    %687 = vector.load %arg11[%c0_317, %c0_318] : memref<16x128xf32, #tpu.memory_space<vmem>>, vector<16x128xf32>
    %688 = vector.extract_strided_slice %677 {offsets = [0, 0], sizes = [16, 384], strides = [1, 1]} : vector<16x512xf32> to vector<16x384xf32>
    %689 = arith.negf %688 : vector<16x384xf32>
    %690 = math.exp %689 : vector<16x384xf32>
    %cst_319 = arith.constant 1.000000e+00 : f32
    %691 = vector.broadcast %cst_319 : f32 to vector<16x384xf32>
    %692 = arith.addf %691, %690 : vector<16x384xf32>
    %693 = arith.divf %691, %692 : vector<16x384xf32>
    %694 = vector.extract_strided_slice %693 {offsets = [0, 0], sizes = [16, 128], strides = [1, 1]} : vector<16x384xf32> to vector<16x128xf32>
    %695 = vector.extract_strided_slice %693 {offsets = [0, 128], sizes = [16, 128], strides = [1, 1]} : vector<16x384xf32> to vector<16x128xf32>
    %696 = vector.extract_strided_slice %693 {offsets = [0, 256], sizes = [16, 128], strides = [1, 1]} : vector<16x384xf32> to vector<16x128xf32>
    %697 = vector.extract_strided_slice %677 {offsets = [0, 384], sizes = [16, 128], strides = [1, 1]} : vector<16x512xf32> to vector<16x128xf32>
    %698 = math.tanh %697 : vector<16x128xf32>
    %699 = arith.mulf %695, %687 : vector<16x128xf32>
    %700 = arith.mulf %694, %698 : vector<16x128xf32>
    %701 = arith.addf %699, %700 : vector<16x128xf32>
    %702 = math.tanh %701 : vector<16x128xf32>
    %703 = arith.mulf %696, %702 : vector<16x128xf32>
    %c0_320 = arith.constant 0 : index
    %c0_321 = arith.constant 0 : index
    %704 = vector.load %arg13[%c0_320, %c0_321] : memref<16x128xf32, #tpu.memory_space<vmem>>, vector<16x128xf32>
    %705 = vector.extract_strided_slice %686 {offsets = [0, 0], sizes = [16, 384], strides = [1, 1]} : vector<16x512xf32> to vector<16x384xf32>
    %706 = arith.negf %705 : vector<16x384xf32>
    %707 = math.exp %706 : vector<16x384xf32>
    %cst_322 = arith.constant 1.000000e+00 : f32
    %708 = vector.broadcast %cst_322 : f32 to vector<16x384xf32>
    %709 = arith.addf %708, %707 : vector<16x384xf32>
    %710 = arith.divf %708, %709 : vector<16x384xf32>
    %711 = vector.extract_strided_slice %710 {offsets = [0, 0], sizes = [16, 128], strides = [1, 1]} : vector<16x384xf32> to vector<16x128xf32>
    %712 = vector.extract_strided_slice %710 {offsets = [0, 128], sizes = [16, 128], strides = [1, 1]} : vector<16x384xf32> to vector<16x128xf32>
    %713 = vector.extract_strided_slice %710 {offsets = [0, 256], sizes = [16, 128], strides = [1, 1]} : vector<16x384xf32> to vector<16x128xf32>
    %714 = vector.extract_strided_slice %686 {offsets = [0, 384], sizes = [16, 128], strides = [1, 1]} : vector<16x512xf32> to vector<16x128xf32>
    %715 = math.tanh %714 : vector<16x128xf32>
    %716 = arith.mulf %712, %704 : vector<16x128xf32>
    %717 = arith.mulf %711, %715 : vector<16x128xf32>
    %718 = arith.addf %716, %717 : vector<16x128xf32>
    %719 = math.tanh %718 : vector<16x128xf32>
    %720 = arith.mulf %713, %719 : vector<16x128xf32>
    %c7_i32_323 = arith.constant 7 : i32
    %721 = arith.addi %8, %c7_i32_323 : i32
    %722 = vector.broadcast %721 : i32 to vector<16x1xi32>
    %723 = arith.cmpi slt, %722, %3 : vector<16x1xi32>
    %c0_i32_324 = arith.constant 0 : i32
    %724 = arith.addi %10, %c0_i32_324 : i32
    %725 = vector.broadcast %724 : i32 to vector<16x1xi32>
    %726 = arith.cmpi slt, %725, %3 : vector<16x1xi32>
    %c0_325 = arith.constant 0 : index
    %c0_326 = arith.constant 0 : index
    %727 = vector.load %arg10[%c0_325, %c0_326] : memref<16x128xf32, #tpu.memory_space<vmem>>, vector<16x128xf32>
    %728 = vector.shape_cast %723 : vector<16x1xi1> to vector<16x1xi1>
    %729 = vector.broadcast %728 : vector<16x1xi1> to vector<16x128xi1>
    %730 = arith.select %729, %703, %727 : vector<16x128xi1>, vector<16x128xf32>
    %c0_327 = arith.constant 0 : index
    %c0_328 = arith.constant 0 : index
    %731 = vector.load %arg10[%c0_327, %c0_328] : memref<16x128xf32, #tpu.memory_space<vmem>>, vector<16x128xf32>
    tpu.vector_store %arg10[%c0_327, %c0_328], %730 {strides = array<i32>} : memref<16x128xf32, #tpu.memory_space<vmem>>, vector<16x128xf32>,
    %c0_329 = arith.constant 0 : index
    %c0_330 = arith.constant 0 : index
    %732 = vector.load %arg11[%c0_329, %c0_330] : memref<16x128xf32, #tpu.memory_space<vmem>>, vector<16x128xf32>
    %733 = vector.shape_cast %723 : vector<16x1xi1> to vector<16x1xi1>
    %734 = vector.broadcast %733 : vector<16x1xi1> to vector<16x128xi1>
    %735 = arith.select %734, %701, %732 : vector<16x128xi1>, vector<16x128xf32>
    %c0_331 = arith.constant 0 : index
    %c0_332 = arith.constant 0 : index
    %736 = vector.load %arg11[%c0_331, %c0_332] : memref<16x128xf32, #tpu.memory_space<vmem>>, vector<16x128xf32>
    tpu.vector_store %arg11[%c0_331, %c0_332], %735 {strides = array<i32>} : memref<16x128xf32, #tpu.memory_space<vmem>>, vector<16x128xf32>,
    %c0_333 = arith.constant 0 : index
    %c0_334 = arith.constant 0 : index
    %737 = vector.load %arg12[%c0_333, %c0_334] : memref<16x128xf32, #tpu.memory_space<vmem>>, vector<16x128xf32>
    %738 = vector.shape_cast %726 : vector<16x1xi1> to vector<16x1xi1>
    %739 = vector.broadcast %738 : vector<16x1xi1> to vector<16x128xi1>
    %740 = arith.select %739, %720, %737 : vector<16x128xi1>, vector<16x128xf32>
    %c0_335 = arith.constant 0 : index
    %c0_336 = arith.constant 0 : index
    %741 = vector.load %arg12[%c0_335, %c0_336] : memref<16x128xf32, #tpu.memory_space<vmem>>, vector<16x128xf32>
    tpu.vector_store %arg12[%c0_335, %c0_336], %740 {strides = array<i32>} : memref<16x128xf32, #tpu.memory_space<vmem>>, vector<16x128xf32>,
    %c0_337 = arith.constant 0 : index
    %c0_338 = arith.constant 0 : index
    %742 = vector.load %arg13[%c0_337, %c0_338] : memref<16x128xf32, #tpu.memory_space<vmem>>, vector<16x128xf32>
    %743 = vector.shape_cast %726 : vector<16x1xi1> to vector<16x1xi1>
    %744 = vector.broadcast %743 : vector<16x1xi1> to vector<16x128xi1>
    %745 = arith.select %744, %718, %742 : vector<16x128xi1>, vector<16x128xf32>
    %c0_339 = arith.constant 0 : index
    %c0_340 = arith.constant 0 : index
    %746 = vector.load %arg13[%c0_339, %c0_340] : memref<16x128xf32, #tpu.memory_space<vmem>>, vector<16x128xf32>
    tpu.vector_store %arg13[%c0_339, %c0_340], %745 {strides = array<i32>} : memref<16x128xf32, #tpu.memory_space<vmem>>, vector<16x128xf32>,
    %cst_341 = arith.constant 0.000000e+00 : f32
    %747 = vector.shape_cast %723 : vector<16x1xi1> to vector<16x1xi1>
    %748 = vector.broadcast %747 : vector<16x1xi1> to vector<16x128xi1>
    %749 = vector.broadcast %cst_341 : f32 to vector<16x128xf32>
    %750 = arith.select %748, %703, %749 : vector<16x128xi1>, vector<16x128xf32>
    %751 = arith.truncf %750 : vector<16x128xf32> to vector<16x128xbf16>
    %c7_342 = arith.constant 7 : index
    %c0_343 = arith.constant 0 : index
    %c0_344 = arith.constant 0 : index
    %752 = vector.load %arg8[%c7_342, %c0_343, %c0_344] : memref<8x16x128xbf16, #tpu.memory_space<vmem>>, vector<1x16x128xbf16>
    %753 = vector.shape_cast %752 : vector<1x16x128xbf16> to vector<16x128xbf16>
    %754 = vector.shape_cast %751 : vector<16x128xbf16> to vector<1x16x128xbf16>
    tpu.vector_store %arg8[%c7_342, %c0_343, %c0_344], %754 {strides = array<i32>} : memref<8x16x128xbf16, #tpu.memory_space<vmem>>, vector<1x16x128xbf16>,
    %cst_345 = arith.constant 0.000000e+00 : f32
    %755 = vector.shape_cast %726 : vector<16x1xi1> to vector<16x1xi1>
    %756 = vector.broadcast %755 : vector<16x1xi1> to vector<16x128xi1>
    %757 = vector.broadcast %cst_345 : f32 to vector<16x128xf32>
    %758 = arith.select %756, %720, %757 : vector<16x128xi1>, vector<16x128xf32>
    %759 = arith.truncf %758 : vector<16x128xf32> to vector<16x128xbf16>
    %c0_346 = arith.constant 0 : index
    %c0_347 = arith.constant 0 : index
    %c0_348 = arith.constant 0 : index
    %760 = vector.load %arg9[%c0_346, %c0_347, %c0_348] : memref<8x16x128xbf16, #tpu.memory_space<vmem>>, vector<1x16x128xbf16>
    %761 = vector.shape_cast %760 : vector<1x16x128xbf16> to vector<16x128xbf16>
    %762 = vector.shape_cast %759 : vector<16x128xbf16> to vector<1x16x128xbf16>
    tpu.vector_store %arg9[%c0_346, %c0_347, %c0_348], %762 {strides = array<i32>} : memref<8x16x128xbf16, #tpu.memory_space<vmem>>, vector<1x16x128xbf16>,
    return
  }
  func.func @transform_0(%arg0: i32) -> (i32, i32) {
    %c0_i32 = arith.constant 0 : i32
    %c0_i32_0 = arith.constant 0 : i32
    %c0_i32_1 = arith.constant 0 : i32
    return %c0_i32, %c0_i32_0 : i32, i32
  }
  func.func @transform_1(%arg0: i32) -> (i32, i32, i32) {
    %c0_i32 = arith.constant 0 : i32
    %c0_i32_0 = arith.constant 0 : i32
    %c0_i32_1 = arith.constant 0 : i32
    return %arg0, %c0_i32, %c0_i32_0 : i32, i32, i32
  }
  func.func @transform_2(%arg0: i32) -> (i32, i32, i32) {
    %c0_i32 = arith.constant 0 : i32
    %0 = arith.subi %c0_i32, %arg0 : i32
    %c0_i32_0 = arith.constant 0 : i32
    %c0_i32_1 = arith.constant 0 : i32
    %c0_i32_2 = arith.constant 0 : i32
    return %0, %c0_i32_0, %c0_i32_1 : i32, i32, i32
  }
  func.func @transform_3(%arg0: i32) -> (i32, i32) {
    %c0_i32 = arith.constant 0 : i32
    %c0_i32_0 = arith.constant 0 : i32
    %c0_i32_1 = arith.constant 0 : i32
    return %c0_i32, %c0_i32_0 : i32, i32
  }
  func.func @transform_4(%arg0: i32) -> (i32, i32) {
    %c0_i32 = arith.constant 0 : i32
    %c0_i32_0 = arith.constant 0 : i32
    %c0_i32_1 = arith.constant 0 : i32
    return %c0_i32, %c0_i32_0 : i32, i32
  }
  func.func @transform_5(%arg0: i32) -> (i32, i32) {
    %c0_i32 = arith.constant 0 : i32
    %c0_i32_0 = arith.constant 0 : i32
    %c0_i32_1 = arith.constant 0 : i32
    return %c0_i32, %c0_i32_0 : i32, i32
  }
  func.func @transform_6(%arg0: i32) -> (i32, i32) {
    %c0_i32 = arith.constant 0 : i32
    %c0_i32_0 = arith.constant 0 : i32
    %c0_i32_1 = arith.constant 0 : i32
    return %c0_i32, %c0_i32_0 : i32, i32
  }
  func.func @transform_7(%arg0: i32) -> (i32, i32, i32) {
    %c0_i32 = arith.constant 0 : i32
    %c0_i32_0 = arith.constant 0 : i32
    %c0_i32_1 = arith.constant 0 : i32
    return %arg0, %c0_i32, %c0_i32_0 : i32, i32, i32
  }
  func.func @transform_8(%arg0: i32) -> (i32, i32, i32) {
    %c0_i32 = arith.constant 0 : i32
    %0 = arith.subi %c0_i32, %arg0 : i32
    %c0_i32_0 = arith.constant 0 : i32
    %c0_i32_1 = arith.constant 0 : i32
    %c0_i32_2 = arith.constant 0 : i32
    return %0, %c0_i32_0, %c0_i32_1 : i32, i32, i32
  }
}

module attributes {stable_mosaic.version = 11 : i64} {
  func.func @kernel(%arg0: i32, %arg1: memref<16x1xi32, #tpu.memory_space<vmem>>, %arg2: memref<8x16x512xbf16, #tpu.memory_space<vmem>>, %arg3: memref<8x16x512xbf16, #tpu.memory_space<vmem>>, %arg4: memref<128x512xbf16, #tpu.memory_space<vmem>>, %arg5: memref<128x512xbf16, #tpu.memory_space<vmem>>, %arg6: memref<1x512xf32, #tpu.memory_space<vmem>>, %arg7: memref<1x512xf32, #tpu.memory_space<vmem>>, %arg8: memref<8x16x128xbf16, #tpu.memory_space<vmem>>, %arg9: memref<8x16x128xbf16, #tpu.memory_space<vmem>>, %arg10: memref<16x128xf32, #tpu.memory_space<vmem>>, %arg11: memref<16x128xf32, #tpu.memory_space<vmem>>, %arg12: memref<16x128xf32, #tpu.memory_space<vmem>>, %arg13: memref<16x128xf32, #tpu.memory_space<vmem>>) attributes {dimension_semantics = [#tpu.dimension_semantics<arbitrary>], iteration_bounds = array<i64: 1>, scalar_prefetch = 0 : i64, scratch_operands = 4 : i64, tpu.core_type = #tpu.core_type<tc>, window_params = [{pipeline_mode = #tpu.pipeline_mode<synchronous>, transform_indices = @transform_0, window_bounds = array<i64: 16, 1>}, {transform_indices = @transform_1, window_bounds = array<i64: 8, 16, 512>}, {transform_indices = @transform_2, window_bounds = array<i64: 8, 16, 512>}, {pipeline_mode = #tpu.pipeline_mode<synchronous>, transform_indices = @transform_3, window_bounds = array<i64: 128, 512>}, {pipeline_mode = #tpu.pipeline_mode<synchronous>, transform_indices = @transform_4, window_bounds = array<i64: 128, 512>}, {pipeline_mode = #tpu.pipeline_mode<synchronous>, transform_indices = @transform_5, window_bounds = array<i64: 1, 512>}, {pipeline_mode = #tpu.pipeline_mode<synchronous>, transform_indices = @transform_6, window_bounds = array<i64: 1, 512>}, {transform_indices = @transform_7, window_bounds = array<i64: 8, 16, 128>}, {transform_indices = @transform_8, window_bounds = array<i64: 8, 16, 128>}]} {
    %c0_i32 = arith.constant 0 : i32
    %0 = arith.cmpi eq, %arg0, %c0_i32 : i32
    %1 = arith.extui %0 : i1 to i32
    %c0_i32_0 = arith.constant 0 : i32
    %2 = arith.cmpi ne, %1, %c0_i32_0 : i32
    scf.if %2 {
      %cst_349 = arith.constant 0.000000e+00 : f32
      %763 = vector.broadcast %cst_349 : f32 to vector<16x128xf32>
      %c0_350 = arith.constant 0 : index
      %c0_351 = arith.constant 0 : index
      %764 = vector.load %arg10[%c0_350, %c0_351] : memref<16x128xf32, #tpu.memory_space<vmem>>, vector<16x128xf32>
      tpu.vector_store %arg10[%c0_350, %c0_351], %763 {strides = array<i32>} : memref<16x128xf32, #tpu.memory_space<vmem>>, vector<16x128xf32>,
      %cst_352 = arith.constant 0.000000e+00 : f32
      %765 = vector.broadcast %cst_352 : f32 to vector<16x128xf32>
      %c0_353 = arith.constant 0 : index
      %c0_354 = arith.constant 0 : index
      %766 = vector.load %arg11[%c0_353, %c0_354] : memref<16x128xf32, #tpu.memory_space<vmem>>, vector<16x128xf32>
      tpu.vector_store %arg11[%c0_353, %c0_354], %765 {strides = array<i32>} : memref<16x128xf32, #tpu.memory_space<vmem>>, vector<16x128xf32>,
      %cst_355 = arith.constant 0.000000e+00 : f32
      %767 = vector.broadcast %cst_355 : f32 to vector<16x128xf32>
      %c0_356 = arith.constant 0 : index
      %c0_357 = arith.constant 0 : index
      %768 = vector.load %arg12[%c0_356, %c0_357] : memref<16x128xf32, #tpu.memory_space<vmem>>, vector<16x128xf32>
      tpu.vector_store %arg12[%c0_356, %c0_357], %767 {strides = array<i32>} : memref<16x128xf32, #tpu.memory_space<vmem>>, vector<16x128xf32>,
      %cst_358 = arith.constant 0.000000e+00 : f32
      %769 = vector.broadcast %cst_358 : f32 to vector<16x128xf32>
      %c0_359 = arith.constant 0 : index
      %c0_360 = arith.constant 0 : index
      %770 = vector.load %arg13[%c0_359, %c0_360] : memref<16x128xf32, #tpu.memory_space<vmem>>, vector<16x128xf32>
      tpu.vector_store %arg13[%c0_359, %c0_360], %769 {strides = array<i32>} : memref<16x128xf32, #tpu.memory_space<vmem>>, vector<16x128xf32>,
    } else {
    }
    %c0 = arith.constant 0 : index
    %c0_1 = arith.constant 0 : index
    %3 = vector.load %arg1[%c0, %c0_1] : memref<16x1xi32, #tpu.memory_space<vmem>>, vector<16x1xi32>
    %c0_2 = arith.constant 0 : index
    %c0_3 = arith.constant 0 : index
    %4 = vector.load %arg4[%c0_2, %c0_3] : memref<128x512xbf16, #tpu.memory_space<vmem>>, vector<128x512xbf16>
    %c0_4 = arith.constant 0 : index
    %c0_5 = arith.constant 0 : index
    %5 = vector.load %arg5[%c0_4, %c0_5] : memref<128x512xbf16, #tpu.memory_space<vmem>>, vector<128x512xbf16>
    %c0_6 = arith.constant 0 : index
    %c0_7 = arith.constant 0 : index
    %6 = vector.load %arg6[%c0_6, %c0_7] : memref<1x512xf32, #tpu.memory_space<vmem>>, vector<1x512xf32>
    %c0_8 = arith.constant 0 : index
    %c0_9 = arith.constant 0 : index
    %7 = vector.load %arg7[%c0_8, %c0_9] : memref<1x512xf32, #tpu.memory_space<vmem>>, vector<1x512xf32>
    %c8_i32 = arith.constant 8 : i32
    %8 = arith.muli %arg0, %c8_i32 : i32
    %c0_i32_10 = arith.constant 0 : i32
    %9 = arith.subi %c0_i32_10, %arg0 : i32
    %c8_i32_11 = arith.constant 8 : i32
    %10 = arith.muli %9, %c8_i32_11 : i32
    %c0_12 = arith.constant 0 : index
    %c0_13 = arith.constant 0 : index
    %c0_14 = arith.constant 0 : index
    %11 = vector.load %arg2[%c0_12, %c0_13, %c0_14] : memref<8x16x512xbf16, #tpu.memory_space<vmem>>, vector<1x16x512xbf16>
    %12 = vector.shape_cast %11 : vector<1x16x512xbf16> to vector<16x512xbf16>
    %13 = arith.extf %12 : vector<16x512xbf16> to vector<16x512xf32>
    %14 = vector.broadcast %6 : vector<1x512xf32> to vector<16x512xf32>
    %15 = arith.addf %13, %14 : vector<16x512xf32>
    %c0_15 = arith.constant 0 : index
    %c0_16 = arith.constant 0 : index
    %16 = vector.load %arg10[%c0_15, %c0_16] : memref<16x128xf32, #tpu.memory_space<vmem>>, vector<16x128xf32>
    %17 = arith.truncf %16 : vector<16x128xf32> to vector<16x128xbf16>
    %cst = arith.constant dense<0.000000e+00> : vector<16x512xf32>
    %18 = tpu.matmul %17, %4, %cst {dimension_numbers = #tpu.dot_dimension_numbers<[1], [0], [0], [1], [0, 0, 1, 1], [], []>} : vector<16x128xbf16>, vector<128x512xbf16>, vector<16x512xf32> -> vector<16x512xf32>
    %19 = arith.addf %15, %18 : vector<16x512xf32>
    %c7 = arith.constant 7 : index
    %c0_17 = arith.constant 0 : index
    %c0_18 = arith.constant 0 : index
    %20 = vector.load %arg3[%c7, %c0_17, %c0_18] : memref<8x16x512xbf16, #tpu.memory_space<vmem>>, vector<1x16x512xbf16>
    %21 = vector.shape_cast %20 : vector<1x16x512xbf16> to vector<16x512xbf16>
    %22 = arith.extf %21 : vector<16x512xbf16> to vector<16x512xf32>
    %23 = vector.broadcast %7 : vector<1x512xf32> to vector<16x512xf32>
    %24 = arith.addf %22, %23 : vector<16x512xf32>
    %c0_19 = arith.constant 0 : index
    %c0_20 = arith.constant 0 : index
    %25 = vector.load %arg12[%c0_19, %c0_20] : memref<16x128xf32, #tpu.memory_space<vmem>>, vector<16x128xf32>
    %26 = arith.truncf %25 : vector<16x128xf32> to vector<16x128xbf16>
    %cst_21 = arith.constant dense<0.000000e+00> : vector<16x512xf32>
    %27 = tpu.matmul %26, %5, %cst_21 {dimension_numbers = #tpu.dot_dimension_numbers<[1], [0], [0], [1], [0, 0, 1, 1], [], []>} : vector<16x128xbf16>, vector<128x512xbf16>, vector<16x512xf32> -> vector<16x512xf32>
    %28 = arith.addf %24, %27 : vector<16x512xf32>
    %c0_22 = arith.constant 0 : index
    %c0_23 = arith.constant 0 : index
    %29 = vector.load %arg11[%c0_22, %c0_23] : memref<16x128xf32, #tpu.memory_space<vmem>>, vector<16x128xf32>
    %30 = vector.extract_strided_slice %19 {offsets = [0, 0], sizes = [16, 384], strides = [1, 1]} : vector<16x512xf32> to vector<16x384xf32>
    %31 = arith.negf %30 : vector<16x384xf32>
    %32 = math.exp %31 : vector<16x384xf32>
    %cst_24 = arith.constant 1.000000e+00 : f32
    %33 = vector.broadcast %cst_24 : f32 to vector<16x384xf32>
    %34 = arith.addf %33, %32 : vector<16x384xf32>
    %35 = arith.divf %33, %34 : vector<16x384xf32>
    %36 = vector.extract_strided_slice %35 {offsets = [0, 0], sizes = [16, 128], strides = [1, 1]} : vector<16x384xf32> to vector<16x128xf32>
    %37 = vector.extract_strided_slice %35 {offsets = [0, 128], sizes = [16, 128], strides = [1, 1]} : vector<16x384xf32> to vector<16x128xf32>
    %38 = vector.extract_strided_slice %35 {offsets = [0, 256], sizes = [16, 128], strides = [1, 1]} : vector<16x384xf32> to vector<16x128xf32>
    %39 = vector.extract_strided_slice %19 {offsets = [0, 384], sizes = [16, 128], strides = [1, 1]} : vector<16x512xf32> to vector<16x128xf32>
    %40 = math.tanh %39 : vector<16x128xf32>
    %41 = arith.mulf %37, %29 : vector<16x128xf32>
    %42 = arith.mulf %36, %40 : vector<16x128xf32>
    %43 = arith.addf %41, %42 : vector<16x128xf32>
    %44 = math.tanh %43 : vector<16x128xf32>
    %45 = arith.mulf %38, %44 : vector<16x128xf32>
    %c0_25 = arith.constant 0 : index
    %c0_26 = arith.constant 0 : index
    %46 = vector.load %arg13[%c0_25, %c0_26] : memref<16x128xf32, #tpu.memory_space<vmem>>, vector<16x128xf32>
    %47 = vector.extract_strided_slice %28 {offsets = [0, 0], sizes = [16, 384], strides = [1, 1]} : vector<16x512xf32> to vector<16x384xf32>
    %48 = arith.negf %47 : vector<16x384xf32>
    %49 = math.exp %48 : vector<16x384xf32>
    %cst_27 = arith.constant 1.000000e+00 : f32
    %50 = vector.broadcast %cst_27 : f32 to vector<16x384xf32>
    %51 = arith.addf %50, %49 : vector<16x384xf32>
    %52 = arith.divf %50, %51 : vector<16x384xf32>
    %53 = vector.extract_strided_slice %52 {offsets = [0, 0], sizes = [16, 128], strides = [1, 1]} : vector<16x384xf32> to vector<16x128xf32>
    %54 = vector.extract_strided_slice %52 {offsets = [0, 128], sizes = [16, 128], strides = [1, 1]} : vector<16x384xf32> to vector<16x128xf32>
    %55 = vector.extract_strided_slice %52 {offsets = [0, 256], sizes = [16, 128], strides = [1, 1]} : vector<16x384xf32> to vector<16x128xf32>
    %56 = vector.extract_strided_slice %28 {offsets = [0, 384], sizes = [16, 128], strides = [1, 1]} : vector<16x512xf32> to vector<16x128xf32>
    %57 = math.tanh %56 : vector<16x128xf32>
    %58 = arith.mulf %54, %46 : vector<16x128xf32>
    %59 = arith.mulf %53, %57 : vector<16x128xf32>
    %60 = arith.addf %58, %59 : vector<16x128xf32>
    %61 = math.tanh %60 : vector<16x128xf32>
    %62 = arith.mulf %55, %61 : vector<16x128xf32>
    %c0_i32_28 = arith.constant 0 : i32
    %63 = arith.addi %8, %c0_i32_28 : i32
    %64 = vector.broadcast %63 : i32 to vector<16x1xi32>
    %65 = arith.cmpi slt, %64, %3 : vector<16x1xi32>
    %c7_i32 = arith.constant 7 : i32
    %66 = arith.addi %10, %c7_i32 : i32
    %67 = vector.broadcast %66 : i32 to vector<16x1xi32>
    %68 = arith.cmpi slt, %67, %3 : vector<16x1xi32>
    %c0_29 = arith.constant 0 : index
    %c0_30 = arith.constant 0 : index
    %69 = vector.load %arg10[%c0_29, %c0_30] : memref<16x128xf32, #tpu.memory_space<vmem>>, vector<16x128xf32>
    %70 = vector.shape_cast %65 : vector<16x1xi1> to vector<16x1xi1>
    %71 = vector.broadcast %70 : vector<16x1xi1> to vector<16x128xi1>
    %72 = arith.select %71, %45, %69 : vector<16x128xi1>, vector<16x128xf32>
    %c0_31 = arith.constant 0 : index
    %c0_32 = arith.constant 0 : index
    %73 = vector.load %arg10[%c0_31, %c0_32] : memref<16x128xf32, #tpu.memory_space<vmem>>, vector<16x128xf32>
    tpu.vector_store %arg10[%c0_31, %c0_32], %72 {strides = array<i32>} : memref<16x128xf32, #tpu.memory_space<vmem>>, vector<16x128xf32>,
    %c0_33 = arith.constant 0 : index
    %c0_34 = arith.constant 0 : index
    %74 = vector.load %arg11[%c0_33, %c0_34] : memref<16x128xf32, #tpu.memory_space<vmem>>, vector<16x128xf32>
    %75 = vector.shape_cast %65 : vector<16x1xi1> to vector<16x1xi1>
    %76 = vector.broadcast %75 : vector<16x1xi1> to vector<16x128xi1>
    %77 = arith.select %76, %43, %74 : vector<16x128xi1>, vector<16x128xf32>
    %c0_35 = arith.constant 0 : index
    %c0_36 = arith.constant 0 : index
    %78 = vector.load %arg11[%c0_35, %c0_36] : memref<16x128xf32, #tpu.memory_space<vmem>>, vector<16x128xf32>
    tpu.vector_store %arg11[%c0_35, %c0_36], %77 {strides = array<i32>} : memref<16x128xf32, #tpu.memory_space<vmem>>, vector<16x128xf32>,
    %c0_37 = arith.constant 0 : index
    %c0_38 = arith.constant 0 : index
    %79 = vector.load %arg12[%c0_37, %c0_38] : memref<16x128xf32, #tpu.memory_space<vmem>>, vector<16x128xf32>
    %80 = vector.shape_cast %68 : vector<16x1xi1> to vector<16x1xi1>
    %81 = vector.broadcast %80 : vector<16x1xi1> to vector<16x128xi1>
    %82 = arith.select %81, %62, %79 : vector<16x128xi1>, vector<16x128xf32>
    %c0_39 = arith.constant 0 : index
    %c0_40 = arith.constant 0 : index
    %83 = vector.load %arg12[%c0_39, %c0_40] : memref<16x128xf32, #tpu.memory_space<vmem>>, vector<16x128xf32>
    tpu.vector_store %arg12[%c0_39, %c0_40], %82 {strides = array<i32>} : memref<16x128xf32, #tpu.memory_space<vmem>>, vector<16x128xf32>,
    %c0_41 = arith.constant 0 : index
    %c0_42 = arith.constant 0 : index
    %84 = vector.load %arg13[%c0_41, %c0_42] : memref<16x128xf32, #tpu.memory_space<vmem>>, vector<16x128xf32>
    %85 = vector.shape_cast %68 : vector<16x1xi1> to vector<16x1xi1>
    %86 = vector.broadcast %85 : vector<16x1xi1> to vector<16x128xi1>
    %87 = arith.select %86, %60, %84 : vector<16x128xi1>, vector<16x128xf32>
    %c0_43 = arith.constant 0 : index
    %c0_44 = arith.constant 0 : index
    %88 = vector.load %arg13[%c0_43, %c0_44] : memref<16x128xf32, #tpu.memory_space<vmem>>, vector<16x128xf32>
    tpu.vector_store %arg13[%c0_43, %c0_44], %87 {strides = array<i32>} : memref<16x128xf32, #tpu.memory_space<vmem>>, vector<16x128xf32>,
    %cst_45 = arith.constant 0.000000e+00 : f32
    %89 = vector.shape_cast %65 : vector<16x1xi1> to vector<16x1xi1>
    %90 = vector.broadcast %89 : vector<16x1xi1> to vector<16x128xi1>
    %91 = vector.broadcast %cst_45 : f32 to vector<16x128xf32>
    %92 = arith.select %90, %45, %91 : vector<16x128xi1>, vector<16x128xf32>
    %93 = arith.truncf %92 : vector<16x128xf32> to vector<16x128xbf16>
    %c0_46 = arith.constant 0 : index
    %c0_47 = arith.constant 0 : index
    %c0_48 = arith.constant 0 : index
    %94 = vector.load %arg8[%c0_46, %c0_47, %c0_48] : memref<8x16x128xbf16, #tpu.memory_space<vmem>>, vector<1x16x128xbf16>
    %95 = vector.shape_cast %94 : vector<1x16x128xbf16> to vector<16x128xbf16>
    %96 = vector.shape_cast %93 : vector<16x128xbf16> to vector<1x16x128xbf16>
    tpu.vector_store %arg8[%c0_46, %c0_47, %c0_48], %96 {strides = array<i32>} : memref<8x16x128xbf16, #tpu.memory_space<vmem>>, vector<1x16x128xbf16>,
    %cst_49 = arith.constant 0.000000e+00 : f32
    %97 = vector.shape_cast %68 : vector<16x1xi1> to vector<16x1xi1>
    %98 = vector.broadcast %97 : vector<16x1xi1> to vector<16x128xi1>
    %99 = vector.broadcast %cst_49 : f32 to vector<16x128xf32>
    %100 = arith.select %98, %62, %99 : vector<16x128xi1>, vector<16x128xf32>
    %101 = arith.truncf %100 : vector<16x128xf32> to vector<16x128xbf16>
    %c7_50 = arith.constant 7 : index
    %c0_51 = arith.constant 0 : index
    %c0_52 = arith.constant 0 : index
    %102 = vector.load %arg9[%c7_50, %c0_51, %c0_52] : memref<8x16x128xbf16, #tpu.memory_space<vmem>>, vector<1x16x128xbf16>
    %103 = vector.shape_cast %102 : vector<1x16x128xbf16> to vector<16x128xbf16>
    %104 = vector.shape_cast %101 : vector<16x128xbf16> to vector<1x16x128xbf16>
    tpu.vector_store %arg9[%c7_50, %c0_51, %c0_52], %104 {strides = array<i32>} : memref<8x16x128xbf16, #tpu.memory_space<vmem>>, vector<1x16x128xbf16>,
    %c1 = arith.constant 1 : index
    %c0_53 = arith.constant 0 : index
    %c0_54 = arith.constant 0 : index
    %105 = vector.load %arg2[%c1, %c0_53, %c0_54] : memref<8x16x512xbf16, #tpu.memory_space<vmem>>, vector<1x16x512xbf16>
    %106 = vector.shape_cast %105 : vector<1x16x512xbf16> to vector<16x512xbf16>
    %107 = arith.extf %106 : vector<16x512xbf16> to vector<16x512xf32>
    %108 = vector.broadcast %6 : vector<1x512xf32> to vector<16x512xf32>
    %109 = arith.addf %107, %108 : vector<16x512xf32>
    %c0_55 = arith.constant 0 : index
    %c0_56 = arith.constant 0 : index
    %110 = vector.load %arg10[%c0_55, %c0_56] : memref<16x128xf32, #tpu.memory_space<vmem>>, vector<16x128xf32>
    %111 = arith.truncf %110 : vector<16x128xf32> to vector<16x128xbf16>
    %cst_57 = arith.constant dense<0.000000e+00> : vector<16x512xf32>
    %112 = tpu.matmul %111, %4, %cst_57 {dimension_numbers = #tpu.dot_dimension_numbers<[1], [0], [0], [1], [0, 0, 1, 1], [], []>} : vector<16x128xbf16>, vector<128x512xbf16>, vector<16x512xf32> -> vector<16x512xf32>
    %113 = arith.addf %109, %112 : vector<16x512xf32>
    %c6 = arith.constant 6 : index
    %c0_58 = arith.constant 0 : index
    %c0_59 = arith.constant 0 : index
    %114 = vector.load %arg3[%c6, %c0_58, %c0_59] : memref<8x16x512xbf16, #tpu.memory_space<vmem>>, vector<1x16x512xbf16>
    %115 = vector.shape_cast %114 : vector<1x16x512xbf16> to vector<16x512xbf16>
    %116 = arith.extf %115 : vector<16x512xbf16> to vector<16x512xf32>
    %117 = vector.broadcast %7 : vector<1x512xf32> to vector<16x512xf32>
    %118 = arith.addf %116, %117 : vector<16x512xf32>
    %c0_60 = arith.constant 0 : index
    %c0_61 = arith.constant 0 : index
    %119 = vector.load %arg12[%c0_60, %c0_61] : memref<16x128xf32, #tpu.memory_space<vmem>>, vector<16x128xf32>
    %120 = arith.truncf %119 : vector<16x128xf32> to vector<16x128xbf16>
    %cst_62 = arith.constant dense<0.000000e+00> : vector<16x512xf32>
    %121 = tpu.matmul %120, %5, %cst_62 {dimension_numbers = #tpu.dot_dimension_numbers<[1], [0], [0], [1], [0, 0, 1, 1], [], []>} : vector<16x128xbf16>, vector<128x512xbf16>, vector<16x512xf32> -> vector<16x512xf32>
    %122 = arith.addf %118, %121 : vector<16x512xf32>
    %c0_63 = arith.constant 0 : index
    %c0_64 = arith.constant 0 : index
    %123 = vector.load %arg11[%c0_63, %c0_64] : memref<16x128xf32, #tpu.memory_space<vmem>>, vector<16x128xf32>
    %124 = vector.extract_strided_slice %113 {offsets = [0, 0], sizes = [16, 384], strides = [1, 1]} : vector<16x512xf32> to vector<16x384xf32>
    %125 = arith.negf %124 : vector<16x384xf32>
    %126 = math.exp %125 : vector<16x384xf32>
    %cst_65 = arith.constant 1.000000e+00 : f32
    %127 = vector.broadcast %cst_65 : f32 to vector<16x384xf32>
    %128 = arith.addf %127, %126 : vector<16x384xf32>
    %129 = arith.divf %127, %128 : vector<16x384xf32>
    %130 = vector.extract_strided_slice %129 {offsets = [0, 0], sizes = [16, 128], strides = [1, 1]} : vector<16x384xf32> to vector<16x128xf32>
    %131 = vector.extract_strided_slice %129 {offsets = [0, 128], sizes = [16, 128], strides = [1, 1]} : vector<16x384xf32> to vector<16x128xf32>
    %132 = vector.extract_strided_slice %129 {offsets = [0, 256], sizes = [16, 128], strides = [1, 1]} : vector<16x384xf32> to vector<16x128xf32>
    %133 = vector.extract_strided_slice %113 {offsets = [0, 384], sizes = [16, 128], strides = [1, 1]} : vector<16x512xf32> to vector<16x128xf32>
    %134 = math.tanh %133 : vector<16x128xf32>
    %135 = arith.mulf %131, %123 : vector<16x128xf32>
    %136 = arith.mulf %130, %134 : vector<16x128xf32>
    %137 = arith.addf %135, %136 : vector<16x128xf32>
    %138 = math.tanh %137 : vector<16x128xf32>
    %139 = arith.mulf %132, %138 : vector<16x128xf32>
    %c0_66 = arith.constant 0 : index
    %c0_67 = arith.constant 0 : index
    %140 = vector.load %arg13[%c0_66, %c0_67] : memref<16x128xf32, #tpu.memory_space<vmem>>, vector<16x128xf32>
    %141 = vector.extract_strided_slice %122 {offsets = [0, 0], sizes = [16, 384], strides = [1, 1]} : vector<16x512xf32> to vector<16x384xf32>
    %142 = arith.negf %141 : vector<16x384xf32>
    %143 = math.exp %142 : vector<16x384xf32>
    %cst_68 = arith.constant 1.000000e+00 : f32
    %144 = vector.broadcast %cst_68 : f32 to vector<16x384xf32>
    %145 = arith.addf %144, %143 : vector<16x384xf32>
    %146 = arith.divf %144, %145 : vector<16x384xf32>
    %147 = vector.extract_strided_slice %146 {offsets = [0, 0], sizes = [16, 128], strides = [1, 1]} : vector<16x384xf32> to vector<16x128xf32>
    %148 = vector.extract_strided_slice %146 {offsets = [0, 128], sizes = [16, 128], strides = [1, 1]} : vector<16x384xf32> to vector<16x128xf32>
    %149 = vector.extract_strided_slice %146 {offsets = [0, 256], sizes = [16, 128], strides = [1, 1]} : vector<16x384xf32> to vector<16x128xf32>
    %150 = vector.extract_strided_slice %122 {offsets = [0, 384], sizes = [16, 128], strides = [1, 1]} : vector<16x512xf32> to vector<16x128xf32>
    %151 = math.tanh %150 : vector<16x128xf32>
    %152 = arith.mulf %148, %140 : vector<16x128xf32>
    %153 = arith.mulf %147, %151 : vector<16x128xf32>
    %154 = arith.addf %152, %153 : vector<16x128xf32>
    %155 = math.tanh %154 : vector<16x128xf32>
    %156 = arith.mulf %149, %155 : vector<16x128xf32>
    %c1_i32 = arith.constant 1 : i32
    %157 = arith.addi %8, %c1_i32 : i32
    %158 = vector.broadcast %157 : i32 to vector<16x1xi32>
    %159 = arith.cmpi slt, %158, %3 : vector<16x1xi32>
    %c6_i32 = arith.constant 6 : i32
    %160 = arith.addi %10, %c6_i32 : i32
    %161 = vector.broadcast %160 : i32 to vector<16x1xi32>
    %162 = arith.cmpi slt, %161, %3 : vector<16x1xi32>
    %c0_69 = arith.constant 0 : index
    %c0_70 = arith.constant 0 : index
    %163 = vector.load %arg10[%c0_69, %c0_70] : memref<16x128xf32, #tpu.memory_space<vmem>>, vector<16x128xf32>
    %164 = vector.shape_cast %159 : vector<16x1xi1> to vector<16x1xi1>
    %165 = vector.broadcast %164 : vector<16x1xi1> to vector<16x128xi1>
    %166 = arith.select %165, %139, %163 : vector<16x128xi1>, vector<16x128xf32>
    %c0_71 = arith.constant 0 : index
    %c0_72 = arith.constant 0 : index
    %167 = vector.load %arg10[%c0_71, %c0_72] : memref<16x128xf32, #tpu.memory_space<vmem>>, vector<16x128xf32>
    tpu.vector_store %arg10[%c0_71, %c0_72], %166 {strides = array<i32>} : memref<16x128xf32, #tpu.memory_space<vmem>>, vector<16x128xf32>,
    %c0_73 = arith.constant 0 : index
    %c0_74 = arith.constant 0 : index
    %168 = vector.load %arg11[%c0_73, %c0_74] : memref<16x128xf32, #tpu.memory_space<vmem>>, vector<16x128xf32>
    %169 = vector.shape_cast %159 : vector<16x1xi1> to vector<16x1xi1>
    %170 = vector.broadcast %169 : vector<16x1xi1> to vector<16x128xi1>
    %171 = arith.select %170, %137, %168 : vector<16x128xi1>, vector<16x128xf32>
    %c0_75 = arith.constant 0 : index
    %c0_76 = arith.constant 0 : index
    %172 = vector.load %arg11[%c0_75, %c0_76] : memref<16x128xf32, #tpu.memory_space<vmem>>, vector<16x128xf32>
    tpu.vector_store %arg11[%c0_75, %c0_76], %171 {strides = array<i32>} : memref<16x128xf32, #tpu.memory_space<vmem>>, vector<16x128xf32>,
    %c0_77 = arith.constant 0 : index
    %c0_78 = arith.constant 0 : index
    %173 = vector.load %arg12[%c0_77, %c0_78] : memref<16x128xf32, #tpu.memory_space<vmem>>, vector<16x128xf32>
    %174 = vector.shape_cast %162 : vector<16x1xi1> to vector<16x1xi1>
    %175 = vector.broadcast %174 : vector<16x1xi1> to vector<16x128xi1>
    %176 = arith.select %175, %156, %173 : vector<16x128xi1>, vector<16x128xf32>
    %c0_79 = arith.constant 0 : index
    %c0_80 = arith.constant 0 : index
    %177 = vector.load %arg12[%c0_79, %c0_80] : memref<16x128xf32, #tpu.memory_space<vmem>>, vector<16x128xf32>
    tpu.vector_store %arg12[%c0_79, %c0_80], %176 {strides = array<i32>} : memref<16x128xf32, #tpu.memory_space<vmem>>, vector<16x128xf32>,
    %c0_81 = arith.constant 0 : index
    %c0_82 = arith.constant 0 : index
    %178 = vector.load %arg13[%c0_81, %c0_82] : memref<16x128xf32, #tpu.memory_space<vmem>>, vector<16x128xf32>
    %179 = vector.shape_cast %162 : vector<16x1xi1> to vector<16x1xi1>
    %180 = vector.broadcast %179 : vector<16x1xi1> to vector<16x128xi1>
    %181 = arith.select %180, %154, %178 : vector<16x128xi1>, vector<16x128xf32>
    %c0_83 = arith.constant 0 : index
    %c0_84 = arith.constant 0 : index
    %182 = vector.load %arg13[%c0_83, %c0_84] : memref<16x128xf32, #tpu.memory_space<vmem>>, vector<16x128xf32>
    tpu.vector_store %arg13[%c0_83, %c0_84], %181 {strides = array<i32>} : memref<16x128xf32, #tpu.memory_space<vmem>>, vector<16x128xf32>,
    %cst_85 = arith.constant 0.000000e+00 : f32
    %183 = vector.shape_cast %159 : vector<16x1xi1> to vector<16x1xi1>
    %184 = vector.broadcast %183 : vector<16x1xi1> to vector<16x128xi1>
    %185 = vector.broadcast %cst_85 : f32 to vector<16x128xf32>
    %186 = arith.select %184, %139, %185 : vector<16x128xi1>, vector<16x128xf32>
    %187 = arith.truncf %186 : vector<16x128xf32> to vector<16x128xbf16>
    %c1_86 = arith.constant 1 : index
    %c0_87 = arith.constant 0 : index
    %c0_88 = arith.constant 0 : index
    %188 = vector.load %arg8[%c1_86, %c0_87, %c0_88] : memref<8x16x128xbf16, #tpu.memory_space<vmem>>, vector<1x16x128xbf16>
    %189 = vector.shape_cast %188 : vector<1x16x128xbf16> to vector<16x128xbf16>
    %190 = vector.shape_cast %187 : vector<16x128xbf16> to vector<1x16x128xbf16>
    tpu.vector_store %arg8[%c1_86, %c0_87, %c0_88], %190 {strides = array<i32>} : memref<8x16x128xbf16, #tpu.memory_space<vmem>>, vector<1x16x128xbf16>,
    %cst_89 = arith.constant 0.000000e+00 : f32
    %191 = vector.shape_cast %162 : vector<16x1xi1> to vector<16x1xi1>
    %192 = vector.broadcast %191 : vector<16x1xi1> to vector<16x128xi1>
    %193 = vector.broadcast %cst_89 : f32 to vector<16x128xf32>
    %194 = arith.select %192, %156, %193 : vector<16x128xi1>, vector<16x128xf32>
    %195 = arith.truncf %194 : vector<16x128xf32> to vector<16x128xbf16>
    %c6_90 = arith.constant 6 : index
    %c0_91 = arith.constant 0 : index
    %c0_92 = arith.constant 0 : index
    %196 = vector.load %arg9[%c6_90, %c0_91, %c0_92] : memref<8x16x128xbf16, #tpu.memory_space<vmem>>, vector<1x16x128xbf16>
    %197 = vector.shape_cast %196 : vector<1x16x128xbf16> to vector<16x128xbf16>
    %198 = vector.shape_cast %195 : vector<16x128xbf16> to vector<1x16x128xbf16>
    tpu.vector_store %arg9[%c6_90, %c0_91, %c0_92], %198 {strides = array<i32>} : memref<8x16x128xbf16, #tpu.memory_space<vmem>>, vector<1x16x128xbf16>,
    %c2 = arith.constant 2 : index
    %c0_93 = arith.constant 0 : index
    %c0_94 = arith.constant 0 : index
    %199 = vector.load %arg2[%c2, %c0_93, %c0_94] : memref<8x16x512xbf16, #tpu.memory_space<vmem>>, vector<1x16x512xbf16>
    %200 = vector.shape_cast %199 : vector<1x16x512xbf16> to vector<16x512xbf16>
    %201 = arith.extf %200 : vector<16x512xbf16> to vector<16x512xf32>
    %202 = vector.broadcast %6 : vector<1x512xf32> to vector<16x512xf32>
    %203 = arith.addf %201, %202 : vector<16x512xf32>
    %c0_95 = arith.constant 0 : index
    %c0_96 = arith.constant 0 : index
    %204 = vector.load %arg10[%c0_95, %c0_96] : memref<16x128xf32, #tpu.memory_space<vmem>>, vector<16x128xf32>
    %205 = arith.truncf %204 : vector<16x128xf32> to vector<16x128xbf16>
    %cst_97 = arith.constant dense<0.000000e+00> : vector<16x512xf32>
    %206 = tpu.matmul %205, %4, %cst_97 {dimension_numbers = #tpu.dot_dimension_numbers<[1], [0], [0], [1], [0, 0, 1, 1], [], []>} : vector<16x128xbf16>, vector<128x512xbf16>, vector<16x512xf32> -> vector<16x512xf32>
    %207 = arith.addf %203, %206 : vector<16x512xf32>
    %c5 = arith.constant 5 : index
    %c0_98 = arith.constant 0 : index
    %c0_99 = arith.constant 0 : index
    %208 = vector.load %arg3[%c5, %c0_98, %c0_99] : memref<8x16x512xbf16, #tpu.memory_space<vmem>>, vector<1x16x512xbf16>
    %209 = vector.shape_cast %208 : vector<1x16x512xbf16> to vector<16x512xbf16>
    %210 = arith.extf %209 : vector<16x512xbf16> to vector<16x512xf32>
    %211 = vector.broadcast %7 : vector<1x512xf32> to vector<16x512xf32>
    %212 = arith.addf %210, %211 : vector<16x512xf32>
    %c0_100 = arith.constant 0 : index
    %c0_101 = arith.constant 0 : index
    %213 = vector.load %arg12[%c0_100, %c0_101] : memref<16x128xf32, #tpu.memory_space<vmem>>, vector<16x128xf32>
    %214 = arith.truncf %213 : vector<16x128xf32> to vector<16x128xbf16>
    %cst_102 = arith.constant dense<0.000000e+00> : vector<16x512xf32>
    %215 = tpu.matmul %214, %5, %cst_102 {dimension_numbers = #tpu.dot_dimension_numbers<[1], [0], [0], [1], [0, 0, 1, 1], [], []>} : vector<16x128xbf16>, vector<128x512xbf16>, vector<16x512xf32> -> vector<16x512xf32>
    %216 = arith.addf %212, %215 : vector<16x512xf32>
    %c0_103 = arith.constant 0 : index
    %c0_104 = arith.constant 0 : index
    %217 = vector.load %arg11[%c0_103, %c0_104] : memref<16x128xf32, #tpu.memory_space<vmem>>, vector<16x128xf32>
    %218 = vector.extract_strided_slice %207 {offsets = [0, 0], sizes = [16, 384], strides = [1, 1]} : vector<16x512xf32> to vector<16x384xf32>
    %219 = arith.negf %218 : vector<16x384xf32>
    %220 = math.exp %219 : vector<16x384xf32>
    %cst_105 = arith.constant 1.000000e+00 : f32
    %221 = vector.broadcast %cst_105 : f32 to vector<16x384xf32>
    %222 = arith.addf %221, %220 : vector<16x384xf32>
    %223 = arith.divf %221, %222 : vector<16x384xf32>
    %224 = vector.extract_strided_slice %223 {offsets = [0, 0], sizes = [16, 128], strides = [1, 1]} : vector<16x384xf32> to vector<16x128xf32>
    %225 = vector.extract_strided_slice %223 {offsets = [0, 128], sizes = [16, 128], strides = [1, 1]} : vector<16x384xf32> to vector<16x128xf32>
    %226 = vector.extract_strided_slice %223 {offsets = [0, 256], sizes = [16, 128], strides = [1, 1]} : vector<16x384xf32> to vector<16x128xf32>
    %227 = vector.extract_strided_slice %207 {offsets = [0, 384], sizes = [16, 128], strides = [1, 1]} : vector<16x512xf32> to vector<16x128xf32>
    %228 = math.tanh %227 : vector<16x128xf32>
    %229 = arith.mulf %225, %217 : vector<16x128xf32>
    %230 = arith.mulf %224, %228 : vector<16x128xf32>
    %231 = arith.addf %229, %230 : vector<16x128xf32>
    %232 = math.tanh %231 : vector<16x128xf32>
    %233 = arith.mulf %226, %232 : vector<16x128xf32>
    %c0_106 = arith.constant 0 : index
    %c0_107 = arith.constant 0 : index
    %234 = vector.load %arg13[%c0_106, %c0_107] : memref<16x128xf32, #tpu.memory_space<vmem>>, vector<16x128xf32>
    %235 = vector.extract_strided_slice %216 {offsets = [0, 0], sizes = [16, 384], strides = [1, 1]} : vector<16x512xf32> to vector<16x384xf32>
    %236 = arith.negf %235 : vector<16x384xf32>
    %237 = math.exp %236 : vector<16x384xf32>
    %cst_108 = arith.constant 1.000000e+00 : f32
    %238 = vector.broadcast %cst_108 : f32 to vector<16x384xf32>
    %239 = arith.addf %238, %237 : vector<16x384xf32>
    %240 = arith.divf %238, %239 : vector<16x384xf32>
    %241 = vector.extract_strided_slice %240 {offsets = [0, 0], sizes = [16, 128], strides = [1, 1]} : vector<16x384xf32> to vector<16x128xf32>
    %242 = vector.extract_strided_slice %240 {offsets = [0, 128], sizes = [16, 128], strides = [1, 1]} : vector<16x384xf32> to vector<16x128xf32>
    %243 = vector.extract_strided_slice %240 {offsets = [0, 256], sizes = [16, 128], strides = [1, 1]} : vector<16x384xf32> to vector<16x128xf32>
    %244 = vector.extract_strided_slice %216 {offsets = [0, 384], sizes = [16, 128], strides = [1, 1]} : vector<16x512xf32> to vector<16x128xf32>
    %245 = math.tanh %244 : vector<16x128xf32>
    %246 = arith.mulf %242, %234 : vector<16x128xf32>
    %247 = arith.mulf %241, %245 : vector<16x128xf32>
    %248 = arith.addf %246, %247 : vector<16x128xf32>
    %249 = math.tanh %248 : vector<16x128xf32>
    %250 = arith.mulf %243, %249 : vector<16x128xf32>
    %c2_i32 = arith.constant 2 : i32
    %251 = arith.addi %8, %c2_i32 : i32
    %252 = vector.broadcast %251 : i32 to vector<16x1xi32>
    %253 = arith.cmpi slt, %252, %3 : vector<16x1xi32>
    %c5_i32 = arith.constant 5 : i32
    %254 = arith.addi %10, %c5_i32 : i32
    %255 = vector.broadcast %254 : i32 to vector<16x1xi32>
    %256 = arith.cmpi slt, %255, %3 : vector<16x1xi32>
    %c0_109 = arith.constant 0 : index
    %c0_110 = arith.constant 0 : index
    %257 = vector.load %arg10[%c0_109, %c0_110] : memref<16x128xf32, #tpu.memory_space<vmem>>, vector<16x128xf32>
    %258 = vector.shape_cast %253 : vector<16x1xi1> to vector<16x1xi1>
    %259 = vector.broadcast %258 : vector<16x1xi1> to vector<16x128xi1>
    %260 = arith.select %259, %233, %257 : vector<16x128xi1>, vector<16x128xf32>
    %c0_111 = arith.constant 0 : index
    %c0_112 = arith.constant 0 : index
    %261 = vector.load %arg10[%c0_111, %c0_112] : memref<16x128xf32, #tpu.memory_space<vmem>>, vector<16x128xf32>
    tpu.vector_store %arg10[%c0_111, %c0_112], %260 {strides = array<i32>} : memref<16x128xf32, #tpu.memory_space<vmem>>, vector<16x128xf32>,
    %c0_113 = arith.constant 0 : index
    %c0_114 = arith.constant 0 : index
    %262 = vector.load %arg11[%c0_113, %c0_114] : memref<16x128xf32, #tpu.memory_space<vmem>>, vector<16x128xf32>
    %263 = vector.shape_cast %253 : vector<16x1xi1> to vector<16x1xi1>
    %264 = vector.broadcast %263 : vector<16x1xi1> to vector<16x128xi1>
    %265 = arith.select %264, %231, %262 : vector<16x128xi1>, vector<16x128xf32>
    %c0_115 = arith.constant 0 : index
    %c0_116 = arith.constant 0 : index
    %266 = vector.load %arg11[%c0_115, %c0_116] : memref<16x128xf32, #tpu.memory_space<vmem>>, vector<16x128xf32>
    tpu.vector_store %arg11[%c0_115, %c0_116], %265 {strides = array<i32>} : memref<16x128xf32, #tpu.memory_space<vmem>>, vector<16x128xf32>,
    %c0_117 = arith.constant 0 : index
    %c0_118 = arith.constant 0 : index
    %267 = vector.load %arg12[%c0_117, %c0_118] : memref<16x128xf32, #tpu.memory_space<vmem>>, vector<16x128xf32>
    %268 = vector.shape_cast %256 : vector<16x1xi1> to vector<16x1xi1>
    %269 = vector.broadcast %268 : vector<16x1xi1> to vector<16x128xi1>
    %270 = arith.select %269, %250, %267 : vector<16x128xi1>, vector<16x128xf32>
    %c0_119 = arith.constant 0 : index
    %c0_120 = arith.constant 0 : index
    %271 = vector.load %arg12[%c0_119, %c0_120] : memref<16x128xf32, #tpu.memory_space<vmem>>, vector<16x128xf32>
    tpu.vector_store %arg12[%c0_119, %c0_120], %270 {strides = array<i32>} : memref<16x128xf32, #tpu.memory_space<vmem>>, vector<16x128xf32>,
    %c0_121 = arith.constant 0 : index
    %c0_122 = arith.constant 0 : index
    %272 = vector.load %arg13[%c0_121, %c0_122] : memref<16x128xf32, #tpu.memory_space<vmem>>, vector<16x128xf32>
    %273 = vector.shape_cast %256 : vector<16x1xi1> to vector<16x1xi1>
    %274 = vector.broadcast %273 : vector<16x1xi1> to vector<16x128xi1>
    %275 = arith.select %274, %248, %272 : vector<16x128xi1>, vector<16x128xf32>
    %c0_123 = arith.constant 0 : index
    %c0_124 = arith.constant 0 : index
    %276 = vector.load %arg13[%c0_123, %c0_124] : memref<16x128xf32, #tpu.memory_space<vmem>>, vector<16x128xf32>
    tpu.vector_store %arg13[%c0_123, %c0_124], %275 {strides = array<i32>} : memref<16x128xf32, #tpu.memory_space<vmem>>, vector<16x128xf32>,
    %cst_125 = arith.constant 0.000000e+00 : f32
    %277 = vector.shape_cast %253 : vector<16x1xi1> to vector<16x1xi1>
    %278 = vector.broadcast %277 : vector<16x1xi1> to vector<16x128xi1>
    %279 = vector.broadcast %cst_125 : f32 to vector<16x128xf32>
    %280 = arith.select %278, %233, %279 : vector<16x128xi1>, vector<16x128xf32>
    %281 = arith.truncf %280 : vector<16x128xf32> to vector<16x128xbf16>
    %c2_126 = arith.constant 2 : index
    %c0_127 = arith.constant 0 : index
    %c0_128 = arith.constant 0 : index
    %282 = vector.load %arg8[%c2_126, %c0_127, %c0_128] : memref<8x16x128xbf16, #tpu.memory_space<vmem>>, vector<1x16x128xbf16>
    %283 = vector.shape_cast %282 : vector<1x16x128xbf16> to vector<16x128xbf16>
    %284 = vector.shape_cast %281 : vector<16x128xbf16> to vector<1x16x128xbf16>
    tpu.vector_store %arg8[%c2_126, %c0_127, %c0_128], %284 {strides = array<i32>} : memref<8x16x128xbf16, #tpu.memory_space<vmem>>, vector<1x16x128xbf16>,
    %cst_129 = arith.constant 0.000000e+00 : f32
    %285 = vector.shape_cast %256 : vector<16x1xi1> to vector<16x1xi1>
    %286 = vector.broadcast %285 : vector<16x1xi1> to vector<16x128xi1>
    %287 = vector.broadcast %cst_129 : f32 to vector<16x128xf32>
    %288 = arith.select %286, %250, %287 : vector<16x128xi1>, vector<16x128xf32>
    %289 = arith.truncf %288 : vector<16x128xf32> to vector<16x128xbf16>
    %c5_130 = arith.constant 5 : index
    %c0_131 = arith.constant 0 : index
    %c0_132 = arith.constant 0 : index
    %290 = vector.load %arg9[%c5_130, %c0_131, %c0_132] : memref<8x16x128xbf16, #tpu.memory_space<vmem>>, vector<1x16x128xbf16>
    %291 = vector.shape_cast %290 : vector<1x16x128xbf16> to vector<16x128xbf16>
    %292 = vector.shape_cast %289 : vector<16x128xbf16> to vector<1x16x128xbf16>
    tpu.vector_store %arg9[%c5_130, %c0_131, %c0_132], %292 {strides = array<i32>} : memref<8x16x128xbf16, #tpu.memory_space<vmem>>, vector<1x16x128xbf16>,
    %c3 = arith.constant 3 : index
    %c0_133 = arith.constant 0 : index
    %c0_134 = arith.constant 0 : index
    %293 = vector.load %arg2[%c3, %c0_133, %c0_134] : memref<8x16x512xbf16, #tpu.memory_space<vmem>>, vector<1x16x512xbf16>
    %294 = vector.shape_cast %293 : vector<1x16x512xbf16> to vector<16x512xbf16>
    %295 = arith.extf %294 : vector<16x512xbf16> to vector<16x512xf32>
    %296 = vector.broadcast %6 : vector<1x512xf32> to vector<16x512xf32>
    %297 = arith.addf %295, %296 : vector<16x512xf32>
    %c0_135 = arith.constant 0 : index
    %c0_136 = arith.constant 0 : index
    %298 = vector.load %arg10[%c0_135, %c0_136] : memref<16x128xf32, #tpu.memory_space<vmem>>, vector<16x128xf32>
    %299 = arith.truncf %298 : vector<16x128xf32> to vector<16x128xbf16>
    %cst_137 = arith.constant dense<0.000000e+00> : vector<16x512xf32>
    %300 = tpu.matmul %299, %4, %cst_137 {dimension_numbers = #tpu.dot_dimension_numbers<[1], [0], [0], [1], [0, 0, 1, 1], [], []>} : vector<16x128xbf16>, vector<128x512xbf16>, vector<16x512xf32> -> vector<16x512xf32>
    %301 = arith.addf %297, %300 : vector<16x512xf32>
    %c4 = arith.constant 4 : index
    %c0_138 = arith.constant 0 : index
    %c0_139 = arith.constant 0 : index
    %302 = vector.load %arg3[%c4, %c0_138, %c0_139] : memref<8x16x512xbf16, #tpu.memory_space<vmem>>, vector<1x16x512xbf16>
    %303 = vector.shape_cast %302 : vector<1x16x512xbf16> to vector<16x512xbf16>
    %304 = arith.extf %303 : vector<16x512xbf16> to vector<16x512xf32>
    %305 = vector.broadcast %7 : vector<1x512xf32> to vector<16x512xf32>
    %306 = arith.addf %304, %305 : vector<16x512xf32>
    %c0_140 = arith.constant 0 : index
    %c0_141 = arith.constant 0 : index
    %307 = vector.load %arg12[%c0_140, %c0_141] : memref<16x128xf32, #tpu.memory_space<vmem>>, vector<16x128xf32>
    %308 = arith.truncf %307 : vector<16x128xf32> to vector<16x128xbf16>
    %cst_142 = arith.constant dense<0.000000e+00> : vector<16x512xf32>
    %309 = tpu.matmul %308, %5, %cst_142 {dimension_numbers = #tpu.dot_dimension_numbers<[1], [0], [0], [1], [0, 0, 1, 1], [], []>} : vector<16x128xbf16>, vector<128x512xbf16>, vector<16x512xf32> -> vector<16x512xf32>
    %310 = arith.addf %306, %309 : vector<16x512xf32>
    %c0_143 = arith.constant 0 : index
    %c0_144 = arith.constant 0 : index
    %311 = vector.load %arg11[%c0_143, %c0_144] : memref<16x128xf32, #tpu.memory_space<vmem>>, vector<16x128xf32>
    %312 = vector.extract_strided_slice %301 {offsets = [0, 0], sizes = [16, 384], strides = [1, 1]} : vector<16x512xf32> to vector<16x384xf32>
    %313 = arith.negf %312 : vector<16x384xf32>
    %314 = math.exp %313 : vector<16x384xf32>
    %cst_145 = arith.constant 1.000000e+00 : f32
    %315 = vector.broadcast %cst_145 : f32 to vector<16x384xf32>
    %316 = arith.addf %315, %314 : vector<16x384xf32>
    %317 = arith.divf %315, %316 : vector<16x384xf32>
    %318 = vector.extract_strided_slice %317 {offsets = [0, 0], sizes = [16, 128], strides = [1, 1]} : vector<16x384xf32> to vector<16x128xf32>
    %319 = vector.extract_strided_slice %317 {offsets = [0, 128], sizes = [16, 128], strides = [1, 1]} : vector<16x384xf32> to vector<16x128xf32>
    %320 = vector.extract_strided_slice %317 {offsets = [0, 256], sizes = [16, 128], strides = [1, 1]} : vector<16x384xf32> to vector<16x128xf32>
    %321 = vector.extract_strided_slice %301 {offsets = [0, 384], sizes = [16, 128], strides = [1, 1]} : vector<16x512xf32> to vector<16x128xf32>
    %322 = math.tanh %321 : vector<16x128xf32>
    %323 = arith.mulf %319, %311 : vector<16x128xf32>
    %324 = arith.mulf %318, %322 : vector<16x128xf32>
    %325 = arith.addf %323, %324 : vector<16x128xf32>
    %326 = math.tanh %325 : vector<16x128xf32>
    %327 = arith.mulf %320, %326 : vector<16x128xf32>
    %c0_146 = arith.constant 0 : index
    %c0_147 = arith.constant 0 : index
    %328 = vector.load %arg13[%c0_146, %c0_147] : memref<16x128xf32, #tpu.memory_space<vmem>>, vector<16x128xf32>
    %329 = vector.extract_strided_slice %310 {offsets = [0, 0], sizes = [16, 384], strides = [1, 1]} : vector<16x512xf32> to vector<16x384xf32>
    %330 = arith.negf %329 : vector<16x384xf32>
    %331 = math.exp %330 : vector<16x384xf32>
    %cst_148 = arith.constant 1.000000e+00 : f32
    %332 = vector.broadcast %cst_148 : f32 to vector<16x384xf32>
    %333 = arith.addf %332, %331 : vector<16x384xf32>
    %334 = arith.divf %332, %333 : vector<16x384xf32>
    %335 = vector.extract_strided_slice %334 {offsets = [0, 0], sizes = [16, 128], strides = [1, 1]} : vector<16x384xf32> to vector<16x128xf32>
    %336 = vector.extract_strided_slice %334 {offsets = [0, 128], sizes = [16, 128], strides = [1, 1]} : vector<16x384xf32> to vector<16x128xf32>
    %337 = vector.extract_strided_slice %334 {offsets = [0, 256], sizes = [16, 128], strides = [1, 1]} : vector<16x384xf32> to vector<16x128xf32>
    %338 = vector.extract_strided_slice %310 {offsets = [0, 384], sizes = [16, 128], strides = [1, 1]} : vector<16x512xf32> to vector<16x128xf32>
    %339 = math.tanh %338 : vector<16x128xf32>
    %340 = arith.mulf %336, %328 : vector<16x128xf32>
    %341 = arith.mulf %335, %339 : vector<16x128xf32>
    %342 = arith.addf %340, %341 : vector<16x128xf32>
    %343 = math.tanh %342 : vector<16x128xf32>
    %344 = arith.mulf %337, %343 : vector<16x128xf32>
    %c3_i32 = arith.constant 3 : i32
    %345 = arith.addi %8, %c3_i32 : i32
    %346 = vector.broadcast %345 : i32 to vector<16x1xi32>
    %347 = arith.cmpi slt, %346, %3 : vector<16x1xi32>
    %c4_i32 = arith.constant 4 : i32
    %348 = arith.addi %10, %c4_i32 : i32
    %349 = vector.broadcast %348 : i32 to vector<16x1xi32>
    %350 = arith.cmpi slt, %349, %3 : vector<16x1xi32>
    %c0_149 = arith.constant 0 : index
    %c0_150 = arith.constant 0 : index
    %351 = vector.load %arg10[%c0_149, %c0_150] : memref<16x128xf32, #tpu.memory_space<vmem>>, vector<16x128xf32>
    %352 = vector.shape_cast %347 : vector<16x1xi1> to vector<16x1xi1>
    %353 = vector.broadcast %352 : vector<16x1xi1> to vector<16x128xi1>
    %354 = arith.select %353, %327, %351 : vector<16x128xi1>, vector<16x128xf32>
    %c0_151 = arith.constant 0 : index
    %c0_152 = arith.constant 0 : index
    %355 = vector.load %arg10[%c0_151, %c0_152] : memref<16x128xf32, #tpu.memory_space<vmem>>, vector<16x128xf32>
    tpu.vector_store %arg10[%c0_151, %c0_152], %354 {strides = array<i32>} : memref<16x128xf32, #tpu.memory_space<vmem>>, vector<16x128xf32>,
    %c0_153 = arith.constant 0 : index
    %c0_154 = arith.constant 0 : index
    %356 = vector.load %arg11[%c0_153, %c0_154] : memref<16x128xf32, #tpu.memory_space<vmem>>, vector<16x128xf32>
    %357 = vector.shape_cast %347 : vector<16x1xi1> to vector<16x1xi1>
    %358 = vector.broadcast %357 : vector<16x1xi1> to vector<16x128xi1>
    %359 = arith.select %358, %325, %356 : vector<16x128xi1>, vector<16x128xf32>
    %c0_155 = arith.constant 0 : index
    %c0_156 = arith.constant 0 : index
    %360 = vector.load %arg11[%c0_155, %c0_156] : memref<16x128xf32, #tpu.memory_space<vmem>>, vector<16x128xf32>
    tpu.vector_store %arg11[%c0_155, %c0_156], %359 {strides = array<i32>} : memref<16x128xf32, #tpu.memory_space<vmem>>, vector<16x128xf32>,
    %c0_157 = arith.constant 0 : index
    %c0_158 = arith.constant 0 : index
    %361 = vector.load %arg12[%c0_157, %c0_158] : memref<16x128xf32, #tpu.memory_space<vmem>>, vector<16x128xf32>
    %362 = vector.shape_cast %350 : vector<16x1xi1> to vector<16x1xi1>
    %363 = vector.broadcast %362 : vector<16x1xi1> to vector<16x128xi1>
    %364 = arith.select %363, %344, %361 : vector<16x128xi1>, vector<16x128xf32>
    %c0_159 = arith.constant 0 : index
    %c0_160 = arith.constant 0 : index
    %365 = vector.load %arg12[%c0_159, %c0_160] : memref<16x128xf32, #tpu.memory_space<vmem>>, vector<16x128xf32>
    tpu.vector_store %arg12[%c0_159, %c0_160], %364 {strides = array<i32>} : memref<16x128xf32, #tpu.memory_space<vmem>>, vector<16x128xf32>,
    %c0_161 = arith.constant 0 : index
    %c0_162 = arith.constant 0 : index
    %366 = vector.load %arg13[%c0_161, %c0_162] : memref<16x128xf32, #tpu.memory_space<vmem>>, vector<16x128xf32>
    %367 = vector.shape_cast %350 : vector<16x1xi1> to vector<16x1xi1>
    %368 = vector.broadcast %367 : vector<16x1xi1> to vector<16x128xi1>
    %369 = arith.select %368, %342, %366 : vector<16x128xi1>, vector<16x128xf32>
    %c0_163 = arith.constant 0 : index
    %c0_164 = arith.constant 0 : index
    %370 = vector.load %arg13[%c0_163, %c0_164] : memref<16x128xf32, #tpu.memory_space<vmem>>, vector<16x128xf32>
    tpu.vector_store %arg13[%c0_163, %c0_164], %369 {strides = array<i32>} : memref<16x128xf32, #tpu.memory_space<vmem>>, vector<16x128xf32>,
    %cst_165 = arith.constant 0.000000e+00 : f32
    %371 = vector.shape_cast %347 : vector<16x1xi1> to vector<16x1xi1>
    %372 = vector.broadcast %371 : vector<16x1xi1> to vector<16x128xi1>
    %373 = vector.broadcast %cst_165 : f32 to vector<16x128xf32>
    %374 = arith.select %372, %327, %373 : vector<16x128xi1>, vector<16x128xf32>
    %375 = arith.truncf %374 : vector<16x128xf32> to vector<16x128xbf16>
    %c3_166 = arith.constant 3 : index
    %c0_167 = arith.constant 0 : index
    %c0_168 = arith.constant 0 : index
    %376 = vector.load %arg8[%c3_166, %c0_167, %c0_168] : memref<8x16x128xbf16, #tpu.memory_space<vmem>>, vector<1x16x128xbf16>
    %377 = vector.shape_cast %376 : vector<1x16x128xbf16> to vector<16x128xbf16>
    %378 = vector.shape_cast %375 : vector<16x128xbf16> to vector<1x16x128xbf16>
    tpu.vector_store %arg8[%c3_166, %c0_167, %c0_168], %378 {strides = array<i32>} : memref<8x16x128xbf16, #tpu.memory_space<vmem>>, vector<1x16x128xbf16>,
    %cst_169 = arith.constant 0.000000e+00 : f32
    %379 = vector.shape_cast %350 : vector<16x1xi1> to vector<16x1xi1>
    %380 = vector.broadcast %379 : vector<16x1xi1> to vector<16x128xi1>
    %381 = vector.broadcast %cst_169 : f32 to vector<16x128xf32>
    %382 = arith.select %380, %344, %381 : vector<16x128xi1>, vector<16x128xf32>
    %383 = arith.truncf %382 : vector<16x128xf32> to vector<16x128xbf16>
    %c4_170 = arith.constant 4 : index
    %c0_171 = arith.constant 0 : index
    %c0_172 = arith.constant 0 : index
    %384 = vector.load %arg9[%c4_170, %c0_171, %c0_172] : memref<8x16x128xbf16, #tpu.memory_space<vmem>>, vector<1x16x128xbf16>
    %385 = vector.shape_cast %384 : vector<1x16x128xbf16> to vector<16x128xbf16>
    %386 = vector.shape_cast %383 : vector<16x128xbf16> to vector<1x16x128xbf16>
    tpu.vector_store %arg9[%c4_170, %c0_171, %c0_172], %386 {strides = array<i32>} : memref<8x16x128xbf16, #tpu.memory_space<vmem>>, vector<1x16x128xbf16>,
    %c4_173 = arith.constant 4 : index
    %c0_174 = arith.constant 0 : index
    %c0_175 = arith.constant 0 : index
    %387 = vector.load %arg2[%c4_173, %c0_174, %c0_175] : memref<8x16x512xbf16, #tpu.memory_space<vmem>>, vector<1x16x512xbf16>
    %388 = vector.shape_cast %387 : vector<1x16x512xbf16> to vector<16x512xbf16>
    %389 = arith.extf %388 : vector<16x512xbf16> to vector<16x512xf32>
    %390 = vector.broadcast %6 : vector<1x512xf32> to vector<16x512xf32>
    %391 = arith.addf %389, %390 : vector<16x512xf32>
    %c0_176 = arith.constant 0 : index
    %c0_177 = arith.constant 0 : index
    %392 = vector.load %arg10[%c0_176, %c0_177] : memref<16x128xf32, #tpu.memory_space<vmem>>, vector<16x128xf32>
    %393 = arith.truncf %392 : vector<16x128xf32> to vector<16x128xbf16>
    %cst_178 = arith.constant dense<0.000000e+00> : vector<16x512xf32>
    %394 = tpu.matmul %393, %4, %cst_178 {dimension_numbers = #tpu.dot_dimension_numbers<[1], [0], [0], [1], [0, 0, 1, 1], [], []>} : vector<16x128xbf16>, vector<128x512xbf16>, vector<16x512xf32> -> vector<16x512xf32>
    %395 = arith.addf %391, %394 : vector<16x512xf32>
    %c3_179 = arith.constant 3 : index
    %c0_180 = arith.constant 0 : index
    %c0_181 = arith.constant 0 : index
    %396 = vector.load %arg3[%c3_179, %c0_180, %c0_181] : memref<8x16x512xbf16, #tpu.memory_space<vmem>>, vector<1x16x512xbf16>
    %397 = vector.shape_cast %396 : vector<1x16x512xbf16> to vector<16x512xbf16>
    %398 = arith.extf %397 : vector<16x512xbf16> to vector<16x512xf32>
    %399 = vector.broadcast %7 : vector<1x512xf32> to vector<16x512xf32>
    %400 = arith.addf %398, %399 : vector<16x512xf32>
    %c0_182 = arith.constant 0 : index
    %c0_183 = arith.constant 0 : index
    %401 = vector.load %arg12[%c0_182, %c0_183] : memref<16x128xf32, #tpu.memory_space<vmem>>, vector<16x128xf32>
    %402 = arith.truncf %401 : vector<16x128xf32> to vector<16x128xbf16>
    %cst_184 = arith.constant dense<0.000000e+00> : vector<16x512xf32>
    %403 = tpu.matmul %402, %5, %cst_184 {dimension_numbers = #tpu.dot_dimension_numbers<[1], [0], [0], [1], [0, 0, 1, 1], [], []>} : vector<16x128xbf16>, vector<128x512xbf16>, vector<16x512xf32> -> vector<16x512xf32>
    %404 = arith.addf %400, %403 : vector<16x512xf32>
    %c0_185 = arith.constant 0 : index
    %c0_186 = arith.constant 0 : index
    %405 = vector.load %arg11[%c0_185, %c0_186] : memref<16x128xf32, #tpu.memory_space<vmem>>, vector<16x128xf32>
    %406 = vector.extract_strided_slice %395 {offsets = [0, 0], sizes = [16, 384], strides = [1, 1]} : vector<16x512xf32> to vector<16x384xf32>
    %407 = arith.negf %406 : vector<16x384xf32>
    %408 = math.exp %407 : vector<16x384xf32>
    %cst_187 = arith.constant 1.000000e+00 : f32
    %409 = vector.broadcast %cst_187 : f32 to vector<16x384xf32>
    %410 = arith.addf %409, %408 : vector<16x384xf32>
    %411 = arith.divf %409, %410 : vector<16x384xf32>
    %412 = vector.extract_strided_slice %411 {offsets = [0, 0], sizes = [16, 128], strides = [1, 1]} : vector<16x384xf32> to vector<16x128xf32>
    %413 = vector.extract_strided_slice %411 {offsets = [0, 128], sizes = [16, 128], strides = [1, 1]} : vector<16x384xf32> to vector<16x128xf32>
    %414 = vector.extract_strided_slice %411 {offsets = [0, 256], sizes = [16, 128], strides = [1, 1]} : vector<16x384xf32> to vector<16x128xf32>
    %415 = vector.extract_strided_slice %395 {offsets = [0, 384], sizes = [16, 128], strides = [1, 1]} : vector<16x512xf32> to vector<16x128xf32>
    %416 = math.tanh %415 : vector<16x128xf32>
    %417 = arith.mulf %413, %405 : vector<16x128xf32>
    %418 = arith.mulf %412, %416 : vector<16x128xf32>
    %419 = arith.addf %417, %418 : vector<16x128xf32>
    %420 = math.tanh %419 : vector<16x128xf32>
    %421 = arith.mulf %414, %420 : vector<16x128xf32>
    %c0_188 = arith.constant 0 : index
    %c0_189 = arith.constant 0 : index
    %422 = vector.load %arg13[%c0_188, %c0_189] : memref<16x128xf32, #tpu.memory_space<vmem>>, vector<16x128xf32>
    %423 = vector.extract_strided_slice %404 {offsets = [0, 0], sizes = [16, 384], strides = [1, 1]} : vector<16x512xf32> to vector<16x384xf32>
    %424 = arith.negf %423 : vector<16x384xf32>
    %425 = math.exp %424 : vector<16x384xf32>
    %cst_190 = arith.constant 1.000000e+00 : f32
    %426 = vector.broadcast %cst_190 : f32 to vector<16x384xf32>
    %427 = arith.addf %426, %425 : vector<16x384xf32>
    %428 = arith.divf %426, %427 : vector<16x384xf32>
    %429 = vector.extract_strided_slice %428 {offsets = [0, 0], sizes = [16, 128], strides = [1, 1]} : vector<16x384xf32> to vector<16x128xf32>
    %430 = vector.extract_strided_slice %428 {offsets = [0, 128], sizes = [16, 128], strides = [1, 1]} : vector<16x384xf32> to vector<16x128xf32>
    %431 = vector.extract_strided_slice %428 {offsets = [0, 256], sizes = [16, 128], strides = [1, 1]} : vector<16x384xf32> to vector<16x128xf32>
    %432 = vector.extract_strided_slice %404 {offsets = [0, 384], sizes = [16, 128], strides = [1, 1]} : vector<16x512xf32> to vector<16x128xf32>
    %433 = math.tanh %432 : vector<16x128xf32>
    %434 = arith.mulf %430, %422 : vector<16x128xf32>
    %435 = arith.mulf %429, %433 : vector<16x128xf32>
    %436 = arith.addf %434, %435 : vector<16x128xf32>
    %437 = math.tanh %436 : vector<16x128xf32>
    %438 = arith.mulf %431, %437 : vector<16x128xf32>
    %c4_i32_191 = arith.constant 4 : i32
    %439 = arith.addi %8, %c4_i32_191 : i32
    %440 = vector.broadcast %439 : i32 to vector<16x1xi32>
    %441 = arith.cmpi slt, %440, %3 : vector<16x1xi32>
    %c3_i32_192 = arith.constant 3 : i32
    %442 = arith.addi %10, %c3_i32_192 : i32
    %443 = vector.broadcast %442 : i32 to vector<16x1xi32>
    %444 = arith.cmpi slt, %443, %3 : vector<16x1xi32>
    %c0_193 = arith.constant 0 : index
    %c0_194 = arith.constant 0 : index
    %445 = vector.load %arg10[%c0_193, %c0_194] : memref<16x128xf32, #tpu.memory_space<vmem>>, vector<16x128xf32>
    %446 = vector.shape_cast %441 : vector<16x1xi1> to vector<16x1xi1>
    %447 = vector.broadcast %446 : vector<16x1xi1> to vector<16x128xi1>
    %448 = arith.select %447, %421, %445 : vector<16x128xi1>, vector<16x128xf32>
    %c0_195 = arith.constant 0 : index
    %c0_196 = arith.constant 0 : index
    %449 = vector.load %arg10[%c0_195, %c0_196] : memref<16x128xf32, #tpu.memory_space<vmem>>, vector<16x128xf32>
    tpu.vector_store %arg10[%c0_195, %c0_196], %448 {strides = array<i32>} : memref<16x128xf32, #tpu.memory_space<vmem>>, vector<16x128xf32>,
    %c0_197 = arith.constant 0 : index
    %c0_198 = arith.constant 0 : index
    %450 = vector.load %arg11[%c0_197, %c0_198] : memref<16x128xf32, #tpu.memory_space<vmem>>, vector<16x128xf32>
    %451 = vector.shape_cast %441 : vector<16x1xi1> to vector<16x1xi1>
    %452 = vector.broadcast %451 : vector<16x1xi1> to vector<16x128xi1>
    %453 = arith.select %452, %419, %450 : vector<16x128xi1>, vector<16x128xf32>
    %c0_199 = arith.constant 0 : index
    %c0_200 = arith.constant 0 : index
    %454 = vector.load %arg11[%c0_199, %c0_200] : memref<16x128xf32, #tpu.memory_space<vmem>>, vector<16x128xf32>
    tpu.vector_store %arg11[%c0_199, %c0_200], %453 {strides = array<i32>} : memref<16x128xf32, #tpu.memory_space<vmem>>, vector<16x128xf32>,
    %c0_201 = arith.constant 0 : index
    %c0_202 = arith.constant 0 : index
    %455 = vector.load %arg12[%c0_201, %c0_202] : memref<16x128xf32, #tpu.memory_space<vmem>>, vector<16x128xf32>
    %456 = vector.shape_cast %444 : vector<16x1xi1> to vector<16x1xi1>
    %457 = vector.broadcast %456 : vector<16x1xi1> to vector<16x128xi1>
    %458 = arith.select %457, %438, %455 : vector<16x128xi1>, vector<16x128xf32>
    %c0_203 = arith.constant 0 : index
    %c0_204 = arith.constant 0 : index
    %459 = vector.load %arg12[%c0_203, %c0_204] : memref<16x128xf32, #tpu.memory_space<vmem>>, vector<16x128xf32>
    tpu.vector_store %arg12[%c0_203, %c0_204], %458 {strides = array<i32>} : memref<16x128xf32, #tpu.memory_space<vmem>>, vector<16x128xf32>,
    %c0_205 = arith.constant 0 : index
    %c0_206 = arith.constant 0 : index
    %460 = vector.load %arg13[%c0_205, %c0_206] : memref<16x128xf32, #tpu.memory_space<vmem>>, vector<16x128xf32>
    %461 = vector.shape_cast %444 : vector<16x1xi1> to vector<16x1xi1>
    %462 = vector.broadcast %461 : vector<16x1xi1> to vector<16x128xi1>
    %463 = arith.select %462, %436, %460 : vector<16x128xi1>, vector<16x128xf32>
    %c0_207 = arith.constant 0 : index
    %c0_208 = arith.constant 0 : index
    %464 = vector.load %arg13[%c0_207, %c0_208] : memref<16x128xf32, #tpu.memory_space<vmem>>, vector<16x128xf32>
    tpu.vector_store %arg13[%c0_207, %c0_208], %463 {strides = array<i32>} : memref<16x128xf32, #tpu.memory_space<vmem>>, vector<16x128xf32>,
    %cst_209 = arith.constant 0.000000e+00 : f32
    %465 = vector.shape_cast %441 : vector<16x1xi1> to vector<16x1xi1>
    %466 = vector.broadcast %465 : vector<16x1xi1> to vector<16x128xi1>
    %467 = vector.broadcast %cst_209 : f32 to vector<16x128xf32>
    %468 = arith.select %466, %421, %467 : vector<16x128xi1>, vector<16x128xf32>
    %469 = arith.truncf %468 : vector<16x128xf32> to vector<16x128xbf16>
    %c4_210 = arith.constant 4 : index
    %c0_211 = arith.constant 0 : index
    %c0_212 = arith.constant 0 : index
    %470 = vector.load %arg8[%c4_210, %c0_211, %c0_212] : memref<8x16x128xbf16, #tpu.memory_space<vmem>>, vector<1x16x128xbf16>
    %471 = vector.shape_cast %470 : vector<1x16x128xbf16> to vector<16x128xbf16>
    %472 = vector.shape_cast %469 : vector<16x128xbf16> to vector<1x16x128xbf16>
    tpu.vector_store %arg8[%c4_210, %c0_211, %c0_212], %472 {strides = array<i32>} : memref<8x16x128xbf16, #tpu.memory_space<vmem>>, vector<1x16x128xbf16>,
    %cst_213 = arith.constant 0.000000e+00 : f32
    %473 = vector.shape_cast %444 : vector<16x1xi1> to vector<16x1xi1>
    %474 = vector.broadcast %473 : vector<16x1xi1> to vector<16x128xi1>
    %475 = vector.broadcast %cst_213 : f32 to vector<16x128xf32>
    %476 = arith.select %474, %438, %475 : vector<16x128xi1>, vector<16x128xf32>
    %477 = arith.truncf %476 : vector<16x128xf32> to vector<16x128xbf16>
    %c3_214 = arith.constant 3 : index
    %c0_215 = arith.constant 0 : index
    %c0_216 = arith.constant 0 : index
    %478 = vector.load %arg9[%c3_214, %c0_215, %c0_216] : memref<8x16x128xbf16, #tpu.memory_space<vmem>>, vector<1x16x128xbf16>
    %479 = vector.shape_cast %478 : vector<1x16x128xbf16> to vector<16x128xbf16>
    %480 = vector.shape_cast %477 : vector<16x128xbf16> to vector<1x16x128xbf16>
    tpu.vector_store %arg9[%c3_214, %c0_215, %c0_216], %480 {strides = array<i32>} : memref<8x16x128xbf16, #tpu.memory_space<vmem>>, vector<1x16x128xbf16>,
    %c5_217 = arith.constant 5 : index
    %c0_218 = arith.constant 0 : index
    %c0_219 = arith.constant 0 : index
    %481 = vector.load %arg2[%c5_217, %c0_218, %c0_219] : memref<8x16x512xbf16, #tpu.memory_space<vmem>>, vector<1x16x512xbf16>
    %482 = vector.shape_cast %481 : vector<1x16x512xbf16> to vector<16x512xbf16>
    %483 = arith.extf %482 : vector<16x512xbf16> to vector<16x512xf32>
    %484 = vector.broadcast %6 : vector<1x512xf32> to vector<16x512xf32>
    %485 = arith.addf %483, %484 : vector<16x512xf32>
    %c0_220 = arith.constant 0 : index
    %c0_221 = arith.constant 0 : index
    %486 = vector.load %arg10[%c0_220, %c0_221] : memref<16x128xf32, #tpu.memory_space<vmem>>, vector<16x128xf32>
    %487 = arith.truncf %486 : vector<16x128xf32> to vector<16x128xbf16>
    %cst_222 = arith.constant dense<0.000000e+00> : vector<16x512xf32>
    %488 = tpu.matmul %487, %4, %cst_222 {dimension_numbers = #tpu.dot_dimension_numbers<[1], [0], [0], [1], [0, 0, 1, 1], [], []>} : vector<16x128xbf16>, vector<128x512xbf16>, vector<16x512xf32> -> vector<16x512xf32>
    %489 = arith.addf %485, %488 : vector<16x512xf32>
    %c2_223 = arith.constant 2 : index
    %c0_224 = arith.constant 0 : index
    %c0_225 = arith.constant 0 : index
    %490 = vector.load %arg3[%c2_223, %c0_224, %c0_225] : memref<8x16x512xbf16, #tpu.memory_space<vmem>>, vector<1x16x512xbf16>
    %491 = vector.shape_cast %490 : vector<1x16x512xbf16> to vector<16x512xbf16>
    %492 = arith.extf %491 : vector<16x512xbf16> to vector<16x512xf32>
    %493 = vector.broadcast %7 : vector<1x512xf32> to vector<16x512xf32>
    %494 = arith.addf %492, %493 : vector<16x512xf32>
    %c0_226 = arith.constant 0 : index
    %c0_227 = arith.constant 0 : index
    %495 = vector.load %arg12[%c0_226, %c0_227] : memref<16x128xf32, #tpu.memory_space<vmem>>, vector<16x128xf32>
    %496 = arith.truncf %495 : vector<16x128xf32> to vector<16x128xbf16>
    %cst_228 = arith.constant dense<0.000000e+00> : vector<16x512xf32>
    %497 = tpu.matmul %496, %5, %cst_228 {dimension_numbers = #tpu.dot_dimension_numbers<[1], [0], [0], [1], [0, 0, 1, 1], [], []>} : vector<16x128xbf16>, vector<128x512xbf16>, vector<16x512xf32> -> vector<16x512xf32>
    %498 = arith.addf %494, %497 : vector<16x512xf32>
    %c0_229 = arith.constant 0 : index
    %c0_230 = arith.constant 0 : index
    %499 = vector.load %arg11[%c0_229, %c0_230] : memref<16x128xf32, #tpu.memory_space<vmem>>, vector<16x128xf32>
    %500 = vector.extract_strided_slice %489 {offsets = [0, 0], sizes = [16, 384], strides = [1, 1]} : vector<16x512xf32> to vector<16x384xf32>
    %501 = arith.negf %500 : vector<16x384xf32>
    %502 = math.exp %501 : vector<16x384xf32>
    %cst_231 = arith.constant 1.000000e+00 : f32
    %503 = vector.broadcast %cst_231 : f32 to vector<16x384xf32>
    %504 = arith.addf %503, %502 : vector<16x384xf32>
    %505 = arith.divf %503, %504 : vector<16x384xf32>
    %506 = vector.extract_strided_slice %505 {offsets = [0, 0], sizes = [16, 128], strides = [1, 1]} : vector<16x384xf32> to vector<16x128xf32>
    %507 = vector.extract_strided_slice %505 {offsets = [0, 128], sizes = [16, 128], strides = [1, 1]} : vector<16x384xf32> to vector<16x128xf32>
    %508 = vector.extract_strided_slice %505 {offsets = [0, 256], sizes = [16, 128], strides = [1, 1]} : vector<16x384xf32> to vector<16x128xf32>
    %509 = vector.extract_strided_slice %489 {offsets = [0, 384], sizes = [16, 128], strides = [1, 1]} : vector<16x512xf32> to vector<16x128xf32>
    %510 = math.tanh %509 : vector<16x128xf32>
    %511 = arith.mulf %507, %499 : vector<16x128xf32>
    %512 = arith.mulf %506, %510 : vector<16x128xf32>
    %513 = arith.addf %511, %512 : vector<16x128xf32>
    %514 = math.tanh %513 : vector<16x128xf32>
    %515 = arith.mulf %508, %514 : vector<16x128xf32>
    %c0_232 = arith.constant 0 : index
    %c0_233 = arith.constant 0 : index
    %516 = vector.load %arg13[%c0_232, %c0_233] : memref<16x128xf32, #tpu.memory_space<vmem>>, vector<16x128xf32>
    %517 = vector.extract_strided_slice %498 {offsets = [0, 0], sizes = [16, 384], strides = [1, 1]} : vector<16x512xf32> to vector<16x384xf32>
    %518 = arith.negf %517 : vector<16x384xf32>
    %519 = math.exp %518 : vector<16x384xf32>
    %cst_234 = arith.constant 1.000000e+00 : f32
    %520 = vector.broadcast %cst_234 : f32 to vector<16x384xf32>
    %521 = arith.addf %520, %519 : vector<16x384xf32>
    %522 = arith.divf %520, %521 : vector<16x384xf32>
    %523 = vector.extract_strided_slice %522 {offsets = [0, 0], sizes = [16, 128], strides = [1, 1]} : vector<16x384xf32> to vector<16x128xf32>
    %524 = vector.extract_strided_slice %522 {offsets = [0, 128], sizes = [16, 128], strides = [1, 1]} : vector<16x384xf32> to vector<16x128xf32>
    %525 = vector.extract_strided_slice %522 {offsets = [0, 256], sizes = [16, 128], strides = [1, 1]} : vector<16x384xf32> to vector<16x128xf32>
    %526 = vector.extract_strided_slice %498 {offsets = [0, 384], sizes = [16, 128], strides = [1, 1]} : vector<16x512xf32> to vector<16x128xf32>
    %527 = math.tanh %526 : vector<16x128xf32>
    %528 = arith.mulf %524, %516 : vector<16x128xf32>
    %529 = arith.mulf %523, %527 : vector<16x128xf32>
    %530 = arith.addf %528, %529 : vector<16x128xf32>
    %531 = math.tanh %530 : vector<16x128xf32>
    %532 = arith.mulf %525, %531 : vector<16x128xf32>
    %c5_i32_235 = arith.constant 5 : i32
    %533 = arith.addi %8, %c5_i32_235 : i32
    %534 = vector.broadcast %533 : i32 to vector<16x1xi32>
    %535 = arith.cmpi slt, %534, %3 : vector<16x1xi32>
    %c2_i32_236 = arith.constant 2 : i32
    %536 = arith.addi %10, %c2_i32_236 : i32
    %537 = vector.broadcast %536 : i32 to vector<16x1xi32>
    %538 = arith.cmpi slt, %537, %3 : vector<16x1xi32>
    %c0_237 = arith.constant 0 : index
    %c0_238 = arith.constant 0 : index
    %539 = vector.load %arg10[%c0_237, %c0_238] : memref<16x128xf32, #tpu.memory_space<vmem>>, vector<16x128xf32>
    %540 = vector.shape_cast %535 : vector<16x1xi1> to vector<16x1xi1>
    %541 = vector.broadcast %540 : vector<16x1xi1> to vector<16x128xi1>
    %542 = arith.select %541, %515, %539 : vector<16x128xi1>, vector<16x128xf32>
    %c0_239 = arith.constant 0 : index
    %c0_240 = arith.constant 0 : index
    %543 = vector.load %arg10[%c0_239, %c0_240] : memref<16x128xf32, #tpu.memory_space<vmem>>, vector<16x128xf32>
    tpu.vector_store %arg10[%c0_239, %c0_240], %542 {strides = array<i32>} : memref<16x128xf32, #tpu.memory_space<vmem>>, vector<16x128xf32>,
    %c0_241 = arith.constant 0 : index
    %c0_242 = arith.constant 0 : index
    %544 = vector.load %arg11[%c0_241, %c0_242] : memref<16x128xf32, #tpu.memory_space<vmem>>, vector<16x128xf32>
    %545 = vector.shape_cast %535 : vector<16x1xi1> to vector<16x1xi1>
    %546 = vector.broadcast %545 : vector<16x1xi1> to vector<16x128xi1>
    %547 = arith.select %546, %513, %544 : vector<16x128xi1>, vector<16x128xf32>
    %c0_243 = arith.constant 0 : index
    %c0_244 = arith.constant 0 : index
    %548 = vector.load %arg11[%c0_243, %c0_244] : memref<16x128xf32, #tpu.memory_space<vmem>>, vector<16x128xf32>
    tpu.vector_store %arg11[%c0_243, %c0_244], %547 {strides = array<i32>} : memref<16x128xf32, #tpu.memory_space<vmem>>, vector<16x128xf32>,
    %c0_245 = arith.constant 0 : index
    %c0_246 = arith.constant 0 : index
    %549 = vector.load %arg12[%c0_245, %c0_246] : memref<16x128xf32, #tpu.memory_space<vmem>>, vector<16x128xf32>
    %550 = vector.shape_cast %538 : vector<16x1xi1> to vector<16x1xi1>
    %551 = vector.broadcast %550 : vector<16x1xi1> to vector<16x128xi1>
    %552 = arith.select %551, %532, %549 : vector<16x128xi1>, vector<16x128xf32>
    %c0_247 = arith.constant 0 : index
    %c0_248 = arith.constant 0 : index
    %553 = vector.load %arg12[%c0_247, %c0_248] : memref<16x128xf32, #tpu.memory_space<vmem>>, vector<16x128xf32>
    tpu.vector_store %arg12[%c0_247, %c0_248], %552 {strides = array<i32>} : memref<16x128xf32, #tpu.memory_space<vmem>>, vector<16x128xf32>,
    %c0_249 = arith.constant 0 : index
    %c0_250 = arith.constant 0 : index
    %554 = vector.load %arg13[%c0_249, %c0_250] : memref<16x128xf32, #tpu.memory_space<vmem>>, vector<16x128xf32>
    %555 = vector.shape_cast %538 : vector<16x1xi1> to vector<16x1xi1>
    %556 = vector.broadcast %555 : vector<16x1xi1> to vector<16x128xi1>
    %557 = arith.select %556, %530, %554 : vector<16x128xi1>, vector<16x128xf32>
    %c0_251 = arith.constant 0 : index
    %c0_252 = arith.constant 0 : index
    %558 = vector.load %arg13[%c0_251, %c0_252] : memref<16x128xf32, #tpu.memory_space<vmem>>, vector<16x128xf32>
    tpu.vector_store %arg13[%c0_251, %c0_252], %557 {strides = array<i32>} : memref<16x128xf32, #tpu.memory_space<vmem>>, vector<16x128xf32>,
    %cst_253 = arith.constant 0.000000e+00 : f32
    %559 = vector.shape_cast %535 : vector<16x1xi1> to vector<16x1xi1>
    %560 = vector.broadcast %559 : vector<16x1xi1> to vector<16x128xi1>
    %561 = vector.broadcast %cst_253 : f32 to vector<16x128xf32>
    %562 = arith.select %560, %515, %561 : vector<16x128xi1>, vector<16x128xf32>
    %563 = arith.truncf %562 : vector<16x128xf32> to vector<16x128xbf16>
    %c5_254 = arith.constant 5 : index
    %c0_255 = arith.constant 0 : index
    %c0_256 = arith.constant 0 : index
    %564 = vector.load %arg8[%c5_254, %c0_255, %c0_256] : memref<8x16x128xbf16, #tpu.memory_space<vmem>>, vector<1x16x128xbf16>
    %565 = vector.shape_cast %564 : vector<1x16x128xbf16> to vector<16x128xbf16>
    %566 = vector.shape_cast %563 : vector<16x128xbf16> to vector<1x16x128xbf16>
    tpu.vector_store %arg8[%c5_254, %c0_255, %c0_256], %566 {strides = array<i32>} : memref<8x16x128xbf16, #tpu.memory_space<vmem>>, vector<1x16x128xbf16>,
    %cst_257 = arith.constant 0.000000e+00 : f32
    %567 = vector.shape_cast %538 : vector<16x1xi1> to vector<16x1xi1>
    %568 = vector.broadcast %567 : vector<16x1xi1> to vector<16x128xi1>
    %569 = vector.broadcast %cst_257 : f32 to vector<16x128xf32>
    %570 = arith.select %568, %532, %569 : vector<16x128xi1>, vector<16x128xf32>
    %571 = arith.truncf %570 : vector<16x128xf32> to vector<16x128xbf16>
    %c2_258 = arith.constant 2 : index
    %c0_259 = arith.constant 0 : index
    %c0_260 = arith.constant 0 : index
    %572 = vector.load %arg9[%c2_258, %c0_259, %c0_260] : memref<8x16x128xbf16, #tpu.memory_space<vmem>>, vector<1x16x128xbf16>
    %573 = vector.shape_cast %572 : vector<1x16x128xbf16> to vector<16x128xbf16>
    %574 = vector.shape_cast %571 : vector<16x128xbf16> to vector<1x16x128xbf16>
    tpu.vector_store %arg9[%c2_258, %c0_259, %c0_260], %574 {strides = array<i32>} : memref<8x16x128xbf16, #tpu.memory_space<vmem>>, vector<1x16x128xbf16>,
    %c6_261 = arith.constant 6 : index
    %c0_262 = arith.constant 0 : index
    %c0_263 = arith.constant 0 : index
    %575 = vector.load %arg2[%c6_261, %c0_262, %c0_263] : memref<8x16x512xbf16, #tpu.memory_space<vmem>>, vector<1x16x512xbf16>
    %576 = vector.shape_cast %575 : vector<1x16x512xbf16> to vector<16x512xbf16>
    %577 = arith.extf %576 : vector<16x512xbf16> to vector<16x512xf32>
    %578 = vector.broadcast %6 : vector<1x512xf32> to vector<16x512xf32>
    %579 = arith.addf %577, %578 : vector<16x512xf32>
    %c0_264 = arith.constant 0 : index
    %c0_265 = arith.constant 0 : index
    %580 = vector.load %arg10[%c0_264, %c0_265] : memref<16x128xf32, #tpu.memory_space<vmem>>, vector<16x128xf32>
    %581 = arith.truncf %580 : vector<16x128xf32> to vector<16x128xbf16>
    %cst_266 = arith.constant dense<0.000000e+00> : vector<16x512xf32>
    %582 = tpu.matmul %581, %4, %cst_266 {dimension_numbers = #tpu.dot_dimension_numbers<[1], [0], [0], [1], [0, 0, 1, 1], [], []>} : vector<16x128xbf16>, vector<128x512xbf16>, vector<16x512xf32> -> vector<16x512xf32>
    %583 = arith.addf %579, %582 : vector<16x512xf32>
    %c1_267 = arith.constant 1 : index
    %c0_268 = arith.constant 0 : index
    %c0_269 = arith.constant 0 : index
    %584 = vector.load %arg3[%c1_267, %c0_268, %c0_269] : memref<8x16x512xbf16, #tpu.memory_space<vmem>>, vector<1x16x512xbf16>
    %585 = vector.shape_cast %584 : vector<1x16x512xbf16> to vector<16x512xbf16>
    %586 = arith.extf %585 : vector<16x512xbf16> to vector<16x512xf32>
    %587 = vector.broadcast %7 : vector<1x512xf32> to vector<16x512xf32>
    %588 = arith.addf %586, %587 : vector<16x512xf32>
    %c0_270 = arith.constant 0 : index
    %c0_271 = arith.constant 0 : index
    %589 = vector.load %arg12[%c0_270, %c0_271] : memref<16x128xf32, #tpu.memory_space<vmem>>, vector<16x128xf32>
    %590 = arith.truncf %589 : vector<16x128xf32> to vector<16x128xbf16>
    %cst_272 = arith.constant dense<0.000000e+00> : vector<16x512xf32>
    %591 = tpu.matmul %590, %5, %cst_272 {dimension_numbers = #tpu.dot_dimension_numbers<[1], [0], [0], [1], [0, 0, 1, 1], [], []>} : vector<16x128xbf16>, vector<128x512xbf16>, vector<16x512xf32> -> vector<16x512xf32>
    %592 = arith.addf %588, %591 : vector<16x512xf32>
    %c0_273 = arith.constant 0 : index
    %c0_274 = arith.constant 0 : index
    %593 = vector.load %arg11[%c0_273, %c0_274] : memref<16x128xf32, #tpu.memory_space<vmem>>, vector<16x128xf32>
    %594 = vector.extract_strided_slice %583 {offsets = [0, 0], sizes = [16, 384], strides = [1, 1]} : vector<16x512xf32> to vector<16x384xf32>
    %595 = arith.negf %594 : vector<16x384xf32>
    %596 = math.exp %595 : vector<16x384xf32>
    %cst_275 = arith.constant 1.000000e+00 : f32
    %597 = vector.broadcast %cst_275 : f32 to vector<16x384xf32>
    %598 = arith.addf %597, %596 : vector<16x384xf32>
    %599 = arith.divf %597, %598 : vector<16x384xf32>
    %600 = vector.extract_strided_slice %599 {offsets = [0, 0], sizes = [16, 128], strides = [1, 1]} : vector<16x384xf32> to vector<16x128xf32>
    %601 = vector.extract_strided_slice %599 {offsets = [0, 128], sizes = [16, 128], strides = [1, 1]} : vector<16x384xf32> to vector<16x128xf32>
    %602 = vector.extract_strided_slice %599 {offsets = [0, 256], sizes = [16, 128], strides = [1, 1]} : vector<16x384xf32> to vector<16x128xf32>
    %603 = vector.extract_strided_slice %583 {offsets = [0, 384], sizes = [16, 128], strides = [1, 1]} : vector<16x512xf32> to vector<16x128xf32>
    %604 = math.tanh %603 : vector<16x128xf32>
    %605 = arith.mulf %601, %593 : vector<16x128xf32>
    %606 = arith.mulf %600, %604 : vector<16x128xf32>
    %607 = arith.addf %605, %606 : vector<16x128xf32>
    %608 = math.tanh %607 : vector<16x128xf32>
    %609 = arith.mulf %602, %608 : vector<16x128xf32>
    %c0_276 = arith.constant 0 : index
    %c0_277 = arith.constant 0 : index
    %610 = vector.load %arg13[%c0_276, %c0_277] : memref<16x128xf32, #tpu.memory_space<vmem>>, vector<16x128xf32>
    %611 = vector.extract_strided_slice %592 {offsets = [0, 0], sizes = [16, 384], strides = [1, 1]} : vector<16x512xf32> to vector<16x384xf32>
    %612 = arith.negf %611 : vector<16x384xf32>
    %613 = math.exp %612 : vector<16x384xf32>
    %cst_278 = arith.constant 1.000000e+00 : f32
    %614 = vector.broadcast %cst_278 : f32 to vector<16x384xf32>
    %615 = arith.addf %614, %613 : vector<16x384xf32>
    %616 = arith.divf %614, %615 : vector<16x384xf32>
    %617 = vector.extract_strided_slice %616 {offsets = [0, 0], sizes = [16, 128], strides = [1, 1]} : vector<16x384xf32> to vector<16x128xf32>
    %618 = vector.extract_strided_slice %616 {offsets = [0, 128], sizes = [16, 128], strides = [1, 1]} : vector<16x384xf32> to vector<16x128xf32>
    %619 = vector.extract_strided_slice %616 {offsets = [0, 256], sizes = [16, 128], strides = [1, 1]} : vector<16x384xf32> to vector<16x128xf32>
    %620 = vector.extract_strided_slice %592 {offsets = [0, 384], sizes = [16, 128], strides = [1, 1]} : vector<16x512xf32> to vector<16x128xf32>
    %621 = math.tanh %620 : vector<16x128xf32>
    %622 = arith.mulf %618, %610 : vector<16x128xf32>
    %623 = arith.mulf %617, %621 : vector<16x128xf32>
    %624 = arith.addf %622, %623 : vector<16x128xf32>
    %625 = math.tanh %624 : vector<16x128xf32>
    %626 = arith.mulf %619, %625 : vector<16x128xf32>
    %c6_i32_279 = arith.constant 6 : i32
    %627 = arith.addi %8, %c6_i32_279 : i32
    %628 = vector.broadcast %627 : i32 to vector<16x1xi32>
    %629 = arith.cmpi slt, %628, %3 : vector<16x1xi32>
    %c1_i32_280 = arith.constant 1 : i32
    %630 = arith.addi %10, %c1_i32_280 : i32
    %631 = vector.broadcast %630 : i32 to vector<16x1xi32>
    %632 = arith.cmpi slt, %631, %3 : vector<16x1xi32>
    %c0_281 = arith.constant 0 : index
    %c0_282 = arith.constant 0 : index
    %633 = vector.load %arg10[%c0_281, %c0_282] : memref<16x128xf32, #tpu.memory_space<vmem>>, vector<16x128xf32>
    %634 = vector.shape_cast %629 : vector<16x1xi1> to vector<16x1xi1>
    %635 = vector.broadcast %634 : vector<16x1xi1> to vector<16x128xi1>
    %636 = arith.select %635, %609, %633 : vector<16x128xi1>, vector<16x128xf32>
    %c0_283 = arith.constant 0 : index
    %c0_284 = arith.constant 0 : index
    %637 = vector.load %arg10[%c0_283, %c0_284] : memref<16x128xf32, #tpu.memory_space<vmem>>, vector<16x128xf32>
    tpu.vector_store %arg10[%c0_283, %c0_284], %636 {strides = array<i32>} : memref<16x128xf32, #tpu.memory_space<vmem>>, vector<16x128xf32>,
    %c0_285 = arith.constant 0 : index
    %c0_286 = arith.constant 0 : index
    %638 = vector.load %arg11[%c0_285, %c0_286] : memref<16x128xf32, #tpu.memory_space<vmem>>, vector<16x128xf32>
    %639 = vector.shape_cast %629 : vector<16x1xi1> to vector<16x1xi1>
    %640 = vector.broadcast %639 : vector<16x1xi1> to vector<16x128xi1>
    %641 = arith.select %640, %607, %638 : vector<16x128xi1>, vector<16x128xf32>
    %c0_287 = arith.constant 0 : index
    %c0_288 = arith.constant 0 : index
    %642 = vector.load %arg11[%c0_287, %c0_288] : memref<16x128xf32, #tpu.memory_space<vmem>>, vector<16x128xf32>
    tpu.vector_store %arg11[%c0_287, %c0_288], %641 {strides = array<i32>} : memref<16x128xf32, #tpu.memory_space<vmem>>, vector<16x128xf32>,
    %c0_289 = arith.constant 0 : index
    %c0_290 = arith.constant 0 : index
    %643 = vector.load %arg12[%c0_289, %c0_290] : memref<16x128xf32, #tpu.memory_space<vmem>>, vector<16x128xf32>
    %644 = vector.shape_cast %632 : vector<16x1xi1> to vector<16x1xi1>
    %645 = vector.broadcast %644 : vector<16x1xi1> to vector<16x128xi1>
    %646 = arith.select %645, %626, %643 : vector<16x128xi1>, vector<16x128xf32>
    %c0_291 = arith.constant 0 : index
    %c0_292 = arith.constant 0 : index
    %647 = vector.load %arg12[%c0_291, %c0_292] : memref<16x128xf32, #tpu.memory_space<vmem>>, vector<16x128xf32>
    tpu.vector_store %arg12[%c0_291, %c0_292], %646 {strides = array<i32>} : memref<16x128xf32, #tpu.memory_space<vmem>>, vector<16x128xf32>,
    %c0_293 = arith.constant 0 : index
    %c0_294 = arith.constant 0 : index
    %648 = vector.load %arg13[%c0_293, %c0_294] : memref<16x128xf32, #tpu.memory_space<vmem>>, vector<16x128xf32>
    %649 = vector.shape_cast %632 : vector<16x1xi1> to vector<16x1xi1>
    %650 = vector.broadcast %649 : vector<16x1xi1> to vector<16x128xi1>
    %651 = arith.select %650, %624, %648 : vector<16x128xi1>, vector<16x128xf32>
    %c0_295 = arith.constant 0 : index
    %c0_296 = arith.constant 0 : index
    %652 = vector.load %arg13[%c0_295, %c0_296] : memref<16x128xf32, #tpu.memory_space<vmem>>, vector<16x128xf32>
    tpu.vector_store %arg13[%c0_295, %c0_296], %651 {strides = array<i32>} : memref<16x128xf32, #tpu.memory_space<vmem>>, vector<16x128xf32>,
    %cst_297 = arith.constant 0.000000e+00 : f32
    %653 = vector.shape_cast %629 : vector<16x1xi1> to vector<16x1xi1>
    %654 = vector.broadcast %653 : vector<16x1xi1> to vector<16x128xi1>
    %655 = vector.broadcast %cst_297 : f32 to vector<16x128xf32>
    %656 = arith.select %654, %609, %655 : vector<16x128xi1>, vector<16x128xf32>
    %657 = arith.truncf %656 : vector<16x128xf32> to vector<16x128xbf16>
    %c6_298 = arith.constant 6 : index
    %c0_299 = arith.constant 0 : index
    %c0_300 = arith.constant 0 : index
    %658 = vector.load %arg8[%c6_298, %c0_299, %c0_300] : memref<8x16x128xbf16, #tpu.memory_space<vmem>>, vector<1x16x128xbf16>
    %659 = vector.shape_cast %658 : vector<1x16x128xbf16> to vector<16x128xbf16>
    %660 = vector.shape_cast %657 : vector<16x128xbf16> to vector<1x16x128xbf16>
    tpu.vector_store %arg8[%c6_298, %c0_299, %c0_300], %660 {strides = array<i32>} : memref<8x16x128xbf16, #tpu.memory_space<vmem>>, vector<1x16x128xbf16>,
    %cst_301 = arith.constant 0.000000e+00 : f32
    %661 = vector.shape_cast %632 : vector<16x1xi1> to vector<16x1xi1>
    %662 = vector.broadcast %661 : vector<16x1xi1> to vector<16x128xi1>
    %663 = vector.broadcast %cst_301 : f32 to vector<16x128xf32>
    %664 = arith.select %662, %626, %663 : vector<16x128xi1>, vector<16x128xf32>
    %665 = arith.truncf %664 : vector<16x128xf32> to vector<16x128xbf16>
    %c1_302 = arith.constant 1 : index
    %c0_303 = arith.constant 0 : index
    %c0_304 = arith.constant 0 : index
    %666 = vector.load %arg9[%c1_302, %c0_303, %c0_304] : memref<8x16x128xbf16, #tpu.memory_space<vmem>>, vector<1x16x128xbf16>
    %667 = vector.shape_cast %666 : vector<1x16x128xbf16> to vector<16x128xbf16>
    %668 = vector.shape_cast %665 : vector<16x128xbf16> to vector<1x16x128xbf16>
    tpu.vector_store %arg9[%c1_302, %c0_303, %c0_304], %668 {strides = array<i32>} : memref<8x16x128xbf16, #tpu.memory_space<vmem>>, vector<1x16x128xbf16>,
    %c7_305 = arith.constant 7 : index
    %c0_306 = arith.constant 0 : index
    %c0_307 = arith.constant 0 : index
    %669 = vector.load %arg2[%c7_305, %c0_306, %c0_307] : memref<8x16x512xbf16, #tpu.memory_space<vmem>>, vector<1x16x512xbf16>
    %670 = vector.shape_cast %669 : vector<1x16x512xbf16> to vector<16x512xbf16>
    %671 = arith.extf %670 : vector<16x512xbf16> to vector<16x512xf32>
    %672 = vector.broadcast %6 : vector<1x512xf32> to vector<16x512xf32>
    %673 = arith.addf %671, %672 : vector<16x512xf32>
    %c0_308 = arith.constant 0 : index
    %c0_309 = arith.constant 0 : index
    %674 = vector.load %arg10[%c0_308, %c0_309] : memref<16x128xf32, #tpu.memory_space<vmem>>, vector<16x128xf32>
    %675 = arith.truncf %674 : vector<16x128xf32> to vector<16x128xbf16>
    %cst_310 = arith.constant dense<0.000000e+00> : vector<16x512xf32>
    %676 = tpu.matmul %675, %4, %cst_310 {dimension_numbers = #tpu.dot_dimension_numbers<[1], [0], [0], [1], [0, 0, 1, 1], [], []>} : vector<16x128xbf16>, vector<128x512xbf16>, vector<16x512xf32> -> vector<16x512xf32>
    %677 = arith.addf %673, %676 : vector<16x512xf32>
    %c0_311 = arith.constant 0 : index
    %c0_312 = arith.constant 0 : index
    %c0_313 = arith.constant 0 : index
    %678 = vector.load %arg3[%c0_311, %c0_312, %c0_313] : memref<8x16x512xbf16, #tpu.memory_space<vmem>>, vector<1x16x512xbf16>
    %679 = vector.shape_cast %678 : vector<1x16x512xbf16> to vector<16x512xbf16>
    %680 = arith.extf %679 : vector<16x512xbf16> to vector<16x512xf32>
    %681 = vector.broadcast %7 : vector<1x512xf32> to vector<16x512xf32>
    %682 = arith.addf %680, %681 : vector<16x512xf32>
    %c0_314 = arith.constant 0 : index
    %c0_315 = arith.constant 0 : index
    %683 = vector.load %arg12[%c0_314, %c0_315] : memref<16x128xf32, #tpu.memory_space<vmem>>, vector<16x128xf32>
    %684 = arith.truncf %683 : vector<16x128xf32> to vector<16x128xbf16>
    %cst_316 = arith.constant dense<0.000000e+00> : vector<16x512xf32>
    %685 = tpu.matmul %684, %5, %cst_316 {dimension_numbers = #tpu.dot_dimension_numbers<[1], [0], [0], [1], [0, 0, 1, 1], [], []>} : vector<16x128xbf16>, vector<128x512xbf16>, vector<16x512xf32> -> vector<16x512xf32>
    %686 = arith.addf %682, %685 : vector<16x512xf32>
    %c0_317 = arith.constant 0 : index
    %c0_318 = arith.constant 0 : index
    %687 = vector.load %arg11[%c0_317, %c0_318] : memref<16x128xf32, #tpu.memory_space<vmem>>, vector<16x128xf32>
    %688 = vector.extract_strided_slice %677 {offsets = [0, 0], sizes = [16, 384], strides = [1, 1]} : vector<16x512xf32> to vector<16x384xf32>
    %689 = arith.negf %688 : vector<16x384xf32>
    %690 = math.exp %689 : vector<16x384xf32>
    %cst_319 = arith.constant 1.000000e+00 : f32
    %691 = vector.broadcast %cst_319 : f32 to vector<16x384xf32>
    %692 = arith.addf %691, %690 : vector<16x384xf32>
    %693 = arith.divf %691, %692 : vector<16x384xf32>
    %694 = vector.extract_strided_slice %693 {offsets = [0, 0], sizes = [16, 128], strides = [1, 1]} : vector<16x384xf32> to vector<16x128xf32>
    %695 = vector.extract_strided_slice %693 {offsets = [0, 128], sizes = [16, 128], strides = [1, 1]} : vector<16x384xf32> to vector<16x128xf32>
    %696 = vector.extract_strided_slice %693 {offsets = [0, 256], sizes = [16, 128], strides = [1, 1]} : vector<16x384xf32> to vector<16x128xf32>
    %697 = vector.extract_strided_slice %677 {offsets = [0, 384], sizes = [16, 128], strides = [1, 1]} : vector<16x512xf32> to vector<16x128xf32>
    %698 = math.tanh %697 : vector<16x128xf32>
    %699 = arith.mulf %695, %687 : vector<16x128xf32>
    %700 = arith.mulf %694, %698 : vector<16x128xf32>
    %701 = arith.addf %699, %700 : vector<16x128xf32>
    %702 = math.tanh %701 : vector<16x128xf32>
    %703 = arith.mulf %696, %702 : vector<16x128xf32>
    %c0_320 = arith.constant 0 : index
    %c0_321 = arith.constant 0 : index
    %704 = vector.load %arg13[%c0_320, %c0_321] : memref<16x128xf32, #tpu.memory_space<vmem>>, vector<16x128xf32>
    %705 = vector.extract_strided_slice %686 {offsets = [0, 0], sizes = [16, 384], strides = [1, 1]} : vector<16x512xf32> to vector<16x384xf32>
    %706 = arith.negf %705 : vector<16x384xf32>
    %707 = math.exp %706 : vector<16x384xf32>
    %cst_322 = arith.constant 1.000000e+00 : f32
    %708 = vector.broadcast %cst_322 : f32 to vector<16x384xf32>
    %709 = arith.addf %708, %707 : vector<16x384xf32>
    %710 = arith.divf %708, %709 : vector<16x384xf32>
    %711 = vector.extract_strided_slice %710 {offsets = [0, 0], sizes = [16, 128], strides = [1, 1]} : vector<16x384xf32> to vector<16x128xf32>
    %712 = vector.extract_strided_slice %710 {offsets = [0, 128], sizes = [16, 128], strides = [1, 1]} : vector<16x384xf32> to vector<16x128xf32>
    %713 = vector.extract_strided_slice %710 {offsets = [0, 256], sizes = [16, 128], strides = [1, 1]} : vector<16x384xf32> to vector<16x128xf32>
    %714 = vector.extract_strided_slice %686 {offsets = [0, 384], sizes = [16, 128], strides = [1, 1]} : vector<16x512xf32> to vector<16x128xf32>
    %715 = math.tanh %714 : vector<16x128xf32>
    %716 = arith.mulf %712, %704 : vector<16x128xf32>
    %717 = arith.mulf %711, %715 : vector<16x128xf32>
    %718 = arith.addf %716, %717 : vector<16x128xf32>
    %719 = math.tanh %718 : vector<16x128xf32>
    %720 = arith.mulf %713, %719 : vector<16x128xf32>
    %c7_i32_323 = arith.constant 7 : i32
    %721 = arith.addi %8, %c7_i32_323 : i32
    %722 = vector.broadcast %721 : i32 to vector<16x1xi32>
    %723 = arith.cmpi slt, %722, %3 : vector<16x1xi32>
    %c0_i32_324 = arith.constant 0 : i32
    %724 = arith.addi %10, %c0_i32_324 : i32
    %725 = vector.broadcast %724 : i32 to vector<16x1xi32>
    %726 = arith.cmpi slt, %725, %3 : vector<16x1xi32>
    %c0_325 = arith.constant 0 : index
    %c0_326 = arith.constant 0 : index
    %727 = vector.load %arg10[%c0_325, %c0_326] : memref<16x128xf32, #tpu.memory_space<vmem>>, vector<16x128xf32>
    %728 = vector.shape_cast %723 : vector<16x1xi1> to vector<16x1xi1>
    %729 = vector.broadcast %728 : vector<16x1xi1> to vector<16x128xi1>
    %730 = arith.select %729, %703, %727 : vector<16x128xi1>, vector<16x128xf32>
    %c0_327 = arith.constant 0 : index
    %c0_328 = arith.constant 0 : index
    %731 = vector.load %arg10[%c0_327, %c0_328] : memref<16x128xf32, #tpu.memory_space<vmem>>, vector<16x128xf32>
    tpu.vector_store %arg10[%c0_327, %c0_328], %730 {strides = array<i32>} : memref<16x128xf32, #tpu.memory_space<vmem>>, vector<16x128xf32>,
    %c0_329 = arith.constant 0 : index
    %c0_330 = arith.constant 0 : index
    %732 = vector.load %arg11[%c0_329, %c0_330] : memref<16x128xf32, #tpu.memory_space<vmem>>, vector<16x128xf32>
    %733 = vector.shape_cast %723 : vector<16x1xi1> to vector<16x1xi1>
    %734 = vector.broadcast %733 : vector<16x1xi1> to vector<16x128xi1>
    %735 = arith.select %734, %701, %732 : vector<16x128xi1>, vector<16x128xf32>
    %c0_331 = arith.constant 0 : index
    %c0_332 = arith.constant 0 : index
    %736 = vector.load %arg11[%c0_331, %c0_332] : memref<16x128xf32, #tpu.memory_space<vmem>>, vector<16x128xf32>
    tpu.vector_store %arg11[%c0_331, %c0_332], %735 {strides = array<i32>} : memref<16x128xf32, #tpu.memory_space<vmem>>, vector<16x128xf32>,
    %c0_333 = arith.constant 0 : index
    %c0_334 = arith.constant 0 : index
    %737 = vector.load %arg12[%c0_333, %c0_334] : memref<16x128xf32, #tpu.memory_space<vmem>>, vector<16x128xf32>
    %738 = vector.shape_cast %726 : vector<16x1xi1> to vector<16x1xi1>
    %739 = vector.broadcast %738 : vector<16x1xi1> to vector<16x128xi1>
    %740 = arith.select %739, %720, %737 : vector<16x128xi1>, vector<16x128xf32>
    %c0_335 = arith.constant 0 : index
    %c0_336 = arith.constant 0 : index
    %741 = vector.load %arg12[%c0_335, %c0_336] : memref<16x128xf32, #tpu.memory_space<vmem>>, vector<16x128xf32>
    tpu.vector_store %arg12[%c0_335, %c0_336], %740 {strides = array<i32>} : memref<16x128xf32, #tpu.memory_space<vmem>>, vector<16x128xf32>,
    %c0_337 = arith.constant 0 : index
    %c0_338 = arith.constant 0 : index
    %742 = vector.load %arg13[%c0_337, %c0_338] : memref<16x128xf32, #tpu.memory_space<vmem>>, vector<16x128xf32>
    %743 = vector.shape_cast %726 : vector<16x1xi1> to vector<16x1xi1>
    %744 = vector.broadcast %743 : vector<16x1xi1> to vector<16x128xi1>
    %745 = arith.select %744, %718, %742 : vector<16x128xi1>, vector<16x128xf32>
    %c0_339 = arith.constant 0 : index
    %c0_340 = arith.constant 0 : index
    %746 = vector.load %arg13[%c0_339, %c0_340] : memref<16x128xf32, #tpu.memory_space<vmem>>, vector<16x128xf32>
    tpu.vector_store %arg13[%c0_339, %c0_340], %745 {strides = array<i32>} : memref<16x128xf32, #tpu.memory_space<vmem>>, vector<16x128xf32>,
    %cst_341 = arith.constant 0.000000e+00 : f32
    %747 = vector.shape_cast %723 : vector<16x1xi1> to vector<16x1xi1>
    %748 = vector.broadcast %747 : vector<16x1xi1> to vector<16x128xi1>
    %749 = vector.broadcast %cst_341 : f32 to vector<16x128xf32>
    %750 = arith.select %748, %703, %749 : vector<16x128xi1>, vector<16x128xf32>
    %751 = arith.truncf %750 : vector<16x128xf32> to vector<16x128xbf16>
    %c7_342 = arith.constant 7 : index
    %c0_343 = arith.constant 0 : index
    %c0_344 = arith.constant 0 : index
    %752 = vector.load %arg8[%c7_342, %c0_343, %c0_344] : memref<8x16x128xbf16, #tpu.memory_space<vmem>>, vector<1x16x128xbf16>
    %753 = vector.shape_cast %752 : vector<1x16x128xbf16> to vector<16x128xbf16>
    %754 = vector.shape_cast %751 : vector<16x128xbf16> to vector<1x16x128xbf16>
    tpu.vector_store %arg8[%c7_342, %c0_343, %c0_344], %754 {strides = array<i32>} : memref<8x16x128xbf16, #tpu.memory_space<vmem>>, vector<1x16x128xbf16>,
    %cst_345 = arith.constant 0.000000e+00 : f32
    %755 = vector.shape_cast %726 : vector<16x1xi1> to vector<16x1xi1>
    %756 = vector.broadcast %755 : vector<16x1xi1> to vector<16x128xi1>
    %757 = vector.broadcast %cst_345 : f32 to vector<16x128xf32>
    %758 = arith.select %756, %720, %757 : vector<16x128xi1>, vector<16x128xf32>
    %759 = arith.truncf %758 : vector<16x128xf32> to vector<16x128xbf16>
    %c0_346 = arith.constant 0 : index
    %c0_347 = arith.constant 0 : index
    %c0_348 = arith.constant 0 : index
    %760 = vector.load %arg9[%c0_346, %c0_347, %c0_348] : memref<8x16x128xbf16, #tpu.memory_space<vmem>>, vector<1x16x128xbf16>
    %761 = vector.shape_cast %760 : vector<1x16x128xbf16> to vector<16x128xbf16>
    %762 = vector.shape_cast %759 : vector<16x128xbf16> to vector<1x16x128xbf16>
    tpu.vector_store %arg9[%c0_346, %c0_347, %c0_348], %762 {strides = array<i32>} : memref<8x16x128xbf16, #tpu.memory_space<vmem>>, vector<1x16x128xbf16>,
    return
  }
  func.func @transform_0(%arg0: i32) -> (i32, i32) {
    %c0_i32 = arith.constant 0 : i32
    %c0_i32_0 = arith.constant 0 : i32
    %c0_i32_1 = arith.constant 0 : i32
    return %c0_i32, %c0_i32_0 : i32, i32
  }
  func.func @transform_1(%arg0: i32) -> (i32, i32, i32) {
    %c0_i32 = arith.constant 0 : i32
    %c0_i32_0 = arith.constant 0 : i32
    %c0_i32_1 = arith.constant 0 : i32
    return %arg0, %c0_i32, %c0_i32_0 : i32, i32, i32
  }
  func.func @transform_2(%arg0: i32) -> (i32, i32, i32) {
    %c0_i32 = arith.constant 0 : i32
    %0 = arith.subi %c0_i32, %arg0 : i32
    %c0_i32_0 = arith.constant 0 : i32
    %c0_i32_1 = arith.constant 0 : i32
    %c0_i32_2 = arith.constant 0 : i32
    return %0, %c0_i32_0, %c0_i32_1 : i32, i32, i32
  }
  func.func @transform_3(%arg0: i32) -> (i32, i32) {
    %c0_i32 = arith.constant 0 : i32
    %c0_i32_0 = arith.constant 0 : i32
    %c0_i32_1 = arith.constant 0 : i32
    return %c0_i32, %c0_i32_0 : i32, i32
  }
  func.func @transform_4(%arg0: i32) -> (i32, i32) {
    %c0_i32 = arith.constant 0 : i32
    %c0_i32_0 = arith.constant 0 : i32
    %c0_i32_1 = arith.constant 0 : i32
    return %c0_i32, %c0_i32_0 : i32, i32
  }
  func.func @transform_5(%arg0: i32) -> (i32, i32) {
    %c0_i32 = arith.constant 0 : i32
    %c0_i32_0 = arith.constant 0 : i32
    %c0_i32_1 = arith.constant 0 : i32
    return %c0_i32, %c0_i32_0 : i32, i32
  }
  func.func @transform_6(%arg0: i32) -> (i32, i32) {
    %c0_i32 = arith.constant 0 : i32
    %c0_i32_0 = arith.constant 0 : i32
    %c0_i32_1 = arith.constant 0 : i32
    return %c0_i32, %c0_i32_0 : i32, i32
  }
  func.func @transform_7(%arg0: i32) -> (i32, i32, i32) {
    %c0_i32 = arith.constant 0 : i32
    %c0_i32_0 = arith.constant 0 : i32
    %c0_i32_1 = arith.constant 0 : i32
    return %arg0, %c0_i32, %c0_i32_0 : i32, i32, i32
  }
  func.func @transform_8(%arg0: i32) -> (i32, i32, i32) {
    %c0_i32 = arith.constant 0 : i32
    %0 = arith.subi %c0_i32, %arg0 : i32
    %c0_i32_0 = arith.constant 0 : i32
    %c0_i32_1 = arith.constant 0 : i32
    %c0_i32_2 = arith.constant 0 : i32
    return %0, %c0_i32_0, %c0_i32_1 : i32, i32, i32
  }
}

</mosaic_0001>

<llo_original>
// kernel: rnn_encoder_forward.2
$region0: #{rnn_encoder_forward.2}
  #allocation0 [shape = 'u32[]', space=smem, size = 0x4, offset = 0x4, fixed_abs, tag = 'smem constant byte address 0x4 - core index']
  #allocation1 [shape = 'u32[144,128]{1,0:T(1,128)}', space=vmem, size = 0x12000, scoped, tag = 'internal scratch']
  #allocation2 [shape = 'f32[16,128]{1,0:T(8,128)}', space=vmem, size = 0x2000, scoped, tag = 'scratch operand']
  #allocation3 [shape = 'f32[16,128]{1,0:T(8,128)}', space=vmem, size = 0x2000, scoped, tag = 'scratch operand']
  #allocation4 [shape = 'f32[16,128]{1,0:T(8,128)}', space=vmem, size = 0x2000, scoped, tag = 'scratch operand']
  #allocation5 [shape = 'f32[16,128]{1,0:T(8,128)}', space=vmem, size = 0x2000, scoped, tag = 'scratch operand']
  %s0 = inlined_call_operand.vmem [shape: s32[16,1], index: 0, kind: input, shape index: {}]
  %s1 = inlined_call_operand.vmem [shape: bf16[8,16,512], index: 1, kind: input, shape index: {}]
  %s2 = inlined_call_operand.vmem [shape: bf16[8,16,512], index: 2, kind: input, shape index: {}]
  %s3 = inlined_call_operand.vmem [shape: bf16[128,512], index: 3, kind: input, shape index: {}]
  %s4 = inlined_call_operand.vmem [shape: bf16[128,512], index: 4, kind: input, shape index: {}]
  %s5 = inlined_call_operand.vmem [shape: f32[1,512], index: 5, kind: input, shape index: {}]
  %s6 = inlined_call_operand.vmem [shape: f32[1,512], index: 6, kind: input, shape index: {}]
  %s7 = inlined_call_operand.vmem [shape: bf16[8,16,128], index: 7, kind: output, shape index: {0}]
  %s8 = inlined_call_operand.vmem [shape: bf16[8,16,128], index: 8, kind: output, shape index: {1}]
  %9 = xla_tuple %s7, %s8
  %s10 = sld [smem:[#allocation0]]
  $region50: #{rnn_encoder_forward.2} parent=0
    _
  %s12 = ssub.s32 1, %s10
  %s13 = scalar_select 0, %s12, %s10
  // Predicated region
  $region2: #{rnn_encoder_forward.2} parent=0 // pred_check
    _
  $region3: #{rnn_encoder_forward.2} parent=0 // pred_check_branch
    %15 = sbr.rel (0) target = $region5
  $region4: #{rnn_encoder_forward.2} parent=0 // pred_region
    _
  $region5: #{rnn_encoder_forward.2} parent=0 // pred_fallthru
    _
  // Predicated region
  $region6: #{rnn_encoder_forward.2} parent=0 // pred_check
    _
  $region7: #{rnn_encoder_forward.2} parent=0 // pred_check_branch
    %17 = sbr.rel (0) target = $region9
  $region8: #{rnn_encoder_forward.2} parent=0 // pred_region
    _
  $region9: #{rnn_encoder_forward.2} parent=0 // pred_fallthru
    _
  // Predicated region
  $region10: #{rnn_encoder_forward.2} parent=0 // pred_check
    _
  $region11: #{rnn_encoder_forward.2} parent=0 // pred_check_branch
    %19 = sbr.rel (0) target = $region13
  $region12: #{rnn_encoder_forward.2} parent=0 // pred_region
    %s20 = ssub.s32 0, 0
    %s21 = smul.u32 8, %s20
    %p22 = scmp.lt.s32.totalorder %s21, 7
    %s23 = scalar_select %p22, %s21, 7
    %s24 = smul.addr %s23, 8
    %s25 = smul.addr %s24, 4
    %s26 = scalar_lea.vmem %s2, %s25
    %s27 = ssub.s32 0, 0
    %s28 = smul.u32 8, %s27
  $region13: #{rnn_encoder_forward.2} parent=0 // pred_fallthru
    _
  // Predicated region
  $region14: #{rnn_encoder_forward.2} parent=0 // pred_check
    _
  $region15: #{rnn_encoder_forward.2} parent=0 // pred_check_branch
    %30 = sbr.rel (0) target = $region17
  $region16: #{rnn_encoder_forward.2} parent=0 // pred_region
    _
  $region17: #{rnn_encoder_forward.2} parent=0 // pred_fallthru
    _
  // Predicated region
  $region18: #{rnn_encoder_forward.2} parent=0 // pred_check
    _
  $region19: #{rnn_encoder_forward.2} parent=0 // pred_check_branch
    %32 = sbr.rel (0) target = $region21
  $region20: #{rnn_encoder_forward.2} parent=0 // pred_region
    _
  $region21: #{rnn_encoder_forward.2} parent=0 // pred_fallthru
    _
  // Predicated region
  $region22: #{rnn_encoder_forward.2} parent=0 // pred_check
    _
  $region23: #{rnn_encoder_forward.2} parent=0 // pred_check_branch
    %34 = sbr.rel (0) target = $region25
  $region24: #{rnn_encoder_forward.2} parent=0 // pred_region
    _
  $region25: #{rnn_encoder_forward.2} parent=0 // pred_fallthru
    _
  // Predicated region
  $region26: #{rnn_encoder_forward.2} parent=0 // pred_check
    _
  $region27: #{rnn_encoder_forward.2} parent=0 // pred_check_branch
    %36 = sbr.rel (0) target = $region29
  $region28: #{rnn_encoder_forward.2} parent=0 // pred_region
    _
  $region29: #{rnn_encoder_forward.2} parent=0 // pred_fallthru
    _
  %s37 = ssub.s32 0, 0
  %s38 = smul.u32 8, %s37
  %p39 = scmp.lt.s32.totalorder %s38, 7
  %s40 = scalar_select %p39, %s38, 7
  %s41 = smul.addr %s40, 8
  %s42 = smul.addr %s41, 4
  %s43 = scalar_lea.vmem %s2, %s42
  %s44 = ssub.s32 0, 0
  %s45 = smul.u32 8, %s44
  %p46 = scmp.lt.s32.totalorder %s45, 7
  %s47 = scalar_select %p46, %s45, 7
  %s48 = smul.addr %s47, 8
  %s49 = scalar_lea.vmem %s8, %s48
  %s50 = ssub.s32 0, 0
  %s51 = smul.u32 8, %s50
  %p52 = scmp.lt.s32.totalorder %s51, 7
  %s53 = scalar_select %p52, %s51, 7
  %s54 = smul.addr %s53, 8
  %s55 = smul.addr %s54, 4
  %s56 = scalar_lea.vmem %s2, %s55
  %s57 = ssub.s32 0, 0
  %s58 = smul.u32 8, %s57
  %s59 = ssub.s32 0, 0
  %s60 = smul.u32 8, %s59
  %p61 = scmp.lt.s32.totalorder %s60, 7
  %s62 = scalar_select %p61, %s60, 7
  %s63 = smul.addr %s62, 8
  %s64 = scalar_lea.vmem %s8, %s63
  %s65 = ssub.s32 0, 0
  %s66 = smul.u32 8, %s65
  %p68 = scmp.eq.s32.totalorder 0, 0
  // Predicated region
  $region30: #{rnn_encoder_forward.2} parent=0 // pred_check
    %p69 = pneg %p68
  $region31: #{rnn_encoder_forward.2} parent=0 // pred_check_branch
    %71 = sbr.rel (%p69) target = $region33
  $region32: #{rnn_encoder_forward.2} parent=0 // pred_region
    %72 = vst [vmem:[#allocation2] sm:$0xff] 0.0
    %73 = vst [vmem:[#allocation2 + $0x8] sm:$0xff] 0.0
    %74 = vst [vmem:[#allocation3] sm:$0xff] 0.0
    %75 = vst [vmem:[#allocation3 + $0x8] sm:$0xff] 0.0
    %76 = vst [vmem:[#allocation4] sm:$0xff] 0.0
    %77 = vst [vmem:[#allocation4 + $0x8] sm:$0xff] 0.0
    %78 = vst [vmem:[#allocation5] sm:$0xff] 0.0
    %79 = vst [vmem:[#allocation5 + $0x8] sm:$0xff] 0.0
  $region33: #{rnn_encoder_forward.2} parent=0 // pred_fallthru
    _
  %v80 = vld [vmem:[%s0] sm:$0xff]
  %v81 = vld [vmem:[%s0 + $0x8] sm:$0xff]
  %v82 = vld [vmem:[%s3] sm:$0xff]
  %v83 = vld [vmem:[%s3 + $0x8] sm:$0xff]
  %v84 = vld [vmem:[%s3 + $0x10] sm:$0xff]
  %v85 = vld [vmem:[%s3 + $0x18] sm:$0xff]
  %v86 = vld [vmem:[%s3 + $0x20] sm:$0xff]
  %v87 = vld [vmem:[%s3 + $0x28] sm:$0xff]
  %v88 = vld [vmem:[%s3 + $0x30] sm:$0xff]
  %v89 = vld [vmem:[%s3 + $0x38] sm:$0xff]
  %v90 = vld [vmem:[%s3 + $0x40] sm:$0xff]
  %v91 = vld [vmem:[%s3 + $0x48] sm:$0xff]
  %v92 = vld [vmem:[%s3 + $0x50] sm:$0xff]
  %v93 = vld [vmem:[%s3 + $0x58] sm:$0xff]
  %v94 = vld [vmem:[%s3 + $0x60] sm:$0xff]
  %v95 = vld [vmem:[%s3 + $0x68] sm:$0xff]
  %v96 = vld [vmem:[%s3 + $0x70] sm:$0xff]
  %v97 = vld [vmem:[%s3 + $0x78] sm:$0xff]
  %v98 = vld [vmem:[%s3 + $0x80] sm:$0xff]
  %v99 = vld [vmem:[%s3 + $0x88] sm:$0xff]
  %v100 = vld [vmem:[%s3 + $0x90] sm:$0xff]
  %v101 = vld [vmem:[%s3 + $0x98] sm:$0xff]
  %v102 = vld [vmem:[%s3 + $0xa0] sm:$0xff]
  %v103 = vld [vmem:[%s3 + $0xa8] sm:$0xff]
  %v104 = vld [vmem:[%s3 + $0xb0] sm:$0xff]
  %v105 = vld [vmem:[%s3 + $0xb8] sm:$0xff]
  %v106 = vld [vmem:[%s3 + $0xc0] sm:$0xff]
  %v107 = vld [vmem:[%s3 + $0xc8] sm:$0xff]
  %v108 = vld [vmem:[%s3 + $0xd0] sm:$0xff]
  %v109 = vld [vmem:[%s3 + $0xd8] sm:$0xff]
  %v110 = vld [vmem:[%s3 + $0xe0] sm:$0xff]
  %v111 = vld [vmem:[%s3 + $0xe8] sm:$0xff]
  %v112 = vld [vmem:[%s3 + $0xf0] sm:$0xff]
  %v113 = vld [vmem:[%s3 + $0xf8] sm:$0xff]
  %v114 = vld [vmem:[%s4] sm:$0xff]
  %v115 = vld [vmem:[%s4 + $0x8] sm:$0xff]
  %v116 = vld [vmem:[%s4 + $0x10] sm:$0xff]
  %v117 = vld [vmem:[%s4 + $0x18] sm:$0xff]
  %v118 = vld [vmem:[%s4 + $0x20] sm:$0xff]
  %v119 = vld [vmem:[%s4 + $0x28] sm:$0xff]
  %v120 = vld [vmem:[%s4 + $0x30] sm:$0xff]
  %v121 = vld [vmem:[%s4 + $0x38] sm:$0xff]
  %v122 = vld [vmem:[%s4 + $0x40] sm:$0xff]
  %v123 = vld [vmem:[%s4 + $0x48] sm:$0xff]
  %v124 = vld [vmem:[%s4 + $0x50] sm:$0xff]
  %v125 = vld [vmem:[%s4 + $0x58] sm:$0xff]
  %v126 = vld [vmem:[%s4 + $0x60] sm:$0xff]
  %v127 = vld [vmem:[%s4 + $0x68] sm:$0xff]
  %v128 = vld [vmem:[%s4 + $0x70] sm:$0xff]
  %v129 = vld [vmem:[%s4 + $0x78] sm:$0xff]
  %v130 = vld [vmem:[%s4 + $0x80] sm:$0xff]
  %v131 = vld [vmem:[%s4 + $0x88] sm:$0xff]
  %v132 = vld [vmem:[%s4 + $0x90] sm:$0xff]
  %v133 = vld [vmem:[%s4 + $0x98] sm:$0xff]
  %v134 = vld [vmem:[%s4 + $0xa0] sm:$0xff]
  %v135 = vld [vmem:[%s4 + $0xa8] sm:$0xff]
  %v136 = vld [vmem:[%s4 + $0xb0] sm:$0xff]
  %v137 = vld [vmem:[%s4 + $0xb8] sm:$0xff]
  %v138 = vld [vmem:[%s4 + $0xc0] sm:$0xff]
  %v139 = vld [vmem:[%s4 + $0xc8] sm:$0xff]
  %v140 = vld [vmem:[%s4 + $0xd0] sm:$0xff]
  %v141 = vld [vmem:[%s4 + $0xd8] sm:$0xff]
  %v142 = vld [vmem:[%s4 + $0xe0] sm:$0xff]
  %v143 = vld [vmem:[%s4 + $0xe8] sm:$0xff]
  %v144 = vld [vmem:[%s4 + $0xf0] sm:$0xff]
  %v145 = vld [vmem:[%s4 + $0xf8] sm:$0xff]
  %v146 = vld [vmem:[%s5] sm:$0xf]
  %v147 = vld [vmem:[%s6] sm:$0xf]
  %s148 = smul.u32 0, 8
  %s149 = ssub.s32 0, 0
  %s150 = smul.u32 %s149, 8
  %v151 = vld [vmem:[%s1] sm:$0xff]
  %v152 = vld [vmem:[%s1 + $0x8] sm:$0xff]
  %v153 = vld [vmem:[%s1 + $0x10] sm:$0xff]
  %v154 = vld [vmem:[%s1 + $0x18] sm:$0xff]
  %v155 = vunpack.c.l.bf16 %v151
  %v156 = vunpack.c.h.bf16 %v151
  %v157 = vunpack.c.l.bf16 %v152
  %v158 = vunpack.c.h.bf16 %v152
  %v159 = vunpack.c.l.bf16 %v153
  %v160 = vunpack.c.h.bf16 %v153
  %v161 = vunpack.c.l.bf16 %v154
  %v162 = vunpack.c.h.bf16 %v154
  %v164 = vlaneseq
  %v165 = vshrl.u32 %v164, 7
  %v166 = vsub.s32 0, %v165
  %v167 = vrot.slane %v146, %v166
  %v168 = vlaneseq
  %v169 = vshrl.u32 %v168, 7
  %v170 = vsub.s32 1, %v169
  %v171 = vrot.slane %v146, %v170
  %v172 = vlaneseq
  %v173 = vshrl.u32 %v172, 7
  %v174 = vsub.s32 2, %v173
  %v175 = vrot.slane %v146, %v174
  %v176 = vlaneseq
  %v177 = vshrl.u32 %v176, 7
  %v178 = vsub.s32 3, %v177
  %v179 = vrot.slane %v146, %v178
  %v184 = vadd.f32 %v155, %v167
  %v185 = vadd.f32 %v156, %v171
  %v186 = vadd.f32 %v157, %v175
  %v187 = vadd.f32 %v158, %v179
  %v188 = vadd.f32 %v159, %v167
  %v189 = vadd.f32 %v160, %v171
  %v190 = vadd.f32 %v161, %v175
  %v191 = vadd.f32 %v162, %v179
  %v192 = vld [vmem:[#allocation2] sm:$0xff]
  %v193 = vld [vmem:[#allocation2 + $0x8] sm:$0xff]
  %v194 = vpack.c.bf16 %v193, %v192
  %v227 = vunpack.c.l.b16 %v82
  %v228 = vunpack.c.h.b16 %v82
  %v229 = vunpack.c.l.b16 %v83
  %v230 = vunpack.c.h.b16 %v83
  %v231 = vunpack.c.l.b16 %v84
  %v232 = vunpack.c.h.b16 %v84
  %v233 = vunpack.c.l.b16 %v85
  %v234 = vunpack.c.h.b16 %v85
  %v235 = vunpack.c.l.b16 %v86
  %v236 = vunpack.c.h.b16 %v86
  %v237 = vunpack.c.l.b16 %v87
  %v238 = vunpack.c.h.b16 %v87
  %v239 = vunpack.c.l.b16 %v88
  %v240 = vunpack.c.h.b16 %v88
  %v241 = vunpack.c.l.b16 %v89
  %v242 = vunpack.c.h.b16 %v89
  %v243 = vunpack.c.l.b16 %v90
  %v244 = vunpack.c.h.b16 %v90
  %v245 = vunpack.c.l.b16 %v91
  %v246 = vunpack.c.h.b16 %v91
  %v247 = vunpack.c.l.b16 %v92
  %v248 = vunpack.c.h.b16 %v92
  %v249 = vunpack.c.l.b16 %v93
  %v250 = vunpack.c.h.b16 %v93
  %v251 = vunpack.c.l.b16 %v94
  %v252 = vunpack.c.h.b16 %v94
  %v253 = vunpack.c.l.b16 %v95
  %v254 = vunpack.c.h.b16 %v95
  %v255 = vunpack.c.l.b16 %v96
  %v256 = vunpack.c.h.b16 %v96
  %v257 = vunpack.c.l.b16 %v97
  %v258 = vunpack.c.h.b16 %v97
  %v259 = vunpack.c.l.b16 %v98
  %v260 = vunpack.c.h.b16 %v98
  %v261 = vunpack.c.l.b16 %v99
  %v262 = vunpack.c.h.b16 %v99
  %v263 = vunpack.c.l.b16 %v100
  %v264 = vunpack.c.h.b16 %v100
  %v265 = vunpack.c.l.b16 %v101
  %v266 = vunpack.c.h.b16 %v101
  %v267 = vunpack.c.l.b16 %v102
  %v268 = vunpack.c.h.b16 %v102
  %v269 = vunpack.c.l.b16 %v103
  %v270 = vunpack.c.h.b16 %v103
  %v271 = vunpack.c.l.b16 %v104
  %v272 = vunpack.c.h.b16 %v104
  %v273 = vunpack.c.l.b16 %v105
  %v274 = vunpack.c.h.b16 %v105
  %v275 = vunpack.c.l.b16 %v106
  %v276 = vunpack.c.h.b16 %v106
  %v277 = vunpack.c.l.b16 %v107
  %v278 = vunpack.c.h.b16 %v107
  %v279 = vunpack.c.l.b16 %v108
  %v280 = vunpack.c.h.b16 %v108
  %v281 = vunpack.c.l.b16 %v109
  %v282 = vunpack.c.h.b16 %v109
  %v283 = vunpack.c.l.b16 %v110
  %v284 = vunpack.c.h.b16 %v110
  %v285 = vunpack.c.l.b16 %v111
  %v286 = vunpack.c.h.b16 %v111
  %v287 = vunpack.c.l.b16 %v112
  %v288 = vunpack.c.h.b16 %v112
  %v289 = vunpack.c.l.b16 %v113
  %v290 = vunpack.c.h.b16 %v113
  %v291 = vpack.c.b16 %v231, %v227
  %v292 = vpack.c.b16 %v232, %v228
  %v293 = vpack.c.b16 %v233, %v229
  %v294 = vpack.c.b16 %v234, %v230
  %v295 = vpack.c.b16 %v239, %v235
  %v296 = vpack.c.b16 %v240, %v236
  %v297 = vpack.c.b16 %v241, %v237
  %v298 = vpack.c.b16 %v242, %v238
  %v299 = vpack.c.b16 %v247, %v243
  %v300 = vpack.c.b16 %v248, %v244
  %v301 = vpack.c.b16 %v249, %v245
  %v302 = vpack.c.b16 %v250, %v246
  %v303 = vpack.c.b16 %v255, %v251
  %v304 = vpack.c.b16 %v256, %v252
  %v305 = vpack.c.b16 %v257, %v253
  %v306 = vpack.c.b16 %v258, %v254
  %v307 = vpack.c.b16 %v263, %v259
  %v308 = vpack.c.b16 %v264, %v260
  %v309 = vpack.c.b16 %v265, %v261
  %v310 = vpack.c.b16 %v266, %v262
  %v311 = vpack.c.b16 %v271, %v267
  %v312 = vpack.c.b16 %v272, %v268
  %v313 = vpack.c.b16 %v273, %v269
  %v314 = vpack.c.b16 %v274, %v270
  %v315 = vpack.c.b16 %v279, %v275
  %v316 = vpack.c.b16 %v280, %v276
  %v317 = vpack.c.b16 %v281, %v277
  %v318 = vpack.c.b16 %v282, %v278
  %v319 = vpack.c.b16 %v287, %v283
  %v320 = vpack.c.b16 %v288, %v284
  %v321 = vpack.c.b16 %v289, %v285
  %v322 = vpack.c.b16 %v290, %v286
  %355 = vmatprep.subr.bf16.mxu0 %v292
  %356 = vmatpush1.bf16.msra.mxu0 %v291
  %357 = vmatprep.subr.bf16.mxu0 %v296
  %358 = vmatpush1.bf16.msra.mxu0 %v295
  %359 = vmatprep.subr.bf16.mxu0 %v300
  %360 = vmatpush1.bf16.msra.mxu0 %v299
  %361 = vmatprep.subr.bf16.mxu0 %v304
  %362 = vmatpush1.bf16.msra.mxu0 %v303
  %363 = vmatprep.subr.bf16.mxu0 %v308
  %364 = vmatpush1.bf16.msra.mxu0 %v307
  %365 = vmatprep.subr.bf16.mxu0 %v312
  %366 = vmatpush1.bf16.msra.mxu0 %v311
  %367 = vmatprep.subr.bf16.mxu0 %v316
  %368 = vmatpush1.bf16.msra.mxu0 %v315
  %369 = vmatprep.subr.bf16.mxu0 %v320
  %370 = vmatpush1.bf16.msra.mxu0 %v319
  %371 = vmatprep.subr.bf16.mxu0 0
  %372 = vmatpush1.bf16.msra.mxu0 0
  %373 = vmatprep.subr.bf16.mxu0 0
  %374 = vmatpush1.bf16.msra.mxu0 0
  %375 = vmatprep.subr.bf16.mxu0 0
  %376 = vmatpush1.bf16.msra.mxu0 0
  %377 = vmatprep.subr.bf16.mxu0 0
  %378 = vmatpush1.bf16.msra.mxu0 0
  %379 = vmatprep.subr.bf16.mxu0 0
  %380 = vmatpush1.bf16.msra.mxu0 0
  %381 = vmatprep.subr.bf16.mxu0 0
  %382 = vmatpush1.bf16.msra.mxu0 0
  %383 = vmatprep.subr.bf16.mxu0 0
  %384 = vmatpush1.bf16.msra.mxu0 0
  %385 = vmatprep.subr.bf16.mxu0 0
  %386 = vmatpush1.bf16.msra.mxu0 0
  %387 = vmatprep.mubr.bf16.mxu0 0
  %388 = vmatmul.mubr.bf16.gmra.mrb[0].mxu0 %v194
  %v389 = vpop.f32.mrb[0].mxu0
  %v390 = vadd.f32 0.0, %v389
  %v391 = vpop.f32.mrb[0].mxu0
  %v392 = vadd.f32 0.0, %v391
  %v393 = vpop.f32.mrb[0].mxu0
  %v394 = vadd.f32 0.0, %v393
  %v395 = vpop.f32.mrb[0].mxu0
  %v396 = vadd.f32 0.0, %v395
  %397 = vdwg.mxu0
  %398 = vmatprep.subr.bf16.mxu0 %v294
  %399 = vmatpush1.bf16.msra.mxu0 %v293
  %400 = vmatprep.subr.bf16.mxu0 %v298
  %401 = vmatpush1.bf16.msra.mxu0 %v297
  %402 = vmatprep.subr.bf16.mxu0 %v302
  %403 = vmatpush1.bf16.msra.mxu0 %v301
  %404 = vmatprep.subr.bf16.mxu0 %v306
  %405 = vmatpush1.bf16.msra.mxu0 %v305
  %406 = vmatprep.subr.bf16.mxu0 %v310
  %407 = vmatpush1.bf16.msra.mxu0 %v309
  %408 = vmatprep.subr.bf16.mxu0 %v314
  %409 = vmatpush1.bf16.msra.mxu0 %v313
  %410 = vmatprep.subr.bf16.mxu0 %v318
  %411 = vmatpush1.bf16.msra.mxu0 %v317
  %412 = vmatprep.subr.bf16.mxu0 %v322
  %413 = vmatpush1.bf16.msra.mxu0 %v321
  %414 = vmatprep.subr.bf16.mxu0 0
  %415 = vmatpush1.bf16.msra.mxu0 0
  %416 = vmatprep.subr.bf16.mxu0 0
  %417 = vmatpush1.bf16.msra.mxu0 0
  %418 = vmatprep.subr.bf16.mxu0 0
  %419 = vmatpush1.bf16.msra.mxu0 0
  %420 = vmatprep.subr.bf16.mxu0 0
  %421 = vmatpush1.bf16.msra.mxu0 0
  %422 = vmatprep.subr.bf16.mxu0 0
  %423 = vmatpush1.bf16.msra.mxu0 0
  %424 = vmatprep.subr.bf16.mxu0 0
  %425 = vmatpush1.bf16.msra.mxu0 0
  %426 = vmatprep.subr.bf16.mxu0 0
  %427 = vmatpush1.bf16.msra.mxu0 0
  %428 = vmatprep.subr.bf16.mxu0 0
  %429 = vmatpush1.bf16.msra.mxu0 0
  %430 = vmatprep.mubr.bf16.mxu0 0
  %431 = vmatmul.mubr.bf16.gmra.mrb[0].mxu0 %v194
  %v432 = vpop.f32.mrb[0].mxu0
  %v433 = vadd.f32 0.0, %v432
  %v434 = vpop.f32.mrb[0].mxu0
  %v435 = vadd.f32 0.0, %v434
  %v436 = vpop.f32.mrb[0].mxu0
  %v437 = vadd.f32 0.0, %v436
  %v438 = vpop.f32.mrb[0].mxu0
  %v439 = vadd.f32 0.0, %v438
  %440 = vdwg.mxu0
  %v441 = vadd.f32 %v184, %v390
  %v442 = vadd.f32 %v185, %v392
  %v443 = vadd.f32 %v186, %v433
  %v444 = vadd.f32 %v187, %v435
  %v445 = vadd.f32 %v188, %v394
  %v446 = vadd.f32 %v189, %v396
  %v447 = vadd.f32 %v190, %v437
  %v448 = vadd.f32 %v191, %v439
  %s449 = scalar_lea.vmem %s56, 224
  %v450 = vld [vmem:[%s449] sm:$0xff]
  %v451 = vld [vmem:[%s449 + $0x8] sm:$0xff]
  %v452 = vld [vmem:[%s449 + $0x10] sm:$0xff]
  %v453 = vld [vmem:[%s449 + $0x18] sm:$0xff]
  %v454 = vunpack.c.l.bf16 %v450
  %v455 = vunpack.c.h.bf16 %v450
  %v456 = vunpack.c.l.bf16 %v451
  %v457 = vunpack.c.h.bf16 %v451
  %v458 = vunpack.c.l.bf16 %v452
  %v459 = vunpack.c.h.bf16 %v452
  %v460 = vunpack.c.l.bf16 %v453
  %v461 = vunpack.c.h.bf16 %v453
  %v463 = vlaneseq
  %v464 = vshrl.u32 %v463, 7
  %v465 = vsub.s32 0, %v464
  %v466 = vrot.slane %v147, %v465
  %v467 = vlaneseq
  %v468 = vshrl.u32 %v467, 7
  %v469 = vsub.s32 1, %v468
  %v470 = vrot.slane %v147, %v469
  %v471 = vlaneseq
  %v472 = vshrl.u32 %v471, 7
  %v473 = vsub.s32 2, %v472
  %v474 = vrot.slane %v147, %v473
  %v475 = vlaneseq
  %v476 = vshrl.u32 %v475, 7
  %v477 = vsub.s32 3, %v476
  %v478 = vrot.slane %v147, %v477
  %v483 = vadd.f32 %v454, %v466
  %v484 = vadd.f32 %v455, %v470
  %v485 = vadd.f32 %v456, %v474
  %v486 = vadd.f32 %v457, %v478
  %v487 = vadd.f32 %v458, %v466
  %v488 = vadd.f32 %v459, %v470
  %v489 = vadd.f32 %v460, %v474
  %v490 = vadd.f32 %v461, %v478
  %v491 = vld [vmem:[#allocation4] sm:$0xff]
  %v492 = vld [vmem:[#allocation4 + $0x8] sm:$0xff]
  %v493 = vpack.c.bf16 %v492, %v491
  %v526 = vunpack.c.l.b16 %v114
  %v527 = vunpack.c.h.b16 %v114
  %v528 = vunpack.c.l.b16 %v115
  %v529 = vunpack.c.h.b16 %v115
  %v530 = vunpack.c.l.b16 %v116
  %v531 = vunpack.c.h.b16 %v116
  %v532 = vunpack.c.l.b16 %v117
  %v533 = vunpack.c.h.b16 %v117
  %v534 = vunpack.c.l.b16 %v118
  %v535 = vunpack.c.h.b16 %v118
  %v536 = vunpack.c.l.b16 %v119
  %v537 = vunpack.c.h.b16 %v119
  %v538 = vunpack.c.l.b16 %v120
  %v539 = vunpack.c.h.b16 %v120
  %v540 = vunpack.c.l.b16 %v121
  %v541 = vunpack.c.h.b16 %v121
  %v542 = vunpack.c.l.b16 %v122
  %v543 = vunpack.c.h.b16 %v122
  %v544 = vunpack.c.l.b16 %v123
  %v545 = vunpack.c.h.b16 %v123
  %v546 = vunpack.c.l.b16 %v124
  %v547 = vunpack.c.h.b16 %v124
  %v548 = vunpack.c.l.b16 %v125
  %v549 = vunpack.c.h.b16 %v125
  %v550 = vunpack.c.l.b16 %v126
  %v551 = vunpack.c.h.b16 %v126
  %v552 = vunpack.c.l.b16 %v127
  %v553 = vunpack.c.h.b16 %v127
  %v554 = vunpack.c.l.b16 %v128
  %v555 = vunpack.c.h.b16 %v128
  %v556 = vunpack.c.l.b16 %v129
  %v557 = vunpack.c.h.b16 %v129
  %v558 = vunpack.c.l.b16 %v130
  %v559 = vunpack.c.h.b16 %v130
  %v560 = vunpack.c.l.b16 %v131
  %v561 = vunpack.c.h.b16 %v131
  %v562 = vunpack.c.l.b16 %v132
  %v563 = vunpack.c.h.b16 %v132
  %v564 = vunpack.c.l.b16 %v133
  %v565 = vunpack.c.h.b16 %v133
  %v566 = vunpack.c.l.b16 %v134
  %v567 = vunpack.c.h.b16 %v134
  %v568 = vunpack.c.l.b16 %v135
  %v569 = vunpack.c.h.b16 %v135
  %v570 = vunpack.c.l.b16 %v136
  %v571 = vunpack.c.h.b16 %v136
  %v572 = vunpack.c.l.b16 %v137
  %v573 = vunpack.c.h.b16 %v137
  %v574 = vunpack.c.l.b16 %v138
  %v575 = vunpack.c.h.b16 %v138
  %v576 = vunpack.c.l.b16 %v139
  %v577 = vunpack.c.h.b16 %v139
  %v578 = vunpack.c.l.b16 %v140
  %v579 = vunpack.c.h.b16 %v140
  %v580 = vunpack.c.l.b16 %v141
  %v581 = vunpack.c.h.b16 %v141
  %v582 = vunpack.c.l.b16 %v142
  %v583 = vunpack.c.h.b16 %v142
  %v584 = vunpack.c.l.b16 %v143
  %v585 = vunpack.c.h.b16 %v143
  %v586 = vunpack.c.l.b16 %v144
  %v587 = vunpack.c.h.b16 %v144
  %v588 = vunpack.c.l.b16 %v145
  %v589 = vunpack.c.h.b16 %v145
  %v590 = vpack.c.b16 %v530, %v526
  %v591 = vpack.c.b16 %v531, %v527
  %v592 = vpack.c.b16 %v532, %v528
  %v593 = vpack.c.b16 %v533, %v529
  %v594 = vpack.c.b16 %v538, %v534
  %v595 = vpack.c.b16 %v539, %v535
  %v596 = vpack.c.b16 %v540, %v536
  %v597 = vpack.c.b16 %v541, %v537
  %v598 = vpack.c.b16 %v546, %v542
  %v599 = vpack.c.b16 %v547, %v543
  %v600 = vpack.c.b16 %v548, %v544
  %v601 = vpack.c.b16 %v549, %v545
  %v602 = vpack.c.b16 %v554, %v550
  %v603 = vpack.c.b16 %v555, %v551
  %v604 = vpack.c.b16 %v556, %v552
  %v605 = vpack.c.b16 %v557, %v553
  %v606 = vpack.c.b16 %v562, %v558
  %v607 = vpack.c.b16 %v563, %v559
  %v608 = vpack.c.b16 %v564, %v560
  %v609 = vpack.c.b16 %v565, %v561
  %v610 = vpack.c.b16 %v570, %v566
  %v611 = vpack.c.b16 %v571, %v567
  %v612 = vpack.c.b16 %v572, %v568
  %v613 = vpack.c.b16 %v573, %v569
  %v614 = vpack.c.b16 %v578, %v574
  %v615 = vpack.c.b16 %v579, %v575
  %v616 = vpack.c.b16 %v580, %v576
  %v617 = vpack.c.b16 %v581, %v577
  %v618 = vpack.c.b16 %v586, %v582
  %v619 = vpack.c.b16 %v587, %v583
  %v620 = vpack.c.b16 %v588, %v584
  %v621 = vpack.c.b16 %v589, %v585
  %654 = vmatprep.subr.bf16.mxu0 %v591
  %655 = vmatpush1.bf16.msra.mxu0 %v590
  %656 = vmatprep.subr.bf16.mxu0 %v595
  %657 = vmatpush1.bf16.msra.mxu0 %v594
  %658 = vmatprep.subr.bf16.mxu0 %v599
  %659 = vmatpush1.bf16.msra.mxu0 %v598
  %660 = vmatprep.subr.bf16.mxu0 %v603
  %661 = vmatpush1.bf16.msra.mxu0 %v602
  %662 = vmatprep.subr.bf16.mxu0 %v607
  %663 = vmatpush1.bf16.msra.mxu0 %v606
  %664 = vmatprep.subr.bf16.mxu0 %v611
  %665 = vmatpush1.bf16.msra.mxu0 %v610
  %666 = vmatprep.subr.bf16.mxu0 %v615
  %667 = vmatpush1.bf16.msra.mxu0 %v614
  %668 = vmatprep.subr.bf16.mxu0 %v619
  %669 = vmatpush1.bf16.msra.mxu0 %v618
  %670 = vmatprep.subr.bf16.mxu0 0
  %671 = vmatpush1.bf16.msra.mxu0 0
  %672 = vmatprep.subr.bf16.mxu0 0
  %673 = vmatpush1.bf16.msra.mxu0 0
  %674 = vmatprep.subr.bf16.mxu0 0
  %675 = vmatpush1.bf16.msra.mxu0 0
  %676 = vmatprep.subr.bf16.mxu0 0
  %677 = vmatpush1.bf16.msra.mxu0 0
  %678 = vmatprep.subr.bf16.mxu0 0
  %679 = vmatpush1.bf16.msra.mxu0 0
  %680 = vmatprep.subr.bf16.mxu0 0
  %681 = vmatpush1.bf16.msra.mxu0 0
  %682 = vmatprep.subr.bf16.mxu0 0
  %683 = vmatpush1.bf16.msra.mxu0 0
  %684 = vmatprep.subr.bf16.mxu0 0
  %685 = vmatpush1.bf16.msra.mxu0 0
  %686 = vmatprep.mubr.bf16.mxu0 0
  %687 = vmatmul.mubr.bf16.gmra.mrb[0].mxu0 %v493
  %v688 = vpop.f32.mrb[0].mxu0
  %v689 = vadd.f32 0.0, %v688
  %v690 = vpop.f32.mrb[0].mxu0
  %v691 = vadd.f32 0.0, %v690
  %v692 = vpop.f32.mrb[0].mxu0
  %v693 = vadd.f32 0.0, %v692
  %v694 = vpop.f32.mrb[0].mxu0
  %v695 = vadd.f32 0.0, %v694
  %696 = vdwg.mxu0
  %697 = vmatprep.subr.bf16.mxu0 %v593
  %698 = vmatpush1.bf16.msra.mxu0 %v592
  %699 = vmatprep.subr.bf16.mxu0 %v597
  %700 = vmatpush1.bf16.msra.mxu0 %v596
  %701 = vmatprep.subr.bf16.mxu0 %v601
  %702 = vmatpush1.bf16.msra.mxu0 %v600
  %703 = vmatprep.subr.bf16.mxu0 %v605
  %704 = vmatpush1.bf16.msra.mxu0 %v604
  %705 = vmatprep.subr.bf16.mxu0 %v609
  %706 = vmatpush1.bf16.msra.mxu0 %v608
  %707 = vmatprep.subr.bf16.mxu0 %v613
  %708 = vmatpush1.bf16.msra.mxu0 %v612
  %709 = vmatprep.subr.bf16.mxu0 %v617
  %710 = vmatpush1.bf16.msra.mxu0 %v616
  %711 = vmatprep.subr.bf16.mxu0 %v621
  %712 = vmatpush1.bf16.msra.mxu0 %v620
  %713 = vmatprep.subr.bf16.mxu0 0
  %714 = vmatpush1.bf16.msra.mxu0 0
  %715 = vmatprep.subr.bf16.mxu0 0
  %716 = vmatpush1.bf16.msra.mxu0 0
  %717 = vmatprep.subr.bf16.mxu0 0
  %718 = vmatpush1.bf16.msra.mxu0 0
  %719 = vmatprep.subr.bf16.mxu0 0
  %720 = vmatpush1.bf16.msra.mxu0 0
  %721 = vmatprep.subr.bf16.mxu0 0
  %722 = vmatpush1.bf16.msra.mxu0 0
  %723 = vmatprep.subr.bf16.mxu0 0
  %724 = vmatpush1.bf16.msra.mxu0 0
  %725 = vmatprep.subr.bf16.mxu0 0
  %726 = vmatpush1.bf16.msra.mxu0 0
  %727 = vmatprep.subr.bf16.mxu0 0
  %728 = vmatpush1.bf16.msra.mxu0 0
  %729 = vmatprep.mubr.bf16.mxu0 0
  %730 = vmatmul.mubr.bf16.gmra.mrb[0].mxu0 %v493
  %v731 = vpop.f32.mrb[0].mxu0
  %v732 = vadd.f32 0.0, %v731
  %v733 = vpop.f32.mrb[0].mxu0
  %v734 = vadd.f32 0.0, %v733
  %v735 = vpop.f32.mrb[0].mxu0
  %v736 = vadd.f32 0.0, %v735
  %v737 = vpop.f32.mrb[0].mxu0
  %v738 = vadd.f32 0.0, %v737
  %739 = vdwg.mxu0
  %v740 = vadd.f32 %v483, %v689
  %v741 = vadd.f32 %v484, %v691
  %v742 = vadd.f32 %v485, %v732
  %v743 = vadd.f32 %v486, %v734
  %v744 = vadd.f32 %v487, %v693
  %v745 = vadd.f32 %v488, %v695
  %v746 = vadd.f32 %v489, %v736
  %v747 = vadd.f32 %v490, %v738
  %v748 = vld [vmem:[#allocation3] sm:$0xff]
  %v749 = vld [vmem:[#allocation3 + $0x8] sm:$0xff]
  %v750 = vxor.u32 %v441, 2147483648
  %v751 = vxor.u32 %v442, 2147483648
  %v752 = vxor.u32 %v443, 2147483648
  %v753 = vxor.u32 %v445, 2147483648
  %v754 = vxor.u32 %v446, 2147483648
  %v755 = vxor.u32 %v447, 2147483648
  %v756 = vmul.f32 %v750, 1.442695
  %v757 = vpow.pop %v756
  %v758 = vmul.f32 %v751, 1.442695
  %v759 = vpow.pop %v758
  %v760 = vmul.f32 %v752, 1.442695
  %v761 = vpow.pop %v760
  %v762 = vmul.f32 %v753, 1.442695
  %v763 = vpow.pop %v762
  %v764 = vmul.f32 %v754, 1.442695
  %v765 = vpow.pop %v764
  %v766 = vmul.f32 %v755, 1.442695
  %v767 = vpow.pop %v766
  %v768 = vadd.f32 %v757, 1.0
  %v769 = vadd.f32 %v759, 1.0
  %v770 = vadd.f32 %v761, 1.0
  %v771 = vadd.f32 %v763, 1.0
  %v772 = vadd.f32 %v765, 1.0
  %v773 = vadd.f32 %v767, 1.0
  %v774 = vrcp.pop %v768
  %v775 = vmul.f32 1.0, %v774
  %v776 = vrcp.pop %v769
  %v777 = vmul.f32 1.0, %v776
  %v778 = vrcp.pop %v770
  %v779 = vmul.f32 1.0, %v778
  %v780 = vrcp.pop %v771
  %v781 = vmul.f32 1.0, %v780
  %v782 = vrcp.pop %v772
  %v783 = vmul.f32 1.0, %v782
  %v784 = vrcp.pop %v773
  %v785 = vmul.f32 1.0, %v784
  %v786 = vtanh.pop %v444
  %v787 = vtanh.pop %v448
  %v788 = vmul.f32 %v777, %v748
  %v789 = vmul.f32 %v783, %v749
  %v790 = vmul.f32 %v775, %v786
  %v791 = vmul.f32 %v781, %v787
  %v792 = vadd.f32 %v788, %v790
  %v793 = vadd.f32 %v789, %v791
  %v794 = vtanh.pop %v792
  %v795 = vtanh.pop %v793
  %v796 = vmul.f32 %v779, %v794
  %v797 = vmul.f32 %v785, %v795
  %v798 = vld [vmem:[#allocation5] sm:$0xff]
  %v799 = vld [vmem:[#allocation5 + $0x8] sm:$0xff]
  %v800 = vxor.u32 %v740, 2147483648
  %v801 = vxor.u32 %v741, 2147483648
  %v802 = vxor.u32 %v742, 2147483648
  %v803 = vxor.u32 %v744, 2147483648
  %v804 = vxor.u32 %v745, 2147483648
  %v805 = vxor.u32 %v746, 2147483648
  %v806 = vmul.f32 %v800, 1.442695
  %v807 = vpow.pop %v806
  %v808 = vmul.f32 %v801, 1.442695
  %v809 = vpow.pop %v808
  %v810 = vmul.f32 %v802, 1.442695
  %v811 = vpow.pop %v810
  %v812 = vmul.f32 %v803, 1.442695
  %v813 = vpow.pop %v812
  %v814 = vmul.f32 %v804, 1.442695
  %v815 = vpow.pop %v814
  %v816 = vmul.f32 %v805, 1.442695
  %v817 = vpow.pop %v816
  %v818 = vadd.f32 %v807, 1.0
  %v819 = vadd.f32 %v809, 1.0
  %v820 = vadd.f32 %v811, 1.0
  %v821 = vadd.f32 %v813, 1.0
  %v822 = vadd.f32 %v815, 1.0
  %v823 = vadd.f32 %v817, 1.0
  %v824 = vrcp.pop %v818
  %v825 = vmul.f32 1.0, %v824
  %v826 = vrcp.pop %v819
  %v827 = vmul.f32 1.0, %v826
  %v828 = vrcp.pop %v820
  %v829 = vmul.f32 1.0, %v828
  %v830 = vrcp.pop %v821
  %v831 = vmul.f32 1.0, %v830
  %v832 = vrcp.pop %v822
  %v833 = vmul.f32 1.0, %v832
  %v834 = vrcp.pop %v823
  %v835 = vmul.f32 1.0, %v834
  %v836 = vtanh.pop %v743
  %v837 = vtanh.pop %v747
  %v838 = vmul.f32 %v827, %v798
  %v839 = vmul.f32 %v833, %v799
  %v840 = vmul.f32 %v825, %v836
  %v841 = vmul.f32 %v831, %v837
  %v842 = vadd.f32 %v838, %v840
  %v843 = vadd.f32 %v839, %v841
  %v844 = vtanh.pop %v842
  %v845 = vtanh.pop %v843
  %v846 = vmul.f32 %v829, %v844
  %v847 = vmul.f32 %v835, %v845
  %v848 = vstv %s148
  %vm849 = vcmp.lt.s32.totalorder %v848, %v80
  %vm850 = vcmp.lt.s32.totalorder %v848, %v81
  %s851 = sadd.s32 %s150, 7
  %v852 = vstv %s851
  %vm853 = vcmp.lt.s32.totalorder %v852, %v80
  %vm854 = vcmp.lt.s32.totalorder %v852, %v81
  %v855 = vsel %vm849, 1, 0
  %v856 = vsel %vm850, 1, 0
  %857 = vset.pattern.permute.xlu0 0
  %858 = vperm.xlu0 %857, %v855
  %v859 = vpop.permute.xlu0 %858
  %860 = vset.pattern.permute.xlu0 0
  %861 = vperm.xlu0 %860, %v856
  %v862 = vpop.permute.xlu0 %861
  %vm863 = vcmp.eq.s32.totalorder %v859, 1
  %vm864 = vcmp.eq.s32.totalorder %v862, 1
  %v865 = vsel %vm863, %v796, %v192
  %v866 = vsel %vm864, %v797, %v193
  %867 = vst [vmem:[#allocation2] sm:$0xff] %v865
  %868 = vst [vmem:[#allocation2 + $0x8] sm:$0xff] %v866
  %v869 = vld [vmem:[#allocation3] sm:$0xff]
  %v870 = vld [vmem:[#allocation3 + $0x8] sm:$0xff]
  %v871 = vsel %vm863, %v792, %v869
  %v872 = vsel %vm864, %v793, %v870
  %873 = vst [vmem:[#allocation3] sm:$0xff] %v871
  %874 = vst [vmem:[#allocation3 + $0x8] sm:$0xff] %v872
  %v875 = vld [vmem:[#allocation4] sm:$0xff]
  %v876 = vld [vmem:[#allocation4 + $0x8] sm:$0xff]
  %v877 = vsel %vm853, 1, 0
  %v878 = vsel %vm854, 1, 0
  %879 = vset.pattern.permute.xlu0 0
  %880 = vperm.xlu0 %879, %v877
  %v881 = vpop.permute.xlu0 %880
  %882 = vset.pattern.permute.xlu0 0
  %883 = vperm.xlu0 %882, %v878
  %v884 = vpop.permute.xlu0 %883
  %vm885 = vcmp.eq.s32.totalorder %v881, 1
  %vm886 = vcmp.eq.s32.totalorder %v884, 1
  %v887 = vsel %vm885, %v846, %v875
  %v888 = vsel %vm886, %v847, %v876
  %889 = vst [vmem:[#allocation4] sm:$0xff] %v887
  %890 = vst [vmem:[#allocation4 + $0x8] sm:$0xff] %v888
  %v891 = vld [vmem:[#allocation5] sm:$0xff]
  %v892 = vld [vmem:[#allocation5 + $0x8] sm:$0xff]
  %v893 = vsel %vm885, %v842, %v891
  %v894 = vsel %vm886, %v843, %v892
  %895 = vst [vmem:[#allocation5] sm:$0xff] %v893
  %896 = vst [vmem:[#allocation5 + $0x8] sm:$0xff] %v894
  %v897 = vsel %vm863, %v796, 0.0
  %v898 = vsel %vm864, %v797, 0.0
  %v899 = vpack.c.bf16 %v898, %v897
  %900 = vst [vmem:[%s7] sm:$0xff] %v899
  %v901 = vsel %vm885, %v846, 0.0
  %v902 = vsel %vm886, %v847, 0.0
  %v903 = vpack.c.bf16 %v902, %v901
  %s904 = scalar_lea.vmem %s64, 56
  %905 = vst [vmem:[%s904] sm:$0xff] %v903
  %s906 = scalar_lea.vmem %s1, 32
  %v907 = vld [vmem:[%s906] sm:$0xff]
  %v908 = vld [vmem:[%s906 + $0x8] sm:$0xff]
  %v909 = vld [vmem:[%s906 + $0x10] sm:$0xff]
  %v910 = vld [vmem:[%s906 + $0x18] sm:$0xff]
  %v911 = vunpack.c.l.bf16 %v907
  %v912 = vunpack.c.h.bf16 %v907
  %v913 = vunpack.c.l.bf16 %v908
  %v914 = vunpack.c.h.bf16 %v908
  %v915 = vunpack.c.l.bf16 %v909
  %v916 = vunpack.c.h.bf16 %v909
  %v917 = vunpack.c.l.bf16 %v910
  %v918 = vunpack.c.h.bf16 %v910
  %v919 = vadd.f32 %v911, %v167
  %v920 = vadd.f32 %v912, %v171
  %v921 = vadd.f32 %v913, %v175
  %v922 = vadd.f32 %v914, %v179
  %v923 = vadd.f32 %v915, %v167
  %v924 = vadd.f32 %v916, %v171
  %v925 = vadd.f32 %v917, %v175
  %v926 = vadd.f32 %v918, %v179
  %v927 = vld [vmem:[#allocation2] sm:$0xff]
  %v928 = vld [vmem:[#allocation2 + $0x8] sm:$0xff]
  %v929 = vpack.c.bf16 %v928, %v927
  %930 = vmatprep.subr.bf16.mxu0 %v292
  %931 = vmatpush1.bf16.msra.mxu0 %v291
  %932 = vmatprep.subr.bf16.mxu0 %v296
  %933 = vmatpush1.bf16.msra.mxu0 %v295
  %934 = vmatprep.subr.bf16.mxu0 %v300
  %935 = vmatpush1.bf16.msra.mxu0 %v299
  %936 = vmatprep.subr.bf16.mxu0 %v304
  %937 = vmatpush1.bf16.msra.mxu0 %v303
  %938 = vmatprep.subr.bf16.mxu0 %v308
  %939 = vmatpush1.bf16.msra.mxu0 %v307
  %940 = vmatprep.subr.bf16.mxu0 %v312
  %941 = vmatpush1.bf16.msra.mxu0 %v311
  %942 = vmatprep.subr.bf16.mxu0 %v316
  %943 = vmatpush1.bf16.msra.mxu0 %v315
  %944 = vmatprep.subr.bf16.mxu0 %v320
  %945 = vmatpush1.bf16.msra.mxu0 %v319
  %946 = vmatprep.subr.bf16.mxu0 0
  %947 = vmatpush1.bf16.msra.mxu0 0
  %948 = vmatprep.subr.bf16.mxu0 0
  %949 = vmatpush1.bf16.msra.mxu0 0
  %950 = vmatprep.subr.bf16.mxu0 0
  %951 = vmatpush1.bf16.msra.mxu0 0
  %952 = vmatprep.subr.bf16.mxu0 0
  %953 = vmatpush1.bf16.msra.mxu0 0
  %954 = vmatprep.subr.bf16.mxu0 0
  %955 = vmatpush1.bf16.msra.mxu0 0
  %956 = vmatprep.subr.bf16.mxu0 0
  %957 = vmatpush1.bf16.msra.mxu0 0
  %958 = vmatprep.subr.bf16.mxu0 0
  %959 = vmatpush1.bf16.msra.mxu0 0
  %960 = vmatprep.subr.bf16.mxu0 0
  %961 = vmatpush1.bf16.msra.mxu0 0
  %962 = vmatprep.mubr.bf16.mxu0 0
  %963 = vmatmul.mubr.bf16.gmra.mrb[0].mxu0 %v929
  %v964 = vpop.f32.mrb[0].mxu0
  %v965 = vadd.f32 0.0, %v964
  %v966 = vpop.f32.mrb[0].mxu0
  %v967 = vadd.f32 0.0, %v966
  %v968 = vpop.f32.mrb[0].mxu0
  %v969 = vadd.f32 0.0, %v968
  %v970 = vpop.f32.mrb[0].mxu0
  %v971 = vadd.f32 0.0, %v970
  %972 = vdwg.mxu0
  %973 = vmatprep.subr.bf16.mxu0 %v294
  %974 = vmatpush1.bf16.msra.mxu0 %v293
  %975 = vmatprep.subr.bf16.mxu0 %v298
  %976 = vmatpush1.bf16.msra.mxu0 %v297
  %977 = vmatprep.subr.bf16.mxu0 %v302
  %978 = vmatpush1.bf16.msra.mxu0 %v301
  %979 = vmatprep.subr.bf16.mxu0 %v306
  %980 = vmatpush1.bf16.msra.mxu0 %v305
  %981 = vmatprep.subr.bf16.mxu0 %v310
  %982 = vmatpush1.bf16.msra.mxu0 %v309
  %983 = vmatprep.subr.bf16.mxu0 %v314
  %984 = vmatpush1.bf16.msra.mxu0 %v313
  %985 = vmatprep.subr.bf16.mxu0 %v318
  %986 = vmatpush1.bf16.msra.mxu0 %v317
  %987 = vmatprep.subr.bf16.mxu0 %v322
  %988 = vmatpush1.bf16.msra.mxu0 %v321
  %989 = vmatprep.subr.bf16.mxu0 0
  %990 = vmatpush1.bf16.msra.mxu0 0
  %991 = vmatprep.subr.bf16.mxu0 0
  %992 = vmatpush1.bf16.msra.mxu0 0
  %993 = vmatprep.subr.bf16.mxu0 0
  %994 = vmatpush1.bf16.msra.mxu0 0
  %995 = vmatprep.subr.bf16.mxu0 0
  %996 = vmatpush1.bf16.msra.mxu0 0
  %997 = vmatprep.subr.bf16.mxu0 0
  %998 = vmatpush1.bf16.msra.mxu0 0
  %999 = vmatprep.subr.bf16.mxu0 0
  %1000 = vmatpush1.bf16.msra.mxu0 0
  %1001 = vmatprep.subr.bf16.mxu0 0
  %1002 = vmatpush1.bf16.msra.mxu0 0
  %1003 = vmatprep.subr.bf16.mxu0 0
  %1004 = vmatpush1.bf16.msra.mxu0 0
  %1005 = vmatprep.mubr.bf16.mxu0 0
  %1006 = vmatmul.mubr.bf16.gmra.mrb[0].mxu0 %v929
  %v1007 = vpop.f32.mrb[0].mxu0
  %v1008 = vadd.f32 0.0, %v1007
  %v1009 = vpop.f32.mrb[0].mxu0
  %v1010 = vadd.f32 0.0, %v1009
  %v1011 = vpop.f32.mrb[0].mxu0
  %v1012 = vadd.f32 0.0, %v1011
  %v1013 = vpop.f32.mrb[0].mxu0
  %v1014 = vadd.f32 0.0, %v1013
  %1015 = vdwg.mxu0
  %v1016 = vadd.f32 %v919, %v965
  %v1017 = vadd.f32 %v920, %v967
  %v1018 = vadd.f32 %v921, %v1008
  %v1019 = vadd.f32 %v922, %v1010
  %v1020 = vadd.f32 %v923, %v969
  %v1021 = vadd.f32 %v924, %v971
  %v1022 = vadd.f32 %v925, %v1012
  %v1023 = vadd.f32 %v926, %v1014
  %s1024 = scalar_lea.vmem %s56, 192
  %v1025 = vld [vmem:[%s1024] sm:$0xff]
  %v1026 = vld [vmem:[%s1024 + $0x8] sm:$0xff]
  %v1027 = vld [vmem:[%s1024 + $0x10] sm:$0xff]
  %v1028 = vld [vmem:[%s1024 + $0x18] sm:$0xff]
  %v1029 = vunpack.c.l.bf16 %v1025
  %v1030 = vunpack.c.h.bf16 %v1025
  %v1031 = vunpack.c.l.bf16 %v1026
  %v1032 = vunpack.c.h.bf16 %v1026
  %v1033 = vunpack.c.l.bf16 %v1027
  %v1034 = vunpack.c.h.bf16 %v1027
  %v1035 = vunpack.c.l.bf16 %v1028
  %v1036 = vunpack.c.h.bf16 %v1028
  %v1037 = vadd.f32 %v1029, %v466
  %v1038 = vadd.f32 %v1030, %v470
  %v1039 = vadd.f32 %v1031, %v474
  %v1040 = vadd.f32 %v1032, %v478
  %v1041 = vadd.f32 %v1033, %v466
  %v1042 = vadd.f32 %v1034, %v470
  %v1043 = vadd.f32 %v1035, %v474
  %v1044 = vadd.f32 %v1036, %v478
  %v1045 = vld [vmem:[#allocation4] sm:$0xff]
  %v1046 = vld [vmem:[#allocation4 + $0x8] sm:$0xff]
  %v1047 = vpack.c.bf16 %v1046, %v1045
  %1048 = vmatprep.subr.bf16.mxu0 %v591
  %1049 = vmatpush1.bf16.msra.mxu0 %v590
  %1050 = vmatprep.subr.bf16.mxu0 %v595
  %1051 = vmatpush1.bf16.msra.mxu0 %v594
  %1052 = vmatprep.subr.bf16.mxu0 %v599
  %1053 = vmatpush1.bf16.msra.mxu0 %v598
  %1054 = vmatprep.subr.bf16.mxu0 %v603
  %1055 = vmatpush1.bf16.msra.mxu0 %v602
  %1056 = vmatprep.subr.bf16.mxu0 %v607
  %1057 = vmatpush1.bf16.msra.mxu0 %v606
  %1058 = vmatprep.subr.bf16.mxu0 %v611
  %1059 = vmatpush1.bf16.msra.mxu0 %v610
  %1060 = vmatprep.subr.bf16.mxu0 %v615
  %1061 = vmatpush1.bf16.msra.mxu0 %v614
  %1062 = vmatprep.subr.bf16.mxu0 %v619
  %1063 = vmatpush1.bf16.msra.mxu0 %v618
  %1064 = vmatprep.subr.bf16.mxu0 0
  %1065 = vmatpush1.bf16.msra.mxu0 0
  %1066 = vmatprep.subr.bf16.mxu0 0
  %1067 = vmatpush1.bf16.msra.mxu0 0
  %1068 = vmatprep.subr.bf16.mxu0 0
  %1069 = vmatpush1.bf16.msra.mxu0 0
  %1070 = vmatprep.subr.bf16.mxu0 0
  %1071 = vmatpush1.bf16.msra.mxu0 0
  %1072 = vmatprep.subr.bf16.mxu0 0
  %1073 = vmatpush1.bf16.msra.mxu0 0
  %1074 = vmatprep.subr.bf16.mxu0 0
  %1075 = vmatpush1.bf16.msra.mxu0 0
  %1076 = vmatprep.subr.bf16.mxu0 0
  %1077 = vmatpush1.bf16.msra.mxu0 0
  %1078 = vmatprep.subr.bf16.mxu0 0
  %1079 = vmatpush1.bf16.msra.mxu0 0
  %1080 = vmatprep.mubr.bf16.mxu0 0
  %1081 = vmatmul.mubr.bf16.gmra.mrb[0].mxu0 %v1047
  %v1082 = vpop.f32.mrb[0].mxu0
  %v1083 = vadd.f32 0.0, %v1082
  %v1084 = vpop.f32.mrb[0].mxu0
  %v1085 = vadd.f32 0.0, %v1084
  %v1086 = vpop.f32.mrb[0].mxu0
  %v1087 = vadd.f32 0.0, %v1086
  %v1088 = vpop.f32.mrb[0].mxu0
  %v1089 = vadd.f32 0.0, %v1088
  %1090 = vdwg.mxu0
  %1091 = vmatprep.subr.bf16.mxu0 %v593
  %1092 = vmatpush1.bf16.msra.mxu0 %v592
  %1093 = vmatprep.subr.bf16.mxu0 %v597
  %1094 = vmatpush1.bf16.msra.mxu0 %v596
  %1095 = vmatprep.subr.bf16.mxu0 %v601
  %1096 = vmatpush1.bf16.msra.mxu0 %v600
  %1097 = vmatprep.subr.bf16.mxu0 %v605
  %1098 = vmatpush1.bf16.msra.mxu0 %v604
  %1099 = vmatprep.subr.bf16.mxu0 %v609
  %1100 = vmatpush1.bf16.msra.mxu0 %v608
  %1101 = vmatprep.subr.bf16.mxu0 %v613
  %1102 = vmatpush1.bf16.msra.mxu0 %v612
  %1103 = vmatprep.subr.bf16.mxu0 %v617
  %1104 = vmatpush1.bf16.msra.mxu0 %v616
  %1105 = vmatprep.subr.bf16.mxu0 %v621
  %1106 = vmatpush1.bf16.msra.mxu0 %v620
  %1107 = vmatprep.subr.bf16.mxu0 0
  %1108 = vmatpush1.bf16.msra.mxu0 0
  %1109 = vmatprep.subr.bf16.mxu0 0
  %1110 = vmatpush1.bf16.msra.mxu0 0
  %1111 = vmatprep.subr.bf16.mxu0 0
  %1112 = vmatpush1.bf16.msra.mxu0 0
  %1113 = vmatprep.subr.bf16.mxu0 0
  %1114 = vmatpush1.bf16.msra.mxu0 0
  %1115 = vmatprep.subr.bf16.mxu0 0
  %1116 = vmatpush1.bf16.msra.mxu0 0
  %1117 = vmatprep.subr.bf16.mxu0 0
  %1118 = vmatpush1.bf16.msra.mxu0 0
  %1119 = vmatprep.subr.bf16.mxu0 0
  %1120 = vmatpush1.bf16.msra.mxu0 0
  %1121 = vmatprep.subr.bf16.mxu0 0
  %1122 = vmatpush1.bf16.msra.mxu0 0
  %1123 = vmatprep.mubr.bf16.mxu0 0
  %1124 = vmatmul.mubr.bf16.gmra.mrb[0].mxu0 %v1047
  %v1125 = vpop.f32.mrb[0].mxu0
  %v1126 = vadd.f32 0.0, %v1125
  %v1127 = vpop.f32.mrb[0].mxu0
  %v1128 = vadd.f32 0.0, %v1127
  %v1129 = vpop.f32.mrb[0].mxu0
  %v1130 = vadd.f32 0.0, %v1129
  %v1131 = vpop.f32.mrb[0].mxu0
  %v1132 = vadd.f32 0.0, %v1131
  %1133 = vdwg.mxu0
  %v1134 = vadd.f32 %v1037, %v1083
  %v1135 = vadd.f32 %v1038, %v1085
  %v1136 = vadd.f32 %v1039, %v1126
  %v1137 = vadd.f32 %v1040, %v1128
  %v1138 = vadd.f32 %v1041, %v1087
  %v1139 = vadd.f32 %v1042, %v1089
  %v1140 = vadd.f32 %v1043, %v1130
  %v1141 = vadd.f32 %v1044, %v1132
  %v1142 = vld [vmem:[#allocation3] sm:$0xff]
  %v1143 = vld [vmem:[#allocation3 + $0x8] sm:$0xff]
  %v1144 = vxor.u32 %v1016, 2147483648
  %v1145 = vxor.u32 %v1017, 2147483648
  %v1146 = vxor.u32 %v1018, 2147483648
  %v1147 = vxor.u32 %v1020, 2147483648
  %v1148 = vxor.u32 %v1021, 2147483648
  %v1149 = vxor.u32 %v1022, 2147483648
  %v1150 = vmul.f32 %v1144, 1.442695
  %v1151 = vpow.pop %v1150
  %v1152 = vmul.f32 %v1145, 1.442695
  %v1153 = vpow.pop %v1152
  %v1154 = vmul.f32 %v1146, 1.442695
  %v1155 = vpow.pop %v1154
  %v1156 = vmul.f32 %v1147, 1.442695
  %v1157 = vpow.pop %v1156
  %v1158 = vmul.f32 %v1148, 1.442695
  %v1159 = vpow.pop %v1158
  %v1160 = vmul.f32 %v1149, 1.442695
  %v1161 = vpow.pop %v1160
  %v1162 = vadd.f32 %v1151, 1.0
  %v1163 = vadd.f32 %v1153, 1.0
  %v1164 = vadd.f32 %v1155, 1.0
  %v1165 = vadd.f32 %v1157, 1.0
  %v1166 = vadd.f32 %v1159, 1.0
  %v1167 = vadd.f32 %v1161, 1.0
  %v1168 = vrcp.pop %v1162
  %v1169 = vmul.f32 1.0, %v1168
  %v1170 = vrcp.pop %v1163
  %v1171 = vmul.f32 1.0, %v1170
  %v1172 = vrcp.pop %v1164
  %v1173 = vmul.f32 1.0, %v1172
  %v1174 = vrcp.pop %v1165
  %v1175 = vmul.f32 1.0, %v1174
  %v1176 = vrcp.pop %v1166
  %v1177 = vmul.f32 1.0, %v1176
  %v1178 = vrcp.pop %v1167
  %v1179 = vmul.f32 1.0, %v1178
  %v1180 = vtanh.pop %v1019
  %v1181 = vtanh.pop %v1023
  %v1182 = vmul.f32 %v1171, %v1142
  %v1183 = vmul.f32 %v1177, %v1143
  %v1184 = vmul.f32 %v1169, %v1180
  %v1185 = vmul.f32 %v1175, %v1181
  %v1186 = vadd.f32 %v1182, %v1184
  %v1187 = vadd.f32 %v1183, %v1185
  %v1188 = vtanh.pop %v1186
  %v1189 = vtanh.pop %v1187
  %v1190 = vmul.f32 %v1173, %v1188
  %v1191 = vmul.f32 %v1179, %v1189
  %v1192 = vld [vmem:[#allocation5] sm:$0xff]
  %v1193 = vld [vmem:[#allocation5 + $0x8] sm:$0xff]
  %v1194 = vxor.u32 %v1134, 2147483648
  %v1195 = vxor.u32 %v1135, 2147483648
  %v1196 = vxor.u32 %v1136, 2147483648
  %v1197 = vxor.u32 %v1138, 2147483648
  %v1198 = vxor.u32 %v1139, 2147483648
  %v1199 = vxor.u32 %v1140, 2147483648
  %v1200 = vmul.f32 %v1194, 1.442695
  %v1201 = vpow.pop %v1200
  %v1202 = vmul.f32 %v1195, 1.442695
  %v1203 = vpow.pop %v1202
  %v1204 = vmul.f32 %v1196, 1.442695
  %v1205 = vpow.pop %v1204
  %v1206 = vmul.f32 %v1197, 1.442695
  %v1207 = vpow.pop %v1206
  %v1208 = vmul.f32 %v1198, 1.442695
  %v1209 = vpow.pop %v1208
  %v1210 = vmul.f32 %v1199, 1.442695
  %v1211 = vpow.pop %v1210
  %v1212 = vadd.f32 %v1201, 1.0
  %v1213 = vadd.f32 %v1203, 1.0
  %v1214 = vadd.f32 %v1205, 1.0
  %v1215 = vadd.f32 %v1207, 1.0
  %v1216 = vadd.f32 %v1209, 1.0
  %v1217 = vadd.f32 %v1211, 1.0
  %v1218 = vrcp.pop %v1212
  %v1219 = vmul.f32 1.0, %v1218
  %v1220 = vrcp.pop %v1213
  %v1221 = vmul.f32 1.0, %v1220
  %v1222 = vrcp.pop %v1214
  %v1223 = vmul.f32 1.0, %v1222
  %v1224 = vrcp.pop %v1215
  %v1225 = vmul.f32 1.0, %v1224
  %v1226 = vrcp.pop %v1216
  %v1227 = vmul.f32 1.0, %v1226
  %v1228 = vrcp.pop %v1217
  %v1229 = vmul.f32 1.0, %v1228
  %v1230 = vtanh.pop %v1137
  %v1231 = vtanh.pop %v1141
  %v1232 = vmul.f32 %v1221, %v1192
  %v1233 = vmul.f32 %v1227, %v1193
  %v1234 = vmul.f32 %v1219, %v1230
  %v1235 = vmul.f32 %v1225, %v1231
  %v1236 = vadd.f32 %v1232, %v1234
  %v1237 = vadd.f32 %v1233, %v1235
  %v1238 = vtanh.pop %v1236
  %v1239 = vtanh.pop %v1237
  %v1240 = vmul.f32 %v1223, %v1238
  %v1241 = vmul.f32 %v1229, %v1239
  %s1242 = sadd.s32 %s148, 1
  %v1243 = vstv %s1242
  %vm1244 = vcmp.lt.s32.totalorder %v1243, %v80
  %vm1245 = vcmp.lt.s32.totalorder %v1243, %v81
  %s1246 = sadd.s32 %s150, 6
  %v1247 = vstv %s1246
  %vm1248 = vcmp.lt.s32.totalorder %v1247, %v80
  %vm1249 = vcmp.lt.s32.totalorder %v1247, %v81
  %v1250 = vsel %vm1244, 1, 0
  %v1251 = vsel %vm1245, 1, 0
  %1252 = vset.pattern.permute.xlu0 0
  %1253 = vperm.xlu0 %1252, %v1250
  %v1254 = vpop.permute.xlu0 %1253
  %1255 = vset.pattern.permute.xlu0 0
  %1256 = vperm.xlu0 %1255, %v1251
  %v1257 = vpop.permute.xlu0 %1256
  %vm1258 = vcmp.eq.s32.totalorder %v1254, 1
  %vm1259 = vcmp.eq.s32.totalorder %v1257, 1
  %v1260 = vsel %vm1258, %v1190, %v927
  %v1261 = vsel %vm1259, %v1191, %v928
  %1262 = vst [vmem:[#allocation2] sm:$0xff] %v1260
  %1263 = vst [vmem:[#allocation2 + $0x8] sm:$0xff] %v1261
  %v1264 = vld [vmem:[#allocation3] sm:$0xff]
  %v1265 = vld [vmem:[#allocation3 + $0x8] sm:$0xff]
  %v1266 = vsel %vm1258, %v1186, %v1264
  %v1267 = vsel %vm1259, %v1187, %v1265
  %1268 = vst [vmem:[#allocation3] sm:$0xff] %v1266
  %1269 = vst [vmem:[#allocation3 + $0x8] sm:$0xff] %v1267
  %v1270 = vld [vmem:[#allocation4] sm:$0xff]
  %v1271 = vld [vmem:[#allocation4 + $0x8] sm:$0xff]
  %v1272 = vsel %vm1248, 1, 0
  %v1273 = vsel %vm1249, 1, 0
  %1274 = vset.pattern.permute.xlu0 0
  %1275 = vperm.xlu0 %1274, %v1272
  %v1276 = vpop.permute.xlu0 %1275
  %1277 = vset.pattern.permute.xlu0 0
  %1278 = vperm.xlu0 %1277, %v1273
  %v1279 = vpop.permute.xlu0 %1278
  %vm1280 = vcmp.eq.s32.totalorder %v1276, 1
  %vm1281 = vcmp.eq.s32.totalorder %v1279, 1
  %v1282 = vsel %vm1280, %v1240, %v1270
  %v1283 = vsel %vm1281, %v1241, %v1271
  %1284 = vst [vmem:[#allocation4] sm:$0xff] %v1282
  %1285 = vst [vmem:[#allocation4 + $0x8] sm:$0xff] %v1283
  %v1286 = vld [vmem:[#allocation5] sm:$0xff]
  %v1287 = vld [vmem:[#allocation5 + $0x8] sm:$0xff]
  %v1288 = vsel %vm1280, %v1236, %v1286
  %v1289 = vsel %vm1281, %v1237, %v1287
  %1290 = vst [vmem:[#allocation5] sm:$0xff] %v1288
  %1291 = vst [vmem:[#allocation5 + $0x8] sm:$0xff] %v1289
  %v1292 = vsel %vm1258, %v1190, 0.0
  %v1293 = vsel %vm1259, %v1191, 0.0
  %v1294 = vpack.c.bf16 %v1293, %v1292
  %s1295 = scalar_lea.vmem %s7, 8
  %1296 = vst [vmem:[%s1295] sm:$0xff] %v1294
  %v1297 = vsel %vm1280, %v1240, 0.0
  %v1298 = vsel %vm1281, %v1241, 0.0
  %v1299 = vpack.c.bf16 %v1298, %v1297
  %s1300 = scalar_lea.vmem %s64, 48
  %1301 = vst [vmem:[%s1300] sm:$0xff] %v1299
  %s1302 = scalar_lea.vmem %s1, 64
  %v1303 = vld [vmem:[%s1302] sm:$0xff]
  %v1304 = vld [vmem:[%s1302 + $0x8] sm:$0xff]
  %v1305 = vld [vmem:[%s1302 + $0x10] sm:$0xff]
  %v1306 = vld [vmem:[%s1302 + $0x18] sm:$0xff]
  %v1307 = vunpack.c.l.bf16 %v1303
  %v1308 = vunpack.c.h.bf16 %v1303
  %v1309 = vunpack.c.l.bf16 %v1304
  %v1310 = vunpack.c.h.bf16 %v1304
  %v1311 = vunpack.c.l.bf16 %v1305
  %v1312 = vunpack.c.h.bf16 %v1305
  %v1313 = vunpack.c.l.bf16 %v1306
  %v1314 = vunpack.c.h.bf16 %v1306
  %v1315 = vadd.f32 %v1307, %v167
  %v1316 = vadd.f32 %v1308, %v171
  %v1317 = vadd.f32 %v1309, %v175
  %v1318 = vadd.f32 %v1310, %v179
  %v1319 = vadd.f32 %v1311, %v167
  %v1320 = vadd.f32 %v1312, %v171
  %v1321 = vadd.f32 %v1313, %v175
  %v1322 = vadd.f32 %v1314, %v179
  %v1323 = vld [vmem:[#allocation2] sm:$0xff]
  %v1324 = vld [vmem:[#allocation2 + $0x8] sm:$0xff]
  %v1325 = vpack.c.bf16 %v1324, %v1323
  %1326 = vmatprep.subr.bf16.mxu0 %v292
  %1327 = vmatpush1.bf16.msra.mxu0 %v291
  %1328 = vmatprep.subr.bf16.mxu0 %v296
  %1329 = vmatpush1.bf16.msra.mxu0 %v295
  %1330 = vmatprep.subr.bf16.mxu0 %v300
  %1331 = vmatpush1.bf16.msra.mxu0 %v299
  %1332 = vmatprep.subr.bf16.mxu0 %v304
  %1333 = vmatpush1.bf16.msra.mxu0 %v303
  %1334 = vmatprep.subr.bf16.mxu0 %v308
  %1335 = vmatpush1.bf16.msra.mxu0 %v307
  %1336 = vmatprep.subr.bf16.mxu0 %v312
  %1337 = vmatpush1.bf16.msra.mxu0 %v311
  %1338 = vmatprep.subr.bf16.mxu0 %v316
  %1339 = vmatpush1.bf16.msra.mxu0 %v315
  %1340 = vmatprep.subr.bf16.mxu0 %v320
  %1341 = vmatpush1.bf16.msra.mxu0 %v319
  %1342 = vmatprep.subr.bf16.mxu0 0
  %1343 = vmatpush1.bf16.msra.mxu0 0
  %1344 = vmatprep.subr.bf16.mxu0 0
  %1345 = vmatpush1.bf16.msra.mxu0 0
  %1346 = vmatprep.subr.bf16.mxu0 0
  %1347 = vmatpush1.bf16.msra.mxu0 0
  %1348 = vmatprep.subr.bf16.mxu0 0
  %1349 = vmatpush1.bf16.msra.mxu0 0
  %1350 = vmatprep.subr.bf16.mxu0 0
  %1351 = vmatpush1.bf16.msra.mxu0 0
  %1352 = vmatprep.subr.bf16.mxu0 0
  %1353 = vmatpush1.bf16.msra.mxu0 0
  %1354 = vmatprep.subr.bf16.mxu0 0
  %1355 = vmatpush1.bf16.msra.mxu0 0
  %1356 = vmatprep.subr.bf16.mxu0 0
  %1357 = vmatpush1.bf16.msra.mxu0 0
  %1358 = vmatprep.mubr.bf16.mxu0 0
  %1359 = vmatmul.mubr.bf16.gmra.mrb[0].mxu0 %v1325
  %v1360 = vpop.f32.mrb[0].mxu0
  %v1361 = vadd.f32 0.0, %v1360
  %v1362 = vpop.f32.mrb[0].mxu0
  %v1363 = vadd.f32 0.0, %v1362
  %v1364 = vpop.f32.mrb[0].mxu0
  %v1365 = vadd.f32 0.0, %v1364
  %v1366 = vpop.f32.mrb[0].mxu0
  %v1367 = vadd.f32 0.0, %v1366
  %1368 = vdwg.mxu0
  %1369 = vmatprep.subr.bf16.mxu0 %v294
  %1370 = vmatpush1.bf16.msra.mxu0 %v293
  %1371 = vmatprep.subr.bf16.mxu0 %v298
  %1372 = vmatpush1.bf16.msra.mxu0 %v297
  %1373 = vmatprep.subr.bf16.mxu0 %v302
  %1374 = vmatpush1.bf16.msra.mxu0 %v301
  %1375 = vmatprep.subr.bf16.mxu0 %v306
  %1376 = vmatpush1.bf16.msra.mxu0 %v305
  %1377 = vmatprep.subr.bf16.mxu0 %v310
  %1378 = vmatpush1.bf16.msra.mxu0 %v309
  %1379 = vmatprep.subr.bf16.mxu0 %v314
  %1380 = vmatpush1.bf16.msra.mxu0 %v313
  %1381 = vmatprep.subr.bf16.mxu0 %v318
  %1382 = vmatpush1.bf16.msra.mxu0 %v317
  %1383 = vmatprep.subr.bf16.mxu0 %v322
  %1384 = vmatpush1.bf16.msra.mxu0 %v321
  %1385 = vmatprep.subr.bf16.mxu0 0
  %1386 = vmatpush1.bf16.msra.mxu0 0
  %1387 = vmatprep.subr.bf16.mxu0 0
  %1388 = vmatpush1.bf16.msra.mxu0 0
  %1389 = vmatprep.subr.bf16.mxu0 0
  %1390 = vmatpush1.bf16.msra.mxu0 0
  %1391 = vmatprep.subr.bf16.mxu0 0
  %1392 = vmatpush1.bf16.msra.mxu0 0
  %1393 = vmatprep.subr.bf16.mxu0 0
  %1394 = vmatpush1.bf16.msra.mxu0 0
  %1395 = vmatprep.subr.bf16.mxu0 0
  %1396 = vmatpush1.bf16.msra.mxu0 0
  %1397 = vmatprep.subr.bf16.mxu0 0
  %1398 = vmatpush1.bf16.msra.mxu0 0
  %1399 = vmatprep.subr.bf16.mxu0 0
  %1400 = vmatpush1.bf16.msra.mxu0 0
  %1401 = vmatprep.mubr.bf16.mxu0 0
  %1402 = vmatmul.mubr.bf16.gmra.mrb[0].mxu0 %v1325
  %v1403 = vpop.f32.mrb[0].mxu0
  %v1404 = vadd.f32 0.0, %v1403
  %v1405 = vpop.f32.mrb[0].mxu0
  %v1406 = vadd.f32 0.0, %v1405
  %v1407 = vpop.f32.mrb[0].mxu0
  %v1408 = vadd.f32 0.0, %v1407
  %v1409 = vpop.f32.mrb[0].mxu0
  %v1410 = vadd.f32 0.0, %v1409
  %1411 = vdwg.mxu0
  %v1412 = vadd.f32 %v1315, %v1361
  %v1413 = vadd.f32 %v1316, %v1363
  %v1414 = vadd.f32 %v1317, %v1404
  %v1415 = vadd.f32 %v1318, %v1406
  %v1416 = vadd.f32 %v1319, %v1365
  %v1417 = vadd.f32 %v1320, %v1367
  %v1418 = vadd.f32 %v1321, %v1408
  %v1419 = vadd.f32 %v1322, %v1410
  %s1420 = scalar_lea.vmem %s56, 160
  %v1421 = vld [vmem:[%s1420] sm:$0xff]
  %v1422 = vld [vmem:[%s1420 + $0x8] sm:$0xff]
  %v1423 = vld [vmem:[%s1420 + $0x10] sm:$0xff]
  %v1424 = vld [vmem:[%s1420 + $0x18] sm:$0xff]
  %v1425 = vunpack.c.l.bf16 %v1421
  %v1426 = vunpack.c.h.bf16 %v1421
  %v1427 = vunpack.c.l.bf16 %v1422
  %v1428 = vunpack.c.h.bf16 %v1422
  %v1429 = vunpack.c.l.bf16 %v1423
  %v1430 = vunpack.c.h.bf16 %v1423
  %v1431 = vunpack.c.l.bf16 %v1424
  %v1432 = vunpack.c.h.bf16 %v1424
  %v1433 = vadd.f32 %v1425, %v466
  %v1434 = vadd.f32 %v1426, %v470
  %v1435 = vadd.f32 %v1427, %v474
  %v1436 = vadd.f32 %v1428, %v478
  %v1437 = vadd.f32 %v1429, %v466
  %v1438 = vadd.f32 %v1430, %v470
  %v1439 = vadd.f32 %v1431, %v474
  %v1440 = vadd.f32 %v1432, %v478
  %v1441 = vld [vmem:[#allocation4] sm:$0xff]
  %v1442 = vld [vmem:[#allocation4 + $0x8] sm:$0xff]
  %v1443 = vpack.c.bf16 %v1442, %v1441
  %1444 = vmatprep.subr.bf16.mxu0 %v591
  %1445 = vmatpush1.bf16.msra.mxu0 %v590
  %1446 = vmatprep.subr.bf16.mxu0 %v595
  %1447 = vmatpush1.bf16.msra.mxu0 %v594
  %1448 = vmatprep.subr.bf16.mxu0 %v599
  %1449 = vmatpush1.bf16.msra.mxu0 %v598
  %1450 = vmatprep.subr.bf16.mxu0 %v603
  %1451 = vmatpush1.bf16.msra.mxu0 %v602
  %1452 = vmatprep.subr.bf16.mxu0 %v607
  %1453 = vmatpush1.bf16.msra.mxu0 %v606
  %1454 = vmatprep.subr.bf16.mxu0 %v611
  %1455 = vmatpush1.bf16.msra.mxu0 %v610
  %1456 = vmatprep.subr.bf16.mxu0 %v615
  %1457 = vmatpush1.bf16.msra.mxu0 %v614
  %1458 = vmatprep.subr.bf16.mxu0 %v619
  %1459 = vmatpush1.bf16.msra.mxu0 %v618
  %1460 = vmatprep.subr.bf16.mxu0 0
  %1461 = vmatpush1.bf16.msra.mxu0 0
  %1462 = vmatprep.subr.bf16.mxu0 0
  %1463 = vmatpush1.bf16.msra.mxu0 0
  %1464 = vmatprep.subr.bf16.mxu0 0
  %1465 = vmatpush1.bf16.msra.mxu0 0
  %1466 = vmatprep.subr.bf16.mxu0 0
  %1467 = vmatpush1.bf16.msra.mxu0 0
  %1468 = vmatprep.subr.bf16.mxu0 0
  %1469 = vmatpush1.bf16.msra.mxu0 0
  %1470 = vmatprep.subr.bf16.mxu0 0
  %1471 = vmatpush1.bf16.msra.mxu0 0
  %1472 = vmatprep.subr.bf16.mxu0 0
  %1473 = vmatpush1.bf16.msra.mxu0 0
  %1474 = vmatprep.subr.bf16.mxu0 0
  %1475 = vmatpush1.bf16.msra.mxu0 0
  %1476 = vmatprep.mubr.bf16.mxu0 0
  %1477 = vmatmul.mubr.bf16.gmra.mrb[0].mxu0 %v1443
  %v1478 = vpop.f32.mrb[0].mxu0
  %v1479 = vadd.f32 0.0, %v1478
  %v1480 = vpop.f32.mrb[0].mxu0
  %v1481 = vadd.f32 0.0, %v1480
  %v1482 = vpop.f32.mrb[0].mxu0
  %v1483 = vadd.f32 0.0, %v1482
  %v1484 = vpop.f32.mrb[0].mxu0
  %v1485 = vadd.f32 0.0, %v1484
  %1486 = vdwg.mxu0
  %1487 = vmatprep.subr.bf16.mxu0 %v593
  %1488 = vmatpush1.bf16.msra.mxu0 %v592
  %1489 = vmatprep.subr.bf16.mxu0 %v597
  %1490 = vmatpush1.bf16.msra.mxu0 %v596
  %1491 = vmatprep.subr.bf16.mxu0 %v601
  %1492 = vmatpush1.bf16.msra.mxu0 %v600
  %1493 = vmatprep.subr.bf16.mxu0 %v605
  %1494 = vmatpush1.bf16.msra.mxu0 %v604
  %1495 = vmatprep.subr.bf16.mxu0 %v609
  %1496 = vmatpush1.bf16.msra.mxu0 %v608
  %1497 = vmatprep.subr.bf16.mxu0 %v613
  %1498 = vmatpush1.bf16.msra.mxu0 %v612
  %1499 = vmatprep.subr.bf16.mxu0 %v617
  %1500 = vmatpush1.bf16.msra.mxu0 %v616
  %1501 = vmatprep.subr.bf16.mxu0 %v621
  %1502 = vmatpush1.bf16.msra.mxu0 %v620
  %1503 = vmatprep.subr.bf16.mxu0 0
  %1504 = vmatpush1.bf16.msra.mxu0 0
  %1505 = vmatprep.subr.bf16.mxu0 0
  %1506 = vmatpush1.bf16.msra.mxu0 0
  %1507 = vmatprep.subr.bf16.mxu0 0
  %1508 = vmatpush1.bf16.msra.mxu0 0
  %1509 = vmatprep.subr.bf16.mxu0 0
  %1510 = vmatpush1.bf16.msra.mxu0 0
  %1511 = vmatprep.subr.bf16.mxu0 0
  %1512 = vmatpush1.bf16.msra.mxu0 0
  %1513 = vmatprep.subr.bf16.mxu0 0
  %1514 = vmatpush1.bf16.msra.mxu0 0
  %1515 = vmatprep.subr.bf16.mxu0 0
  %1516 = vmatpush1.bf16.msra.mxu0 0
  %1517 = vmatprep.subr.bf16.mxu0 0
  %1518 = vmatpush1.bf16.msra.mxu0 0
  %1519 = vmatprep.mubr.bf16.mxu0 0
  %1520 = vmatmul.mubr.bf16.gmra.mrb[0].mxu0 %v1443
  %v1521 = vpop.f32.mrb[0].mxu0
  %v1522 = vadd.f32 0.0, %v1521
  %v1523 = vpop.f32.mrb[0].mxu0
  %v1524 = vadd.f32 0.0, %v1523
  %v1525 = vpop.f32.mrb[0].mxu0
  %v1526 = vadd.f32 0.0, %v1525
  %v1527 = vpop.f32.mrb[0].mxu0
  %v1528 = vadd.f32 0.0, %v1527
  %1529 = vdwg.mxu0
  %v1530 = vadd.f32 %v1433, %v1479
  %v1531 = vadd.f32 %v1434, %v1481
  %v1532 = vadd.f32 %v1435, %v1522
  %v1533 = vadd.f32 %v1436, %v1524
  %v1534 = vadd.f32 %v1437, %v1483
  %v1535 = vadd.f32 %v1438, %v1485
  %v1536 = vadd.f32 %v1439, %v1526
  %v1537 = vadd.f32 %v1440, %v1528
  %v1538 = vld [vmem:[#allocation3] sm:$0xff]
  %v1539 = vld [vmem:[#allocation3 + $0x8] sm:$0xff]
  %v1540 = vxor.u32 %v1412, 2147483648
  %v1541 = vxor.u32 %v1413, 2147483648
  %v1542 = vxor.u32 %v1414, 2147483648
  %v1543 = vxor.u32 %v1416, 2147483648
  %v1544 = vxor.u32 %v1417, 2147483648
  %v1545 = vxor.u32 %v1418, 2147483648
  %v1546 = vmul.f32 %v1540, 1.442695
  %v1547 = vpow.pop %v1546
  %v1548 = vmul.f32 %v1541, 1.442695
  %v1549 = vpow.pop %v1548
  %v1550 = vmul.f32 %v1542, 1.442695
  %v1551 = vpow.pop %v1550
  %v1552 = vmul.f32 %v1543, 1.442695
  %v1553 = vpow.pop %v1552
  %v1554 = vmul.f32 %v1544, 1.442695
  %v1555 = vpow.pop %v1554
  %v1556 = vmul.f32 %v1545, 1.442695
  %v1557 = vpow.pop %v1556
  %v1558 = vadd.f32 %v1547, 1.0
  %v1559 = vadd.f32 %v1549, 1.0
  %v1560 = vadd.f32 %v1551, 1.0
  %v1561 = vadd.f32 %v1553, 1.0
  %v1562 = vadd.f32 %v1555, 1.0
  %v1563 = vadd.f32 %v1557, 1.0
  %v1564 = vrcp.pop %v1558
  %v1565 = vmul.f32 1.0, %v1564
  %v1566 = vrcp.pop %v1559
  %v1567 = vmul.f32 1.0, %v1566
  %v1568 = vrcp.pop %v1560
  %v1569 = vmul.f32 1.0, %v1568
  %v1570 = vrcp.pop %v1561
  %v1571 = vmul.f32 1.0, %v1570
  %v1572 = vrcp.pop %v1562
  %v1573 = vmul.f32 1.0, %v1572
  %v1574 = vrcp.pop %v1563
  %v1575 = vmul.f32 1.0, %v1574
  %v1576 = vtanh.pop %v1415
  %v1577 = vtanh.pop %v1419
  %v1578 = vmul.f32 %v1567, %v1538
  %v1579 = vmul.f32 %v1573, %v1539
  %v1580 = vmul.f32 %v1565, %v1576
  %v1581 = vmul.f32 %v1571, %v1577
  %v1582 = vadd.f32 %v1578, %v1580
  %v1583 = vadd.f32 %v1579, %v1581
  %v1584 = vtanh.pop %v1582
  %v1585 = vtanh.pop %v1583
  %v1586 = vmul.f32 %v1569, %v1584
  %v1587 = vmul.f32 %v1575, %v1585
  %v1588 = vld [vmem:[#allocation5] sm:$0xff]
  %v1589 = vld [vmem:[#allocation5 + $0x8] sm:$0xff]
  %v1590 = vxor.u32 %v1530, 2147483648
  %v1591 = vxor.u32 %v1531, 2147483648
  %v1592 = vxor.u32 %v1532, 2147483648
  %v1593 = vxor.u32 %v1534, 2147483648
  %v1594 = vxor.u32 %v1535, 2147483648
  %v1595 = vxor.u32 %v1536, 2147483648
  %v1596 = vmul.f32 %v1590, 1.442695
  %v1597 = vpow.pop %v1596
  %v1598 = vmul.f32 %v1591, 1.442695
  %v1599 = vpow.pop %v1598
  %v1600 = vmul.f32 %v1592, 1.442695
  %v1601 = vpow.pop %v1600
  %v1602 = vmul.f32 %v1593, 1.442695
  %v1603 = vpow.pop %v1602
  %v1604 = vmul.f32 %v1594, 1.442695
  %v1605 = vpow.pop %v1604
  %v1606 = vmul.f32 %v1595, 1.442695
  %v1607 = vpow.pop %v1606
  %v1608 = vadd.f32 %v1597, 1.0
  %v1609 = vadd.f32 %v1599, 1.0
  %v1610 = vadd.f32 %v1601, 1.0
  %v1611 = vadd.f32 %v1603, 1.0
  %v1612 = vadd.f32 %v1605, 1.0
  %v1613 = vadd.f32 %v1607, 1.0
  %v1614 = vrcp.pop %v1608
  %v1615 = vmul.f32 1.0, %v1614
  %v1616 = vrcp.pop %v1609
  %v1617 = vmul.f32 1.0, %v1616
  %v1618 = vrcp.pop %v1610
  %v1619 = vmul.f32 1.0, %v1618
  %v1620 = vrcp.pop %v1611
  %v1621 = vmul.f32 1.0, %v1620
  %v1622 = vrcp.pop %v1612
  %v1623 = vmul.f32 1.0, %v1622
  %v1624 = vrcp.pop %v1613
  %v1625 = vmul.f32 1.0, %v1624
  %v1626 = vtanh.pop %v1533
  %v1627 = vtanh.pop %v1537
  %v1628 = vmul.f32 %v1617, %v1588
  %v1629 = vmul.f32 %v1623, %v1589
  %v1630 = vmul.f32 %v1615, %v1626
  %v1631 = vmul.f32 %v1621, %v1627
  %v1632 = vadd.f32 %v1628, %v1630
  %v1633 = vadd.f32 %v1629, %v1631
  %v1634 = vtanh.pop %v1632
  %v1635 = vtanh.pop %v1633
  %v1636 = vmul.f32 %v1619, %v1634
  %v1637 = vmul.f32 %v1625, %v1635
  %s1638 = sadd.s32 %s148, 2
  %v1639 = vstv %s1638
  %vm1640 = vcmp.lt.s32.totalorder %v1639, %v80
  %vm1641 = vcmp.lt.s32.totalorder %v1639, %v81
  %s1642 = sadd.s32 %s150, 5
  %v1643 = vstv %s1642
  %vm1644 = vcmp.lt.s32.totalorder %v1643, %v80
  %vm1645 = vcmp.lt.s32.totalorder %v1643, %v81
  %v1646 = vsel %vm1640, 1, 0
  %v1647 = vsel %vm1641, 1, 0
  %1648 = vset.pattern.permute.xlu0 0
  %1649 = vperm.xlu0 %1648, %v1646
  %v1650 = vpop.permute.xlu0 %1649
  %1651 = vset.pattern.permute.xlu0 0
  %1652 = vperm.xlu0 %1651, %v1647
  %v1653 = vpop.permute.xlu0 %1652
  %vm1654 = vcmp.eq.s32.totalorder %v1650, 1
  %vm1655 = vcmp.eq.s32.totalorder %v1653, 1
  %v1656 = vsel %vm1654, %v1586, %v1323
  %v1657 = vsel %vm1655, %v1587, %v1324
  %1658 = vst [vmem:[#allocation2] sm:$0xff] %v1656
  %1659 = vst [vmem:[#allocation2 + $0x8] sm:$0xff] %v1657
  %v1660 = vld [vmem:[#allocation3] sm:$0xff]
  %v1661 = vld [vmem:[#allocation3 + $0x8] sm:$0xff]
  %v1662 = vsel %vm1654, %v1582, %v1660
  %v1663 = vsel %vm1655, %v1583, %v1661
  %1664 = vst [vmem:[#allocation3] sm:$0xff] %v1662
  %1665 = vst [vmem:[#allocation3 + $0x8] sm:$0xff] %v1663
  %v1666 = vld [vmem:[#allocation4] sm:$0xff]
  %v1667 = vld [vmem:[#allocation4 + $0x8] sm:$0xff]
  %v1668 = vsel %vm1644, 1, 0
  %v1669 = vsel %vm1645, 1, 0
  %1670 = vset.pattern.permute.xlu0 0
  %1671 = vperm.xlu0 %1670, %v1668
  %v1672 = vpop.permute.xlu0 %1671
  %1673 = vset.pattern.permute.xlu0 0
  %1674 = vperm.xlu0 %1673, %v1669
  %v1675 = vpop.permute.xlu0 %1674
  %vm1676 = vcmp.eq.s32.totalorder %v1672, 1
  %vm1677 = vcmp.eq.s32.totalorder %v1675, 1
  %v1678 = vsel %vm1676, %v1636, %v1666
  %v1679 = vsel %vm1677, %v1637, %v1667
  %1680 = vst [vmem:[#allocation4] sm:$0xff] %v1678
  %1681 = vst [vmem:[#allocation4 + $0x8] sm:$0xff] %v1679
  %v1682 = vld [vmem:[#allocation5] sm:$0xff]
  %v1683 = vld [vmem:[#allocation5 + $0x8] sm:$0xff]
  %v1684 = vsel %vm1676, %v1632, %v1682
  %v1685 = vsel %vm1677, %v1633, %v1683
  %1686 = vst [vmem:[#allocation5] sm:$0xff] %v1684
  %1687 = vst [vmem:[#allocation5 + $0x8] sm:$0xff] %v1685
  %v1688 = vsel %vm1654, %v1586, 0.0
  %v1689 = vsel %vm1655, %v1587, 0.0
  %v1690 = vpack.c.bf16 %v1689, %v1688
  %s1691 = scalar_lea.vmem %s7, 16
  %1692 = vst [vmem:[%s1691] sm:$0xff] %v1690
  %v1693 = vsel %vm1676, %v1636, 0.0
  %v1694 = vsel %vm1677, %v1637, 0.0
  %v1695 = vpack.c.bf16 %v1694, %v1693
  %s1696 = scalar_lea.vmem %s64, 40
  %1697 = vst [vmem:[%s1696] sm:$0xff] %v1695
  %s1698 = scalar_lea.vmem %s1, 96
  %v1699 = vld [vmem:[%s1698] sm:$0xff]
  %v1700 = vld [vmem:[%s1698 + $0x8] sm:$0xff]
  %v1701 = vld [vmem:[%s1698 + $0x10] sm:$0xff]
  %v1702 = vld [vmem:[%s1698 + $0x18] sm:$0xff]
  %v1703 = vunpack.c.l.bf16 %v1699
  %v1704 = vunpack.c.h.bf16 %v1699
  %v1705 = vunpack.c.l.bf16 %v1700
  %v1706 = vunpack.c.h.bf16 %v1700
  %v1707 = vunpack.c.l.bf16 %v1701
  %v1708 = vunpack.c.h.bf16 %v1701
  %v1709 = vunpack.c.l.bf16 %v1702
  %v1710 = vunpack.c.h.bf16 %v1702
  %v1711 = vadd.f32 %v1703, %v167
  %v1712 = vadd.f32 %v1704, %v171
  %v1713 = vadd.f32 %v1705, %v175
  %v1714 = vadd.f32 %v1706, %v179
  %v1715 = vadd.f32 %v1707, %v167
  %v1716 = vadd.f32 %v1708, %v171
  %v1717 = vadd.f32 %v1709, %v175
  %v1718 = vadd.f32 %v1710, %v179
  %v1719 = vld [vmem:[#allocation2] sm:$0xff]
  %v1720 = vld [vmem:[#allocation2 + $0x8] sm:$0xff]
  %v1721 = vpack.c.bf16 %v1720, %v1719
  %1722 = vmatprep.subr.bf16.mxu0 %v292
  %1723 = vmatpush1.bf16.msra.mxu0 %v291
  %1724 = vmatprep.subr.bf16.mxu0 %v296
  %1725 = vmatpush1.bf16.msra.mxu0 %v295
  %1726 = vmatprep.subr.bf16.mxu0 %v300
  %1727 = vmatpush1.bf16.msra.mxu0 %v299
  %1728 = vmatprep.subr.bf16.mxu0 %v304
  %1729 = vmatpush1.bf16.msra.mxu0 %v303
  %1730 = vmatprep.subr.bf16.mxu0 %v308
  %1731 = vmatpush1.bf16.msra.mxu0 %v307
  %1732 = vmatprep.subr.bf16.mxu0 %v312
  %1733 = vmatpush1.bf16.msra.mxu0 %v311
  %1734 = vmatprep.subr.bf16.mxu0 %v316
  %1735 = vmatpush1.bf16.msra.mxu0 %v315
  %1736 = vmatprep.subr.bf16.mxu0 %v320
  %1737 = vmatpush1.bf16.msra.mxu0 %v319
  %1738 = vmatprep.subr.bf16.mxu0 0
  %1739 = vmatpush1.bf16.msra.mxu0 0
  %1740 = vmatprep.subr.bf16.mxu0 0
  %1741 = vmatpush1.bf16.msra.mxu0 0
  %1742 = vmatprep.subr.bf16.mxu0 0
  %1743 = vmatpush1.bf16.msra.mxu0 0
  %1744 = vmatprep.subr.bf16.mxu0 0
  %1745 = vmatpush1.bf16.msra.mxu0 0
  %1746 = vmatprep.subr.bf16.mxu0 0
  %1747 = vmatpush1.bf16.msra.mxu0 0
  %1748 = vmatprep.subr.bf16.mxu0 0
  %1749 = vmatpush1.bf16.msra.mxu0 0
  %1750 = vmatprep.subr.bf16.mxu0 0
  %1751 = vmatpush1.bf16.msra.mxu0 0
  %1752 = vmatprep.subr.bf16.mxu0 0
  %1753 = vmatpush1.bf16.msra.mxu0 0
  %1754 = vmatprep.mubr.bf16.mxu0 0
  %1755 = vmatmul.mubr.bf16.gmra.mrb[0].mxu0 %v1721
  %v1756 = vpop.f32.mrb[0].mxu0
  %v1757 = vadd.f32 0.0, %v1756
  %v1758 = vpop.f32.mrb[0].mxu0
  %v1759 = vadd.f32 0.0, %v1758
  %v1760 = vpop.f32.mrb[0].mxu0
  %v1761 = vadd.f32 0.0, %v1760
  %v1762 = vpop.f32.mrb[0].mxu0
  %v1763 = vadd.f32 0.0, %v1762
  %1764 = vdwg.mxu0
  %1765 = vmatprep.subr.bf16.mxu0 %v294
  %1766 = vmatpush1.bf16.msra.mxu0 %v293
  %1767 = vmatprep.subr.bf16.mxu0 %v298
  %1768 = vmatpush1.bf16.msra.mxu0 %v297
  %1769 = vmatprep.subr.bf16.mxu0 %v302
  %1770 = vmatpush1.bf16.msra.mxu0 %v301
  %1771 = vmatprep.subr.bf16.mxu0 %v306
  %1772 = vmatpush1.bf16.msra.mxu0 %v305
  %1773 = vmatprep.subr.bf16.mxu0 %v310
  %1774 = vmatpush1.bf16.msra.mxu0 %v309
  %1775 = vmatprep.subr.bf16.mxu0 %v314
  %1776 = vmatpush1.bf16.msra.mxu0 %v313
  %1777 = vmatprep.subr.bf16.mxu0 %v318
  %1778 = vmatpush1.bf16.msra.mxu0 %v317
  %1779 = vmatprep.subr.bf16.mxu0 %v322
  %1780 = vmatpush1.bf16.msra.mxu0 %v321
  %1781 = vmatprep.subr.bf16.mxu0 0
  %1782 = vmatpush1.bf16.msra.mxu0 0
  %1783 = vmatprep.subr.bf16.mxu0 0
  %1784 = vmatpush1.bf16.msra.mxu0 0
  %1785 = vmatprep.subr.bf16.mxu0 0
  %1786 = vmatpush1.bf16.msra.mxu0 0
  %1787 = vmatprep.subr.bf16.mxu0 0
  %1788 = vmatpush1.bf16.msra.mxu0 0
  %1789 = vmatprep.subr.bf16.mxu0 0
  %1790 = vmatpush1.bf16.msra.mxu0 0
  %1791 = vmatprep.subr.bf16.mxu0 0
  %1792 = vmatpush1.bf16.msra.mxu0 0
  %1793 = vmatprep.subr.bf16.mxu0 0
  %1794 = vmatpush1.bf16.msra.mxu0 0
  %1795 = vmatprep.subr.bf16.mxu0 0
  %1796 = vmatpush1.bf16.msra.mxu0 0
  %1797 = vmatprep.mubr.bf16.mxu0 0
  %1798 = vmatmul.mubr.bf16.gmra.mrb[0].mxu0 %v1721
  %v1799 = vpop.f32.mrb[0].mxu0
  %v1800 = vadd.f32 0.0, %v1799
  %v1801 = vpop.f32.mrb[0].mxu0
  %v1802 = vadd.f32 0.0, %v1801
  %v1803 = vpop.f32.mrb[0].mxu0
  %v1804 = vadd.f32 0.0, %v1803
  %v1805 = vpop.f32.mrb[0].mxu0
  %v1806 = vadd.f32 0.0, %v1805
  %1807 = vdwg.mxu0
  %v1808 = vadd.f32 %v1711, %v1757
  %v1809 = vadd.f32 %v1712, %v1759
  %v1810 = vadd.f32 %v1713, %v1800
  %v1811 = vadd.f32 %v1714, %v1802
  %v1812 = vadd.f32 %v1715, %v1761
  %v1813 = vadd.f32 %v1716, %v1763
  %v1814 = vadd.f32 %v1717, %v1804
  %v1815 = vadd.f32 %v1718, %v1806
  %s1816 = scalar_lea.vmem %s56, 128
  %v1817 = vld [vmem:[%s1816] sm:$0xff]
  %v1818 = vld [vmem:[%s1816 + $0x8] sm:$0xff]
  %v1819 = vld [vmem:[%s1816 + $0x10] sm:$0xff]
  %v1820 = vld [vmem:[%s1816 + $0x18] sm:$0xff]
  %v1821 = vunpack.c.l.bf16 %v1817
  %v1822 = vunpack.c.h.bf16 %v1817
  %v1823 = vunpack.c.l.bf16 %v1818
  %v1824 = vunpack.c.h.bf16 %v1818
  %v1825 = vunpack.c.l.bf16 %v1819
  %v1826 = vunpack.c.h.bf16 %v1819
  %v1827 = vunpack.c.l.bf16 %v1820
  %v1828 = vunpack.c.h.bf16 %v1820
  %v1829 = vadd.f32 %v1821, %v466
  %v1830 = vadd.f32 %v1822, %v470
  %v1831 = vadd.f32 %v1823, %v474
  %v1832 = vadd.f32 %v1824, %v478
  %v1833 = vadd.f32 %v1825, %v466
  %v1834 = vadd.f32 %v1826, %v470
  %v1835 = vadd.f32 %v1827, %v474
  %v1836 = vadd.f32 %v1828, %v478
  %v1837 = vld [vmem:[#allocation4] sm:$0xff]
  %v1838 = vld [vmem:[#allocation4 + $0x8] sm:$0xff]
  %v1839 = vpack.c.bf16 %v1838, %v1837
  %1840 = vmatprep.subr.bf16.mxu0 %v591
  %1841 = vmatpush1.bf16.msra.mxu0 %v590
  %1842 = vmatprep.subr.bf16.mxu0 %v595
  %1843 = vmatpush1.bf16.msra.mxu0 %v594
  %1844 = vmatprep.subr.bf16.mxu0 %v599
  %1845 = vmatpush1.bf16.msra.mxu0 %v598
  %1846 = vmatprep.subr.bf16.mxu0 %v603
  %1847 = vmatpush1.bf16.msra.mxu0 %v602
  %1848 = vmatprep.subr.bf16.mxu0 %v607
  %1849 = vmatpush1.bf16.msra.mxu0 %v606
  %1850 = vmatprep.subr.bf16.mxu0 %v611
  %1851 = vmatpush1.bf16.msra.mxu0 %v610
  %1852 = vmatprep.subr.bf16.mxu0 %v615
  %1853 = vmatpush1.bf16.msra.mxu0 %v614
  %1854 = vmatprep.subr.bf16.mxu0 %v619
  %1855 = vmatpush1.bf16.msra.mxu0 %v618
  %1856 = vmatprep.subr.bf16.mxu0 0
  %1857 = vmatpush1.bf16.msra.mxu0 0
  %1858 = vmatprep.subr.bf16.mxu0 0
  %1859 = vmatpush1.bf16.msra.mxu0 0
  %1860 = vmatprep.subr.bf16.mxu0 0
  %1861 = vmatpush1.bf16.msra.mxu0 0
  %1862 = vmatprep.subr.bf16.mxu0 0
  %1863 = vmatpush1.bf16.msra.mxu0 0
  %1864 = vmatprep.subr.bf16.mxu0 0
  %1865 = vmatpush1.bf16.msra.mxu0 0
  %1866 = vmatprep.subr.bf16.mxu0 0
  %1867 = vmatpush1.bf16.msra.mxu0 0
  %1868 = vmatprep.subr.bf16.mxu0 0
  %1869 = vmatpush1.bf16.msra.mxu0 0
  %1870 = vmatprep.subr.bf16.mxu0 0
  %1871 = vmatpush1.bf16.msra.mxu0 0
  %1872 = vmatprep.mubr.bf16.mxu0 0
  %1873 = vmatmul.mubr.bf16.gmra.mrb[0].mxu0 %v1839
  %v1874 = vpop.f32.mrb[0].mxu0
  %v1875 = vadd.f32 0.0, %v1874
  %v1876 = vpop.f32.mrb[0].mxu0
  %v1877 = vadd.f32 0.0, %v1876
  %v1878 = vpop.f32.mrb[0].mxu0
  %v1879 = vadd.f32 0.0, %v1878
  %v1880 = vpop.f32.mrb[0].mxu0
  %v1881 = vadd.f32 0.0, %v1880
  %1882 = vdwg.mxu0
  %1883 = vmatprep.subr.bf16.mxu0 %v593
  %1884 = vmatpush1.bf16.msra.mxu0 %v592
  %1885 = vmatprep.subr.bf16.mxu0 %v597
  %1886 = vmatpush1.bf16.msra.mxu0 %v596
  %1887 = vmatprep.subr.bf16.mxu0 %v601
  %1888 = vmatpush1.bf16.msra.mxu0 %v600
  %1889 = vmatprep.subr.bf16.mxu0 %v605
  %1890 = vmatpush1.bf16.msra.mxu0 %v604
  %1891 = vmatprep.subr.bf16.mxu0 %v609
  %1892 = vmatpush1.bf16.msra.mxu0 %v608
  %1893 = vmatprep.subr.bf16.mxu0 %v613
  %1894 = vmatpush1.bf16.msra.mxu0 %v612
  %1895 = vmatprep.subr.bf16.mxu0 %v617
  %1896 = vmatpush1.bf16.msra.mxu0 %v616
  %1897 = vmatprep.subr.bf16.mxu0 %v621
  %1898 = vmatpush1.bf16.msra.mxu0 %v620
  %1899 = vmatprep.subr.bf16.mxu0 0
  %1900 = vmatpush1.bf16.msra.mxu0 0
  %1901 = vmatprep.subr.bf16.mxu0 0
  %1902 = vmatpush1.bf16.msra.mxu0 0
  %1903 = vmatprep.subr.bf16.mxu0 0
  %1904 = vmatpush1.bf16.msra.mxu0 0
  %1905 = vmatprep.subr.bf16.mxu0 0
  %1906 = vmatpush1.bf16.msra.mxu0 0
  %1907 = vmatprep.subr.bf16.mxu0 0
  %1908 = vmatpush1.bf16.msra.mxu0 0
  %1909 = vmatprep.subr.bf16.mxu0 0
  %1910 = vmatpush1.bf16.msra.mxu0 0
  %1911 = vmatprep.subr.bf16.mxu0 0
  %1912 = vmatpush1.bf16.msra.mxu0 0
  %1913 = vmatprep.subr.bf16.mxu0 0
  %1914 = vmatpush1.bf16.msra.mxu0 0
  %1915 = vmatprep.mubr.bf16.mxu0 0
  %1916 = vmatmul.mubr.bf16.gmra.mrb[0].mxu0 %v1839
  %v1917 = vpop.f32.mrb[0].mxu0
  %v1918 = vadd.f32 0.0, %v1917
  %v1919 = vpop.f32.mrb[0].mxu0
  %v1920 = vadd.f32 0.0, %v1919
  %v1921 = vpop.f32.mrb[0].mxu0
  %v1922 = vadd.f32 0.0, %v1921
  %v1923 = vpop.f32.mrb[0].mxu0
  %v1924 = vadd.f32 0.0, %v1923
  %1925 = vdwg.mxu0
  %v1926 = vadd.f32 %v1829, %v1875
  %v1927 = vadd.f32 %v1830, %v1877
  %v1928 = vadd.f32 %v1831, %v1918
  %v1929 = vadd.f32 %v1832, %v1920
  %v1930 = vadd.f32 %v1833, %v1879
  %v1931 = vadd.f32 %v1834, %v1881
  %v1932 = vadd.f32 %v1835, %v1922
  %v1933 = vadd.f32 %v1836, %v1924
  %v1934 = vld [vmem:[#allocation3] sm:$0xff]
  %v1935 = vld [vmem:[#allocation3 + $0x8] sm:$0xff]
  %v1936 = vxor.u32 %v1808, 2147483648
  %v1937 = vxor.u32 %v1809, 2147483648
  %v1938 = vxor.u32 %v1810, 2147483648
  %v1939 = vxor.u32 %v1812, 2147483648
  %v1940 = vxor.u32 %v1813, 2147483648
  %v1941 = vxor.u32 %v1814, 2147483648
  %v1942 = vmul.f32 %v1936, 1.442695
  %v1943 = vpow.pop %v1942
  %v1944 = vmul.f32 %v1937, 1.442695
  %v1945 = vpow.pop %v1944
  %v1946 = vmul.f32 %v1938, 1.442695
  %v1947 = vpow.pop %v1946
  %v1948 = vmul.f32 %v1939, 1.442695
  %v1949 = vpow.pop %v1948
  %v1950 = vmul.f32 %v1940, 1.442695
  %v1951 = vpow.pop %v1950
  %v1952 = vmul.f32 %v1941, 1.442695
  %v1953 = vpow.pop %v1952
  %v1954 = vadd.f32 %v1943, 1.0
  %v1955 = vadd.f32 %v1945, 1.0
  %v1956 = vadd.f32 %v1947, 1.0
  %v1957 = vadd.f32 %v1949, 1.0
  %v1958 = vadd.f32 %v1951, 1.0
  %v1959 = vadd.f32 %v1953, 1.0
  %v1960 = vrcp.pop %v1954
  %v1961 = vmul.f32 1.0, %v1960
  %v1962 = vrcp.pop %v1955
  %v1963 = vmul.f32 1.0, %v1962
  %v1964 = vrcp.pop %v1956
  %v1965 = vmul.f32 1.0, %v1964
  %v1966 = vrcp.pop %v1957
  %v1967 = vmul.f32 1.0, %v1966
  %v1968 = vrcp.pop %v1958
  %v1969 = vmul.f32 1.0, %v1968
  %v1970 = vrcp.pop %v1959
  %v1971 = vmul.f32 1.0, %v1970
  %v1972 = vtanh.pop %v1811
  %v1973 = vtanh.pop %v1815
  %v1974 = vmul.f32 %v1963, %v1934
  %v1975 = vmul.f32 %v1969, %v1935
  %v1976 = vmul.f32 %v1961, %v1972
  %v1977 = vmul.f32 %v1967, %v1973
  %v1978 = vadd.f32 %v1974, %v1976
  %v1979 = vadd.f32 %v1975, %v1977
  %v1980 = vtanh.pop %v1978
  %v1981 = vtanh.pop %v1979
  %v1982 = vmul.f32 %v1965, %v1980
  %v1983 = vmul.f32 %v1971, %v1981
  %v1984 = vld [vmem:[#allocation5] sm:$0xff]
  %v1985 = vld [vmem:[#allocation5 + $0x8] sm:$0xff]
  %v1986 = vxor.u32 %v1926, 2147483648
  %v1987 = vxor.u32 %v1927, 2147483648
  %v1988 = vxor.u32 %v1928, 2147483648
  %v1989 = vxor.u32 %v1930, 2147483648
  %v1990 = vxor.u32 %v1931, 2147483648
  %v1991 = vxor.u32 %v1932, 2147483648
  %v1992 = vmul.f32 %v1986, 1.442695
  %v1993 = vpow.pop %v1992
  %v1994 = vmul.f32 %v1987, 1.442695
  %v1995 = vpow.pop %v1994
  %v1996 = vmul.f32 %v1988, 1.442695
  %v1997 = vpow.pop %v1996
  %v1998 = vmul.f32 %v1989, 1.442695
  %v1999 = vpow.pop %v1998
  %v2000 = vmul.f32 %v1990, 1.442695
  %v2001 = vpow.pop %v2000
  %v2002 = vmul.f32 %v1991, 1.442695
  %v2003 = vpow.pop %v2002
  %v2004 = vadd.f32 %v1993, 1.0
  %v2005 = vadd.f32 %v1995, 1.0
  %v2006 = vadd.f32 %v1997, 1.0
  %v2007 = vadd.f32 %v1999, 1.0
  %v2008 = vadd.f32 %v2001, 1.0
  %v2009 = vadd.f32 %v2003, 1.0
  %v2010 = vrcp.pop %v2004
  %v2011 = vmul.f32 1.0, %v2010
  %v2012 = vrcp.pop %v2005
  %v2013 = vmul.f32 1.0, %v2012
  %v2014 = vrcp.pop %v2006
  %v2015 = vmul.f32 1.0, %v2014
  %v2016 = vrcp.pop %v2007
  %v2017 = vmul.f32 1.0, %v2016
  %v2018 = vrcp.pop %v2008
  %v2019 = vmul.f32 1.0, %v2018
  %v2020 = vrcp.pop %v2009
  %v2021 = vmul.f32 1.0, %v2020
  %v2022 = vtanh.pop %v1929
  %v2023 = vtanh.pop %v1933
  %v2024 = vmul.f32 %v2013, %v1984
  %v2025 = vmul.f32 %v2019, %v1985
  %v2026 = vmul.f32 %v2011, %v2022
  %v2027 = vmul.f32 %v2017, %v2023
  %v2028 = vadd.f32 %v2024, %v2026
  %v2029 = vadd.f32 %v2025, %v2027
  %v2030 = vtanh.pop %v2028
  %v2031 = vtanh.pop %v2029
  %v2032 = vmul.f32 %v2015, %v2030
  %v2033 = vmul.f32 %v2021, %v2031
  %s2034 = sadd.s32 %s148, 3
  %v2035 = vstv %s2034
  %vm2036 = vcmp.lt.s32.totalorder %v2035, %v80
  %vm2037 = vcmp.lt.s32.totalorder %v2035, %v81
  %s2038 = sadd.s32 %s150, 4
  %v2039 = vstv %s2038
  %vm2040 = vcmp.lt.s32.totalorder %v2039, %v80
  %vm2041 = vcmp.lt.s32.totalorder %v2039, %v81
  %v2042 = vsel %vm2036, 1, 0
  %v2043 = vsel %vm2037, 1, 0
  %2044 = vset.pattern.permute.xlu0 0
  %2045 = vperm.xlu0 %2044, %v2042
  %v2046 = vpop.permute.xlu0 %2045
  %2047 = vset.pattern.permute.xlu0 0
  %2048 = vperm.xlu0 %2047, %v2043
  %v2049 = vpop.permute.xlu0 %2048
  %vm2050 = vcmp.eq.s32.totalorder %v2046, 1
  %vm2051 = vcmp.eq.s32.totalorder %v2049, 1
  %v2052 = vsel %vm2050, %v1982, %v1719
  %v2053 = vsel %vm2051, %v1983, %v1720
  %2054 = vst [vmem:[#allocation2] sm:$0xff] %v2052
  %2055 = vst [vmem:[#allocation2 + $0x8] sm:$0xff] %v2053
  %v2056 = vld [vmem:[#allocation3] sm:$0xff]
  %v2057 = vld [vmem:[#allocation3 + $0x8] sm:$0xff]
  %v2058 = vsel %vm2050, %v1978, %v2056
  %v2059 = vsel %vm2051, %v1979, %v2057
  %2060 = vst [vmem:[#allocation3] sm:$0xff] %v2058
  %2061 = vst [vmem:[#allocation3 + $0x8] sm:$0xff] %v2059
  %v2062 = vld [vmem:[#allocation4] sm:$0xff]
  %v2063 = vld [vmem:[#allocation4 + $0x8] sm:$0xff]
  %v2064 = vsel %vm2040, 1, 0
  %v2065 = vsel %vm2041, 1, 0
  %2066 = vset.pattern.permute.xlu0 0
  %2067 = vperm.xlu0 %2066, %v2064
  %v2068 = vpop.permute.xlu0 %2067
  %2069 = vset.pattern.permute.xlu0 0
  %2070 = vperm.xlu0 %2069, %v2065
  %v2071 = vpop.permute.xlu0 %2070
  %vm2072 = vcmp.eq.s32.totalorder %v2068, 1
  %vm2073 = vcmp.eq.s32.totalorder %v2071, 1
  %v2074 = vsel %vm2072, %v2032, %v2062
  %v2075 = vsel %vm2073, %v2033, %v2063
  %2076 = vst [vmem:[#allocation4] sm:$0xff] %v2074
  %2077 = vst [vmem:[#allocation4 + $0x8] sm:$0xff] %v2075
  %v2078 = vld [vmem:[#allocation5] sm:$0xff]
  %v2079 = vld [vmem:[#allocation5 + $0x8] sm:$0xff]
  %v2080 = vsel %vm2072, %v2028, %v2078
  %v2081 = vsel %vm2073, %v2029, %v2079
  %2082 = vst [vmem:[#allocation5] sm:$0xff] %v2080
  %2083 = vst [vmem:[#allocation5 + $0x8] sm:$0xff] %v2081
  %v2084 = vsel %vm2050, %v1982, 0.0
  %v2085 = vsel %vm2051, %v1983, 0.0
  %v2086 = vpack.c.bf16 %v2085, %v2084
  %s2087 = scalar_lea.vmem %s7, 24
  %2088 = vst [vmem:[%s2087] sm:$0xff] %v2086
  %v2089 = vsel %vm2072, %v2032, 0.0
  %v2090 = vsel %vm2073, %v2033, 0.0
  %v2091 = vpack.c.bf16 %v2090, %v2089
  %s2092 = scalar_lea.vmem %s64, 32
  %2093 = vst [vmem:[%s2092] sm:$0xff] %v2091
  %s2094 = scalar_lea.vmem %s1, 128
  %v2095 = vld [vmem:[%s2094] sm:$0xff]
  %v2096 = vld [vmem:[%s2094 + $0x8] sm:$0xff]
  %v2097 = vld [vmem:[%s2094 + $0x10] sm:$0xff]
  %v2098 = vld [vmem:[%s2094 + $0x18] sm:$0xff]
  %v2099 = vunpack.c.l.bf16 %v2095
  %v2100 = vunpack.c.h.bf16 %v2095
  %v2101 = vunpack.c.l.bf16 %v2096
  %v2102 = vunpack.c.h.bf16 %v2096
  %v2103 = vunpack.c.l.bf16 %v2097
  %v2104 = vunpack.c.h.bf16 %v2097
  %v2105 = vunpack.c.l.bf16 %v2098
  %v2106 = vunpack.c.h.bf16 %v2098
  %v2107 = vadd.f32 %v2099, %v167
  %v2108 = vadd.f32 %v2100, %v171
  %v2109 = vadd.f32 %v2101, %v175
  %v2110 = vadd.f32 %v2102, %v179
  %v2111 = vadd.f32 %v2103, %v167
  %v2112 = vadd.f32 %v2104, %v171
  %v2113 = vadd.f32 %v2105, %v175
  %v2114 = vadd.f32 %v2106, %v179
  %v2115 = vld [vmem:[#allocation2] sm:$0xff]
  %v2116 = vld [vmem:[#allocation2 + $0x8] sm:$0xff]
  %v2117 = vpack.c.bf16 %v2116, %v2115
  %2118 = vmatprep.subr.bf16.mxu0 %v292
  %2119 = vmatpush1.bf16.msra.mxu0 %v291
  %2120 = vmatprep.subr.bf16.mxu0 %v296
  %2121 = vmatpush1.bf16.msra.mxu0 %v295
  %2122 = vmatprep.subr.bf16.mxu0 %v300
  %2123 = vmatpush1.bf16.msra.mxu0 %v299
  %2124 = vmatprep.subr.bf16.mxu0 %v304
  %2125 = vmatpush1.bf16.msra.mxu0 %v303
  %2126 = vmatprep.subr.bf16.mxu0 %v308
  %2127 = vmatpush1.bf16.msra.mxu0 %v307
  %2128 = vmatprep.subr.bf16.mxu0 %v312
  %2129 = vmatpush1.bf16.msra.mxu0 %v311
  %2130 = vmatprep.subr.bf16.mxu0 %v316
  %2131 = vmatpush1.bf16.msra.mxu0 %v315
  %2132 = vmatprep.subr.bf16.mxu0 %v320
  %2133 = vmatpush1.bf16.msra.mxu0 %v319
  %2134 = vmatprep.subr.bf16.mxu0 0
  %2135 = vmatpush1.bf16.msra.mxu0 0
  %2136 = vmatprep.subr.bf16.mxu0 0
  %2137 = vmatpush1.bf16.msra.mxu0 0
  %2138 = vmatprep.subr.bf16.mxu0 0
  %2139 = vmatpush1.bf16.msra.mxu0 0
  %2140 = vmatprep.subr.bf16.mxu0 0
  %2141 = vmatpush1.bf16.msra.mxu0 0
  %2142 = vmatprep.subr.bf16.mxu0 0
  %2143 = vmatpush1.bf16.msra.mxu0 0
  %2144 = vmatprep.subr.bf16.mxu0 0
  %2145 = vmatpush1.bf16.msra.mxu0 0
  %2146 = vmatprep.subr.bf16.mxu0 0
  %2147 = vmatpush1.bf16.msra.mxu0 0
  %2148 = vmatprep.subr.bf16.mxu0 0
  %2149 = vmatpush1.bf16.msra.mxu0 0
  %2150 = vmatprep.mubr.bf16.mxu0 0
  %2151 = vmatmul.mubr.bf16.gmra.mrb[0].mxu0 %v2117
  %v2152 = vpop.f32.mrb[0].mxu0
  %v2153 = vadd.f32 0.0, %v2152
  %v2154 = vpop.f32.mrb[0].mxu0
  %v2155 = vadd.f32 0.0, %v2154
  %v2156 = vpop.f32.mrb[0].mxu0
  %v2157 = vadd.f32 0.0, %v2156
  %v2158 = vpop.f32.mrb[0].mxu0
  %v2159 = vadd.f32 0.0, %v2158
  %2160 = vdwg.mxu0
  %2161 = vmatprep.subr.bf16.mxu0 %v294
  %2162 = vmatpush1.bf16.msra.mxu0 %v293
  %2163 = vmatprep.subr.bf16.mxu0 %v298
  %2164 = vmatpush1.bf16.msra.mxu0 %v297
  %2165 = vmatprep.subr.bf16.mxu0 %v302
  %2166 = vmatpush1.bf16.msra.mxu0 %v301
  %2167 = vmatprep.subr.bf16.mxu0 %v306
  %2168 = vmatpush1.bf16.msra.mxu0 %v305
  %2169 = vmatprep.subr.bf16.mxu0 %v310
  %2170 = vmatpush1.bf16.msra.mxu0 %v309
  %2171 = vmatprep.subr.bf16.mxu0 %v314
  %2172 = vmatpush1.bf16.msra.mxu0 %v313
  %2173 = vmatprep.subr.bf16.mxu0 %v318
  %2174 = vmatpush1.bf16.msra.mxu0 %v317
  %2175 = vmatprep.subr.bf16.mxu0 %v322
  %2176 = vmatpush1.bf16.msra.mxu0 %v321
  %2177 = vmatprep.subr.bf16.mxu0 0
  %2178 = vmatpush1.bf16.msra.mxu0 0
  %2179 = vmatprep.subr.bf16.mxu0 0
  %2180 = vmatpush1.bf16.msra.mxu0 0
  %2181 = vmatprep.subr.bf16.mxu0 0
  %2182 = vmatpush1.bf16.msra.mxu0 0
  %2183 = vmatprep.subr.bf16.mxu0 0
  %2184 = vmatpush1.bf16.msra.mxu0 0
  %2185 = vmatprep.subr.bf16.mxu0 0
  %2186 = vmatpush1.bf16.msra.mxu0 0
  %2187 = vmatprep.subr.bf16.mxu0 0
  %2188 = vmatpush1.bf16.msra.mxu0 0
  %2189 = vmatprep.subr.bf16.mxu0 0
  %2190 = vmatpush1.bf16.msra.mxu0 0
  %2191 = vmatprep.subr.bf16.mxu0 0
  %2192 = vmatpush1.bf16.msra.mxu0 0
  %2193 = vmatprep.mubr.bf16.mxu0 0
  %2194 = vmatmul.mubr.bf16.gmra.mrb[0].mxu0 %v2117
  %v2195 = vpop.f32.mrb[0].mxu0
  %v2196 = vadd.f32 0.0, %v2195
  %v2197 = vpop.f32.mrb[0].mxu0
  %v2198 = vadd.f32 0.0, %v2197
  %v2199 = vpop.f32.mrb[0].mxu0
  %v2200 = vadd.f32 0.0, %v2199
  %v2201 = vpop.f32.mrb[0].mxu0
  %v2202 = vadd.f32 0.0, %v2201
  %2203 = vdwg.mxu0
  %v2204 = vadd.f32 %v2107, %v2153
  %v2205 = vadd.f32 %v2108, %v2155
  %v2206 = vadd.f32 %v2109, %v2196
  %v2207 = vadd.f32 %v2110, %v2198
  %v2208 = vadd.f32 %v2111, %v2157
  %v2209 = vadd.f32 %v2112, %v2159
  %v2210 = vadd.f32 %v2113, %v2200
  %v2211 = vadd.f32 %v2114, %v2202
  %s2212 = scalar_lea.vmem %s56, 96
  %v2213 = vld [vmem:[%s2212] sm:$0xff]
  %v2214 = vld [vmem:[%s2212 + $0x8] sm:$0xff]
  %v2215 = vld [vmem:[%s2212 + $0x10] sm:$0xff]
  %v2216 = vld [vmem:[%s2212 + $0x18] sm:$0xff]
  %v2217 = vunpack.c.l.bf16 %v2213
  %v2218 = vunpack.c.h.bf16 %v2213
  %v2219 = vunpack.c.l.bf16 %v2214
  %v2220 = vunpack.c.h.bf16 %v2214
  %v2221 = vunpack.c.l.bf16 %v2215
  %v2222 = vunpack.c.h.bf16 %v2215
  %v2223 = vunpack.c.l.bf16 %v2216
  %v2224 = vunpack.c.h.bf16 %v2216
  %v2225 = vadd.f32 %v2217, %v466
  %v2226 = vadd.f32 %v2218, %v470
  %v2227 = vadd.f32 %v2219, %v474
  %v2228 = vadd.f32 %v2220, %v478
  %v2229 = vadd.f32 %v2221, %v466
  %v2230 = vadd.f32 %v2222, %v470
  %v2231 = vadd.f32 %v2223, %v474
  %v2232 = vadd.f32 %v2224, %v478
  %v2233 = vld [vmem:[#allocation4] sm:$0xff]
  %v2234 = vld [vmem:[#allocation4 + $0x8] sm:$0xff]
  %v2235 = vpack.c.bf16 %v2234, %v2233
  %2236 = vmatprep.subr.bf16.mxu0 %v591
  %2237 = vmatpush1.bf16.msra.mxu0 %v590
  %2238 = vmatprep.subr.bf16.mxu0 %v595
  %2239 = vmatpush1.bf16.msra.mxu0 %v594
  %2240 = vmatprep.subr.bf16.mxu0 %v599
  %2241 = vmatpush1.bf16.msra.mxu0 %v598
  %2242 = vmatprep.subr.bf16.mxu0 %v603
  %2243 = vmatpush1.bf16.msra.mxu0 %v602
  %2244 = vmatprep.subr.bf16.mxu0 %v607
  %2245 = vmatpush1.bf16.msra.mxu0 %v606
  %2246 = vmatprep.subr.bf16.mxu0 %v611
  %2247 = vmatpush1.bf16.msra.mxu0 %v610
  %2248 = vmatprep.subr.bf16.mxu0 %v615
  %2249 = vmatpush1.bf16.msra.mxu0 %v614
  %2250 = vmatprep.subr.bf16.mxu0 %v619
  %2251 = vmatpush1.bf16.msra.mxu0 %v618
  %2252 = vmatprep.subr.bf16.mxu0 0
  %2253 = vmatpush1.bf16.msra.mxu0 0
  %2254 = vmatprep.subr.bf16.mxu0 0
  %2255 = vmatpush1.bf16.msra.mxu0 0
  %2256 = vmatprep.subr.bf16.mxu0 0
  %2257 = vmatpush1.bf16.msra.mxu0 0
  %2258 = vmatprep.subr.bf16.mxu0 0
  %2259 = vmatpush1.bf16.msra.mxu0 0
  %2260 = vmatprep.subr.bf16.mxu0 0
  %2261 = vmatpush1.bf16.msra.mxu0 0
  %2262 = vmatprep.subr.bf16.mxu0 0
  %2263 = vmatpush1.bf16.msra.mxu0 0
  %2264 = vmatprep.subr.bf16.mxu0 0
  %2265 = vmatpush1.bf16.msra.mxu0 0
  %2266 = vmatprep.subr.bf16.mxu0 0
  %2267 = vmatpush1.bf16.msra.mxu0 0
  %2268 = vmatprep.mubr.bf16.mxu0 0
  %2269 = vmatmul.mubr.bf16.gmra.mrb[0].mxu0 %v2235
  %v2270 = vpop.f32.mrb[0].mxu0
  %v2271 = vadd.f32 0.0, %v2270
  %v2272 = vpop.f32.mrb[0].mxu0
  %v2273 = vadd.f32 0.0, %v2272
  %v2274 = vpop.f32.mrb[0].mxu0
  %v2275 = vadd.f32 0.0, %v2274
  %v2276 = vpop.f32.mrb[0].mxu0
  %v2277 = vadd.f32 0.0, %v2276
  %2278 = vdwg.mxu0
  %2279 = vmatprep.subr.bf16.mxu0 %v593
  %2280 = vmatpush1.bf16.msra.mxu0 %v592
  %2281 = vmatprep.subr.bf16.mxu0 %v597
  %2282 = vmatpush1.bf16.msra.mxu0 %v596
  %2283 = vmatprep.subr.bf16.mxu0 %v601
  %2284 = vmatpush1.bf16.msra.mxu0 %v600
  %2285 = vmatprep.subr.bf16.mxu0 %v605
  %2286 = vmatpush1.bf16.msra.mxu0 %v604
  %2287 = vmatprep.subr.bf16.mxu0 %v609
  %2288 = vmatpush1.bf16.msra.mxu0 %v608
  %2289 = vmatprep.subr.bf16.mxu0 %v613
  %2290 = vmatpush1.bf16.msra.mxu0 %v612
  %2291 = vmatprep.subr.bf16.mxu0 %v617
  %2292 = vmatpush1.bf16.msra.mxu0 %v616
  %2293 = vmatprep.subr.bf16.mxu0 %v621
  %2294 = vmatpush1.bf16.msra.mxu0 %v620
  %2295 = vmatprep.subr.bf16.mxu0 0
  %2296 = vmatpush1.bf16.msra.mxu0 0
  %2297 = vmatprep.subr.bf16.mxu0 0
  %2298 = vmatpush1.bf16.msra.mxu0 0
  %2299 = vmatprep.subr.bf16.mxu0 0
  %2300 = vmatpush1.bf16.msra.mxu0 0
  %2301 = vmatprep.subr.bf16.mxu0 0
  %2302 = vmatpush1.bf16.msra.mxu0 0
  %2303 = vmatprep.subr.bf16.mxu0 0
  %2304 = vmatpush1.bf16.msra.mxu0 0
  %2305 = vmatprep.subr.bf16.mxu0 0
  %2306 = vmatpush1.bf16.msra.mxu0 0
  %2307 = vmatprep.subr.bf16.mxu0 0
  %2308 = vmatpush1.bf16.msra.mxu0 0
  %2309 = vmatprep.subr.bf16.mxu0 0
  %2310 = vmatpush1.bf16.msra.mxu0 0
  %2311 = vmatprep.mubr.bf16.mxu0 0
  %2312 = vmatmul.mubr.bf16.gmra.mrb[0].mxu0 %v2235
  %v2313 = vpop.f32.mrb[0].mxu0
  %v2314 = vadd.f32 0.0, %v2313
  %v2315 = vpop.f32.mrb[0].mxu0
  %v2316 = vadd.f32 0.0, %v2315
  %v2317 = vpop.f32.mrb[0].mxu0
  %v2318 = vadd.f32 0.0, %v2317
  %v2319 = vpop.f32.mrb[0].mxu0
  %v2320 = vadd.f32 0.0, %v2319
  %2321 = vdwg.mxu0
  %v2322 = vadd.f32 %v2225, %v2271
  %v2323 = vadd.f32 %v2226, %v2273
  %v2324 = vadd.f32 %v2227, %v2314
  %v2325 = vadd.f32 %v2228, %v2316
  %v2326 = vadd.f32 %v2229, %v2275
  %v2327 = vadd.f32 %v2230, %v2277
  %v2328 = vadd.f32 %v2231, %v2318
  %v2329 = vadd.f32 %v2232, %v2320
  %v2330 = vld [vmem:[#allocation3] sm:$0xff]
  %v2331 = vld [vmem:[#allocation3 + $0x8] sm:$0xff]
  %v2332 = vxor.u32 %v2204, 2147483648
  %v2333 = vxor.u32 %v2205, 2147483648
  %v2334 = vxor.u32 %v2206, 2147483648
  %v2335 = vxor.u32 %v2208, 2147483648
  %v2336 = vxor.u32 %v2209, 2147483648
  %v2337 = vxor.u32 %v2210, 2147483648
  %v2338 = vmul.f32 %v2332, 1.442695
  %v2339 = vpow.pop %v2338
  %v2340 = vmul.f32 %v2333, 1.442695
  %v2341 = vpow.pop %v2340
  %v2342 = vmul.f32 %v2334, 1.442695
  %v2343 = vpow.pop %v2342
  %v2344 = vmul.f32 %v2335, 1.442695
  %v2345 = vpow.pop %v2344
  %v2346 = vmul.f32 %v2336, 1.442695
  %v2347 = vpow.pop %v2346
  %v2348 = vmul.f32 %v2337, 1.442695
  %v2349 = vpow.pop %v2348
  %v2350 = vadd.f32 %v2339, 1.0
  %v2351 = vadd.f32 %v2341, 1.0
  %v2352 = vadd.f32 %v2343, 1.0
  %v2353 = vadd.f32 %v2345, 1.0
  %v2354 = vadd.f32 %v2347, 1.0
  %v2355 = vadd.f32 %v2349, 1.0
  %v2356 = vrcp.pop %v2350
  %v2357 = vmul.f32 1.0, %v2356
  %v2358 = vrcp.pop %v2351
  %v2359 = vmul.f32 1.0, %v2358
  %v2360 = vrcp.pop %v2352
  %v2361 = vmul.f32 1.0, %v2360
  %v2362 = vrcp.pop %v2353
  %v2363 = vmul.f32 1.0, %v2362
  %v2364 = vrcp.pop %v2354
  %v2365 = vmul.f32 1.0, %v2364
  %v2366 = vrcp.pop %v2355
  %v2367 = vmul.f32 1.0, %v2366
  %v2368 = vtanh.pop %v2207
  %v2369 = vtanh.pop %v2211
  %v2370 = vmul.f32 %v2359, %v2330
  %v2371 = vmul.f32 %v2365, %v2331
  %v2372 = vmul.f32 %v2357, %v2368
  %v2373 = vmul.f32 %v2363, %v2369
  %v2374 = vadd.f32 %v2370, %v2372
  %v2375 = vadd.f32 %v2371, %v2373
  %v2376 = vtanh.pop %v2374
  %v2377 = vtanh.pop %v2375
  %v2378 = vmul.f32 %v2361, %v2376
  %v2379 = vmul.f32 %v2367, %v2377
  %v2380 = vld [vmem:[#allocation5] sm:$0xff]
  %v2381 = vld [vmem:[#allocation5 + $0x8] sm:$0xff]
  %v2382 = vxor.u32 %v2322, 2147483648
  %v2383 = vxor.u32 %v2323, 2147483648
  %v2384 = vxor.u32 %v2324, 2147483648
  %v2385 = vxor.u32 %v2326, 2147483648
  %v2386 = vxor.u32 %v2327, 2147483648
  %v2387 = vxor.u32 %v2328, 2147483648
  %v2388 = vmul.f32 %v2382, 1.442695
  %v2389 = vpow.pop %v2388
  %v2390 = vmul.f32 %v2383, 1.442695
  %v2391 = vpow.pop %v2390
  %v2392 = vmul.f32 %v2384, 1.442695
  %v2393 = vpow.pop %v2392
  %v2394 = vmul.f32 %v2385, 1.442695
  %v2395 = vpow.pop %v2394
  %v2396 = vmul.f32 %v2386, 1.442695
  %v2397 = vpow.pop %v2396
  %v2398 = vmul.f32 %v2387, 1.442695
  %v2399 = vpow.pop %v2398
  %v2400 = vadd.f32 %v2389, 1.0
  %v2401 = vadd.f32 %v2391, 1.0
  %v2402 = vadd.f32 %v2393, 1.0
  %v2403 = vadd.f32 %v2395, 1.0
  %v2404 = vadd.f32 %v2397, 1.0
  %v2405 = vadd.f32 %v2399, 1.0
  %v2406 = vrcp.pop %v2400
  %v2407 = vmul.f32 1.0, %v2406
  %v2408 = vrcp.pop %v2401
  %v2409 = vmul.f32 1.0, %v2408
  %v2410 = vrcp.pop %v2402
  %v2411 = vmul.f32 1.0, %v2410
  %v2412 = vrcp.pop %v2403
  %v2413 = vmul.f32 1.0, %v2412
  %v2414 = vrcp.pop %v2404
  %v2415 = vmul.f32 1.0, %v2414
  %v2416 = vrcp.pop %v2405
  %v2417 = vmul.f32 1.0, %v2416
  %v2418 = vtanh.pop %v2325
  %v2419 = vtanh.pop %v2329
  %v2420 = vmul.f32 %v2409, %v2380
  %v2421 = vmul.f32 %v2415, %v2381
  %v2422 = vmul.f32 %v2407, %v2418
  %v2423 = vmul.f32 %v2413, %v2419
  %v2424 = vadd.f32 %v2420, %v2422
  %v2425 = vadd.f32 %v2421, %v2423
  %v2426 = vtanh.pop %v2424
  %v2427 = vtanh.pop %v2425
  %v2428 = vmul.f32 %v2411, %v2426
  %v2429 = vmul.f32 %v2417, %v2427
  %s2430 = sadd.s32 %s148, 4
  %v2431 = vstv %s2430
  %vm2432 = vcmp.lt.s32.totalorder %v2431, %v80
  %vm2433 = vcmp.lt.s32.totalorder %v2431, %v81
  %s2434 = sadd.s32 %s150, 3
  %v2435 = vstv %s2434
  %vm2436 = vcmp.lt.s32.totalorder %v2435, %v80
  %vm2437 = vcmp.lt.s32.totalorder %v2435, %v81
  %v2438 = vsel %vm2432, 1, 0
  %v2439 = vsel %vm2433, 1, 0
  %2440 = vset.pattern.permute.xlu0 0
  %2441 = vperm.xlu0 %2440, %v2438
  %v2442 = vpop.permute.xlu0 %2441
  %2443 = vset.pattern.permute.xlu0 0
  %2444 = vperm.xlu0 %2443, %v2439
  %v2445 = vpop.permute.xlu0 %2444
  %vm2446 = vcmp.eq.s32.totalorder %v2442, 1
  %vm2447 = vcmp.eq.s32.totalorder %v2445, 1
  %v2448 = vsel %vm2446, %v2378, %v2115
  %v2449 = vsel %vm2447, %v2379, %v2116
  %2450 = vst [vmem:[#allocation2] sm:$0xff] %v2448
  %2451 = vst [vmem:[#allocation2 + $0x8] sm:$0xff] %v2449
  %v2452 = vld [vmem:[#allocation3] sm:$0xff]
  %v2453 = vld [vmem:[#allocation3 + $0x8] sm:$0xff]
  %v2454 = vsel %vm2446, %v2374, %v2452
  %v2455 = vsel %vm2447, %v2375, %v2453
  %2456 = vst [vmem:[#allocation3] sm:$0xff] %v2454
  %2457 = vst [vmem:[#allocation3 + $0x8] sm:$0xff] %v2455
  %v2458 = vld [vmem:[#allocation4] sm:$0xff]
  %v2459 = vld [vmem:[#allocation4 + $0x8] sm:$0xff]
  %v2460 = vsel %vm2436, 1, 0
  %v2461 = vsel %vm2437, 1, 0
  %2462 = vset.pattern.permute.xlu0 0
  %2463 = vperm.xlu0 %2462, %v2460
  %v2464 = vpop.permute.xlu0 %2463
  %2465 = vset.pattern.permute.xlu0 0
  %2466 = vperm.xlu0 %2465, %v2461
  %v2467 = vpop.permute.xlu0 %2466
  %vm2468 = vcmp.eq.s32.totalorder %v2464, 1
  %vm2469 = vcmp.eq.s32.totalorder %v2467, 1
  %v2470 = vsel %vm2468, %v2428, %v2458
  %v2471 = vsel %vm2469, %v2429, %v2459
  %2472 = vst [vmem:[#allocation4] sm:$0xff] %v2470
  %2473 = vst [vmem:[#allocation4 + $0x8] sm:$0xff] %v2471
  %v2474 = vld [vmem:[#allocation5] sm:$0xff]
  %v2475 = vld [vmem:[#allocation5 + $0x8] sm:$0xff]
  %v2476 = vsel %vm2468, %v2424, %v2474
  %v2477 = vsel %vm2469, %v2425, %v2475
  %2478 = vst [vmem:[#allocation5] sm:$0xff] %v2476
  %2479 = vst [vmem:[#allocation5 + $0x8] sm:$0xff] %v2477
  %v2480 = vsel %vm2446, %v2378, 0.0
  %v2481 = vsel %vm2447, %v2379, 0.0
  %v2482 = vpack.c.bf16 %v2481, %v2480
  %s2483 = scalar_lea.vmem %s7, 32
  %2484 = vst [vmem:[%s2483] sm:$0xff] %v2482
  %v2485 = vsel %vm2468, %v2428, 0.0
  %v2486 = vsel %vm2469, %v2429, 0.0
  %v2487 = vpack.c.bf16 %v2486, %v2485
  %s2488 = scalar_lea.vmem %s64, 24
  %2489 = vst [vmem:[%s2488] sm:$0xff] %v2487
  %s2490 = scalar_lea.vmem %s1, 160
  %v2491 = vld [vmem:[%s2490] sm:$0xff]
  %v2492 = vld [vmem:[%s2490 + $0x8] sm:$0xff]
  %v2493 = vld [vmem:[%s2490 + $0x10] sm:$0xff]
  %v2494 = vld [vmem:[%s2490 + $0x18] sm:$0xff]
  %v2495 = vunpack.c.l.bf16 %v2491
  %v2496 = vunpack.c.h.bf16 %v2491
  %v2497 = vunpack.c.l.bf16 %v2492
  %v2498 = vunpack.c.h.bf16 %v2492
  %v2499 = vunpack.c.l.bf16 %v2493
  %v2500 = vunpack.c.h.bf16 %v2493
  %v2501 = vunpack.c.l.bf16 %v2494
  %v2502 = vunpack.c.h.bf16 %v2494
  %v2503 = vadd.f32 %v2495, %v167
  %v2504 = vadd.f32 %v2496, %v171
  %v2505 = vadd.f32 %v2497, %v175
  %v2506 = vadd.f32 %v2498, %v179
  %v2507 = vadd.f32 %v2499, %v167
  %v2508 = vadd.f32 %v2500, %v171
  %v2509 = vadd.f32 %v2501, %v175
  %v2510 = vadd.f32 %v2502, %v179
  %v2511 = vld [vmem:[#allocation2] sm:$0xff]
  %v2512 = vld [vmem:[#allocation2 + $0x8] sm:$0xff]
  %v2513 = vpack.c.bf16 %v2512, %v2511
  %2514 = vmatprep.subr.bf16.mxu0 %v292
  %2515 = vmatpush1.bf16.msra.mxu0 %v291
  %2516 = vmatprep.subr.bf16.mxu0 %v296
  %2517 = vmatpush1.bf16.msra.mxu0 %v295
  %2518 = vmatprep.subr.bf16.mxu0 %v300
  %2519 = vmatpush1.bf16.msra.mxu0 %v299
  %2520 = vmatprep.subr.bf16.mxu0 %v304
  %2521 = vmatpush1.bf16.msra.mxu0 %v303
  %2522 = vmatprep.subr.bf16.mxu0 %v308
  %2523 = vmatpush1.bf16.msra.mxu0 %v307
  %2524 = vmatprep.subr.bf16.mxu0 %v312
  %2525 = vmatpush1.bf16.msra.mxu0 %v311
  %2526 = vmatprep.subr.bf16.mxu0 %v316
  %2527 = vmatpush1.bf16.msra.mxu0 %v315
  %2528 = vmatprep.subr.bf16.mxu0 %v320
  %2529 = vmatpush1.bf16.msra.mxu0 %v319
  %2530 = vmatprep.subr.bf16.mxu0 0
  %2531 = vmatpush1.bf16.msra.mxu0 0
  %2532 = vmatprep.subr.bf16.mxu0 0
  %2533 = vmatpush1.bf16.msra.mxu0 0
  %2534 = vmatprep.subr.bf16.mxu0 0
  %2535 = vmatpush1.bf16.msra.mxu0 0
  %2536 = vmatprep.subr.bf16.mxu0 0
  %2537 = vmatpush1.bf16.msra.mxu0 0
  %2538 = vmatprep.subr.bf16.mxu0 0
  %2539 = vmatpush1.bf16.msra.mxu0 0
  %2540 = vmatprep.subr.bf16.mxu0 0
  %2541 = vmatpush1.bf16.msra.mxu0 0
  %2542 = vmatprep.subr.bf16.mxu0 0
  %2543 = vmatpush1.bf16.msra.mxu0 0
  %2544 = vmatprep.subr.bf16.mxu0 0
  %2545 = vmatpush1.bf16.msra.mxu0 0
  %2546 = vmatprep.mubr.bf16.mxu0 0
  %2547 = vmatmul.mubr.bf16.gmra.mrb[0].mxu0 %v2513
  %v2548 = vpop.f32.mrb[0].mxu0
  %v2549 = vadd.f32 0.0, %v2548
  %v2550 = vpop.f32.mrb[0].mxu0
  %v2551 = vadd.f32 0.0, %v2550
  %v2552 = vpop.f32.mrb[0].mxu0
  %v2553 = vadd.f32 0.0, %v2552
  %v2554 = vpop.f32.mrb[0].mxu0
  %v2555 = vadd.f32 0.0, %v2554
  %2556 = vdwg.mxu0
  %2557 = vmatprep.subr.bf16.mxu0 %v294
  %2558 = vmatpush1.bf16.msra.mxu0 %v293
  %2559 = vmatprep.subr.bf16.mxu0 %v298
  %2560 = vmatpush1.bf16.msra.mxu0 %v297
  %2561 = vmatprep.subr.bf16.mxu0 %v302
  %2562 = vmatpush1.bf16.msra.mxu0 %v301
  %2563 = vmatprep.subr.bf16.mxu0 %v306
  %2564 = vmatpush1.bf16.msra.mxu0 %v305
  %2565 = vmatprep.subr.bf16.mxu0 %v310
  %2566 = vmatpush1.bf16.msra.mxu0 %v309
  %2567 = vmatprep.subr.bf16.mxu0 %v314
  %2568 = vmatpush1.bf16.msra.mxu0 %v313
  %2569 = vmatprep.subr.bf16.mxu0 %v318
  %2570 = vmatpush1.bf16.msra.mxu0 %v317
  %2571 = vmatprep.subr.bf16.mxu0 %v322
  %2572 = vmatpush1.bf16.msra.mxu0 %v321
  %2573 = vmatprep.subr.bf16.mxu0 0
  %2574 = vmatpush1.bf16.msra.mxu0 0
  %2575 = vmatprep.subr.bf16.mxu0 0
  %2576 = vmatpush1.bf16.msra.mxu0 0
  %2577 = vmatprep.subr.bf16.mxu0 0
  %2578 = vmatpush1.bf16.msra.mxu0 0
  %2579 = vmatprep.subr.bf16.mxu0 0
  %2580 = vmatpush1.bf16.msra.mxu0 0
  %2581 = vmatprep.subr.bf16.mxu0 0
  %2582 = vmatpush1.bf16.msra.mxu0 0
  %2583 = vmatprep.subr.bf16.mxu0 0
  %2584 = vmatpush1.bf16.msra.mxu0 0
  %2585 = vmatprep.subr.bf16.mxu0 0
  %2586 = vmatpush1.bf16.msra.mxu0 0
  %2587 = vmatprep.subr.bf16.mxu0 0
  %2588 = vmatpush1.bf16.msra.mxu0 0
  %2589 = vmatprep.mubr.bf16.mxu0 0
  %2590 = vmatmul.mubr.bf16.gmra.mrb[0].mxu0 %v2513
  %v2591 = vpop.f32.mrb[0].mxu0
  %v2592 = vadd.f32 0.0, %v2591
  %v2593 = vpop.f32.mrb[0].mxu0
  %v2594 = vadd.f32 0.0, %v2593
  %v2595 = vpop.f32.mrb[0].mxu0
  %v2596 = vadd.f32 0.0, %v2595
  %v2597 = vpop.f32.mrb[0].mxu0
  %v2598 = vadd.f32 0.0, %v2597
  %2599 = vdwg.mxu0
  %v2600 = vadd.f32 %v2503, %v2549
  %v2601 = vadd.f32 %v2504, %v2551
  %v2602 = vadd.f32 %v2505, %v2592
  %v2603 = vadd.f32 %v2506, %v2594
  %v2604 = vadd.f32 %v2507, %v2553
  %v2605 = vadd.f32 %v2508, %v2555
  %v2606 = vadd.f32 %v2509, %v2596
  %v2607 = vadd.f32 %v2510, %v2598
  %s2608 = scalar_lea.vmem %s56, 64
  %v2609 = vld [vmem:[%s2608] sm:$0xff]
  %v2610 = vld [vmem:[%s2608 + $0x8] sm:$0xff]
  %v2611 = vld [vmem:[%s2608 + $0x10] sm:$0xff]
  %v2612 = vld [vmem:[%s2608 + $0x18] sm:$0xff]
  %v2613 = vunpack.c.l.bf16 %v2609
  %v2614 = vunpack.c.h.bf16 %v2609
  %v2615 = vunpack.c.l.bf16 %v2610
  %v2616 = vunpack.c.h.bf16 %v2610
  %v2617 = vunpack.c.l.bf16 %v2611
  %v2618 = vunpack.c.h.bf16 %v2611
  %v2619 = vunpack.c.l.bf16 %v2612
  %v2620 = vunpack.c.h.bf16 %v2612
  %v2621 = vadd.f32 %v2613, %v466
  %v2622 = vadd.f32 %v2614, %v470
  %v2623 = vadd.f32 %v2615, %v474
  %v2624 = vadd.f32 %v2616, %v478
  %v2625 = vadd.f32 %v2617, %v466
  %v2626 = vadd.f32 %v2618, %v470
  %v2627 = vadd.f32 %v2619, %v474
  %v2628 = vadd.f32 %v2620, %v478
  %v2629 = vld [vmem:[#allocation4] sm:$0xff]
  %v2630 = vld [vmem:[#allocation4 + $0x8] sm:$0xff]
  %v2631 = vpack.c.bf16 %v2630, %v2629
  %2632 = vmatprep.subr.bf16.mxu0 %v591
  %2633 = vmatpush1.bf16.msra.mxu0 %v590
  %2634 = vmatprep.subr.bf16.mxu0 %v595
  %2635 = vmatpush1.bf16.msra.mxu0 %v594
  %2636 = vmatprep.subr.bf16.mxu0 %v599
  %2637 = vmatpush1.bf16.msra.mxu0 %v598
  %2638 = vmatprep.subr.bf16.mxu0 %v603
  %2639 = vmatpush1.bf16.msra.mxu0 %v602
  %2640 = vmatprep.subr.bf16.mxu0 %v607
  %2641 = vmatpush1.bf16.msra.mxu0 %v606
  %2642 = vmatprep.subr.bf16.mxu0 %v611
  %2643 = vmatpush1.bf16.msra.mxu0 %v610
  %2644 = vmatprep.subr.bf16.mxu0 %v615
  %2645 = vmatpush1.bf16.msra.mxu0 %v614
  %2646 = vmatprep.subr.bf16.mxu0 %v619
  %2647 = vmatpush1.bf16.msra.mxu0 %v618
  %2648 = vmatprep.subr.bf16.mxu0 0
  %2649 = vmatpush1.bf16.msra.mxu0 0
  %2650 = vmatprep.subr.bf16.mxu0 0
  %2651 = vmatpush1.bf16.msra.mxu0 0
  %2652 = vmatprep.subr.bf16.mxu0 0
  %2653 = vmatpush1.bf16.msra.mxu0 0
  %2654 = vmatprep.subr.bf16.mxu0 0
  %2655 = vmatpush1.bf16.msra.mxu0 0
  %2656 = vmatprep.subr.bf16.mxu0 0
  %2657 = vmatpush1.bf16.msra.mxu0 0
  %2658 = vmatprep.subr.bf16.mxu0 0
  %2659 = vmatpush1.bf16.msra.mxu0 0
  %2660 = vmatprep.subr.bf16.mxu0 0
  %2661 = vmatpush1.bf16.msra.mxu0 0
  %2662 = vmatprep.subr.bf16.mxu0 0
  %2663 = vmatpush1.bf16.msra.mxu0 0
  %2664 = vmatprep.mubr.bf16.mxu0 0
  %2665 = vmatmul.mubr.bf16.gmra.mrb[0].mxu0 %v2631
  %v2666 = vpop.f32.mrb[0].mxu0
  %v2667 = vadd.f32 0.0, %v2666
  %v2668 = vpop.f32.mrb[0].mxu0
  %v2669 = vadd.f32 0.0, %v2668
  %v2670 = vpop.f32.mrb[0].mxu0
  %v2671 = vadd.f32 0.0, %v2670
  %v2672 = vpop.f32.mrb[0].mxu0
  %v2673 = vadd.f32 0.0, %v2672
  %2674 = vdwg.mxu0
  %2675 = vmatprep.subr.bf16.mxu0 %v593
  %2676 = vmatpush1.bf16.msra.mxu0 %v592
  %2677 = vmatprep.subr.bf16.mxu0 %v597
  %2678 = vmatpush1.bf16.msra.mxu0 %v596
  %2679 = vmatprep.subr.bf16.mxu0 %v601
  %2680 = vmatpush1.bf16.msra.mxu0 %v600
  %2681 = vmatprep.subr.bf16.mxu0 %v605
  %2682 = vmatpush1.bf16.msra.mxu0 %v604
  %2683 = vmatprep.subr.bf16.mxu0 %v609
  %2684 = vmatpush1.bf16.msra.mxu0 %v608
  %2685 = vmatprep.subr.bf16.mxu0 %v613
  %2686 = vmatpush1.bf16.msra.mxu0 %v612
  %2687 = vmatprep.subr.bf16.mxu0 %v617
  %2688 = vmatpush1.bf16.msra.mxu0 %v616
  %2689 = vmatprep.subr.bf16.mxu0 %v621
  %2690 = vmatpush1.bf16.msra.mxu0 %v620
  %2691 = vmatprep.subr.bf16.mxu0 0
  %2692 = vmatpush1.bf16.msra.mxu0 0
  %2693 = vmatprep.subr.bf16.mxu0 0
  %2694 = vmatpush1.bf16.msra.mxu0 0
  %2695 = vmatprep.subr.bf16.mxu0 0
  %2696 = vmatpush1.bf16.msra.mxu0 0
  %2697 = vmatprep.subr.bf16.mxu0 0
  %2698 = vmatpush1.bf16.msra.mxu0 0
  %2699 = vmatprep.subr.bf16.mxu0 0
  %2700 = vmatpush1.bf16.msra.mxu0 0
  %2701 = vmatprep.subr.bf16.mxu0 0
  %2702 = vmatpush1.bf16.msra.mxu0 0
  %2703 = vmatprep.subr.bf16.mxu0 0
  %2704 = vmatpush1.bf16.msra.mxu0 0
  %2705 = vmatprep.subr.bf16.mxu0 0
  %2706 = vmatpush1.bf16.msra.mxu0 0
  %2707 = vmatprep.mubr.bf16.mxu0 0
  %2708 = vmatmul.mubr.bf16.gmra.mrb[0].mxu0 %v2631
  %v2709 = vpop.f32.mrb[0].mxu0
  %v2710 = vadd.f32 0.0, %v2709
  %v2711 = vpop.f32.mrb[0].mxu0
  %v2712 = vadd.f32 0.0, %v2711
  %v2713 = vpop.f32.mrb[0].mxu0
  %v2714 = vadd.f32 0.0, %v2713
  %v2715 = vpop.f32.mrb[0].mxu0
  %v2716 = vadd.f32 0.0, %v2715
  %2717 = vdwg.mxu0
  %v2718 = vadd.f32 %v2621, %v2667
  %v2719 = vadd.f32 %v2622, %v2669
  %v2720 = vadd.f32 %v2623, %v2710
  %v2721 = vadd.f32 %v2624, %v2712
  %v2722 = vadd.f32 %v2625, %v2671
  %v2723 = vadd.f32 %v2626, %v2673
  %v2724 = vadd.f32 %v2627, %v2714
  %v2725 = vadd.f32 %v2628, %v2716
  %v2726 = vld [vmem:[#allocation3] sm:$0xff]
  %v2727 = vld [vmem:[#allocation3 + $0x8] sm:$0xff]
  %v2728 = vxor.u32 %v2600, 2147483648
  %v2729 = vxor.u32 %v2601, 2147483648
  %v2730 = vxor.u32 %v2602, 2147483648
  %v2731 = vxor.u32 %v2604, 2147483648
  %v2732 = vxor.u32 %v2605, 2147483648
  %v2733 = vxor.u32 %v2606, 2147483648
  %v2734 = vmul.f32 %v2728, 1.442695
  %v2735 = vpow.pop %v2734
  %v2736 = vmul.f32 %v2729, 1.442695
  %v2737 = vpow.pop %v2736
  %v2738 = vmul.f32 %v2730, 1.442695
  %v2739 = vpow.pop %v2738
  %v2740 = vmul.f32 %v2731, 1.442695
  %v2741 = vpow.pop %v2740
  %v2742 = vmul.f32 %v2732, 1.442695
  %v2743 = vpow.pop %v2742
  %v2744 = vmul.f32 %v2733, 1.442695
  %v2745 = vpow.pop %v2744
  %v2746 = vadd.f32 %v2735, 1.0
  %v2747 = vadd.f32 %v2737, 1.0
  %v2748 = vadd.f32 %v2739, 1.0
  %v2749 = vadd.f32 %v2741, 1.0
  %v2750 = vadd.f32 %v2743, 1.0
  %v2751 = vadd.f32 %v2745, 1.0
  %v2752 = vrcp.pop %v2746
  %v2753 = vmul.f32 1.0, %v2752
  %v2754 = vrcp.pop %v2747
  %v2755 = vmul.f32 1.0, %v2754
  %v2756 = vrcp.pop %v2748
  %v2757 = vmul.f32 1.0, %v2756
  %v2758 = vrcp.pop %v2749
  %v2759 = vmul.f32 1.0, %v2758
  %v2760 = vrcp.pop %v2750
  %v2761 = vmul.f32 1.0, %v2760
  %v2762 = vrcp.pop %v2751
  %v2763 = vmul.f32 1.0, %v2762
  %v2764 = vtanh.pop %v2603
  %v2765 = vtanh.pop %v2607
  %v2766 = vmul.f32 %v2755, %v2726
  %v2767 = vmul.f32 %v2761, %v2727
  %v2768 = vmul.f32 %v2753, %v2764
  %v2769 = vmul.f32 %v2759, %v2765
  %v2770 = vadd.f32 %v2766, %v2768
  %v2771 = vadd.f32 %v2767, %v2769
  %v2772 = vtanh.pop %v2770
  %v2773 = vtanh.pop %v2771
  %v2774 = vmul.f32 %v2757, %v2772
  %v2775 = vmul.f32 %v2763, %v2773
  %v2776 = vld [vmem:[#allocation5] sm:$0xff]
  %v2777 = vld [vmem:[#allocation5 + $0x8] sm:$0xff]
  %v2778 = vxor.u32 %v2718, 2147483648
  %v2779 = vxor.u32 %v2719, 2147483648
  %v2780 = vxor.u32 %v2720, 2147483648
  %v2781 = vxor.u32 %v2722, 2147483648
  %v2782 = vxor.u32 %v2723, 2147483648
  %v2783 = vxor.u32 %v2724, 2147483648
  %v2784 = vmul.f32 %v2778, 1.442695
  %v2785 = vpow.pop %v2784
  %v2786 = vmul.f32 %v2779, 1.442695
  %v2787 = vpow.pop %v2786
  %v2788 = vmul.f32 %v2780, 1.442695
  %v2789 = vpow.pop %v2788
  %v2790 = vmul.f32 %v2781, 1.442695
  %v2791 = vpow.pop %v2790
  %v2792 = vmul.f32 %v2782, 1.442695
  %v2793 = vpow.pop %v2792
  %v2794 = vmul.f32 %v2783, 1.442695
  %v2795 = vpow.pop %v2794
  %v2796 = vadd.f32 %v2785, 1.0
  %v2797 = vadd.f32 %v2787, 1.0
  %v2798 = vadd.f32 %v2789, 1.0
  %v2799 = vadd.f32 %v2791, 1.0
  %v2800 = vadd.f32 %v2793, 1.0
  %v2801 = vadd.f32 %v2795, 1.0
  %v2802 = vrcp.pop %v2796
  %v2803 = vmul.f32 1.0, %v2802
  %v2804 = vrcp.pop %v2797
  %v2805 = vmul.f32 1.0, %v2804
  %v2806 = vrcp.pop %v2798
  %v2807 = vmul.f32 1.0, %v2806
  %v2808 = vrcp.pop %v2799
  %v2809 = vmul.f32 1.0, %v2808
  %v2810 = vrcp.pop %v2800
  %v2811 = vmul.f32 1.0, %v2810
  %v2812 = vrcp.pop %v2801
  %v2813 = vmul.f32 1.0, %v2812
  %v2814 = vtanh.pop %v2721
  %v2815 = vtanh.pop %v2725
  %v2816 = vmul.f32 %v2805, %v2776
  %v2817 = vmul.f32 %v2811, %v2777
  %v2818 = vmul.f32 %v2803, %v2814
  %v2819 = vmul.f32 %v2809, %v2815
  %v2820 = vadd.f32 %v2816, %v2818
  %v2821 = vadd.f32 %v2817, %v2819
  %v2822 = vtanh.pop %v2820
  %v2823 = vtanh.pop %v2821
  %v2824 = vmul.f32 %v2807, %v2822
  %v2825 = vmul.f32 %v2813, %v2823
  %s2826 = sadd.s32 %s148, 5
  %v2827 = vstv %s2826
  %vm2828 = vcmp.lt.s32.totalorder %v2827, %v80
  %vm2829 = vcmp.lt.s32.totalorder %v2827, %v81
  %s2830 = sadd.s32 %s150, 2
  %v2831 = vstv %s2830
  %vm2832 = vcmp.lt.s32.totalorder %v2831, %v80
  %vm2833 = vcmp.lt.s32.totalorder %v2831, %v81
  %v2834 = vsel %vm2828, 1, 0
  %v2835 = vsel %vm2829, 1, 0
  %2836 = vset.pattern.permute.xlu0 0
  %2837 = vperm.xlu0 %2836, %v2834
  %v2838 = vpop.permute.xlu0 %2837
  %2839 = vset.pattern.permute.xlu0 0
  %2840 = vperm.xlu0 %2839, %v2835
  %v2841 = vpop.permute.xlu0 %2840
  %vm2842 = vcmp.eq.s32.totalorder %v2838, 1
  %vm2843 = vcmp.eq.s32.totalorder %v2841, 1
  %v2844 = vsel %vm2842, %v2774, %v2511
  %v2845 = vsel %vm2843, %v2775, %v2512
  %2846 = vst [vmem:[#allocation2] sm:$0xff] %v2844
  %2847 = vst [vmem:[#allocation2 + $0x8] sm:$0xff] %v2845
  %v2848 = vld [vmem:[#allocation3] sm:$0xff]
  %v2849 = vld [vmem:[#allocation3 + $0x8] sm:$0xff]
  %v2850 = vsel %vm2842, %v2770, %v2848
  %v2851 = vsel %vm2843, %v2771, %v2849
  %2852 = vst [vmem:[#allocation3] sm:$0xff] %v2850
  %2853 = vst [vmem:[#allocation3 + $0x8] sm:$0xff] %v2851
  %v2854 = vld [vmem:[#allocation4] sm:$0xff]
  %v2855 = vld [vmem:[#allocation4 + $0x8] sm:$0xff]
  %v2856 = vsel %vm2832, 1, 0
  %v2857 = vsel %vm2833, 1, 0
  %2858 = vset.pattern.permute.xlu0 0
  %2859 = vperm.xlu0 %2858, %v2856
  %v2860 = vpop.permute.xlu0 %2859
  %2861 = vset.pattern.permute.xlu0 0
  %2862 = vperm.xlu0 %2861, %v2857
  %v2863 = vpop.permute.xlu0 %2862
  %vm2864 = vcmp.eq.s32.totalorder %v2860, 1
  %vm2865 = vcmp.eq.s32.totalorder %v2863, 1
  %v2866 = vsel %vm2864, %v2824, %v2854
  %v2867 = vsel %vm2865, %v2825, %v2855
  %2868 = vst [vmem:[#allocation4] sm:$0xff] %v2866
  %2869 = vst [vmem:[#allocation4 + $0x8] sm:$0xff] %v2867
  %v2870 = vld [vmem:[#allocation5] sm:$0xff]
  %v2871 = vld [vmem:[#allocation5 + $0x8] sm:$0xff]
  %v2872 = vsel %vm2864, %v2820, %v2870
  %v2873 = vsel %vm2865, %v2821, %v2871
  %2874 = vst [vmem:[#allocation5] sm:$0xff] %v2872
  %2875 = vst [vmem:[#allocation5 + $0x8] sm:$0xff] %v2873
  %v2876 = vsel %vm2842, %v2774, 0.0
  %v2877 = vsel %vm2843, %v2775, 0.0
  %v2878 = vpack.c.bf16 %v2877, %v2876
  %s2879 = scalar_lea.vmem %s7, 40
  %2880 = vst [vmem:[%s2879] sm:$0xff] %v2878
  %v2881 = vsel %vm2864, %v2824, 0.0
  %v2882 = vsel %vm2865, %v2825, 0.0
  %v2883 = vpack.c.bf16 %v2882, %v2881
  %s2884 = scalar_lea.vmem %s64, 16
  %2885 = vst [vmem:[%s2884] sm:$0xff] %v2883
  %s2886 = scalar_lea.vmem %s1, 192
  %v2887 = vld [vmem:[%s2886] sm:$0xff]
  %v2888 = vld [vmem:[%s2886 + $0x8] sm:$0xff]
  %v2889 = vld [vmem:[%s2886 + $0x10] sm:$0xff]
  %v2890 = vld [vmem:[%s2886 + $0x18] sm:$0xff]
  %v2891 = vunpack.c.l.bf16 %v2887
  %v2892 = vunpack.c.h.bf16 %v2887
  %v2893 = vunpack.c.l.bf16 %v2888
  %v2894 = vunpack.c.h.bf16 %v2888
  %v2895 = vunpack.c.l.bf16 %v2889
  %v2896 = vunpack.c.h.bf16 %v2889
  %v2897 = vunpack.c.l.bf16 %v2890
  %v2898 = vunpack.c.h.bf16 %v2890
  %v2899 = vadd.f32 %v2891, %v167
  %v2900 = vadd.f32 %v2892, %v171
  %v2901 = vadd.f32 %v2893, %v175
  %v2902 = vadd.f32 %v2894, %v179
  %v2903 = vadd.f32 %v2895, %v167
  %v2904 = vadd.f32 %v2896, %v171
  %v2905 = vadd.f32 %v2897, %v175
  %v2906 = vadd.f32 %v2898, %v179
  %v2907 = vld [vmem:[#allocation2] sm:$0xff]
  %v2908 = vld [vmem:[#allocation2 + $0x8] sm:$0xff]
  %v2909 = vpack.c.bf16 %v2908, %v2907
  %2910 = vmatprep.subr.bf16.mxu0 %v292
  %2911 = vmatpush1.bf16.msra.mxu0 %v291
  %2912 = vmatprep.subr.bf16.mxu0 %v296
  %2913 = vmatpush1.bf16.msra.mxu0 %v295
  %2914 = vmatprep.subr.bf16.mxu0 %v300
  %2915 = vmatpush1.bf16.msra.mxu0 %v299
  %2916 = vmatprep.subr.bf16.mxu0 %v304
  %2917 = vmatpush1.bf16.msra.mxu0 %v303
  %2918 = vmatprep.subr.bf16.mxu0 %v308
  %2919 = vmatpush1.bf16.msra.mxu0 %v307
  %2920 = vmatprep.subr.bf16.mxu0 %v312
  %2921 = vmatpush1.bf16.msra.mxu0 %v311
  %2922 = vmatprep.subr.bf16.mxu0 %v316
  %2923 = vmatpush1.bf16.msra.mxu0 %v315
  %2924 = vmatprep.subr.bf16.mxu0 %v320
  %2925 = vmatpush1.bf16.msra.mxu0 %v319
  %2926 = vmatprep.subr.bf16.mxu0 0
  %2927 = vmatpush1.bf16.msra.mxu0 0
  %2928 = vmatprep.subr.bf16.mxu0 0
  %2929 = vmatpush1.bf16.msra.mxu0 0
  %2930 = vmatprep.subr.bf16.mxu0 0
  %2931 = vmatpush1.bf16.msra.mxu0 0
  %2932 = vmatprep.subr.bf16.mxu0 0
  %2933 = vmatpush1.bf16.msra.mxu0 0
  %2934 = vmatprep.subr.bf16.mxu0 0
  %2935 = vmatpush1.bf16.msra.mxu0 0
  %2936 = vmatprep.subr.bf16.mxu0 0
  %2937 = vmatpush1.bf16.msra.mxu0 0
  %2938 = vmatprep.subr.bf16.mxu0 0
  %2939 = vmatpush1.bf16.msra.mxu0 0
  %2940 = vmatprep.subr.bf16.mxu0 0
  %2941 = vmatpush1.bf16.msra.mxu0 0
  %2942 = vmatprep.mubr.bf16.mxu0 0
  %2943 = vmatmul.mubr.bf16.gmra.mrb[0].mxu0 %v2909
  %v2944 = vpop.f32.mrb[0].mxu0
  %v2945 = vadd.f32 0.0, %v2944
  %v2946 = vpop.f32.mrb[0].mxu0
  %v2947 = vadd.f32 0.0, %v2946
  %v2948 = vpop.f32.mrb[0].mxu0
  %v2949 = vadd.f32 0.0, %v2948
  %v2950 = vpop.f32.mrb[0].mxu0
  %v2951 = vadd.f32 0.0, %v2950
  %2952 = vdwg.mxu0
  %2953 = vmatprep.subr.bf16.mxu0 %v294
  %2954 = vmatpush1.bf16.msra.mxu0 %v293
  %2955 = vmatprep.subr.bf16.mxu0 %v298
  %2956 = vmatpush1.bf16.msra.mxu0 %v297
  %2957 = vmatprep.subr.bf16.mxu0 %v302
  %2958 = vmatpush1.bf16.msra.mxu0 %v301
  %2959 = vmatprep.subr.bf16.mxu0 %v306
  %2960 = vmatpush1.bf16.msra.mxu0 %v305
  %2961 = vmatprep.subr.bf16.mxu0 %v310
  %2962 = vmatpush1.bf16.msra.mxu0 %v309
  %2963 = vmatprep.subr.bf16.mxu0 %v314
  %2964 = vmatpush1.bf16.msra.mxu0 %v313
  %2965 = vmatprep.subr.bf16.mxu0 %v318
  %2966 = vmatpush1.bf16.msra.mxu0 %v317
  %2967 = vmatprep.subr.bf16.mxu0 %v322
  %2968 = vmatpush1.bf16.msra.mxu0 %v321
  %2969 = vmatprep.subr.bf16.mxu0 0
  %2970 = vmatpush1.bf16.msra.mxu0 0
  %2971 = vmatprep.subr.bf16.mxu0 0
  %2972 = vmatpush1.bf16.msra.mxu0 0
  %2973 = vmatprep.subr.bf16.mxu0 0
  %2974 = vmatpush1.bf16.msra.mxu0 0
  %2975 = vmatprep.subr.bf16.mxu0 0
  %2976 = vmatpush1.bf16.msra.mxu0 0
  %2977 = vmatprep.subr.bf16.mxu0 0
  %2978 = vmatpush1.bf16.msra.mxu0 0
  %2979 = vmatprep.subr.bf16.mxu0 0
  %2980 = vmatpush1.bf16.msra.mxu0 0
  %2981 = vmatprep.subr.bf16.mxu0 0
  %2982 = vmatpush1.bf16.msra.mxu0 0
  %2983 = vmatprep.subr.bf16.mxu0 0
  %2984 = vmatpush1.bf16.msra.mxu0 0
  %2985 = vmatprep.mubr.bf16.mxu0 0
  %2986 = vmatmul.mubr.bf16.gmra.mrb[0].mxu0 %v2909
  %v2987 = vpop.f32.mrb[0].mxu0
  %v2988 = vadd.f32 0.0, %v2987
  %v2989 = vpop.f32.mrb[0].mxu0
  %v2990 = vadd.f32 0.0, %v2989
  %v2991 = vpop.f32.mrb[0].mxu0
  %v2992 = vadd.f32 0.0, %v2991
  %v2993 = vpop.f32.mrb[0].mxu0
  %v2994 = vadd.f32 0.0, %v2993
  %2995 = vdwg.mxu0
  %v2996 = vadd.f32 %v2899, %v2945
  %v2997 = vadd.f32 %v2900, %v2947
  %v2998 = vadd.f32 %v2901, %v2988
  %v2999 = vadd.f32 %v2902, %v2990
  %v3000 = vadd.f32 %v2903, %v2949
  %v3001 = vadd.f32 %v2904, %v2951
  %v3002 = vadd.f32 %v2905, %v2992
  %v3003 = vadd.f32 %v2906, %v2994
  %s3004 = scalar_lea.vmem %s56, 32
  %v3005 = vld [vmem:[%s3004] sm:$0xff]
  %v3006 = vld [vmem:[%s3004 + $0x8] sm:$0xff]
  %v3007 = vld [vmem:[%s3004 + $0x10] sm:$0xff]
  %v3008 = vld [vmem:[%s3004 + $0x18] sm:$0xff]
  %v3009 = vunpack.c.l.bf16 %v3005
  %v3010 = vunpack.c.h.bf16 %v3005
  %v3011 = vunpack.c.l.bf16 %v3006
  %v3012 = vunpack.c.h.bf16 %v3006
  %v3013 = vunpack.c.l.bf16 %v3007
  %v3014 = vunpack.c.h.bf16 %v3007
  %v3015 = vunpack.c.l.bf16 %v3008
  %v3016 = vunpack.c.h.bf16 %v3008
  %v3017 = vadd.f32 %v3009, %v466
  %v3018 = vadd.f32 %v3010, %v470
  %v3019 = vadd.f32 %v3011, %v474
  %v3020 = vadd.f32 %v3012, %v478
  %v3021 = vadd.f32 %v3013, %v466
  %v3022 = vadd.f32 %v3014, %v470
  %v3023 = vadd.f32 %v3015, %v474
  %v3024 = vadd.f32 %v3016, %v478
  %v3025 = vld [vmem:[#allocation4] sm:$0xff]
  %v3026 = vld [vmem:[#allocation4 + $0x8] sm:$0xff]
  %v3027 = vpack.c.bf16 %v3026, %v3025
  %3028 = vmatprep.subr.bf16.mxu0 %v591
  %3029 = vmatpush1.bf16.msra.mxu0 %v590
  %3030 = vmatprep.subr.bf16.mxu0 %v595
  %3031 = vmatpush1.bf16.msra.mxu0 %v594
  %3032 = vmatprep.subr.bf16.mxu0 %v599
  %3033 = vmatpush1.bf16.msra.mxu0 %v598
  %3034 = vmatprep.subr.bf16.mxu0 %v603
  %3035 = vmatpush1.bf16.msra.mxu0 %v602
  %3036 = vmatprep.subr.bf16.mxu0 %v607
  %3037 = vmatpush1.bf16.msra.mxu0 %v606
  %3038 = vmatprep.subr.bf16.mxu0 %v611
  %3039 = vmatpush1.bf16.msra.mxu0 %v610
  %3040 = vmatprep.subr.bf16.mxu0 %v615
  %3041 = vmatpush1.bf16.msra.mxu0 %v614
  %3042 = vmatprep.subr.bf16.mxu0 %v619
  %3043 = vmatpush1.bf16.msra.mxu0 %v618
  %3044 = vmatprep.subr.bf16.mxu0 0
  %3045 = vmatpush1.bf16.msra.mxu0 0
  %3046 = vmatprep.subr.bf16.mxu0 0
  %3047 = vmatpush1.bf16.msra.mxu0 0
  %3048 = vmatprep.subr.bf16.mxu0 0
  %3049 = vmatpush1.bf16.msra.mxu0 0
  %3050 = vmatprep.subr.bf16.mxu0 0
  %3051 = vmatpush1.bf16.msra.mxu0 0
  %3052 = vmatprep.subr.bf16.mxu0 0
  %3053 = vmatpush1.bf16.msra.mxu0 0
  %3054 = vmatprep.subr.bf16.mxu0 0
  %3055 = vmatpush1.bf16.msra.mxu0 0
  %3056 = vmatprep.subr.bf16.mxu0 0
  %3057 = vmatpush1.bf16.msra.mxu0 0
  %3058 = vmatprep.subr.bf16.mxu0 0
  %3059 = vmatpush1.bf16.msra.mxu0 0
  %3060 = vmatprep.mubr.bf16.mxu0 0
  %3061 = vmatmul.mubr.bf16.gmra.mrb[0].mxu0 %v3027
  %v3062 = vpop.f32.mrb[0].mxu0
  %v3063 = vadd.f32 0.0, %v3062
  %v3064 = vpop.f32.mrb[0].mxu0
  %v3065 = vadd.f32 0.0, %v3064
  %v3066 = vpop.f32.mrb[0].mxu0
  %v3067 = vadd.f32 0.0, %v3066
  %v3068 = vpop.f32.mrb[0].mxu0
  %v3069 = vadd.f32 0.0, %v3068
  %3070 = vdwg.mxu0
  %3071 = vmatprep.subr.bf16.mxu0 %v593
  %3072 = vmatpush1.bf16.msra.mxu0 %v592
  %3073 = vmatprep.subr.bf16.mxu0 %v597
  %3074 = vmatpush1.bf16.msra.mxu0 %v596
  %3075 = vmatprep.subr.bf16.mxu0 %v601
  %3076 = vmatpush1.bf16.msra.mxu0 %v600
  %3077 = vmatprep.subr.bf16.mxu0 %v605
  %3078 = vmatpush1.bf16.msra.mxu0 %v604
  %3079 = vmatprep.subr.bf16.mxu0 %v609
  %3080 = vmatpush1.bf16.msra.mxu0 %v608
  %3081 = vmatprep.subr.bf16.mxu0 %v613
  %3082 = vmatpush1.bf16.msra.mxu0 %v612
  %3083 = vmatprep.subr.bf16.mxu0 %v617
  %3084 = vmatpush1.bf16.msra.mxu0 %v616
  %3085 = vmatprep.subr.bf16.mxu0 %v621
  %3086 = vmatpush1.bf16.msra.mxu0 %v620
  %3087 = vmatprep.subr.bf16.mxu0 0
  %3088 = vmatpush1.bf16.msra.mxu0 0
  %3089 = vmatprep.subr.bf16.mxu0 0
  %3090 = vmatpush1.bf16.msra.mxu0 0
  %3091 = vmatprep.subr.bf16.mxu0 0
  %3092 = vmatpush1.bf16.msra.mxu0 0
  %3093 = vmatprep.subr.bf16.mxu0 0
  %3094 = vmatpush1.bf16.msra.mxu0 0
  %3095 = vmatprep.subr.bf16.mxu0 0
  %3096 = vmatpush1.bf16.msra.mxu0 0
  %3097 = vmatprep.subr.bf16.mxu0 0
  %3098 = vmatpush1.bf16.msra.mxu0 0
  %3099 = vmatprep.subr.bf16.mxu0 0
  %3100 = vmatpush1.bf16.msra.mxu0 0
  %3101 = vmatprep.subr.bf16.mxu0 0
  %3102 = vmatpush1.bf16.msra.mxu0 0
  %3103 = vmatprep.mubr.bf16.mxu0 0
  %3104 = vmatmul.mubr.bf16.gmra.mrb[0].mxu0 %v3027
  %v3105 = vpop.f32.mrb[0].mxu0
  %v3106 = vadd.f32 0.0, %v3105
  %v3107 = vpop.f32.mrb[0].mxu0
  %v3108 = vadd.f32 0.0, %v3107
  %v3109 = vpop.f32.mrb[0].mxu0
  %v3110 = vadd.f32 0.0, %v3109
  %v3111 = vpop.f32.mrb[0].mxu0
  %v3112 = vadd.f32 0.0, %v3111
  %3113 = vdwg.mxu0
  %v3114 = vadd.f32 %v3017, %v3063
  %v3115 = vadd.f32 %v3018, %v3065
  %v3116 = vadd.f32 %v3019, %v3106
  %v3117 = vadd.f32 %v3020, %v3108
  %v3118 = vadd.f32 %v3021, %v3067
  %v3119 = vadd.f32 %v3022, %v3069
  %v3120 = vadd.f32 %v3023, %v3110
  %v3121 = vadd.f32 %v3024, %v3112
  %v3122 = vld [vmem:[#allocation3] sm:$0xff]
  %v3123 = vld [vmem:[#allocation3 + $0x8] sm:$0xff]
  %v3124 = vxor.u32 %v2996, 2147483648
  %v3125 = vxor.u32 %v2997, 2147483648
  %v3126 = vxor.u32 %v2998, 2147483648
  %v3127 = vxor.u32 %v3000, 2147483648
  %v3128 = vxor.u32 %v3001, 2147483648
  %v3129 = vxor.u32 %v3002, 2147483648
  %v3130 = vmul.f32 %v3124, 1.442695
  %v3131 = vpow.pop %v3130
  %v3132 = vmul.f32 %v3125, 1.442695
  %v3133 = vpow.pop %v3132
  %v3134 = vmul.f32 %v3126, 1.442695
  %v3135 = vpow.pop %v3134
  %v3136 = vmul.f32 %v3127, 1.442695
  %v3137 = vpow.pop %v3136
  %v3138 = vmul.f32 %v3128, 1.442695
  %v3139 = vpow.pop %v3138
  %v3140 = vmul.f32 %v3129, 1.442695
  %v3141 = vpow.pop %v3140
  %v3142 = vadd.f32 %v3131, 1.0
  %v3143 = vadd.f32 %v3133, 1.0
  %v3144 = vadd.f32 %v3135, 1.0
  %v3145 = vadd.f32 %v3137, 1.0
  %v3146 = vadd.f32 %v3139, 1.0
  %v3147 = vadd.f32 %v3141, 1.0
  %v3148 = vrcp.pop %v3142
  %v3149 = vmul.f32 1.0, %v3148
  %v3150 = vrcp.pop %v3143
  %v3151 = vmul.f32 1.0, %v3150
  %v3152 = vrcp.pop %v3144
  %v3153 = vmul.f32 1.0, %v3152
  %v3154 = vrcp.pop %v3145
  %v3155 = vmul.f32 1.0, %v3154
  %v3156 = vrcp.pop %v3146
  %v3157 = vmul.f32 1.0, %v3156
  %v3158 = vrcp.pop %v3147
  %v3159 = vmul.f32 1.0, %v3158
  %v3160 = vtanh.pop %v2999
  %v3161 = vtanh.pop %v3003
  %v3162 = vmul.f32 %v3151, %v3122
  %v3163 = vmul.f32 %v3157, %v3123
  %v3164 = vmul.f32 %v3149, %v3160
  %v3165 = vmul.f32 %v3155, %v3161
  %v3166 = vadd.f32 %v3162, %v3164
  %v3167 = vadd.f32 %v3163, %v3165
  %v3168 = vtanh.pop %v3166
  %v3169 = vtanh.pop %v3167
  %v3170 = vmul.f32 %v3153, %v3168
  %v3171 = vmul.f32 %v3159, %v3169
  %v3172 = vld [vmem:[#allocation5] sm:$0xff]
  %v3173 = vld [vmem:[#allocation5 + $0x8] sm:$0xff]
  %v3174 = vxor.u32 %v3114, 2147483648
  %v3175 = vxor.u32 %v3115, 2147483648
  %v3176 = vxor.u32 %v3116, 2147483648
  %v3177 = vxor.u32 %v3118, 2147483648
  %v3178 = vxor.u32 %v3119, 2147483648
  %v3179 = vxor.u32 %v3120, 2147483648
  %v3180 = vmul.f32 %v3174, 1.442695
  %v3181 = vpow.pop %v3180
  %v3182 = vmul.f32 %v3175, 1.442695
  %v3183 = vpow.pop %v3182
  %v3184 = vmul.f32 %v3176, 1.442695
  %v3185 = vpow.pop %v3184
  %v3186 = vmul.f32 %v3177, 1.442695
  %v3187 = vpow.pop %v3186
  %v3188 = vmul.f32 %v3178, 1.442695
  %v3189 = vpow.pop %v3188
  %v3190 = vmul.f32 %v3179, 1.442695
  %v3191 = vpow.pop %v3190
  %v3192 = vadd.f32 %v3181, 1.0
  %v3193 = vadd.f32 %v3183, 1.0
  %v3194 = vadd.f32 %v3185, 1.0
  %v3195 = vadd.f32 %v3187, 1.0
  %v3196 = vadd.f32 %v3189, 1.0
  %v3197 = vadd.f32 %v3191, 1.0
  %v3198 = vrcp.pop %v3192
  %v3199 = vmul.f32 1.0, %v3198
  %v3200 = vrcp.pop %v3193
  %v3201 = vmul.f32 1.0, %v3200
  %v3202 = vrcp.pop %v3194
  %v3203 = vmul.f32 1.0, %v3202
  %v3204 = vrcp.pop %v3195
  %v3205 = vmul.f32 1.0, %v3204
  %v3206 = vrcp.pop %v3196
  %v3207 = vmul.f32 1.0, %v3206
  %v3208 = vrcp.pop %v3197
  %v3209 = vmul.f32 1.0, %v3208
  %v3210 = vtanh.pop %v3117
  %v3211 = vtanh.pop %v3121
  %v3212 = vmul.f32 %v3201, %v3172
  %v3213 = vmul.f32 %v3207, %v3173
  %v3214 = vmul.f32 %v3199, %v3210
  %v3215 = vmul.f32 %v3205, %v3211
  %v3216 = vadd.f32 %v3212, %v3214
  %v3217 = vadd.f32 %v3213, %v3215
  %v3218 = vtanh.pop %v3216
  %v3219 = vtanh.pop %v3217
  %v3220 = vmul.f32 %v3203, %v3218
  %v3221 = vmul.f32 %v3209, %v3219
  %s3222 = sadd.s32 %s148, 6
  %v3223 = vstv %s3222
  %vm3224 = vcmp.lt.s32.totalorder %v3223, %v80
  %vm3225 = vcmp.lt.s32.totalorder %v3223, %v81
  %s3226 = sadd.s32 %s150, 1
  %v3227 = vstv %s3226
  %vm3228 = vcmp.lt.s32.totalorder %v3227, %v80
  %vm3229 = vcmp.lt.s32.totalorder %v3227, %v81
  %v3230 = vsel %vm3224, 1, 0
  %v3231 = vsel %vm3225, 1, 0
  %3232 = vset.pattern.permute.xlu0 0
  %3233 = vperm.xlu0 %3232, %v3230
  %v3234 = vpop.permute.xlu0 %3233
  %3235 = vset.pattern.permute.xlu0 0
  %3236 = vperm.xlu0 %3235, %v3231
  %v3237 = vpop.permute.xlu0 %3236
  %vm3238 = vcmp.eq.s32.totalorder %v3234, 1
  %vm3239 = vcmp.eq.s32.totalorder %v3237, 1
  %v3240 = vsel %vm3238, %v3170, %v2907
  %v3241 = vsel %vm3239, %v3171, %v2908
  %3242 = vst [vmem:[#allocation2] sm:$0xff] %v3240
  %3243 = vst [vmem:[#allocation2 + $0x8] sm:$0xff] %v3241
  %v3244 = vld [vmem:[#allocation3] sm:$0xff]
  %v3245 = vld [vmem:[#allocation3 + $0x8] sm:$0xff]
  %v3246 = vsel %vm3238, %v3166, %v3244
  %v3247 = vsel %vm3239, %v3167, %v3245
  %3248 = vst [vmem:[#allocation3] sm:$0xff] %v3246
  %3249 = vst [vmem:[#allocation3 + $0x8] sm:$0xff] %v3247
  %v3250 = vld [vmem:[#allocation4] sm:$0xff]
  %v3251 = vld [vmem:[#allocation4 + $0x8] sm:$0xff]
  %v3252 = vsel %vm3228, 1, 0
  %v3253 = vsel %vm3229, 1, 0
  %3254 = vset.pattern.permute.xlu0 0
  %3255 = vperm.xlu0 %3254, %v3252
  %v3256 = vpop.permute.xlu0 %3255
  %3257 = vset.pattern.permute.xlu0 0
  %3258 = vperm.xlu0 %3257, %v3253
  %v3259 = vpop.permute.xlu0 %3258
  %vm3260 = vcmp.eq.s32.totalorder %v3256, 1
  %vm3261 = vcmp.eq.s32.totalorder %v3259, 1
  %v3262 = vsel %vm3260, %v3220, %v3250
  %v3263 = vsel %vm3261, %v3221, %v3251
  %3264 = vst [vmem:[#allocation4] sm:$0xff] %v3262
  %3265 = vst [vmem:[#allocation4 + $0x8] sm:$0xff] %v3263
  %v3266 = vld [vmem:[#allocation5] sm:$0xff]
  %v3267 = vld [vmem:[#allocation5 + $0x8] sm:$0xff]
  %v3268 = vsel %vm3260, %v3216, %v3266
  %v3269 = vsel %vm3261, %v3217, %v3267
  %3270 = vst [vmem:[#allocation5] sm:$0xff] %v3268
  %3271 = vst [vmem:[#allocation5 + $0x8] sm:$0xff] %v3269
  %v3272 = vsel %vm3238, %v3170, 0.0
  %v3273 = vsel %vm3239, %v3171, 0.0
  %v3274 = vpack.c.bf16 %v3273, %v3272
  %s3275 = scalar_lea.vmem %s7, 48
  %3276 = vst [vmem:[%s3275] sm:$0xff] %v3274
  %v3277 = vsel %vm3260, %v3220, 0.0
  %v3278 = vsel %vm3261, %v3221, 0.0
  %v3279 = vpack.c.bf16 %v3278, %v3277
  %s3280 = scalar_lea.vmem %s64, 8
  %3281 = vst [vmem:[%s3280] sm:$0xff] %v3279
  %s3282 = scalar_lea.vmem %s1, 224
  %v3283 = vld [vmem:[%s3282] sm:$0xff]
  %v3284 = vld [vmem:[%s3282 + $0x8] sm:$0xff]
  %v3285 = vld [vmem:[%s3282 + $0x10] sm:$0xff]
  %v3286 = vld [vmem:[%s3282 + $0x18] sm:$0xff]
  %v3287 = vunpack.c.l.bf16 %v3283
  %v3288 = vunpack.c.h.bf16 %v3283
  %v3289 = vunpack.c.l.bf16 %v3284
  %v3290 = vunpack.c.h.bf16 %v3284
  %v3291 = vunpack.c.l.bf16 %v3285
  %v3292 = vunpack.c.h.bf16 %v3285
  %v3293 = vunpack.c.l.bf16 %v3286
  %v3294 = vunpack.c.h.bf16 %v3286
  %v3295 = vadd.f32 %v3287, %v167
  %v3296 = vadd.f32 %v3288, %v171
  %v3297 = vadd.f32 %v3289, %v175
  %v3298 = vadd.f32 %v3290, %v179
  %v3299 = vadd.f32 %v3291, %v167
  %v3300 = vadd.f32 %v3292, %v171
  %v3301 = vadd.f32 %v3293, %v175
  %v3302 = vadd.f32 %v3294, %v179
  %v3303 = vld [vmem:[#allocation2] sm:$0xff]
  %v3304 = vld [vmem:[#allocation2 + $0x8] sm:$0xff]
  %v3305 = vpack.c.bf16 %v3304, %v3303
  %3306 = vmatprep.subr.bf16.mxu0 %v292
  %3307 = vmatpush1.bf16.msra.mxu0 %v291
  %3308 = vmatprep.subr.bf16.mxu0 %v296
  %3309 = vmatpush1.bf16.msra.mxu0 %v295
  %3310 = vmatprep.subr.bf16.mxu0 %v300
  %3311 = vmatpush1.bf16.msra.mxu0 %v299
  %3312 = vmatprep.subr.bf16.mxu0 %v304
  %3313 = vmatpush1.bf16.msra.mxu0 %v303
  %3314 = vmatprep.subr.bf16.mxu0 %v308
  %3315 = vmatpush1.bf16.msra.mxu0 %v307
  %3316 = vmatprep.subr.bf16.mxu0 %v312
  %3317 = vmatpush1.bf16.msra.mxu0 %v311
  %3318 = vmatprep.subr.bf16.mxu0 %v316
  %3319 = vmatpush1.bf16.msra.mxu0 %v315
  %3320 = vmatprep.subr.bf16.mxu0 %v320
  %3321 = vmatpush1.bf16.msra.mxu0 %v319
  %3322 = vmatprep.subr.bf16.mxu0 0
  %3323 = vmatpush1.bf16.msra.mxu0 0
  %3324 = vmatprep.subr.bf16.mxu0 0
  %3325 = vmatpush1.bf16.msra.mxu0 0
  %3326 = vmatprep.subr.bf16.mxu0 0
  %3327 = vmatpush1.bf16.msra.mxu0 0
  %3328 = vmatprep.subr.bf16.mxu0 0
  %3329 = vmatpush1.bf16.msra.mxu0 0
  %3330 = vmatprep.subr.bf16.mxu0 0
  %3331 = vmatpush1.bf16.msra.mxu0 0
  %3332 = vmatprep.subr.bf16.mxu0 0
  %3333 = vmatpush1.bf16.msra.mxu0 0
  %3334 = vmatprep.subr.bf16.mxu0 0
  %3335 = vmatpush1.bf16.msra.mxu0 0
  %3336 = vmatprep.subr.bf16.mxu0 0
  %3337 = vmatpush1.bf16.msra.mxu0 0
  %3338 = vmatprep.mubr.bf16.mxu0 0
  %3339 = vmatmul.mubr.bf16.gmra.mrb[0].mxu0 %v3305
  %v3340 = vpop.f32.mrb[0].mxu0
  %v3341 = vadd.f32 0.0, %v3340
  %v3342 = vpop.f32.mrb[0].mxu0
  %v3343 = vadd.f32 0.0, %v3342
  %v3344 = vpop.f32.mrb[0].mxu0
  %v3345 = vadd.f32 0.0, %v3344
  %v3346 = vpop.f32.mrb[0].mxu0
  %v3347 = vadd.f32 0.0, %v3346
  %3348 = vdwg.mxu0
  %3349 = vmatprep.subr.bf16.mxu0 %v294
  %3350 = vmatpush1.bf16.msra.mxu0 %v293
  %3351 = vmatprep.subr.bf16.mxu0 %v298
  %3352 = vmatpush1.bf16.msra.mxu0 %v297
  %3353 = vmatprep.subr.bf16.mxu0 %v302
  %3354 = vmatpush1.bf16.msra.mxu0 %v301
  %3355 = vmatprep.subr.bf16.mxu0 %v306
  %3356 = vmatpush1.bf16.msra.mxu0 %v305
  %3357 = vmatprep.subr.bf16.mxu0 %v310
  %3358 = vmatpush1.bf16.msra.mxu0 %v309
  %3359 = vmatprep.subr.bf16.mxu0 %v314
  %3360 = vmatpush1.bf16.msra.mxu0 %v313
  %3361 = vmatprep.subr.bf16.mxu0 %v318
  %3362 = vmatpush1.bf16.msra.mxu0 %v317
  %3363 = vmatprep.subr.bf16.mxu0 %v322
  %3364 = vmatpush1.bf16.msra.mxu0 %v321
  %3365 = vmatprep.subr.bf16.mxu0 0
  %3366 = vmatpush1.bf16.msra.mxu0 0
  %3367 = vmatprep.subr.bf16.mxu0 0
  %3368 = vmatpush1.bf16.msra.mxu0 0
  %3369 = vmatprep.subr.bf16.mxu0 0
  %3370 = vmatpush1.bf16.msra.mxu0 0
  %3371 = vmatprep.subr.bf16.mxu0 0
  %3372 = vmatpush1.bf16.msra.mxu0 0
  %3373 = vmatprep.subr.bf16.mxu0 0
  %3374 = vmatpush1.bf16.msra.mxu0 0
  %3375 = vmatprep.subr.bf16.mxu0 0
  %3376 = vmatpush1.bf16.msra.mxu0 0
  %3377 = vmatprep.subr.bf16.mxu0 0
  %3378 = vmatpush1.bf16.msra.mxu0 0
  %3379 = vmatprep.subr.bf16.mxu0 0
  %3380 = vmatpush1.bf16.msra.mxu0 0
  %3381 = vmatprep.mubr.bf16.mxu0 0
  %3382 = vmatmul.mubr.bf16.gmra.mrb[0].mxu0 %v3305
  %v3383 = vpop.f32.mrb[0].mxu0
  %v3384 = vadd.f32 0.0, %v3383
  %v3385 = vpop.f32.mrb[0].mxu0
  %v3386 = vadd.f32 0.0, %v3385
  %v3387 = vpop.f32.mrb[0].mxu0
  %v3388 = vadd.f32 0.0, %v3387
  %v3389 = vpop.f32.mrb[0].mxu0
  %v3390 = vadd.f32 0.0, %v3389
  %3391 = vdwg.mxu0
  %v3392 = vadd.f32 %v3295, %v3341
  %v3393 = vadd.f32 %v3296, %v3343
  %v3394 = vadd.f32 %v3297, %v3384
  %v3395 = vadd.f32 %v3298, %v3386
  %v3396 = vadd.f32 %v3299, %v3345
  %v3397 = vadd.f32 %v3300, %v3347
  %v3398 = vadd.f32 %v3301, %v3388
  %v3399 = vadd.f32 %v3302, %v3390
  %v3400 = vld [vmem:[%s56] sm:$0xff]
  %v3401 = vld [vmem:[%s56 + $0x8] sm:$0xff]
  %v3402 = vld [vmem:[%s56 + $0x10] sm:$0xff]
  %v3403 = vld [vmem:[%s56 + $0x18] sm:$0xff]
  %v3404 = vunpack.c.l.bf16 %v3400
  %v3405 = vunpack.c.h.bf16 %v3400
  %v3406 = vunpack.c.l.bf16 %v3401
  %v3407 = vunpack.c.h.bf16 %v3401
  %v3408 = vunpack.c.l.bf16 %v3402
  %v3409 = vunpack.c.h.bf16 %v3402
  %v3410 = vunpack.c.l.bf16 %v3403
  %v3411 = vunpack.c.h.bf16 %v3403
  %v3412 = vadd.f32 %v3404, %v466
  %v3413 = vadd.f32 %v3405, %v470
  %v3414 = vadd.f32 %v3406, %v474
  %v3415 = vadd.f32 %v3407, %v478
  %v3416 = vadd.f32 %v3408, %v466
  %v3417 = vadd.f32 %v3409, %v470
  %v3418 = vadd.f32 %v3410, %v474
  %v3419 = vadd.f32 %v3411, %v478
  %v3420 = vld [vmem:[#allocation4] sm:$0xff]
  %v3421 = vld [vmem:[#allocation4 + $0x8] sm:$0xff]
  %v3422 = vpack.c.bf16 %v3421, %v3420
  %3423 = vmatprep.subr.bf16.mxu0 %v591
  %3424 = vmatpush1.bf16.msra.mxu0 %v590
  %3425 = vmatprep.subr.bf16.mxu0 %v595
  %3426 = vmatpush1.bf16.msra.mxu0 %v594
  %3427 = vmatprep.subr.bf16.mxu0 %v599
  %3428 = vmatpush1.bf16.msra.mxu0 %v598
  %3429 = vmatprep.subr.bf16.mxu0 %v603
  %3430 = vmatpush1.bf16.msra.mxu0 %v602
  %3431 = vmatprep.subr.bf16.mxu0 %v607
  %3432 = vmatpush1.bf16.msra.mxu0 %v606
  %3433 = vmatprep.subr.bf16.mxu0 %v611
  %3434 = vmatpush1.bf16.msra.mxu0 %v610
  %3435 = vmatprep.subr.bf16.mxu0 %v615
  %3436 = vmatpush1.bf16.msra.mxu0 %v614
  %3437 = vmatprep.subr.bf16.mxu0 %v619
  %3438 = vmatpush1.bf16.msra.mxu0 %v618
  %3439 = vmatprep.subr.bf16.mxu0 0
  %3440 = vmatpush1.bf16.msra.mxu0 0
  %3441 = vmatprep.subr.bf16.mxu0 0
  %3442 = vmatpush1.bf16.msra.mxu0 0
  %3443 = vmatprep.subr.bf16.mxu0 0
  %3444 = vmatpush1.bf16.msra.mxu0 0
  %3445 = vmatprep.subr.bf16.mxu0 0
  %3446 = vmatpush1.bf16.msra.mxu0 0
  %3447 = vmatprep.subr.bf16.mxu0 0
  %3448 = vmatpush1.bf16.msra.mxu0 0
  %3449 = vmatprep.subr.bf16.mxu0 0
  %3450 = vmatpush1.bf16.msra.mxu0 0
  %3451 = vmatprep.subr.bf16.mxu0 0
  %3452 = vmatpush1.bf16.msra.mxu0 0
  %3453 = vmatprep.subr.bf16.mxu0 0
  %3454 = vmatpush1.bf16.msra.mxu0 0
  %3455 = vmatprep.mubr.bf16.mxu0 0
  %3456 = vmatmul.mubr.bf16.gmra.mrb[0].mxu0 %v3422
  %v3457 = vpop.f32.mrb[0].mxu0
  %v3458 = vadd.f32 0.0, %v3457
  %v3459 = vpop.f32.mrb[0].mxu0
  %v3460 = vadd.f32 0.0, %v3459
  %v3461 = vpop.f32.mrb[0].mxu0
  %v3462 = vadd.f32 0.0, %v3461
  %v3463 = vpop.f32.mrb[0].mxu0
  %v3464 = vadd.f32 0.0, %v3463
  %3465 = vdwg.mxu0
  %3466 = vmatprep.subr.bf16.mxu0 %v593
  %3467 = vmatpush1.bf16.msra.mxu0 %v592
  %3468 = vmatprep.subr.bf16.mxu0 %v597
  %3469 = vmatpush1.bf16.msra.mxu0 %v596
  %3470 = vmatprep.subr.bf16.mxu0 %v601
  %3471 = vmatpush1.bf16.msra.mxu0 %v600
  %3472 = vmatprep.subr.bf16.mxu0 %v605
  %3473 = vmatpush1.bf16.msra.mxu0 %v604
  %3474 = vmatprep.subr.bf16.mxu0 %v609
  %3475 = vmatpush1.bf16.msra.mxu0 %v608
  %3476 = vmatprep.subr.bf16.mxu0 %v613
  %3477 = vmatpush1.bf16.msra.mxu0 %v612
  %3478 = vmatprep.subr.bf16.mxu0 %v617
  %3479 = vmatpush1.bf16.msra.mxu0 %v616
  %3480 = vmatprep.subr.bf16.mxu0 %v621
  %3481 = vmatpush1.bf16.msra.mxu0 %v620
  %3482 = vmatprep.subr.bf16.mxu0 0
  %3483 = vmatpush1.bf16.msra.mxu0 0
  %3484 = vmatprep.subr.bf16.mxu0 0
  %3485 = vmatpush1.bf16.msra.mxu0 0
  %3486 = vmatprep.subr.bf16.mxu0 0
  %3487 = vmatpush1.bf16.msra.mxu0 0
  %3488 = vmatprep.subr.bf16.mxu0 0
  %3489 = vmatpush1.bf16.msra.mxu0 0
  %3490 = vmatprep.subr.bf16.mxu0 0
  %3491 = vmatpush1.bf16.msra.mxu0 0
  %3492 = vmatprep.subr.bf16.mxu0 0
  %3493 = vmatpush1.bf16.msra.mxu0 0
  %3494 = vmatprep.subr.bf16.mxu0 0
  %3495 = vmatpush1.bf16.msra.mxu0 0
  %3496 = vmatprep.subr.bf16.mxu0 0
  %3497 = vmatpush1.bf16.msra.mxu0 0
  %3498 = vmatprep.mubr.bf16.mxu0 0
  %3499 = vmatmul.mubr.bf16.gmra.mrb[0].mxu0 %v3422
  %v3500 = vpop.f32.mrb[0].mxu0
  %v3501 = vadd.f32 0.0, %v3500
  %v3502 = vpop.f32.mrb[0].mxu0
  %v3503 = vadd.f32 0.0, %v3502
  %v3504 = vpop.f32.mrb[0].mxu0
  %v3505 = vadd.f32 0.0, %v3504
  %v3506 = vpop.f32.mrb[0].mxu0
  %v3507 = vadd.f32 0.0, %v3506
  %3508 = vdwg.mxu0
  %v3509 = vadd.f32 %v3412, %v3458
  %v3510 = vadd.f32 %v3413, %v3460
  %v3511 = vadd.f32 %v3414, %v3501
  %v3512 = vadd.f32 %v3415, %v3503
  %v3513 = vadd.f32 %v3416, %v3462
  %v3514 = vadd.f32 %v3417, %v3464
  %v3515 = vadd.f32 %v3418, %v3505
  %v3516 = vadd.f32 %v3419, %v3507
  %v3517 = vld [vmem:[#allocation3] sm:$0xff]
  %v3518 = vld [vmem:[#allocation3 + $0x8] sm:$0xff]
  %v3519 = vxor.u32 %v3392, 2147483648
  %v3520 = vxor.u32 %v3393, 2147483648
  %v3521 = vxor.u32 %v3394, 2147483648
  %v3522 = vxor.u32 %v3396, 2147483648
  %v3523 = vxor.u32 %v3397, 2147483648
  %v3524 = vxor.u32 %v3398, 2147483648
  %v3525 = vmul.f32 %v3519, 1.442695
  %v3526 = vpow.pop %v3525
  %v3527 = vmul.f32 %v3520, 1.442695
  %v3528 = vpow.pop %v3527
  %v3529 = vmul.f32 %v3521, 1.442695
  %v3530 = vpow.pop %v3529
  %v3531 = vmul.f32 %v3522, 1.442695
  %v3532 = vpow.pop %v3531
  %v3533 = vmul.f32 %v3523, 1.442695
  %v3534 = vpow.pop %v3533
  %v3535 = vmul.f32 %v3524, 1.442695
  %v3536 = vpow.pop %v3535
  %v3537 = vadd.f32 %v3526, 1.0
  %v3538 = vadd.f32 %v3528, 1.0
  %v3539 = vadd.f32 %v3530, 1.0
  %v3540 = vadd.f32 %v3532, 1.0
  %v3541 = vadd.f32 %v3534, 1.0
  %v3542 = vadd.f32 %v3536, 1.0
  %v3543 = vrcp.pop %v3537
  %v3544 = vmul.f32 1.0, %v3543
  %v3545 = vrcp.pop %v3538
  %v3546 = vmul.f32 1.0, %v3545
  %v3547 = vrcp.pop %v3539
  %v3548 = vmul.f32 1.0, %v3547
  %v3549 = vrcp.pop %v3540
  %v3550 = vmul.f32 1.0, %v3549
  %v3551 = vrcp.pop %v3541
  %v3552 = vmul.f32 1.0, %v3551
  %v3553 = vrcp.pop %v3542
  %v3554 = vmul.f32 1.0, %v3553
  %v3555 = vtanh.pop %v3395
  %v3556 = vtanh.pop %v3399
  %v3557 = vmul.f32 %v3546, %v3517
  %v3558 = vmul.f32 %v3552, %v3518
  %v3559 = vmul.f32 %v3544, %v3555
  %v3560 = vmul.f32 %v3550, %v3556
  %v3561 = vadd.f32 %v3557, %v3559
  %v3562 = vadd.f32 %v3558, %v3560
  %v3563 = vtanh.pop %v3561
  %v3564 = vtanh.pop %v3562
  %v3565 = vmul.f32 %v3548, %v3563
  %v3566 = vmul.f32 %v3554, %v3564
  %v3567 = vld [vmem:[#allocation5] sm:$0xff]
  %v3568 = vld [vmem:[#allocation5 + $0x8] sm:$0xff]
  %v3569 = vxor.u32 %v3509, 2147483648
  %v3570 = vxor.u32 %v3510, 2147483648
  %v3571 = vxor.u32 %v3511, 2147483648
  %v3572 = vxor.u32 %v3513, 2147483648
  %v3573 = vxor.u32 %v3514, 2147483648
  %v3574 = vxor.u32 %v3515, 2147483648
  %v3575 = vmul.f32 %v3569, 1.442695
  %v3576 = vpow.pop %v3575
  %v3577 = vmul.f32 %v3570, 1.442695
  %v3578 = vpow.pop %v3577
  %v3579 = vmul.f32 %v3571, 1.442695
  %v3580 = vpow.pop %v3579
  %v3581 = vmul.f32 %v3572, 1.442695
  %v3582 = vpow.pop %v3581
  %v3583 = vmul.f32 %v3573, 1.442695
  %v3584 = vpow.pop %v3583
  %v3585 = vmul.f32 %v3574, 1.442695
  %v3586 = vpow.pop %v3585
  %v3587 = vadd.f32 %v3576, 1.0
  %v3588 = vadd.f32 %v3578, 1.0
  %v3589 = vadd.f32 %v3580, 1.0
  %v3590 = vadd.f32 %v3582, 1.0
  %v3591 = vadd.f32 %v3584, 1.0
  %v3592 = vadd.f32 %v3586, 1.0
  %v3593 = vrcp.pop %v3587
  %v3594 = vmul.f32 1.0, %v3593
  %v3595 = vrcp.pop %v3588
  %v3596 = vmul.f32 1.0, %v3595
  %v3597 = vrcp.pop %v3589
  %v3598 = vmul.f32 1.0, %v3597
  %v3599 = vrcp.pop %v3590
  %v3600 = vmul.f32 1.0, %v3599
  %v3601 = vrcp.pop %v3591
  %v3602 = vmul.f32 1.0, %v3601
  %v3603 = vrcp.pop %v3592
  %v3604 = vmul.f32 1.0, %v3603
  %v3605 = vtanh.pop %v3512
  %v3606 = vtanh.pop %v3516
  %v3607 = vmul.f32 %v3596, %v3567
  %v3608 = vmul.f32 %v3602, %v3568
  %v3609 = vmul.f32 %v3594, %v3605
  %v3610 = vmul.f32 %v3600, %v3606
  %v3611 = vadd.f32 %v3607, %v3609
  %v3612 = vadd.f32 %v3608, %v3610
  %v3613 = vtanh.pop %v3611
  %v3614 = vtanh.pop %v3612
  %v3615 = vmul.f32 %v3598, %v3613
  %v3616 = vmul.f32 %v3604, %v3614
  %s3617 = sadd.s32 %s148, 7
  %v3618 = vstv %s3617
  %vm3619 = vcmp.lt.s32.totalorder %v3618, %v80
  %vm3620 = vcmp.lt.s32.totalorder %v3618, %v81
  %v3621 = vstv %s150
  %vm3622 = vcmp.lt.s32.totalorder %v3621, %v80
  %vm3623 = vcmp.lt.s32.totalorder %v3621, %v81
  %v3624 = vsel %vm3619, 1, 0
  %v3625 = vsel %vm3620, 1, 0
  %3626 = vset.pattern.permute.xlu0 0
  %3627 = vperm.xlu0 %3626, %v3624
  %v3628 = vpop.permute.xlu0 %3627
  %3629 = vset.pattern.permute.xlu0 0
  %3630 = vperm.xlu0 %3629, %v3625
  %v3631 = vpop.permute.xlu0 %3630
  %vm3632 = vcmp.eq.s32.totalorder %v3628, 1
  %vm3633 = vcmp.eq.s32.totalorder %v3631, 1
  %v3634 = vsel %vm3632, %v3565, %v3303
  %v3635 = vsel %vm3633, %v3566, %v3304
  %3636 = vst [vmem:[#allocation2] sm:$0xff] %v3634
  %3637 = vst [vmem:[#allocation2 + $0x8] sm:$0xff] %v3635
  %v3638 = vld [vmem:[#allocation3] sm:$0xff]
  %v3639 = vld [vmem:[#allocation3 + $0x8] sm:$0xff]
  %v3640 = vsel %vm3632, %v3561, %v3638
  %v3641 = vsel %vm3633, %v3562, %v3639
  %3642 = vst [vmem:[#allocation3] sm:$0xff] %v3640
  %3643 = vst [vmem:[#allocation3 + $0x8] sm:$0xff] %v3641
  %v3644 = vld [vmem:[#allocation4] sm:$0xff]
  %v3645 = vld [vmem:[#allocation4 + $0x8] sm:$0xff]
  %v3646 = vsel %vm3622, 1, 0
  %v3647 = vsel %vm3623, 1, 0
  %3648 = vset.pattern.permute.xlu0 0
  %3649 = vperm.xlu0 %3648, %v3646
  %v3650 = vpop.permute.xlu0 %3649
  %3651 = vset.pattern.permute.xlu0 0
  %3652 = vperm.xlu0 %3651, %v3647
  %v3653 = vpop.permute.xlu0 %3652
  %vm3654 = vcmp.eq.s32.totalorder %v3650, 1
  %vm3655 = vcmp.eq.s32.totalorder %v3653, 1
  %v3656 = vsel %vm3654, %v3615, %v3644
  %v3657 = vsel %vm3655, %v3616, %v3645
  %3658 = vst [vmem:[#allocation4] sm:$0xff] %v3656
  %3659 = vst [vmem:[#allocation4 + $0x8] sm:$0xff] %v3657
  %v3660 = vld [vmem:[#allocation5] sm:$0xff]
  %v3661 = vld [vmem:[#allocation5 + $0x8] sm:$0xff]
  %v3662 = vsel %vm3654, %v3611, %v3660
  %v3663 = vsel %vm3655, %v3612, %v3661
  %3664 = vst [vmem:[#allocation5] sm:$0xff] %v3662
  %3665 = vst [vmem:[#allocation5 + $0x8] sm:$0xff] %v3663
  %v3666 = vsel %vm3632, %v3565, 0.0
  %v3667 = vsel %vm3633, %v3566, 0.0
  %v3668 = vpack.c.bf16 %v3667, %v3666
  %s3669 = scalar_lea.vmem %s7, 56
  %3670 = vst [vmem:[%s3669] sm:$0xff] %v3668
  %v3671 = vsel %vm3654, %v3615, 0.0
  %v3672 = vsel %vm3655, %v3616, 0.0
  %v3673 = vpack.c.bf16 %v3672, %v3671
  %3674 = vst [vmem:[%s64] sm:$0xff] %v3673
  %s3675 = ssub.s32 0, 0
  %s3676 = smul.u32 8, %s3675
  %p3677 = scmp.lt.s32.totalorder %s3676, 7
  %s3678 = scalar_select %p3677, %s3676, 7
  %s3679 = smul.addr %s3678, 8
  %s3680 = scalar_lea.vmem %s8, %s3679
  // Predicated region
  $region34: #{rnn_encoder_forward.2} parent=0 // pred_check
    _
  $region35: #{rnn_encoder_forward.2} parent=0 // pred_check_branch
    %3682 = sbr.rel (0) target = $region37
  $region36: #{rnn_encoder_forward.2} parent=0 // pred_region
    _
  $region37: #{rnn_encoder_forward.2} parent=0 // pred_fallthru
    _
  // Predicated region
  $region38: #{rnn_encoder_forward.2} parent=0 // pred_check
    _
  $region39: #{rnn_encoder_forward.2} parent=0 // pred_check_branch
    %3684 = sbr.rel (0) target = $region41
  $region40: #{rnn_encoder_forward.2} parent=0 // pred_region
    %s3685 = ssub.s32 0, 0
    %s3686 = smul.u32 8, %s3685
  $region41: #{rnn_encoder_forward.2} parent=0 // pred_fallthru
    _
  // Predicated region
  $region42: #{rnn_encoder_forward.2} parent=0 // pred_check
    _
  $region43: #{rnn_encoder_forward.2} parent=0 // pred_check_branch
    %3688 = sbr.rel (0) target = $region45
  $region44: #{rnn_encoder_forward.2} parent=0 // pred_region
    _
  $region45: #{rnn_encoder_forward.2} parent=0 // pred_fallthru
    _
  // Predicated region
  $region46: #{rnn_encoder_forward.2} parent=0 // pred_check
    _
  $region47: #{rnn_encoder_forward.2} parent=0 // pred_check_branch
    %3690 = sbr.rel (0) target = $region49
  $region48: #{rnn_encoder_forward.2} parent=0 // pred_region
    %s3691 = ssub.s32 0, 0
    %s3692 = smul.u32 8, %s3691
    %p3693 = scmp.lt.s32.totalorder %s3692, 7
    %s3694 = scalar_select %p3693, %s3692, 7
    %s3695 = smul.addr %s3694, 8
    %s3696 = scalar_lea.vmem %s8, %s3695
  $region49: #{rnn_encoder_forward.2} parent=0 // pred_fallthru
    _

// kernel: rnn_encoder_forward.3
$region0: #{rnn_encoder_forward.3}
  #allocation0 [shape = 'u32[]', space=smem, size = 0x4, offset = 0x4, fixed_abs, tag = 'smem constant byte address 0x4 - core index']
  #allocation1 [shape = 'u32[144,128]{1,0:T(1,128)}', space=vmem, size = 0x12000, scoped, tag = 'internal scratch']
  #allocation2 [shape = 'f32[16,128]{1,0:T(8,128)}', space=vmem, size = 0x2000, scoped, tag = 'scratch operand']
  #allocation3 [shape = 'f32[16,128]{1,0:T(8,128)}', space=vmem, size = 0x2000, scoped, tag = 'scratch operand']
  #allocation4 [shape = 'f32[16,128]{1,0:T(8,128)}', space=vmem, size = 0x2000, scoped, tag = 'scratch operand']
  #allocation5 [shape = 'f32[16,128]{1,0:T(8,128)}', space=vmem, size = 0x2000, scoped, tag = 'scratch operand']
  %s0 = inlined_call_operand.vmem [shape: s32[16,1], index: 0, kind: input, shape index: {}]
  %s1 = inlined_call_operand.vmem [shape: bf16[8,16,512], index: 1, kind: input, shape index: {}]
  %s2 = inlined_call_operand.vmem [shape: bf16[8,16,512], index: 2, kind: input, shape index: {}]
  %s3 = inlined_call_operand.vmem [shape: bf16[128,512], index: 3, kind: input, shape index: {}]
  %s4 = inlined_call_operand.vmem [shape: bf16[128,512], index: 4, kind: input, shape index: {}]
  %s5 = inlined_call_operand.vmem [shape: f32[1,512], index: 5, kind: input, shape index: {}]
  %s6 = inlined_call_operand.vmem [shape: f32[1,512], index: 6, kind: input, shape index: {}]
  %s7 = inlined_call_operand.vmem [shape: bf16[8,16,128], index: 7, kind: output, shape index: {0}]
  %s8 = inlined_call_operand.vmem [shape: bf16[8,16,128], index: 8, kind: output, shape index: {1}]
  %9 = xla_tuple %s7, %s8
  %s10 = sld [smem:[#allocation0]]
  $region50: #{rnn_encoder_forward.3} parent=0
    _
  %s12 = ssub.s32 1, %s10
  %s13 = scalar_select 0, %s12, %s10
  // Predicated region
  $region2: #{rnn_encoder_forward.3} parent=0 // pred_check
    _
  $region3: #{rnn_encoder_forward.3} parent=0 // pred_check_branch
    %15 = sbr.rel (0) target = $region5
  $region4: #{rnn_encoder_forward.3} parent=0 // pred_region
    _
  $region5: #{rnn_encoder_forward.3} parent=0 // pred_fallthru
    _
  // Predicated region
  $region6: #{rnn_encoder_forward.3} parent=0 // pred_check
    _
  $region7: #{rnn_encoder_forward.3} parent=0 // pred_check_branch
    %17 = sbr.rel (0) target = $region9
  $region8: #{rnn_encoder_forward.3} parent=0 // pred_region
    _
  $region9: #{rnn_encoder_forward.3} parent=0 // pred_fallthru
    _
  // Predicated region
  $region10: #{rnn_encoder_forward.3} parent=0 // pred_check
    _
  $region11: #{rnn_encoder_forward.3} parent=0 // pred_check_branch
    %19 = sbr.rel (0) target = $region13
  $region12: #{rnn_encoder_forward.3} parent=0 // pred_region
    %s20 = ssub.s32 0, 0
    %s21 = smul.u32 8, %s20
    %p22 = scmp.lt.s32.totalorder %s21, 7
    %s23 = scalar_select %p22, %s21, 7
    %s24 = smul.addr %s23, 8
    %s25 = smul.addr %s24, 4
    %s26 = scalar_lea.vmem %s2, %s25
    %s27 = ssub.s32 0, 0
    %s28 = smul.u32 8, %s27
  $region13: #{rnn_encoder_forward.3} parent=0 // pred_fallthru
    _
  // Predicated region
  $region14: #{rnn_encoder_forward.3} parent=0 // pred_check
    _
  $region15: #{rnn_encoder_forward.3} parent=0 // pred_check_branch
    %30 = sbr.rel (0) target = $region17
  $region16: #{rnn_encoder_forward.3} parent=0 // pred_region
    _
  $region17: #{rnn_encoder_forward.3} parent=0 // pred_fallthru
    _
  // Predicated region
  $region18: #{rnn_encoder_forward.3} parent=0 // pred_check
    _
  $region19: #{rnn_encoder_forward.3} parent=0 // pred_check_branch
    %32 = sbr.rel (0) target = $region21
  $region20: #{rnn_encoder_forward.3} parent=0 // pred_region
    _
  $region21: #{rnn_encoder_forward.3} parent=0 // pred_fallthru
    _
  // Predicated region
  $region22: #{rnn_encoder_forward.3} parent=0 // pred_check
    _
  $region23: #{rnn_encoder_forward.3} parent=0 // pred_check_branch
    %34 = sbr.rel (0) target = $region25
  $region24: #{rnn_encoder_forward.3} parent=0 // pred_region
    _
  $region25: #{rnn_encoder_forward.3} parent=0 // pred_fallthru
    _
  // Predicated region
  $region26: #{rnn_encoder_forward.3} parent=0 // pred_check
    _
  $region27: #{rnn_encoder_forward.3} parent=0 // pred_check_branch
    %36 = sbr.rel (0) target = $region29
  $region28: #{rnn_encoder_forward.3} parent=0 // pred_region
    _
  $region29: #{rnn_encoder_forward.3} parent=0 // pred_fallthru
    _
  %s37 = ssub.s32 0, 0
  %s38 = smul.u32 8, %s37
  %p39 = scmp.lt.s32.totalorder %s38, 7
  %s40 = scalar_select %p39, %s38, 7
  %s41 = smul.addr %s40, 8
  %s42 = smul.addr %s41, 4
  %s43 = scalar_lea.vmem %s2, %s42
  %s44 = ssub.s32 0, 0
  %s45 = smul.u32 8, %s44
  %p46 = scmp.lt.s32.totalorder %s45, 7
  %s47 = scalar_select %p46, %s45, 7
  %s48 = smul.addr %s47, 2
  %s49 = smul.addr %s48, 4
  %s50 = scalar_lea.vmem %s8, %s49
  %s51 = ssub.s32 0, 0
  %s52 = smul.u32 8, %s51
  %p53 = scmp.lt.s32.totalorder %s52, 7
  %s54 = scalar_select %p53, %s52, 7
  %s55 = smul.addr %s54, 8
  %s56 = smul.addr %s55, 4
  %s57 = scalar_lea.vmem %s2, %s56
  %s58 = ssub.s32 0, 0
  %s59 = smul.u32 8, %s58
  %s60 = ssub.s32 0, 0
  %s61 = smul.u32 8, %s60
  %p62 = scmp.lt.s32.totalorder %s61, 7
  %s63 = scalar_select %p62, %s61, 7
  %s64 = smul.addr %s63, 2
  %s65 = smul.addr %s64, 4
  %s66 = scalar_lea.vmem %s8, %s65
  %s67 = ssub.s32 0, 0
  %s68 = smul.u32 8, %s67
  %p70 = scmp.eq.s32.totalorder 0, 0
  // Predicated region
  $region30: #{rnn_encoder_forward.3} parent=0 // pred_check
    %p71 = pneg %p70
  $region31: #{rnn_encoder_forward.3} parent=0 // pred_check_branch
    %73 = sbr.rel (%p71) target = $region33
  $region32: #{rnn_encoder_forward.3} parent=0 // pred_region
    %74 = vst [vmem:[#allocation2] sm:$0xff] 0.0
    %75 = vst [vmem:[#allocation2 + $0x8] sm:$0xff] 0.0
    %76 = vst [vmem:[#allocation3] sm:$0xff] 0.0
    %77 = vst [vmem:[#allocation3 + $0x8] sm:$0xff] 0.0
    %78 = vst [vmem:[#allocation4] sm:$0xff] 0.0
    %79 = vst [vmem:[#allocation4 + $0x8] sm:$0xff] 0.0
    %80 = vst [vmem:[#allocation5] sm:$0xff] 0.0
    %81 = vst [vmem:[#allocation5 + $0x8] sm:$0xff] 0.0
  $region33: #{rnn_encoder_forward.3} parent=0 // pred_fallthru
    _
  %v82 = vld [vmem:[%s0] sm:$0xff]
  %v83 = vld [vmem:[%s0 + $0x8] sm:$0xff]
  %v84 = vld [vmem:[%s3] sm:$0xff]
  %v85 = vld [vmem:[%s3 + $0x8] sm:$0xff]
  %v86 = vld [vmem:[%s3 + $0x10] sm:$0xff]
  %v87 = vld [vmem:[%s3 + $0x18] sm:$0xff]
  %v88 = vld [vmem:[%s3 + $0x20] sm:$0xff]
  %v89 = vld [vmem:[%s3 + $0x28] sm:$0xff]
  %v90 = vld [vmem:[%s3 + $0x30] sm:$0xff]
  %v91 = vld [vmem:[%s3 + $0x38] sm:$0xff]
  %v92 = vld [vmem:[%s3 + $0x40] sm:$0xff]
  %v93 = vld [vmem:[%s3 + $0x48] sm:$0xff]
  %v94 = vld [vmem:[%s3 + $0x50] sm:$0xff]
  %v95 = vld [vmem:[%s3 + $0x58] sm:$0xff]
  %v96 = vld [vmem:[%s3 + $0x60] sm:$0xff]
  %v97 = vld [vmem:[%s3 + $0x68] sm:$0xff]
  %v98 = vld [vmem:[%s3 + $0x70] sm:$0xff]
  %v99 = vld [vmem:[%s3 + $0x78] sm:$0xff]
  %v100 = vld [vmem:[%s3 + $0x80] sm:$0xff]
  %v101 = vld [vmem:[%s3 + $0x88] sm:$0xff]
  %v102 = vld [vmem:[%s3 + $0x90] sm:$0xff]
  %v103 = vld [vmem:[%s3 + $0x98] sm:$0xff]
  %v104 = vld [vmem:[%s3 + $0xa0] sm:$0xff]
  %v105 = vld [vmem:[%s3 + $0xa8] sm:$0xff]
  %v106 = vld [vmem:[%s3 + $0xb0] sm:$0xff]
  %v107 = vld [vmem:[%s3 + $0xb8] sm:$0xff]
  %v108 = vld [vmem:[%s3 + $0xc0] sm:$0xff]
  %v109 = vld [vmem:[%s3 + $0xc8] sm:$0xff]
  %v110 = vld [vmem:[%s3 + $0xd0] sm:$0xff]
  %v111 = vld [vmem:[%s3 + $0xd8] sm:$0xff]
  %v112 = vld [vmem:[%s3 + $0xe0] sm:$0xff]
  %v113 = vld [vmem:[%s3 + $0xe8] sm:$0xff]
  %v114 = vld [vmem:[%s3 + $0xf0] sm:$0xff]
  %v115 = vld [vmem:[%s3 + $0xf8] sm:$0xff]
  %v116 = vld [vmem:[%s4] sm:$0xff]
  %v117 = vld [vmem:[%s4 + $0x8] sm:$0xff]
  %v118 = vld [vmem:[%s4 + $0x10] sm:$0xff]
  %v119 = vld [vmem:[%s4 + $0x18] sm:$0xff]
  %v120 = vld [vmem:[%s4 + $0x20] sm:$0xff]
  %v121 = vld [vmem:[%s4 + $0x28] sm:$0xff]
  %v122 = vld [vmem:[%s4 + $0x30] sm:$0xff]
  %v123 = vld [vmem:[%s4 + $0x38] sm:$0xff]
  %v124 = vld [vmem:[%s4 + $0x40] sm:$0xff]
  %v125 = vld [vmem:[%s4 + $0x48] sm:$0xff]
  %v126 = vld [vmem:[%s4 + $0x50] sm:$0xff]
  %v127 = vld [vmem:[%s4 + $0x58] sm:$0xff]
  %v128 = vld [vmem:[%s4 + $0x60] sm:$0xff]
  %v129 = vld [vmem:[%s4 + $0x68] sm:$0xff]
  %v130 = vld [vmem:[%s4 + $0x70] sm:$0xff]
  %v131 = vld [vmem:[%s4 + $0x78] sm:$0xff]
  %v132 = vld [vmem:[%s4 + $0x80] sm:$0xff]
  %v133 = vld [vmem:[%s4 + $0x88] sm:$0xff]
  %v134 = vld [vmem:[%s4 + $0x90] sm:$0xff]
  %v135 = vld [vmem:[%s4 + $0x98] sm:$0xff]
  %v136 = vld [vmem:[%s4 + $0xa0] sm:$0xff]
  %v137 = vld [vmem:[%s4 + $0xa8] sm:$0xff]
  %v138 = vld [vmem:[%s4 + $0xb0] sm:$0xff]
  %v139 = vld [vmem:[%s4 + $0xb8] sm:$0xff]
  %v140 = vld [vmem:[%s4 + $0xc0] sm:$0xff]
  %v141 = vld [vmem:[%s4 + $0xc8] sm:$0xff]
  %v142 = vld [vmem:[%s4 + $0xd0] sm:$0xff]
  %v143 = vld [vmem:[%s4 + $0xd8] sm:$0xff]
  %v144 = vld [vmem:[%s4 + $0xe0] sm:$0xff]
  %v145 = vld [vmem:[%s4 + $0xe8] sm:$0xff]
  %v146 = vld [vmem:[%s4 + $0xf0] sm:$0xff]
  %v147 = vld [vmem:[%s4 + $0xf8] sm:$0xff]
  %v148 = vld [vmem:[%s5] sm:$0xf]
  %v149 = vld [vmem:[%s6] sm:$0xf]
  %s150 = smul.u32 0, 8
  %s151 = ssub.s32 0, 0
  %s152 = smul.u32 %s151, 8
  %v153 = vld [vmem:[%s1] sm:$0xff]
  %v154 = vld [vmem:[%s1 + $0x8] sm:$0xff]
  %v155 = vld [vmem:[%s1 + $0x10] sm:$0xff]
  %v156 = vld [vmem:[%s1 + $0x18] sm:$0xff]
  %v157 = vunpack.c.l.bf16 %v153
  %v158 = vunpack.c.h.bf16 %v153
  %v159 = vunpack.c.l.bf16 %v154
  %v160 = vunpack.c.h.bf16 %v154
  %v161 = vunpack.c.l.bf16 %v155
  %v162 = vunpack.c.h.bf16 %v155
  %v163 = vunpack.c.l.bf16 %v156
  %v164 = vunpack.c.h.bf16 %v156
  %v166 = vlaneseq
  %v167 = vshrl.u32 %v166, 7
  %v168 = vsub.s32 0, %v167
  %v169 = vrot.slane %v148, %v168
  %v170 = vlaneseq
  %v171 = vshrl.u32 %v170, 7
  %v172 = vsub.s32 1, %v171
  %v173 = vrot.slane %v148, %v172
  %v174 = vlaneseq
  %v175 = vshrl.u32 %v174, 7
  %v176 = vsub.s32 2, %v175
  %v177 = vrot.slane %v148, %v176
  %v178 = vlaneseq
  %v179 = vshrl.u32 %v178, 7
  %v180 = vsub.s32 3, %v179
  %v181 = vrot.slane %v148, %v180
  %v186 = vadd.f32 %v157, %v169
  %v187 = vadd.f32 %v158, %v173
  %v188 = vadd.f32 %v159, %v177
  %v189 = vadd.f32 %v160, %v181
  %v190 = vadd.f32 %v161, %v169
  %v191 = vadd.f32 %v162, %v173
  %v192 = vadd.f32 %v163, %v177
  %v193 = vadd.f32 %v164, %v181
  %v194 = vld [vmem:[#allocation2] sm:$0xff]
  %v195 = vld [vmem:[#allocation2 + $0x8] sm:$0xff]
  %v196 = vpack.c.bf16 %v195, %v194
  %v229 = vunpack.c.l.b16 %v84
  %v230 = vunpack.c.h.b16 %v84
  %v231 = vunpack.c.l.b16 %v85
  %v232 = vunpack.c.h.b16 %v85
  %v233 = vunpack.c.l.b16 %v86
  %v234 = vunpack.c.h.b16 %v86
  %v235 = vunpack.c.l.b16 %v87
  %v236 = vunpack.c.h.b16 %v87
  %v237 = vunpack.c.l.b16 %v88
  %v238 = vunpack.c.h.b16 %v88
  %v239 = vunpack.c.l.b16 %v89
  %v240 = vunpack.c.h.b16 %v89
  %v241 = vunpack.c.l.b16 %v90
  %v242 = vunpack.c.h.b16 %v90
  %v243 = vunpack.c.l.b16 %v91
  %v244 = vunpack.c.h.b16 %v91
  %v245 = vunpack.c.l.b16 %v92
  %v246 = vunpack.c.h.b16 %v92
  %v247 = vunpack.c.l.b16 %v93
  %v248 = vunpack.c.h.b16 %v93
  %v249 = vunpack.c.l.b16 %v94
  %v250 = vunpack.c.h.b16 %v94
  %v251 = vunpack.c.l.b16 %v95
  %v252 = vunpack.c.h.b16 %v95
  %v253 = vunpack.c.l.b16 %v96
  %v254 = vunpack.c.h.b16 %v96
  %v255 = vunpack.c.l.b16 %v97
  %v256 = vunpack.c.h.b16 %v97
  %v257 = vunpack.c.l.b16 %v98
  %v258 = vunpack.c.h.b16 %v98
  %v259 = vunpack.c.l.b16 %v99
  %v260 = vunpack.c.h.b16 %v99
  %v261 = vunpack.c.l.b16 %v100
  %v262 = vunpack.c.h.b16 %v100
  %v263 = vunpack.c.l.b16 %v101
  %v264 = vunpack.c.h.b16 %v101
  %v265 = vunpack.c.l.b16 %v102
  %v266 = vunpack.c.h.b16 %v102
  %v267 = vunpack.c.l.b16 %v103
  %v268 = vunpack.c.h.b16 %v103
  %v269 = vunpack.c.l.b16 %v104
  %v270 = vunpack.c.h.b16 %v104
  %v271 = vunpack.c.l.b16 %v105
  %v272 = vunpack.c.h.b16 %v105
  %v273 = vunpack.c.l.b16 %v106
  %v274 = vunpack.c.h.b16 %v106
  %v275 = vunpack.c.l.b16 %v107
  %v276 = vunpack.c.h.b16 %v107
  %v277 = vunpack.c.l.b16 %v108
  %v278 = vunpack.c.h.b16 %v108
  %v279 = vunpack.c.l.b16 %v109
  %v280 = vunpack.c.h.b16 %v109
  %v281 = vunpack.c.l.b16 %v110
  %v282 = vunpack.c.h.b16 %v110
  %v283 = vunpack.c.l.b16 %v111
  %v284 = vunpack.c.h.b16 %v111
  %v285 = vunpack.c.l.b16 %v112
  %v286 = vunpack.c.h.b16 %v112
  %v287 = vunpack.c.l.b16 %v113
  %v288 = vunpack.c.h.b16 %v113
  %v289 = vunpack.c.l.b16 %v114
  %v290 = vunpack.c.h.b16 %v114
  %v291 = vunpack.c.l.b16 %v115
  %v292 = vunpack.c.h.b16 %v115
  %v293 = vpack.c.b16 %v233, %v229
  %v294 = vpack.c.b16 %v234, %v230
  %v295 = vpack.c.b16 %v235, %v231
  %v296 = vpack.c.b16 %v236, %v232
  %v297 = vpack.c.b16 %v241, %v237
  %v298 = vpack.c.b16 %v242, %v238
  %v299 = vpack.c.b16 %v243, %v239
  %v300 = vpack.c.b16 %v244, %v240
  %v301 = vpack.c.b16 %v249, %v245
  %v302 = vpack.c.b16 %v250, %v246
  %v303 = vpack.c.b16 %v251, %v247
  %v304 = vpack.c.b16 %v252, %v248
  %v305 = vpack.c.b16 %v257, %v253
  %v306 = vpack.c.b16 %v258, %v254
  %v307 = vpack.c.b16 %v259, %v255
  %v308 = vpack.c.b16 %v260, %v256
  %v309 = vpack.c.b16 %v265, %v261
  %v310 = vpack.c.b16 %v266, %v262
  %v311 = vpack.c.b16 %v267, %v263
  %v312 = vpack.c.b16 %v268, %v264
  %v313 = vpack.c.b16 %v273, %v269
  %v314 = vpack.c.b16 %v274, %v270
  %v315 = vpack.c.b16 %v275, %v271
  %v316 = vpack.c.b16 %v276, %v272
  %v317 = vpack.c.b16 %v281, %v277
  %v318 = vpack.c.b16 %v282, %v278
  %v319 = vpack.c.b16 %v283, %v279
  %v320 = vpack.c.b16 %v284, %v280
  %v321 = vpack.c.b16 %v289, %v285
  %v322 = vpack.c.b16 %v290, %v286
  %v323 = vpack.c.b16 %v291, %v287
  %v324 = vpack.c.b16 %v292, %v288
  %357 = vmatprep.subr.bf16.mxu0 %v294
  %358 = vmatpush1.bf16.msra.mxu0 %v293
  %359 = vmatprep.subr.bf16.mxu0 %v298
  %360 = vmatpush1.bf16.msra.mxu0 %v297
  %361 = vmatprep.subr.bf16.mxu0 %v302
  %362 = vmatpush1.bf16.msra.mxu0 %v301
  %363 = vmatprep.subr.bf16.mxu0 %v306
  %364 = vmatpush1.bf16.msra.mxu0 %v305
  %365 = vmatprep.subr.bf16.mxu0 %v310
  %366 = vmatpush1.bf16.msra.mxu0 %v309
  %367 = vmatprep.subr.bf16.mxu0 %v314
  %368 = vmatpush1.bf16.msra.mxu0 %v313
  %369 = vmatprep.subr.bf16.mxu0 %v318
  %370 = vmatpush1.bf16.msra.mxu0 %v317
  %371 = vmatprep.subr.bf16.mxu0 %v322
  %372 = vmatpush1.bf16.msra.mxu0 %v321
  %373 = vmatprep.subr.bf16.mxu0 0
  %374 = vmatpush1.bf16.msra.mxu0 0
  %375 = vmatprep.subr.bf16.mxu0 0
  %376 = vmatpush1.bf16.msra.mxu0 0
  %377 = vmatprep.subr.bf16.mxu0 0
  %378 = vmatpush1.bf16.msra.mxu0 0
  %379 = vmatprep.subr.bf16.mxu0 0
  %380 = vmatpush1.bf16.msra.mxu0 0
  %381 = vmatprep.subr.bf16.mxu0 0
  %382 = vmatpush1.bf16.msra.mxu0 0
  %383 = vmatprep.subr.bf16.mxu0 0
  %384 = vmatpush1.bf16.msra.mxu0 0
  %385 = vmatprep.subr.bf16.mxu0 0
  %386 = vmatpush1.bf16.msra.mxu0 0
  %387 = vmatprep.subr.bf16.mxu0 0
  %388 = vmatpush1.bf16.msra.mxu0 0
  %389 = vmatprep.mubr.bf16.mxu0 0
  %390 = vmatmul.mubr.bf16.gmra.mrb[0].mxu0 %v196
  %v391 = vpop.f32.mrb[0].mxu0
  %v392 = vadd.f32 0.0, %v391
  %v393 = vpop.f32.mrb[0].mxu0
  %v394 = vadd.f32 0.0, %v393
  %v395 = vpop.f32.mrb[0].mxu0
  %v396 = vadd.f32 0.0, %v395
  %v397 = vpop.f32.mrb[0].mxu0
  %v398 = vadd.f32 0.0, %v397
  %399 = vdwg.mxu0
  %400 = vmatprep.subr.bf16.mxu0 %v296
  %401 = vmatpush1.bf16.msra.mxu0 %v295
  %402 = vmatprep.subr.bf16.mxu0 %v300
  %403 = vmatpush1.bf16.msra.mxu0 %v299
  %404 = vmatprep.subr.bf16.mxu0 %v304
  %405 = vmatpush1.bf16.msra.mxu0 %v303
  %406 = vmatprep.subr.bf16.mxu0 %v308
  %407 = vmatpush1.bf16.msra.mxu0 %v307
  %408 = vmatprep.subr.bf16.mxu0 %v312
  %409 = vmatpush1.bf16.msra.mxu0 %v311
  %410 = vmatprep.subr.bf16.mxu0 %v316
  %411 = vmatpush1.bf16.msra.mxu0 %v315
  %412 = vmatprep.subr.bf16.mxu0 %v320
  %413 = vmatpush1.bf16.msra.mxu0 %v319
  %414 = vmatprep.subr.bf16.mxu0 %v324
  %415 = vmatpush1.bf16.msra.mxu0 %v323
  %416 = vmatprep.subr.bf16.mxu0 0
  %417 = vmatpush1.bf16.msra.mxu0 0
  %418 = vmatprep.subr.bf16.mxu0 0
  %419 = vmatpush1.bf16.msra.mxu0 0
  %420 = vmatprep.subr.bf16.mxu0 0
  %421 = vmatpush1.bf16.msra.mxu0 0
  %422 = vmatprep.subr.bf16.mxu0 0
  %423 = vmatpush1.bf16.msra.mxu0 0
  %424 = vmatprep.subr.bf16.mxu0 0
  %425 = vmatpush1.bf16.msra.mxu0 0
  %426 = vmatprep.subr.bf16.mxu0 0
  %427 = vmatpush1.bf16.msra.mxu0 0
  %428 = vmatprep.subr.bf16.mxu0 0
  %429 = vmatpush1.bf16.msra.mxu0 0
  %430 = vmatprep.subr.bf16.mxu0 0
  %431 = vmatpush1.bf16.msra.mxu0 0
  %432 = vmatprep.mubr.bf16.mxu0 0
  %433 = vmatmul.mubr.bf16.gmra.mrb[0].mxu0 %v196
  %v434 = vpop.f32.mrb[0].mxu0
  %v435 = vadd.f32 0.0, %v434
  %v436 = vpop.f32.mrb[0].mxu0
  %v437 = vadd.f32 0.0, %v436
  %v438 = vpop.f32.mrb[0].mxu0
  %v439 = vadd.f32 0.0, %v438
  %v440 = vpop.f32.mrb[0].mxu0
  %v441 = vadd.f32 0.0, %v440
  %442 = vdwg.mxu0
  %v443 = vadd.f32 %v186, %v392
  %v444 = vadd.f32 %v187, %v394
  %v445 = vadd.f32 %v188, %v435
  %v446 = vadd.f32 %v189, %v437
  %v447 = vadd.f32 %v190, %v396
  %v448 = vadd.f32 %v191, %v398
  %v449 = vadd.f32 %v192, %v439
  %v450 = vadd.f32 %v193, %v441
  %s451 = scalar_lea.vmem %s57, 224
  %v452 = vld [vmem:[%s451] sm:$0xff]
  %v453 = vld [vmem:[%s451 + $0x8] sm:$0xff]
  %v454 = vld [vmem:[%s451 + $0x10] sm:$0xff]
  %v455 = vld [vmem:[%s451 + $0x18] sm:$0xff]
  %v456 = vunpack.c.l.bf16 %v452
  %v457 = vunpack.c.h.bf16 %v452
  %v458 = vunpack.c.l.bf16 %v453
  %v459 = vunpack.c.h.bf16 %v453
  %v460 = vunpack.c.l.bf16 %v454
  %v461 = vunpack.c.h.bf16 %v454
  %v462 = vunpack.c.l.bf16 %v455
  %v463 = vunpack.c.h.bf16 %v455
  %v465 = vlaneseq
  %v466 = vshrl.u32 %v465, 7
  %v467 = vsub.s32 0, %v466
  %v468 = vrot.slane %v149, %v467
  %v469 = vlaneseq
  %v470 = vshrl.u32 %v469, 7
  %v471 = vsub.s32 1, %v470
  %v472 = vrot.slane %v149, %v471
  %v473 = vlaneseq
  %v474 = vshrl.u32 %v473, 7
  %v475 = vsub.s32 2, %v474
  %v476 = vrot.slane %v149, %v475
  %v477 = vlaneseq
  %v478 = vshrl.u32 %v477, 7
  %v479 = vsub.s32 3, %v478
  %v480 = vrot.slane %v149, %v479
  %v485 = vadd.f32 %v456, %v468
  %v486 = vadd.f32 %v457, %v472
  %v487 = vadd.f32 %v458, %v476
  %v488 = vadd.f32 %v459, %v480
  %v489 = vadd.f32 %v460, %v468
  %v490 = vadd.f32 %v461, %v472
  %v491 = vadd.f32 %v462, %v476
  %v492 = vadd.f32 %v463, %v480
  %v493 = vld [vmem:[#allocation4] sm:$0xff]
  %v494 = vld [vmem:[#allocation4 + $0x8] sm:$0xff]
  %v495 = vpack.c.bf16 %v494, %v493
  %v528 = vunpack.c.l.b16 %v116
  %v529 = vunpack.c.h.b16 %v116
  %v530 = vunpack.c.l.b16 %v117
  %v531 = vunpack.c.h.b16 %v117
  %v532 = vunpack.c.l.b16 %v118
  %v533 = vunpack.c.h.b16 %v118
  %v534 = vunpack.c.l.b16 %v119
  %v535 = vunpack.c.h.b16 %v119
  %v536 = vunpack.c.l.b16 %v120
  %v537 = vunpack.c.h.b16 %v120
  %v538 = vunpack.c.l.b16 %v121
  %v539 = vunpack.c.h.b16 %v121
  %v540 = vunpack.c.l.b16 %v122
  %v541 = vunpack.c.h.b16 %v122
  %v542 = vunpack.c.l.b16 %v123
  %v543 = vunpack.c.h.b16 %v123
  %v544 = vunpack.c.l.b16 %v124
  %v545 = vunpack.c.h.b16 %v124
  %v546 = vunpack.c.l.b16 %v125
  %v547 = vunpack.c.h.b16 %v125
  %v548 = vunpack.c.l.b16 %v126
  %v549 = vunpack.c.h.b16 %v126
  %v550 = vunpack.c.l.b16 %v127
  %v551 = vunpack.c.h.b16 %v127
  %v552 = vunpack.c.l.b16 %v128
  %v553 = vunpack.c.h.b16 %v128
  %v554 = vunpack.c.l.b16 %v129
  %v555 = vunpack.c.h.b16 %v129
  %v556 = vunpack.c.l.b16 %v130
  %v557 = vunpack.c.h.b16 %v130
  %v558 = vunpack.c.l.b16 %v131
  %v559 = vunpack.c.h.b16 %v131
  %v560 = vunpack.c.l.b16 %v132
  %v561 = vunpack.c.h.b16 %v132
  %v562 = vunpack.c.l.b16 %v133
  %v563 = vunpack.c.h.b16 %v133
  %v564 = vunpack.c.l.b16 %v134
  %v565 = vunpack.c.h.b16 %v134
  %v566 = vunpack.c.l.b16 %v135
  %v567 = vunpack.c.h.b16 %v135
  %v568 = vunpack.c.l.b16 %v136
  %v569 = vunpack.c.h.b16 %v136
  %v570 = vunpack.c.l.b16 %v137
  %v571 = vunpack.c.h.b16 %v137
  %v572 = vunpack.c.l.b16 %v138
  %v573 = vunpack.c.h.b16 %v138
  %v574 = vunpack.c.l.b16 %v139
  %v575 = vunpack.c.h.b16 %v139
  %v576 = vunpack.c.l.b16 %v140
  %v577 = vunpack.c.h.b16 %v140
  %v578 = vunpack.c.l.b16 %v141
  %v579 = vunpack.c.h.b16 %v141
  %v580 = vunpack.c.l.b16 %v142
  %v581 = vunpack.c.h.b16 %v142
  %v582 = vunpack.c.l.b16 %v143
  %v583 = vunpack.c.h.b16 %v143
  %v584 = vunpack.c.l.b16 %v144
  %v585 = vunpack.c.h.b16 %v144
  %v586 = vunpack.c.l.b16 %v145
  %v587 = vunpack.c.h.b16 %v145
  %v588 = vunpack.c.l.b16 %v146
  %v589 = vunpack.c.h.b16 %v146
  %v590 = vunpack.c.l.b16 %v147
  %v591 = vunpack.c.h.b16 %v147
  %v592 = vpack.c.b16 %v532, %v528
  %v593 = vpack.c.b16 %v533, %v529
  %v594 = vpack.c.b16 %v534, %v530
  %v595 = vpack.c.b16 %v535, %v531
  %v596 = vpack.c.b16 %v540, %v536
  %v597 = vpack.c.b16 %v541, %v537
  %v598 = vpack.c.b16 %v542, %v538
  %v599 = vpack.c.b16 %v543, %v539
  %v600 = vpack.c.b16 %v548, %v544
  %v601 = vpack.c.b16 %v549, %v545
  %v602 = vpack.c.b16 %v550, %v546
  %v603 = vpack.c.b16 %v551, %v547
  %v604 = vpack.c.b16 %v556, %v552
  %v605 = vpack.c.b16 %v557, %v553
  %v606 = vpack.c.b16 %v558, %v554
  %v607 = vpack.c.b16 %v559, %v555
  %v608 = vpack.c.b16 %v564, %v560
  %v609 = vpack.c.b16 %v565, %v561
  %v610 = vpack.c.b16 %v566, %v562
  %v611 = vpack.c.b16 %v567, %v563
  %v612 = vpack.c.b16 %v572, %v568
  %v613 = vpack.c.b16 %v573, %v569
  %v614 = vpack.c.b16 %v574, %v570
  %v615 = vpack.c.b16 %v575, %v571
  %v616 = vpack.c.b16 %v580, %v576
  %v617 = vpack.c.b16 %v581, %v577
  %v618 = vpack.c.b16 %v582, %v578
  %v619 = vpack.c.b16 %v583, %v579
  %v620 = vpack.c.b16 %v588, %v584
  %v621 = vpack.c.b16 %v589, %v585
  %v622 = vpack.c.b16 %v590, %v586
  %v623 = vpack.c.b16 %v591, %v587
  %656 = vmatprep.subr.bf16.mxu0 %v593
  %657 = vmatpush1.bf16.msra.mxu0 %v592
  %658 = vmatprep.subr.bf16.mxu0 %v597
  %659 = vmatpush1.bf16.msra.mxu0 %v596
  %660 = vmatprep.subr.bf16.mxu0 %v601
  %661 = vmatpush1.bf16.msra.mxu0 %v600
  %662 = vmatprep.subr.bf16.mxu0 %v605
  %663 = vmatpush1.bf16.msra.mxu0 %v604
  %664 = vmatprep.subr.bf16.mxu0 %v609
  %665 = vmatpush1.bf16.msra.mxu0 %v608
  %666 = vmatprep.subr.bf16.mxu0 %v613
  %667 = vmatpush1.bf16.msra.mxu0 %v612
  %668 = vmatprep.subr.bf16.mxu0 %v617
  %669 = vmatpush1.bf16.msra.mxu0 %v616
  %670 = vmatprep.subr.bf16.mxu0 %v621
  %671 = vmatpush1.bf16.msra.mxu0 %v620
  %672 = vmatprep.subr.bf16.mxu0 0
  %673 = vmatpush1.bf16.msra.mxu0 0
  %674 = vmatprep.subr.bf16.mxu0 0
  %675 = vmatpush1.bf16.msra.mxu0 0
  %676 = vmatprep.subr.bf16.mxu0 0
  %677 = vmatpush1.bf16.msra.mxu0 0
  %678 = vmatprep.subr.bf16.mxu0 0
  %679 = vmatpush1.bf16.msra.mxu0 0
  %680 = vmatprep.subr.bf16.mxu0 0
  %681 = vmatpush1.bf16.msra.mxu0 0
  %682 = vmatprep.subr.bf16.mxu0 0
  %683 = vmatpush1.bf16.msra.mxu0 0
  %684 = vmatprep.subr.bf16.mxu0 0
  %685 = vmatpush1.bf16.msra.mxu0 0
  %686 = vmatprep.subr.bf16.mxu0 0
  %687 = vmatpush1.bf16.msra.mxu0 0
  %688 = vmatprep.mubr.bf16.mxu0 0
  %689 = vmatmul.mubr.bf16.gmra.mrb[0].mxu0 %v495
  %v690 = vpop.f32.mrb[0].mxu0
  %v691 = vadd.f32 0.0, %v690
  %v692 = vpop.f32.mrb[0].mxu0
  %v693 = vadd.f32 0.0, %v692
  %v694 = vpop.f32.mrb[0].mxu0
  %v695 = vadd.f32 0.0, %v694
  %v696 = vpop.f32.mrb[0].mxu0
  %v697 = vadd.f32 0.0, %v696
  %698 = vdwg.mxu0
  %699 = vmatprep.subr.bf16.mxu0 %v595
  %700 = vmatpush1.bf16.msra.mxu0 %v594
  %701 = vmatprep.subr.bf16.mxu0 %v599
  %702 = vmatpush1.bf16.msra.mxu0 %v598
  %703 = vmatprep.subr.bf16.mxu0 %v603
  %704 = vmatpush1.bf16.msra.mxu0 %v602
  %705 = vmatprep.subr.bf16.mxu0 %v607
  %706 = vmatpush1.bf16.msra.mxu0 %v606
  %707 = vmatprep.subr.bf16.mxu0 %v611
  %708 = vmatpush1.bf16.msra.mxu0 %v610
  %709 = vmatprep.subr.bf16.mxu0 %v615
  %710 = vmatpush1.bf16.msra.mxu0 %v614
  %711 = vmatprep.subr.bf16.mxu0 %v619
  %712 = vmatpush1.bf16.msra.mxu0 %v618
  %713 = vmatprep.subr.bf16.mxu0 %v623
  %714 = vmatpush1.bf16.msra.mxu0 %v622
  %715 = vmatprep.subr.bf16.mxu0 0
  %716 = vmatpush1.bf16.msra.mxu0 0
  %717 = vmatprep.subr.bf16.mxu0 0
  %718 = vmatpush1.bf16.msra.mxu0 0
  %719 = vmatprep.subr.bf16.mxu0 0
  %720 = vmatpush1.bf16.msra.mxu0 0
  %721 = vmatprep.subr.bf16.mxu0 0
  %722 = vmatpush1.bf16.msra.mxu0 0
  %723 = vmatprep.subr.bf16.mxu0 0
  %724 = vmatpush1.bf16.msra.mxu0 0
  %725 = vmatprep.subr.bf16.mxu0 0
  %726 = vmatpush1.bf16.msra.mxu0 0
  %727 = vmatprep.subr.bf16.mxu0 0
  %728 = vmatpush1.bf16.msra.mxu0 0
  %729 = vmatprep.subr.bf16.mxu0 0
  %730 = vmatpush1.bf16.msra.mxu0 0
  %731 = vmatprep.mubr.bf16.mxu0 0
  %732 = vmatmul.mubr.bf16.gmra.mrb[0].mxu0 %v495
  %v733 = vpop.f32.mrb[0].mxu0
  %v734 = vadd.f32 0.0, %v733
  %v735 = vpop.f32.mrb[0].mxu0
  %v736 = vadd.f32 0.0, %v735
  %v737 = vpop.f32.mrb[0].mxu0
  %v738 = vadd.f32 0.0, %v737
  %v739 = vpop.f32.mrb[0].mxu0
  %v740 = vadd.f32 0.0, %v739
  %741 = vdwg.mxu0
  %v742 = vadd.f32 %v485, %v691
  %v743 = vadd.f32 %v486, %v693
  %v744 = vadd.f32 %v487, %v734
  %v745 = vadd.f32 %v488, %v736
  %v746 = vadd.f32 %v489, %v695
  %v747 = vadd.f32 %v490, %v697
  %v748 = vadd.f32 %v491, %v738
  %v749 = vadd.f32 %v492, %v740
  %v750 = vld [vmem:[#allocation3] sm:$0xff]
  %v751 = vld [vmem:[#allocation3 + $0x8] sm:$0xff]
  %v752 = vxor.u32 %v443, 2147483648
  %v753 = vxor.u32 %v444, 2147483648
  %v754 = vxor.u32 %v445, 2147483648
  %v755 = vxor.u32 %v447, 2147483648
  %v756 = vxor.u32 %v448, 2147483648
  %v757 = vxor.u32 %v449, 2147483648
  %v758 = vmul.f32 %v752, 1.442695
  %v759 = vpow.pop %v758
  %v760 = vmul.f32 %v753, 1.442695
  %v761 = vpow.pop %v760
  %v762 = vmul.f32 %v754, 1.442695
  %v763 = vpow.pop %v762
  %v764 = vmul.f32 %v755, 1.442695
  %v765 = vpow.pop %v764
  %v766 = vmul.f32 %v756, 1.442695
  %v767 = vpow.pop %v766
  %v768 = vmul.f32 %v757, 1.442695
  %v769 = vpow.pop %v768
  %v770 = vadd.f32 %v759, 1.0
  %v771 = vadd.f32 %v761, 1.0
  %v772 = vadd.f32 %v763, 1.0
  %v773 = vadd.f32 %v765, 1.0
  %v774 = vadd.f32 %v767, 1.0
  %v775 = vadd.f32 %v769, 1.0
  %v776 = vrcp.pop %v770
  %v777 = vmul.f32 1.0, %v776
  %v778 = vrcp.pop %v771
  %v779 = vmul.f32 1.0, %v778
  %v780 = vrcp.pop %v772
  %v781 = vmul.f32 1.0, %v780
  %v782 = vrcp.pop %v773
  %v783 = vmul.f32 1.0, %v782
  %v784 = vrcp.pop %v774
  %v785 = vmul.f32 1.0, %v784
  %v786 = vrcp.pop %v775
  %v787 = vmul.f32 1.0, %v786
  %v788 = vtanh.pop %v446
  %v789 = vtanh.pop %v450
  %v790 = vmul.f32 %v779, %v750
  %v791 = vmul.f32 %v785, %v751
  %v792 = vmul.f32 %v777, %v788
  %v793 = vmul.f32 %v783, %v789
  %v794 = vadd.f32 %v790, %v792
  %v795 = vadd.f32 %v791, %v793
  %v796 = vtanh.pop %v794
  %v797 = vtanh.pop %v795
  %v798 = vmul.f32 %v781, %v796
  %v799 = vmul.f32 %v787, %v797
  %v800 = vld [vmem:[#allocation5] sm:$0xff]
  %v801 = vld [vmem:[#allocation5 + $0x8] sm:$0xff]
  %v802 = vxor.u32 %v742, 2147483648
  %v803 = vxor.u32 %v743, 2147483648
  %v804 = vxor.u32 %v744, 2147483648
  %v805 = vxor.u32 %v746, 2147483648
  %v806 = vxor.u32 %v747, 2147483648
  %v807 = vxor.u32 %v748, 2147483648
  %v808 = vmul.f32 %v802, 1.442695
  %v809 = vpow.pop %v808
  %v810 = vmul.f32 %v803, 1.442695
  %v811 = vpow.pop %v810
  %v812 = vmul.f32 %v804, 1.442695
  %v813 = vpow.pop %v812
  %v814 = vmul.f32 %v805, 1.442695
  %v815 = vpow.pop %v814
  %v816 = vmul.f32 %v806, 1.442695
  %v817 = vpow.pop %v816
  %v818 = vmul.f32 %v807, 1.442695
  %v819 = vpow.pop %v818
  %v820 = vadd.f32 %v809, 1.0
  %v821 = vadd.f32 %v811, 1.0
  %v822 = vadd.f32 %v813, 1.0
  %v823 = vadd.f32 %v815, 1.0
  %v824 = vadd.f32 %v817, 1.0
  %v825 = vadd.f32 %v819, 1.0
  %v826 = vrcp.pop %v820
  %v827 = vmul.f32 1.0, %v826
  %v828 = vrcp.pop %v821
  %v829 = vmul.f32 1.0, %v828
  %v830 = vrcp.pop %v822
  %v831 = vmul.f32 1.0, %v830
  %v832 = vrcp.pop %v823
  %v833 = vmul.f32 1.0, %v832
  %v834 = vrcp.pop %v824
  %v835 = vmul.f32 1.0, %v834
  %v836 = vrcp.pop %v825
  %v837 = vmul.f32 1.0, %v836
  %v838 = vtanh.pop %v745
  %v839 = vtanh.pop %v749
  %v840 = vmul.f32 %v829, %v800
  %v841 = vmul.f32 %v835, %v801
  %v842 = vmul.f32 %v827, %v838
  %v843 = vmul.f32 %v833, %v839
  %v844 = vadd.f32 %v840, %v842
  %v845 = vadd.f32 %v841, %v843
  %v846 = vtanh.pop %v844
  %v847 = vtanh.pop %v845
  %v848 = vmul.f32 %v831, %v846
  %v849 = vmul.f32 %v837, %v847
  %v850 = vstv %s150
  %vm851 = vcmp.lt.s32.totalorder %v850, %v82
  %vm852 = vcmp.lt.s32.totalorder %v850, %v83
  %s853 = sadd.s32 %s152, 7
  %v854 = vstv %s853
  %vm855 = vcmp.lt.s32.totalorder %v854, %v82
  %vm856 = vcmp.lt.s32.totalorder %v854, %v83
  %v857 = vsel %vm851, 1, 0
  %v858 = vsel %vm852, 1, 0
  %859 = vset.pattern.permute.xlu0 0
  %860 = vperm.xlu0 %859, %v857
  %v861 = vpop.permute.xlu0 %860
  %862 = vset.pattern.permute.xlu0 0
  %863 = vperm.xlu0 %862, %v858
  %v864 = vpop.permute.xlu0 %863
  %vm865 = vcmp.eq.s32.totalorder %v861, 1
  %vm866 = vcmp.eq.s32.totalorder %v864, 1
  %v867 = vsel %vm865, %v798, %v194
  %v868 = vsel %vm866, %v799, %v195
  %869 = vst [vmem:[#allocation2] sm:$0xff] %v867
  %870 = vst [vmem:[#allocation2 + $0x8] sm:$0xff] %v868
  %v871 = vld [vmem:[#allocation3] sm:$0xff]
  %v872 = vld [vmem:[#allocation3 + $0x8] sm:$0xff]
  %v873 = vsel %vm865, %v794, %v871
  %v874 = vsel %vm866, %v795, %v872
  %875 = vst [vmem:[#allocation3] sm:$0xff] %v873
  %876 = vst [vmem:[#allocation3 + $0x8] sm:$0xff] %v874
  %v877 = vld [vmem:[#allocation4] sm:$0xff]
  %v878 = vld [vmem:[#allocation4 + $0x8] sm:$0xff]
  %v879 = vsel %vm855, 1, 0
  %v880 = vsel %vm856, 1, 0
  %881 = vset.pattern.permute.xlu0 0
  %882 = vperm.xlu0 %881, %v879
  %v883 = vpop.permute.xlu0 %882
  %884 = vset.pattern.permute.xlu0 0
  %885 = vperm.xlu0 %884, %v880
  %v886 = vpop.permute.xlu0 %885
  %vm887 = vcmp.eq.s32.totalorder %v883, 1
  %vm888 = vcmp.eq.s32.totalorder %v886, 1
  %v889 = vsel %vm887, %v848, %v877
  %v890 = vsel %vm888, %v849, %v878
  %891 = vst [vmem:[#allocation4] sm:$0xff] %v889
  %892 = vst [vmem:[#allocation4 + $0x8] sm:$0xff] %v890
  %v893 = vld [vmem:[#allocation5] sm:$0xff]
  %v894 = vld [vmem:[#allocation5 + $0x8] sm:$0xff]
  %v895 = vsel %vm887, %v844, %v893
  %v896 = vsel %vm888, %v845, %v894
  %897 = vst [vmem:[#allocation5] sm:$0xff] %v895
  %898 = vst [vmem:[#allocation5 + $0x8] sm:$0xff] %v896
  %v899 = vsel %vm865, %v798, 0.0
  %v900 = vsel %vm866, %v799, 0.0
  %v901 = vpack.c.bf16 %v900, %v899
  %v903 = vunpack.c.l.b16 %v901
  %v904 = vunpack.c.h.b16 %v901
  %v905 = vpack.c.b16 %v903, %v903
  %v906 = vpack.c.b16 %v904, %v904
  %909 = vst [vmem:[%s7] sm:$0xf] %v905
  %910 = vst [vmem:[%s7 + $0x4] sm:$0xf] %v906
  %v911 = vsel %vm887, %v848, 0.0
  %v912 = vsel %vm888, %v849, 0.0
  %v913 = vpack.c.bf16 %v912, %v911
  %v915 = vunpack.c.l.b16 %v913
  %v916 = vunpack.c.h.b16 %v913
  %v917 = vpack.c.b16 %v915, %v915
  %v918 = vpack.c.b16 %v916, %v916
  %s921 = scalar_lea.vmem %s66, 56
  %922 = vst [vmem:[%s921] sm:$0xf] %v917
  %923 = vst [vmem:[%s921 + $0x4] sm:$0xf] %v918
  %s924 = scalar_lea.vmem %s1, 32
  %v925 = vld [vmem:[%s924] sm:$0xff]
  %v926 = vld [vmem:[%s924 + $0x8] sm:$0xff]
  %v927 = vld [vmem:[%s924 + $0x10] sm:$0xff]
  %v928 = vld [vmem:[%s924 + $0x18] sm:$0xff]
  %v929 = vunpack.c.l.bf16 %v925
  %v930 = vunpack.c.h.bf16 %v925
  %v931 = vunpack.c.l.bf16 %v926
  %v932 = vunpack.c.h.bf16 %v926
  %v933 = vunpack.c.l.bf16 %v927
  %v934 = vunpack.c.h.bf16 %v927
  %v935 = vunpack.c.l.bf16 %v928
  %v936 = vunpack.c.h.bf16 %v928
  %v937 = vadd.f32 %v929, %v169
  %v938 = vadd.f32 %v930, %v173
  %v939 = vadd.f32 %v931, %v177
  %v940 = vadd.f32 %v932, %v181
  %v941 = vadd.f32 %v933, %v169
  %v942 = vadd.f32 %v934, %v173
  %v943 = vadd.f32 %v935, %v177
  %v944 = vadd.f32 %v936, %v181
  %v945 = vld [vmem:[#allocation2] sm:$0xff]
  %v946 = vld [vmem:[#allocation2 + $0x8] sm:$0xff]
  %v947 = vpack.c.bf16 %v946, %v945
  %948 = vmatprep.subr.bf16.mxu0 %v294
  %949 = vmatpush1.bf16.msra.mxu0 %v293
  %950 = vmatprep.subr.bf16.mxu0 %v298
  %951 = vmatpush1.bf16.msra.mxu0 %v297
  %952 = vmatprep.subr.bf16.mxu0 %v302
  %953 = vmatpush1.bf16.msra.mxu0 %v301
  %954 = vmatprep.subr.bf16.mxu0 %v306
  %955 = vmatpush1.bf16.msra.mxu0 %v305
  %956 = vmatprep.subr.bf16.mxu0 %v310
  %957 = vmatpush1.bf16.msra.mxu0 %v309
  %958 = vmatprep.subr.bf16.mxu0 %v314
  %959 = vmatpush1.bf16.msra.mxu0 %v313
  %960 = vmatprep.subr.bf16.mxu0 %v318
  %961 = vmatpush1.bf16.msra.mxu0 %v317
  %962 = vmatprep.subr.bf16.mxu0 %v322
  %963 = vmatpush1.bf16.msra.mxu0 %v321
  %964 = vmatprep.subr.bf16.mxu0 0
  %965 = vmatpush1.bf16.msra.mxu0 0
  %966 = vmatprep.subr.bf16.mxu0 0
  %967 = vmatpush1.bf16.msra.mxu0 0
  %968 = vmatprep.subr.bf16.mxu0 0
  %969 = vmatpush1.bf16.msra.mxu0 0
  %970 = vmatprep.subr.bf16.mxu0 0
  %971 = vmatpush1.bf16.msra.mxu0 0
  %972 = vmatprep.subr.bf16.mxu0 0
  %973 = vmatpush1.bf16.msra.mxu0 0
  %974 = vmatprep.subr.bf16.mxu0 0
  %975 = vmatpush1.bf16.msra.mxu0 0
  %976 = vmatprep.subr.bf16.mxu0 0
  %977 = vmatpush1.bf16.msra.mxu0 0
  %978 = vmatprep.subr.bf16.mxu0 0
  %979 = vmatpush1.bf16.msra.mxu0 0
  %980 = vmatprep.mubr.bf16.mxu0 0
  %981 = vmatmul.mubr.bf16.gmra.mrb[0].mxu0 %v947
  %v982 = vpop.f32.mrb[0].mxu0
  %v983 = vadd.f32 0.0, %v982
  %v984 = vpop.f32.mrb[0].mxu0
  %v985 = vadd.f32 0.0, %v984
  %v986 = vpop.f32.mrb[0].mxu0
  %v987 = vadd.f32 0.0, %v986
  %v988 = vpop.f32.mrb[0].mxu0
  %v989 = vadd.f32 0.0, %v988
  %990 = vdwg.mxu0
  %991 = vmatprep.subr.bf16.mxu0 %v296
  %992 = vmatpush1.bf16.msra.mxu0 %v295
  %993 = vmatprep.subr.bf16.mxu0 %v300
  %994 = vmatpush1.bf16.msra.mxu0 %v299
  %995 = vmatprep.subr.bf16.mxu0 %v304
  %996 = vmatpush1.bf16.msra.mxu0 %v303
  %997 = vmatprep.subr.bf16.mxu0 %v308
  %998 = vmatpush1.bf16.msra.mxu0 %v307
  %999 = vmatprep.subr.bf16.mxu0 %v312
  %1000 = vmatpush1.bf16.msra.mxu0 %v311
  %1001 = vmatprep.subr.bf16.mxu0 %v316
  %1002 = vmatpush1.bf16.msra.mxu0 %v315
  %1003 = vmatprep.subr.bf16.mxu0 %v320
  %1004 = vmatpush1.bf16.msra.mxu0 %v319
  %1005 = vmatprep.subr.bf16.mxu0 %v324
  %1006 = vmatpush1.bf16.msra.mxu0 %v323
  %1007 = vmatprep.subr.bf16.mxu0 0
  %1008 = vmatpush1.bf16.msra.mxu0 0
  %1009 = vmatprep.subr.bf16.mxu0 0
  %1010 = vmatpush1.bf16.msra.mxu0 0
  %1011 = vmatprep.subr.bf16.mxu0 0
  %1012 = vmatpush1.bf16.msra.mxu0 0
  %1013 = vmatprep.subr.bf16.mxu0 0
  %1014 = vmatpush1.bf16.msra.mxu0 0
  %1015 = vmatprep.subr.bf16.mxu0 0
  %1016 = vmatpush1.bf16.msra.mxu0 0
  %1017 = vmatprep.subr.bf16.mxu0 0
  %1018 = vmatpush1.bf16.msra.mxu0 0
  %1019 = vmatprep.subr.bf16.mxu0 0
  %1020 = vmatpush1.bf16.msra.mxu0 0
  %1021 = vmatprep.subr.bf16.mxu0 0
  %1022 = vmatpush1.bf16.msra.mxu0 0
  %1023 = vmatprep.mubr.bf16.mxu0 0
  %1024 = vmatmul.mubr.bf16.gmra.mrb[0].mxu0 %v947
  %v1025 = vpop.f32.mrb[0].mxu0
  %v1026 = vadd.f32 0.0, %v1025
  %v1027 = vpop.f32.mrb[0].mxu0
  %v1028 = vadd.f32 0.0, %v1027
  %v1029 = vpop.f32.mrb[0].mxu0
  %v1030 = vadd.f32 0.0, %v1029
  %v1031 = vpop.f32.mrb[0].mxu0
  %v1032 = vadd.f32 0.0, %v1031
  %1033 = vdwg.mxu0
  %v1034 = vadd.f32 %v937, %v983
  %v1035 = vadd.f32 %v938, %v985
  %v1036 = vadd.f32 %v939, %v1026
  %v1037 = vadd.f32 %v940, %v1028
  %v1038 = vadd.f32 %v941, %v987
  %v1039 = vadd.f32 %v942, %v989
  %v1040 = vadd.f32 %v943, %v1030
  %v1041 = vadd.f32 %v944, %v1032
  %s1042 = scalar_lea.vmem %s57, 192
  %v1043 = vld [vmem:[%s1042] sm:$0xff]
  %v1044 = vld [vmem:[%s1042 + $0x8] sm:$0xff]
  %v1045 = vld [vmem:[%s1042 + $0x10] sm:$0xff]
  %v1046 = vld [vmem:[%s1042 + $0x18] sm:$0xff]
  %v1047 = vunpack.c.l.bf16 %v1043
  %v1048 = vunpack.c.h.bf16 %v1043
  %v1049 = vunpack.c.l.bf16 %v1044
  %v1050 = vunpack.c.h.bf16 %v1044
  %v1051 = vunpack.c.l.bf16 %v1045
  %v1052 = vunpack.c.h.bf16 %v1045
  %v1053 = vunpack.c.l.bf16 %v1046
  %v1054 = vunpack.c.h.bf16 %v1046
  %v1055 = vadd.f32 %v1047, %v468
  %v1056 = vadd.f32 %v1048, %v472
  %v1057 = vadd.f32 %v1049, %v476
  %v1058 = vadd.f32 %v1050, %v480
  %v1059 = vadd.f32 %v1051, %v468
  %v1060 = vadd.f32 %v1052, %v472
  %v1061 = vadd.f32 %v1053, %v476
  %v1062 = vadd.f32 %v1054, %v480
  %v1063 = vld [vmem:[#allocation4] sm:$0xff]
  %v1064 = vld [vmem:[#allocation4 + $0x8] sm:$0xff]
  %v1065 = vpack.c.bf16 %v1064, %v1063
  %1066 = vmatprep.subr.bf16.mxu0 %v593
  %1067 = vmatpush1.bf16.msra.mxu0 %v592
  %1068 = vmatprep.subr.bf16.mxu0 %v597
  %1069 = vmatpush1.bf16.msra.mxu0 %v596
  %1070 = vmatprep.subr.bf16.mxu0 %v601
  %1071 = vmatpush1.bf16.msra.mxu0 %v600
  %1072 = vmatprep.subr.bf16.mxu0 %v605
  %1073 = vmatpush1.bf16.msra.mxu0 %v604
  %1074 = vmatprep.subr.bf16.mxu0 %v609
  %1075 = vmatpush1.bf16.msra.mxu0 %v608
  %1076 = vmatprep.subr.bf16.mxu0 %v613
  %1077 = vmatpush1.bf16.msra.mxu0 %v612
  %1078 = vmatprep.subr.bf16.mxu0 %v617
  %1079 = vmatpush1.bf16.msra.mxu0 %v616
  %1080 = vmatprep.subr.bf16.mxu0 %v621
  %1081 = vmatpush1.bf16.msra.mxu0 %v620
  %1082 = vmatprep.subr.bf16.mxu0 0
  %1083 = vmatpush1.bf16.msra.mxu0 0
  %1084 = vmatprep.subr.bf16.mxu0 0
  %1085 = vmatpush1.bf16.msra.mxu0 0
  %1086 = vmatprep.subr.bf16.mxu0 0
  %1087 = vmatpush1.bf16.msra.mxu0 0
  %1088 = vmatprep.subr.bf16.mxu0 0
  %1089 = vmatpush1.bf16.msra.mxu0 0
  %1090 = vmatprep.subr.bf16.mxu0 0
  %1091 = vmatpush1.bf16.msra.mxu0 0
  %1092 = vmatprep.subr.bf16.mxu0 0
  %1093 = vmatpush1.bf16.msra.mxu0 0
  %1094 = vmatprep.subr.bf16.mxu0 0
  %1095 = vmatpush1.bf16.msra.mxu0 0
  %1096 = vmatprep.subr.bf16.mxu0 0
  %1097 = vmatpush1.bf16.msra.mxu0 0
  %1098 = vmatprep.mubr.bf16.mxu0 0
  %1099 = vmatmul.mubr.bf16.gmra.mrb[0].mxu0 %v1065
  %v1100 = vpop.f32.mrb[0].mxu0
  %v1101 = vadd.f32 0.0, %v1100
  %v1102 = vpop.f32.mrb[0].mxu0
  %v1103 = vadd.f32 0.0, %v1102
  %v1104 = vpop.f32.mrb[0].mxu0
  %v1105 = vadd.f32 0.0, %v1104
  %v1106 = vpop.f32.mrb[0].mxu0
  %v1107 = vadd.f32 0.0, %v1106
  %1108 = vdwg.mxu0
  %1109 = vmatprep.subr.bf16.mxu0 %v595
  %1110 = vmatpush1.bf16.msra.mxu0 %v594
  %1111 = vmatprep.subr.bf16.mxu0 %v599
  %1112 = vmatpush1.bf16.msra.mxu0 %v598
  %1113 = vmatprep.subr.bf16.mxu0 %v603
  %1114 = vmatpush1.bf16.msra.mxu0 %v602
  %1115 = vmatprep.subr.bf16.mxu0 %v607
  %1116 = vmatpush1.bf16.msra.mxu0 %v606
  %1117 = vmatprep.subr.bf16.mxu0 %v611
  %1118 = vmatpush1.bf16.msra.mxu0 %v610
  %1119 = vmatprep.subr.bf16.mxu0 %v615
  %1120 = vmatpush1.bf16.msra.mxu0 %v614
  %1121 = vmatprep.subr.bf16.mxu0 %v619
  %1122 = vmatpush1.bf16.msra.mxu0 %v618
  %1123 = vmatprep.subr.bf16.mxu0 %v623
  %1124 = vmatpush1.bf16.msra.mxu0 %v622
  %1125 = vmatprep.subr.bf16.mxu0 0
  %1126 = vmatpush1.bf16.msra.mxu0 0
  %1127 = vmatprep.subr.bf16.mxu0 0
  %1128 = vmatpush1.bf16.msra.mxu0 0
  %1129 = vmatprep.subr.bf16.mxu0 0
  %1130 = vmatpush1.bf16.msra.mxu0 0
  %1131 = vmatprep.subr.bf16.mxu0 0
  %1132 = vmatpush1.bf16.msra.mxu0 0
  %1133 = vmatprep.subr.bf16.mxu0 0
  %1134 = vmatpush1.bf16.msra.mxu0 0
  %1135 = vmatprep.subr.bf16.mxu0 0
  %1136 = vmatpush1.bf16.msra.mxu0 0
  %1137 = vmatprep.subr.bf16.mxu0 0
  %1138 = vmatpush1.bf16.msra.mxu0 0
  %1139 = vmatprep.subr.bf16.mxu0 0
  %1140 = vmatpush1.bf16.msra.mxu0 0
  %1141 = vmatprep.mubr.bf16.mxu0 0
  %1142 = vmatmul.mubr.bf16.gmra.mrb[0].mxu0 %v1065
  %v1143 = vpop.f32.mrb[0].mxu0
  %v1144 = vadd.f32 0.0, %v1143
  %v1145 = vpop.f32.mrb[0].mxu0
  %v1146 = vadd.f32 0.0, %v1145
  %v1147 = vpop.f32.mrb[0].mxu0
  %v1148 = vadd.f32 0.0, %v1147
  %v1149 = vpop.f32.mrb[0].mxu0
  %v1150 = vadd.f32 0.0, %v1149
  %1151 = vdwg.mxu0
  %v1152 = vadd.f32 %v1055, %v1101
  %v1153 = vadd.f32 %v1056, %v1103
  %v1154 = vadd.f32 %v1057, %v1144
  %v1155 = vadd.f32 %v1058, %v1146
  %v1156 = vadd.f32 %v1059, %v1105
  %v1157 = vadd.f32 %v1060, %v1107
  %v1158 = vadd.f32 %v1061, %v1148
  %v1159 = vadd.f32 %v1062, %v1150
  %v1160 = vld [vmem:[#allocation3] sm:$0xff]
  %v1161 = vld [vmem:[#allocation3 + $0x8] sm:$0xff]
  %v1162 = vxor.u32 %v1034, 2147483648
  %v1163 = vxor.u32 %v1035, 2147483648
  %v1164 = vxor.u32 %v1036, 2147483648
  %v1165 = vxor.u32 %v1038, 2147483648
  %v1166 = vxor.u32 %v1039, 2147483648
  %v1167 = vxor.u32 %v1040, 2147483648
  %v1168 = vmul.f32 %v1162, 1.442695
  %v1169 = vpow.pop %v1168
  %v1170 = vmul.f32 %v1163, 1.442695
  %v1171 = vpow.pop %v1170
  %v1172 = vmul.f32 %v1164, 1.442695
  %v1173 = vpow.pop %v1172
  %v1174 = vmul.f32 %v1165, 1.442695
  %v1175 = vpow.pop %v1174
  %v1176 = vmul.f32 %v1166, 1.442695
  %v1177 = vpow.pop %v1176
  %v1178 = vmul.f32 %v1167, 1.442695
  %v1179 = vpow.pop %v1178
  %v1180 = vadd.f32 %v1169, 1.0
  %v1181 = vadd.f32 %v1171, 1.0
  %v1182 = vadd.f32 %v1173, 1.0
  %v1183 = vadd.f32 %v1175, 1.0
  %v1184 = vadd.f32 %v1177, 1.0
  %v1185 = vadd.f32 %v1179, 1.0
  %v1186 = vrcp.pop %v1180
  %v1187 = vmul.f32 1.0, %v1186
  %v1188 = vrcp.pop %v1181
  %v1189 = vmul.f32 1.0, %v1188
  %v1190 = vrcp.pop %v1182
  %v1191 = vmul.f32 1.0, %v1190
  %v1192 = vrcp.pop %v1183
  %v1193 = vmul.f32 1.0, %v1192
  %v1194 = vrcp.pop %v1184
  %v1195 = vmul.f32 1.0, %v1194
  %v1196 = vrcp.pop %v1185
  %v1197 = vmul.f32 1.0, %v1196
  %v1198 = vtanh.pop %v1037
  %v1199 = vtanh.pop %v1041
  %v1200 = vmul.f32 %v1189, %v1160
  %v1201 = vmul.f32 %v1195, %v1161
  %v1202 = vmul.f32 %v1187, %v1198
  %v1203 = vmul.f32 %v1193, %v1199
  %v1204 = vadd.f32 %v1200, %v1202
  %v1205 = vadd.f32 %v1201, %v1203
  %v1206 = vtanh.pop %v1204
  %v1207 = vtanh.pop %v1205
  %v1208 = vmul.f32 %v1191, %v1206
  %v1209 = vmul.f32 %v1197, %v1207
  %v1210 = vld [vmem:[#allocation5] sm:$0xff]
  %v1211 = vld [vmem:[#allocation5 + $0x8] sm:$0xff]
  %v1212 = vxor.u32 %v1152, 2147483648
  %v1213 = vxor.u32 %v1153, 2147483648
  %v1214 = vxor.u32 %v1154, 2147483648
  %v1215 = vxor.u32 %v1156, 2147483648
  %v1216 = vxor.u32 %v1157, 2147483648
  %v1217 = vxor.u32 %v1158, 2147483648
  %v1218 = vmul.f32 %v1212, 1.442695
  %v1219 = vpow.pop %v1218
  %v1220 = vmul.f32 %v1213, 1.442695
  %v1221 = vpow.pop %v1220
  %v1222 = vmul.f32 %v1214, 1.442695
  %v1223 = vpow.pop %v1222
  %v1224 = vmul.f32 %v1215, 1.442695
  %v1225 = vpow.pop %v1224
  %v1226 = vmul.f32 %v1216, 1.442695
  %v1227 = vpow.pop %v1226
  %v1228 = vmul.f32 %v1217, 1.442695
  %v1229 = vpow.pop %v1228
  %v1230 = vadd.f32 %v1219, 1.0
  %v1231 = vadd.f32 %v1221, 1.0
  %v1232 = vadd.f32 %v1223, 1.0
  %v1233 = vadd.f32 %v1225, 1.0
  %v1234 = vadd.f32 %v1227, 1.0
  %v1235 = vadd.f32 %v1229, 1.0
  %v1236 = vrcp.pop %v1230
  %v1237 = vmul.f32 1.0, %v1236
  %v1238 = vrcp.pop %v1231
  %v1239 = vmul.f32 1.0, %v1238
  %v1240 = vrcp.pop %v1232
  %v1241 = vmul.f32 1.0, %v1240
  %v1242 = vrcp.pop %v1233
  %v1243 = vmul.f32 1.0, %v1242
  %v1244 = vrcp.pop %v1234
  %v1245 = vmul.f32 1.0, %v1244
  %v1246 = vrcp.pop %v1235
  %v1247 = vmul.f32 1.0, %v1246
  %v1248 = vtanh.pop %v1155
  %v1249 = vtanh.pop %v1159
  %v1250 = vmul.f32 %v1239, %v1210
  %v1251 = vmul.f32 %v1245, %v1211
  %v1252 = vmul.f32 %v1237, %v1248
  %v1253 = vmul.f32 %v1243, %v1249
  %v1254 = vadd.f32 %v1250, %v1252
  %v1255 = vadd.f32 %v1251, %v1253
  %v1256 = vtanh.pop %v1254
  %v1257 = vtanh.pop %v1255
  %v1258 = vmul.f32 %v1241, %v1256
  %v1259 = vmul.f32 %v1247, %v1257
  %s1260 = sadd.s32 %s150, 1
  %v1261 = vstv %s1260
  %vm1262 = vcmp.lt.s32.totalorder %v1261, %v82
  %vm1263 = vcmp.lt.s32.totalorder %v1261, %v83
  %s1264 = sadd.s32 %s152, 6
  %v1265 = vstv %s1264
  %vm1266 = vcmp.lt.s32.totalorder %v1265, %v82
  %vm1267 = vcmp.lt.s32.totalorder %v1265, %v83
  %v1268 = vsel %vm1262, 1, 0
  %v1269 = vsel %vm1263, 1, 0
  %1270 = vset.pattern.permute.xlu0 0
  %1271 = vperm.xlu0 %1270, %v1268
  %v1272 = vpop.permute.xlu0 %1271
  %1273 = vset.pattern.permute.xlu0 0
  %1274 = vperm.xlu0 %1273, %v1269
  %v1275 = vpop.permute.xlu0 %1274
  %vm1276 = vcmp.eq.s32.totalorder %v1272, 1
  %vm1277 = vcmp.eq.s32.totalorder %v1275, 1
  %v1278 = vsel %vm1276, %v1208, %v945
  %v1279 = vsel %vm1277, %v1209, %v946
  %1280 = vst [vmem:[#allocation2] sm:$0xff] %v1278
  %1281 = vst [vmem:[#allocation2 + $0x8] sm:$0xff] %v1279
  %v1282 = vld [vmem:[#allocation3] sm:$0xff]
  %v1283 = vld [vmem:[#allocation3 + $0x8] sm:$0xff]
  %v1284 = vsel %vm1276, %v1204, %v1282
  %v1285 = vsel %vm1277, %v1205, %v1283
  %1286 = vst [vmem:[#allocation3] sm:$0xff] %v1284
  %1287 = vst [vmem:[#allocation3 + $0x8] sm:$0xff] %v1285
  %v1288 = vld [vmem:[#allocation4] sm:$0xff]
  %v1289 = vld [vmem:[#allocation4 + $0x8] sm:$0xff]
  %v1290 = vsel %vm1266, 1, 0
  %v1291 = vsel %vm1267, 1, 0
  %1292 = vset.pattern.permute.xlu0 0
  %1293 = vperm.xlu0 %1292, %v1290
  %v1294 = vpop.permute.xlu0 %1293
  %1295 = vset.pattern.permute.xlu0 0
  %1296 = vperm.xlu0 %1295, %v1291
  %v1297 = vpop.permute.xlu0 %1296
  %vm1298 = vcmp.eq.s32.totalorder %v1294, 1
  %vm1299 = vcmp.eq.s32.totalorder %v1297, 1
  %v1300 = vsel %vm1298, %v1258, %v1288
  %v1301 = vsel %vm1299, %v1259, %v1289
  %1302 = vst [vmem:[#allocation4] sm:$0xff] %v1300
  %1303 = vst [vmem:[#allocation4 + $0x8] sm:$0xff] %v1301
  %v1304 = vld [vmem:[#allocation5] sm:$0xff]
  %v1305 = vld [vmem:[#allocation5 + $0x8] sm:$0xff]
  %v1306 = vsel %vm1298, %v1254, %v1304
  %v1307 = vsel %vm1299, %v1255, %v1305
  %1308 = vst [vmem:[#allocation5] sm:$0xff] %v1306
  %1309 = vst [vmem:[#allocation5 + $0x8] sm:$0xff] %v1307
  %v1310 = vsel %vm1276, %v1208, 0.0
  %v1311 = vsel %vm1277, %v1209, 0.0
  %v1312 = vpack.c.bf16 %v1311, %v1310
  %v1314 = vunpack.c.l.b16 %v1312
  %v1315 = vunpack.c.h.b16 %v1312
  %v1316 = vpack.c.b16 %v1314, %v1314
  %v1317 = vpack.c.b16 %v1315, %v1315
  %s1320 = scalar_lea.vmem %s7, 8
  %1321 = vst [vmem:[%s1320] sm:$0xf] %v1316
  %1322 = vst [vmem:[%s1320 + $0x4] sm:$0xf] %v1317
  %v1323 = vsel %vm1298, %v1258, 0.0
  %v1324 = vsel %vm1299, %v1259, 0.0
  %v1325 = vpack.c.bf16 %v1324, %v1323
  %v1327 = vunpack.c.l.b16 %v1325
  %v1328 = vunpack.c.h.b16 %v1325
  %v1329 = vpack.c.b16 %v1327, %v1327
  %v1330 = vpack.c.b16 %v1328, %v1328
  %s1333 = scalar_lea.vmem %s66, 48
  %1334 = vst [vmem:[%s1333] sm:$0xf] %v1329
  %1335 = vst [vmem:[%s1333 + $0x4] sm:$0xf] %v1330
  %s1336 = scalar_lea.vmem %s1, 64
  %v1337 = vld [vmem:[%s1336] sm:$0xff]
  %v1338 = vld [vmem:[%s1336 + $0x8] sm:$0xff]
  %v1339 = vld [vmem:[%s1336 + $0x10] sm:$0xff]
  %v1340 = vld [vmem:[%s1336 + $0x18] sm:$0xff]
  %v1341 = vunpack.c.l.bf16 %v1337
  %v1342 = vunpack.c.h.bf16 %v1337
  %v1343 = vunpack.c.l.bf16 %v1338
  %v1344 = vunpack.c.h.bf16 %v1338
  %v1345 = vunpack.c.l.bf16 %v1339
  %v1346 = vunpack.c.h.bf16 %v1339
  %v1347 = vunpack.c.l.bf16 %v1340
  %v1348 = vunpack.c.h.bf16 %v1340
  %v1349 = vadd.f32 %v1341, %v169
  %v1350 = vadd.f32 %v1342, %v173
  %v1351 = vadd.f32 %v1343, %v177
  %v1352 = vadd.f32 %v1344, %v181
  %v1353 = vadd.f32 %v1345, %v169
  %v1354 = vadd.f32 %v1346, %v173
  %v1355 = vadd.f32 %v1347, %v177
  %v1356 = vadd.f32 %v1348, %v181
  %v1357 = vld [vmem:[#allocation2] sm:$0xff]
  %v1358 = vld [vmem:[#allocation2 + $0x8] sm:$0xff]
  %v1359 = vpack.c.bf16 %v1358, %v1357
  %1360 = vmatprep.subr.bf16.mxu0 %v294
  %1361 = vmatpush1.bf16.msra.mxu0 %v293
  %1362 = vmatprep.subr.bf16.mxu0 %v298
  %1363 = vmatpush1.bf16.msra.mxu0 %v297
  %1364 = vmatprep.subr.bf16.mxu0 %v302
  %1365 = vmatpush1.bf16.msra.mxu0 %v301
  %1366 = vmatprep.subr.bf16.mxu0 %v306
  %1367 = vmatpush1.bf16.msra.mxu0 %v305
  %1368 = vmatprep.subr.bf16.mxu0 %v310
  %1369 = vmatpush1.bf16.msra.mxu0 %v309
  %1370 = vmatprep.subr.bf16.mxu0 %v314
  %1371 = vmatpush1.bf16.msra.mxu0 %v313
  %1372 = vmatprep.subr.bf16.mxu0 %v318
  %1373 = vmatpush1.bf16.msra.mxu0 %v317
  %1374 = vmatprep.subr.bf16.mxu0 %v322
  %1375 = vmatpush1.bf16.msra.mxu0 %v321
  %1376 = vmatprep.subr.bf16.mxu0 0
  %1377 = vmatpush1.bf16.msra.mxu0 0
  %1378 = vmatprep.subr.bf16.mxu0 0
  %1379 = vmatpush1.bf16.msra.mxu0 0
  %1380 = vmatprep.subr.bf16.mxu0 0
  %1381 = vmatpush1.bf16.msra.mxu0 0
  %1382 = vmatprep.subr.bf16.mxu0 0
  %1383 = vmatpush1.bf16.msra.mxu0 0
  %1384 = vmatprep.subr.bf16.mxu0 0
  %1385 = vmatpush1.bf16.msra.mxu0 0
  %1386 = vmatprep.subr.bf16.mxu0 0
  %1387 = vmatpush1.bf16.msra.mxu0 0
  %1388 = vmatprep.subr.bf16.mxu0 0
  %1389 = vmatpush1.bf16.msra.mxu0 0
  %1390 = vmatprep.subr.bf16.mxu0 0
  %1391 = vmatpush1.bf16.msra.mxu0 0
  %1392 = vmatprep.mubr.bf16.mxu0 0
  %1393 = vmatmul.mubr.bf16.gmra.mrb[0].mxu0 %v1359
  %v1394 = vpop.f32.mrb[0].mxu0
  %v1395 = vadd.f32 0.0, %v1394
  %v1396 = vpop.f32.mrb[0].mxu0
  %v1397 = vadd.f32 0.0, %v1396
  %v1398 = vpop.f32.mrb[0].mxu0
  %v1399 = vadd.f32 0.0, %v1398
  %v1400 = vpop.f32.mrb[0].mxu0
  %v1401 = vadd.f32 0.0, %v1400
  %1402 = vdwg.mxu0
  %1403 = vmatprep.subr.bf16.mxu0 %v296
  %1404 = vmatpush1.bf16.msra.mxu0 %v295
  %1405 = vmatprep.subr.bf16.mxu0 %v300
  %1406 = vmatpush1.bf16.msra.mxu0 %v299
  %1407 = vmatprep.subr.bf16.mxu0 %v304
  %1408 = vmatpush1.bf16.msra.mxu0 %v303
  %1409 = vmatprep.subr.bf16.mxu0 %v308
  %1410 = vmatpush1.bf16.msra.mxu0 %v307
  %1411 = vmatprep.subr.bf16.mxu0 %v312
  %1412 = vmatpush1.bf16.msra.mxu0 %v311
  %1413 = vmatprep.subr.bf16.mxu0 %v316
  %1414 = vmatpush1.bf16.msra.mxu0 %v315
  %1415 = vmatprep.subr.bf16.mxu0 %v320
  %1416 = vmatpush1.bf16.msra.mxu0 %v319
  %1417 = vmatprep.subr.bf16.mxu0 %v324
  %1418 = vmatpush1.bf16.msra.mxu0 %v323
  %1419 = vmatprep.subr.bf16.mxu0 0
  %1420 = vmatpush1.bf16.msra.mxu0 0
  %1421 = vmatprep.subr.bf16.mxu0 0
  %1422 = vmatpush1.bf16.msra.mxu0 0
  %1423 = vmatprep.subr.bf16.mxu0 0
  %1424 = vmatpush1.bf16.msra.mxu0 0
  %1425 = vmatprep.subr.bf16.mxu0 0
  %1426 = vmatpush1.bf16.msra.mxu0 0
  %1427 = vmatprep.subr.bf16.mxu0 0
  %1428 = vmatpush1.bf16.msra.mxu0 0
  %1429 = vmatprep.subr.bf16.mxu0 0
  %1430 = vmatpush1.bf16.msra.mxu0 0
  %1431 = vmatprep.subr.bf16.mxu0 0
  %1432 = vmatpush1.bf16.msra.mxu0 0
  %1433 = vmatprep.subr.bf16.mxu0 0
  %1434 = vmatpush1.bf16.msra.mxu0 0
  %1435 = vmatprep.mubr.bf16.mxu0 0
  %1436 = vmatmul.mubr.bf16.gmra.mrb[0].mxu0 %v1359
  %v1437 = vpop.f32.mrb[0].mxu0
  %v1438 = vadd.f32 0.0, %v1437
  %v1439 = vpop.f32.mrb[0].mxu0
  %v1440 = vadd.f32 0.0, %v1439
  %v1441 = vpop.f32.mrb[0].mxu0
  %v1442 = vadd.f32 0.0, %v1441
  %v1443 = vpop.f32.mrb[0].mxu0
  %v1444 = vadd.f32 0.0, %v1443
  %1445 = vdwg.mxu0
  %v1446 = vadd.f32 %v1349, %v1395
  %v1447 = vadd.f32 %v1350, %v1397
  %v1448 = vadd.f32 %v1351, %v1438
  %v1449 = vadd.f32 %v1352, %v1440
  %v1450 = vadd.f32 %v1353, %v1399
  %v1451 = vadd.f32 %v1354, %v1401
  %v1452 = vadd.f32 %v1355, %v1442
  %v1453 = vadd.f32 %v1356, %v1444
  %s1454 = scalar_lea.vmem %s57, 160
  %v1455 = vld [vmem:[%s1454] sm:$0xff]
  %v1456 = vld [vmem:[%s1454 + $0x8] sm:$0xff]
  %v1457 = vld [vmem:[%s1454 + $0x10] sm:$0xff]
  %v1458 = vld [vmem:[%s1454 + $0x18] sm:$0xff]
  %v1459 = vunpack.c.l.bf16 %v1455
  %v1460 = vunpack.c.h.bf16 %v1455
  %v1461 = vunpack.c.l.bf16 %v1456
  %v1462 = vunpack.c.h.bf16 %v1456
  %v1463 = vunpack.c.l.bf16 %v1457
  %v1464 = vunpack.c.h.bf16 %v1457
  %v1465 = vunpack.c.l.bf16 %v1458
  %v1466 = vunpack.c.h.bf16 %v1458
  %v1467 = vadd.f32 %v1459, %v468
  %v1468 = vadd.f32 %v1460, %v472
  %v1469 = vadd.f32 %v1461, %v476
  %v1470 = vadd.f32 %v1462, %v480
  %v1471 = vadd.f32 %v1463, %v468
  %v1472 = vadd.f32 %v1464, %v472
  %v1473 = vadd.f32 %v1465, %v476
  %v1474 = vadd.f32 %v1466, %v480
  %v1475 = vld [vmem:[#allocation4] sm:$0xff]
  %v1476 = vld [vmem:[#allocation4 + $0x8] sm:$0xff]
  %v1477 = vpack.c.bf16 %v1476, %v1475
  %1478 = vmatprep.subr.bf16.mxu0 %v593
  %1479 = vmatpush1.bf16.msra.mxu0 %v592
  %1480 = vmatprep.subr.bf16.mxu0 %v597
  %1481 = vmatpush1.bf16.msra.mxu0 %v596
  %1482 = vmatprep.subr.bf16.mxu0 %v601
  %1483 = vmatpush1.bf16.msra.mxu0 %v600
  %1484 = vmatprep.subr.bf16.mxu0 %v605
  %1485 = vmatpush1.bf16.msra.mxu0 %v604
  %1486 = vmatprep.subr.bf16.mxu0 %v609
  %1487 = vmatpush1.bf16.msra.mxu0 %v608
  %1488 = vmatprep.subr.bf16.mxu0 %v613
  %1489 = vmatpush1.bf16.msra.mxu0 %v612
  %1490 = vmatprep.subr.bf16.mxu0 %v617
  %1491 = vmatpush1.bf16.msra.mxu0 %v616
  %1492 = vmatprep.subr.bf16.mxu0 %v621
  %1493 = vmatpush1.bf16.msra.mxu0 %v620
  %1494 = vmatprep.subr.bf16.mxu0 0
  %1495 = vmatpush1.bf16.msra.mxu0 0
  %1496 = vmatprep.subr.bf16.mxu0 0
  %1497 = vmatpush1.bf16.msra.mxu0 0
  %1498 = vmatprep.subr.bf16.mxu0 0
  %1499 = vmatpush1.bf16.msra.mxu0 0
  %1500 = vmatprep.subr.bf16.mxu0 0
  %1501 = vmatpush1.bf16.msra.mxu0 0
  %1502 = vmatprep.subr.bf16.mxu0 0
  %1503 = vmatpush1.bf16.msra.mxu0 0
  %1504 = vmatprep.subr.bf16.mxu0 0
  %1505 = vmatpush1.bf16.msra.mxu0 0
  %1506 = vmatprep.subr.bf16.mxu0 0
  %1507 = vmatpush1.bf16.msra.mxu0 0
  %1508 = vmatprep.subr.bf16.mxu0 0
  %1509 = vmatpush1.bf16.msra.mxu0 0
  %1510 = vmatprep.mubr.bf16.mxu0 0
  %1511 = vmatmul.mubr.bf16.gmra.mrb[0].mxu0 %v1477
  %v1512 = vpop.f32.mrb[0].mxu0
  %v1513 = vadd.f32 0.0, %v1512
  %v1514 = vpop.f32.mrb[0].mxu0
  %v1515 = vadd.f32 0.0, %v1514
  %v1516 = vpop.f32.mrb[0].mxu0
  %v1517 = vadd.f32 0.0, %v1516
  %v1518 = vpop.f32.mrb[0].mxu0
  %v1519 = vadd.f32 0.0, %v1518
  %1520 = vdwg.mxu0
  %1521 = vmatprep.subr.bf16.mxu0 %v595
  %1522 = vmatpush1.bf16.msra.mxu0 %v594
  %1523 = vmatprep.subr.bf16.mxu0 %v599
  %1524 = vmatpush1.bf16.msra.mxu0 %v598
  %1525 = vmatprep.subr.bf16.mxu0 %v603
  %1526 = vmatpush1.bf16.msra.mxu0 %v602
  %1527 = vmatprep.subr.bf16.mxu0 %v607
  %1528 = vmatpush1.bf16.msra.mxu0 %v606
  %1529 = vmatprep.subr.bf16.mxu0 %v611
  %1530 = vmatpush1.bf16.msra.mxu0 %v610
  %1531 = vmatprep.subr.bf16.mxu0 %v615
  %1532 = vmatpush1.bf16.msra.mxu0 %v614
  %1533 = vmatprep.subr.bf16.mxu0 %v619
  %1534 = vmatpush1.bf16.msra.mxu0 %v618
  %1535 = vmatprep.subr.bf16.mxu0 %v623
  %1536 = vmatpush1.bf16.msra.mxu0 %v622
  %1537 = vmatprep.subr.bf16.mxu0 0
  %1538 = vmatpush1.bf16.msra.mxu0 0
  %1539 = vmatprep.subr.bf16.mxu0 0
  %1540 = vmatpush1.bf16.msra.mxu0 0
  %1541 = vmatprep.subr.bf16.mxu0 0
  %1542 = vmatpush1.bf16.msra.mxu0 0
  %1543 = vmatprep.subr.bf16.mxu0 0
  %1544 = vmatpush1.bf16.msra.mxu0 0
  %1545 = vmatprep.subr.bf16.mxu0 0
  %1546 = vmatpush1.bf16.msra.mxu0 0
  %1547 = vmatprep.subr.bf16.mxu0 0
  %1548 = vmatpush1.bf16.msra.mxu0 0
  %1549 = vmatprep.subr.bf16.mxu0 0
  %1550 = vmatpush1.bf16.msra.mxu0 0
  %1551 = vmatprep.subr.bf16.mxu0 0
  %1552 = vmatpush1.bf16.msra.mxu0 0
  %1553 = vmatprep.mubr.bf16.mxu0 0
  %1554 = vmatmul.mubr.bf16.gmra.mrb[0].mxu0 %v1477
  %v1555 = vpop.f32.mrb[0].mxu0
  %v1556 = vadd.f32 0.0, %v1555
  %v1557 = vpop.f32.mrb[0].mxu0
  %v1558 = vadd.f32 0.0, %v1557
  %v1559 = vpop.f32.mrb[0].mxu0
  %v1560 = vadd.f32 0.0, %v1559
  %v1561 = vpop.f32.mrb[0].mxu0
  %v1562 = vadd.f32 0.0, %v1561
  %1563 = vdwg.mxu0
  %v1564 = vadd.f32 %v1467, %v1513
  %v1565 = vadd.f32 %v1468, %v1515
  %v1566 = vadd.f32 %v1469, %v1556
  %v1567 = vadd.f32 %v1470, %v1558
  %v1568 = vadd.f32 %v1471, %v1517
  %v1569 = vadd.f32 %v1472, %v1519
  %v1570 = vadd.f32 %v1473, %v1560
  %v1571 = vadd.f32 %v1474, %v1562
  %v1572 = vld [vmem:[#allocation3] sm:$0xff]
  %v1573 = vld [vmem:[#allocation3 + $0x8] sm:$0xff]
  %v1574 = vxor.u32 %v1446, 2147483648
  %v1575 = vxor.u32 %v1447, 2147483648
  %v1576 = vxor.u32 %v1448, 2147483648
  %v1577 = vxor.u32 %v1450, 2147483648
  %v1578 = vxor.u32 %v1451, 2147483648
  %v1579 = vxor.u32 %v1452, 2147483648
  %v1580 = vmul.f32 %v1574, 1.442695
  %v1581 = vpow.pop %v1580
  %v1582 = vmul.f32 %v1575, 1.442695
  %v1583 = vpow.pop %v1582
  %v1584 = vmul.f32 %v1576, 1.442695
  %v1585 = vpow.pop %v1584
  %v1586 = vmul.f32 %v1577, 1.442695
  %v1587 = vpow.pop %v1586
  %v1588 = vmul.f32 %v1578, 1.442695
  %v1589 = vpow.pop %v1588
  %v1590 = vmul.f32 %v1579, 1.442695
  %v1591 = vpow.pop %v1590
  %v1592 = vadd.f32 %v1581, 1.0
  %v1593 = vadd.f32 %v1583, 1.0
  %v1594 = vadd.f32 %v1585, 1.0
  %v1595 = vadd.f32 %v1587, 1.0
  %v1596 = vadd.f32 %v1589, 1.0
  %v1597 = vadd.f32 %v1591, 1.0
  %v1598 = vrcp.pop %v1592
  %v1599 = vmul.f32 1.0, %v1598
  %v1600 = vrcp.pop %v1593
  %v1601 = vmul.f32 1.0, %v1600
  %v1602 = vrcp.pop %v1594
  %v1603 = vmul.f32 1.0, %v1602
  %v1604 = vrcp.pop %v1595
  %v1605 = vmul.f32 1.0, %v1604
  %v1606 = vrcp.pop %v1596
  %v1607 = vmul.f32 1.0, %v1606
  %v1608 = vrcp.pop %v1597
  %v1609 = vmul.f32 1.0, %v1608
  %v1610 = vtanh.pop %v1449
  %v1611 = vtanh.pop %v1453
  %v1612 = vmul.f32 %v1601, %v1572
  %v1613 = vmul.f32 %v1607, %v1573
  %v1614 = vmul.f32 %v1599, %v1610
  %v1615 = vmul.f32 %v1605, %v1611
  %v1616 = vadd.f32 %v1612, %v1614
  %v1617 = vadd.f32 %v1613, %v1615
  %v1618 = vtanh.pop %v1616
  %v1619 = vtanh.pop %v1617
  %v1620 = vmul.f32 %v1603, %v1618
  %v1621 = vmul.f32 %v1609, %v1619
  %v1622 = vld [vmem:[#allocation5] sm:$0xff]
  %v1623 = vld [vmem:[#allocation5 + $0x8] sm:$0xff]
  %v1624 = vxor.u32 %v1564, 2147483648
  %v1625 = vxor.u32 %v1565, 2147483648
  %v1626 = vxor.u32 %v1566, 2147483648
  %v1627 = vxor.u32 %v1568, 2147483648
  %v1628 = vxor.u32 %v1569, 2147483648
  %v1629 = vxor.u32 %v1570, 2147483648
  %v1630 = vmul.f32 %v1624, 1.442695
  %v1631 = vpow.pop %v1630
  %v1632 = vmul.f32 %v1625, 1.442695
  %v1633 = vpow.pop %v1632
  %v1634 = vmul.f32 %v1626, 1.442695
  %v1635 = vpow.pop %v1634
  %v1636 = vmul.f32 %v1627, 1.442695
  %v1637 = vpow.pop %v1636
  %v1638 = vmul.f32 %v1628, 1.442695
  %v1639 = vpow.pop %v1638
  %v1640 = vmul.f32 %v1629, 1.442695
  %v1641 = vpow.pop %v1640
  %v1642 = vadd.f32 %v1631, 1.0
  %v1643 = vadd.f32 %v1633, 1.0
  %v1644 = vadd.f32 %v1635, 1.0
  %v1645 = vadd.f32 %v1637, 1.0
  %v1646 = vadd.f32 %v1639, 1.0
  %v1647 = vadd.f32 %v1641, 1.0
  %v1648 = vrcp.pop %v1642
  %v1649 = vmul.f32 1.0, %v1648
  %v1650 = vrcp.pop %v1643
  %v1651 = vmul.f32 1.0, %v1650
  %v1652 = vrcp.pop %v1644
  %v1653 = vmul.f32 1.0, %v1652
  %v1654 = vrcp.pop %v1645
  %v1655 = vmul.f32 1.0, %v1654
  %v1656 = vrcp.pop %v1646
  %v1657 = vmul.f32 1.0, %v1656
  %v1658 = vrcp.pop %v1647
  %v1659 = vmul.f32 1.0, %v1658
  %v1660 = vtanh.pop %v1567
  %v1661 = vtanh.pop %v1571
  %v1662 = vmul.f32 %v1651, %v1622
  %v1663 = vmul.f32 %v1657, %v1623
  %v1664 = vmul.f32 %v1649, %v1660
  %v1665 = vmul.f32 %v1655, %v1661
  %v1666 = vadd.f32 %v1662, %v1664
  %v1667 = vadd.f32 %v1663, %v1665
  %v1668 = vtanh.pop %v1666
  %v1669 = vtanh.pop %v1667
  %v1670 = vmul.f32 %v1653, %v1668
  %v1671 = vmul.f32 %v1659, %v1669
  %s1672 = sadd.s32 %s150, 2
  %v1673 = vstv %s1672
  %vm1674 = vcmp.lt.s32.totalorder %v1673, %v82
  %vm1675 = vcmp.lt.s32.totalorder %v1673, %v83
  %s1676 = sadd.s32 %s152, 5
  %v1677 = vstv %s1676
  %vm1678 = vcmp.lt.s32.totalorder %v1677, %v82
  %vm1679 = vcmp.lt.s32.totalorder %v1677, %v83
  %v1680 = vsel %vm1674, 1, 0
  %v1681 = vsel %vm1675, 1, 0
  %1682 = vset.pattern.permute.xlu0 0
  %1683 = vperm.xlu0 %1682, %v1680
  %v1684 = vpop.permute.xlu0 %1683
  %1685 = vset.pattern.permute.xlu0 0
  %1686 = vperm.xlu0 %1685, %v1681
  %v1687 = vpop.permute.xlu0 %1686
  %vm1688 = vcmp.eq.s32.totalorder %v1684, 1
  %vm1689 = vcmp.eq.s32.totalorder %v1687, 1
  %v1690 = vsel %vm1688, %v1620, %v1357
  %v1691 = vsel %vm1689, %v1621, %v1358
  %1692 = vst [vmem:[#allocation2] sm:$0xff] %v1690
  %1693 = vst [vmem:[#allocation2 + $0x8] sm:$0xff] %v1691
  %v1694 = vld [vmem:[#allocation3] sm:$0xff]
  %v1695 = vld [vmem:[#allocation3 + $0x8] sm:$0xff]
  %v1696 = vsel %vm1688, %v1616, %v1694
  %v1697 = vsel %vm1689, %v1617, %v1695
  %1698 = vst [vmem:[#allocation3] sm:$0xff] %v1696
  %1699 = vst [vmem:[#allocation3 + $0x8] sm:$0xff] %v1697
  %v1700 = vld [vmem:[#allocation4] sm:$0xff]
  %v1701 = vld [vmem:[#allocation4 + $0x8] sm:$0xff]
  %v1702 = vsel %vm1678, 1, 0
  %v1703 = vsel %vm1679, 1, 0
  %1704 = vset.pattern.permute.xlu0 0
  %1705 = vperm.xlu0 %1704, %v1702
  %v1706 = vpop.permute.xlu0 %1705
  %1707 = vset.pattern.permute.xlu0 0
  %1708 = vperm.xlu0 %1707, %v1703
  %v1709 = vpop.permute.xlu0 %1708
  %vm1710 = vcmp.eq.s32.totalorder %v1706, 1
  %vm1711 = vcmp.eq.s32.totalorder %v1709, 1
  %v1712 = vsel %vm1710, %v1670, %v1700
  %v1713 = vsel %vm1711, %v1671, %v1701
  %1714 = vst [vmem:[#allocation4] sm:$0xff] %v1712
  %1715 = vst [vmem:[#allocation4 + $0x8] sm:$0xff] %v1713
  %v1716 = vld [vmem:[#allocation5] sm:$0xff]
  %v1717 = vld [vmem:[#allocation5 + $0x8] sm:$0xff]
  %v1718 = vsel %vm1710, %v1666, %v1716
  %v1719 = vsel %vm1711, %v1667, %v1717
  %1720 = vst [vmem:[#allocation5] sm:$0xff] %v1718
  %1721 = vst [vmem:[#allocation5 + $0x8] sm:$0xff] %v1719
  %v1722 = vsel %vm1688, %v1620, 0.0
  %v1723 = vsel %vm1689, %v1621, 0.0
  %v1724 = vpack.c.bf16 %v1723, %v1722
  %v1726 = vunpack.c.l.b16 %v1724
  %v1727 = vunpack.c.h.b16 %v1724
  %v1728 = vpack.c.b16 %v1726, %v1726
  %v1729 = vpack.c.b16 %v1727, %v1727
  %s1732 = scalar_lea.vmem %s7, 16
  %1733 = vst [vmem:[%s1732] sm:$0xf] %v1728
  %1734 = vst [vmem:[%s1732 + $0x4] sm:$0xf] %v1729
  %v1735 = vsel %vm1710, %v1670, 0.0
  %v1736 = vsel %vm1711, %v1671, 0.0
  %v1737 = vpack.c.bf16 %v1736, %v1735
  %v1739 = vunpack.c.l.b16 %v1737
  %v1740 = vunpack.c.h.b16 %v1737
  %v1741 = vpack.c.b16 %v1739, %v1739
  %v1742 = vpack.c.b16 %v1740, %v1740
  %s1745 = scalar_lea.vmem %s66, 40
  %1746 = vst [vmem:[%s1745] sm:$0xf] %v1741
  %1747 = vst [vmem:[%s1745 + $0x4] sm:$0xf] %v1742
  %s1748 = scalar_lea.vmem %s1, 96
  %v1749 = vld [vmem:[%s1748] sm:$0xff]
  %v1750 = vld [vmem:[%s1748 + $0x8] sm:$0xff]
  %v1751 = vld [vmem:[%s1748 + $0x10] sm:$0xff]
  %v1752 = vld [vmem:[%s1748 + $0x18] sm:$0xff]
  %v1753 = vunpack.c.l.bf16 %v1749
  %v1754 = vunpack.c.h.bf16 %v1749
  %v1755 = vunpack.c.l.bf16 %v1750
  %v1756 = vunpack.c.h.bf16 %v1750
  %v1757 = vunpack.c.l.bf16 %v1751
  %v1758 = vunpack.c.h.bf16 %v1751
  %v1759 = vunpack.c.l.bf16 %v1752
  %v1760 = vunpack.c.h.bf16 %v1752
  %v1761 = vadd.f32 %v1753, %v169
  %v1762 = vadd.f32 %v1754, %v173
  %v1763 = vadd.f32 %v1755, %v177
  %v1764 = vadd.f32 %v1756, %v181
  %v1765 = vadd.f32 %v1757, %v169
  %v1766 = vadd.f32 %v1758, %v173
  %v1767 = vadd.f32 %v1759, %v177
  %v1768 = vadd.f32 %v1760, %v181
  %v1769 = vld [vmem:[#allocation2] sm:$0xff]
  %v1770 = vld [vmem:[#allocation2 + $0x8] sm:$0xff]
  %v1771 = vpack.c.bf16 %v1770, %v1769
  %1772 = vmatprep.subr.bf16.mxu0 %v294
  %1773 = vmatpush1.bf16.msra.mxu0 %v293
  %1774 = vmatprep.subr.bf16.mxu0 %v298
  %1775 = vmatpush1.bf16.msra.mxu0 %v297
  %1776 = vmatprep.subr.bf16.mxu0 %v302
  %1777 = vmatpush1.bf16.msra.mxu0 %v301
  %1778 = vmatprep.subr.bf16.mxu0 %v306
  %1779 = vmatpush1.bf16.msra.mxu0 %v305
  %1780 = vmatprep.subr.bf16.mxu0 %v310
  %1781 = vmatpush1.bf16.msra.mxu0 %v309
  %1782 = vmatprep.subr.bf16.mxu0 %v314
  %1783 = vmatpush1.bf16.msra.mxu0 %v313
  %1784 = vmatprep.subr.bf16.mxu0 %v318
  %1785 = vmatpush1.bf16.msra.mxu0 %v317
  %1786 = vmatprep.subr.bf16.mxu0 %v322
  %1787 = vmatpush1.bf16.msra.mxu0 %v321
  %1788 = vmatprep.subr.bf16.mxu0 0
  %1789 = vmatpush1.bf16.msra.mxu0 0
  %1790 = vmatprep.subr.bf16.mxu0 0
  %1791 = vmatpush1.bf16.msra.mxu0 0
  %1792 = vmatprep.subr.bf16.mxu0 0
  %1793 = vmatpush1.bf16.msra.mxu0 0
  %1794 = vmatprep.subr.bf16.mxu0 0
  %1795 = vmatpush1.bf16.msra.mxu0 0
  %1796 = vmatprep.subr.bf16.mxu0 0
  %1797 = vmatpush1.bf16.msra.mxu0 0
  %1798 = vmatprep.subr.bf16.mxu0 0
  %1799 = vmatpush1.bf16.msra.mxu0 0
  %1800 = vmatprep.subr.bf16.mxu0 0
  %1801 = vmatpush1.bf16.msra.mxu0 0
  %1802 = vmatprep.subr.bf16.mxu0 0
  %1803 = vmatpush1.bf16.msra.mxu0 0
  %1804 = vmatprep.mubr.bf16.mxu0 0
  %1805 = vmatmul.mubr.bf16.gmra.mrb[0].mxu0 %v1771
  %v1806 = vpop.f32.mrb[0].mxu0
  %v1807 = vadd.f32 0.0, %v1806
  %v1808 = vpop.f32.mrb[0].mxu0
  %v1809 = vadd.f32 0.0, %v1808
  %v1810 = vpop.f32.mrb[0].mxu0
  %v1811 = vadd.f32 0.0, %v1810
  %v1812 = vpop.f32.mrb[0].mxu0
  %v1813 = vadd.f32 0.0, %v1812
  %1814 = vdwg.mxu0
  %1815 = vmatprep.subr.bf16.mxu0 %v296
  %1816 = vmatpush1.bf16.msra.mxu0 %v295
  %1817 = vmatprep.subr.bf16.mxu0 %v300
  %1818 = vmatpush1.bf16.msra.mxu0 %v299
  %1819 = vmatprep.subr.bf16.mxu0 %v304
  %1820 = vmatpush1.bf16.msra.mxu0 %v303
  %1821 = vmatprep.subr.bf16.mxu0 %v308
  %1822 = vmatpush1.bf16.msra.mxu0 %v307
  %1823 = vmatprep.subr.bf16.mxu0 %v312
  %1824 = vmatpush1.bf16.msra.mxu0 %v311
  %1825 = vmatprep.subr.bf16.mxu0 %v316
  %1826 = vmatpush1.bf16.msra.mxu0 %v315
  %1827 = vmatprep.subr.bf16.mxu0 %v320
  %1828 = vmatpush1.bf16.msra.mxu0 %v319
  %1829 = vmatprep.subr.bf16.mxu0 %v324
  %1830 = vmatpush1.bf16.msra.mxu0 %v323
  %1831 = vmatprep.subr.bf16.mxu0 0
  %1832 = vmatpush1.bf16.msra.mxu0 0
  %1833 = vmatprep.subr.bf16.mxu0 0
  %1834 = vmatpush1.bf16.msra.mxu0 0
  %1835 = vmatprep.subr.bf16.mxu0 0
  %1836 = vmatpush1.bf16.msra.mxu0 0
  %1837 = vmatprep.subr.bf16.mxu0 0
  %1838 = vmatpush1.bf16.msra.mxu0 0
  %1839 = vmatprep.subr.bf16.mxu0 0
  %1840 = vmatpush1.bf16.msra.mxu0 0
  %1841 = vmatprep.subr.bf16.mxu0 0
  %1842 = vmatpush1.bf16.msra.mxu0 0
  %1843 = vmatprep.subr.bf16.mxu0 0
  %1844 = vmatpush1.bf16.msra.mxu0 0
  %1845 = vmatprep.subr.bf16.mxu0 0
  %1846 = vmatpush1.bf16.msra.mxu0 0
  %1847 = vmatprep.mubr.bf16.mxu0 0
  %1848 = vmatmul.mubr.bf16.gmra.mrb[0].mxu0 %v1771
  %v1849 = vpop.f32.mrb[0].mxu0
  %v1850 = vadd.f32 0.0, %v1849
  %v1851 = vpop.f32.mrb[0].mxu0
  %v1852 = vadd.f32 0.0, %v1851
  %v1853 = vpop.f32.mrb[0].mxu0
  %v1854 = vadd.f32 0.0, %v1853
  %v1855 = vpop.f32.mrb[0].mxu0
  %v1856 = vadd.f32 0.0, %v1855
  %1857 = vdwg.mxu0
  %v1858 = vadd.f32 %v1761, %v1807
  %v1859 = vadd.f32 %v1762, %v1809
  %v1860 = vadd.f32 %v1763, %v1850
  %v1861 = vadd.f32 %v1764, %v1852
  %v1862 = vadd.f32 %v1765, %v1811
  %v1863 = vadd.f32 %v1766, %v1813
  %v1864 = vadd.f32 %v1767, %v1854
  %v1865 = vadd.f32 %v1768, %v1856
  %s1866 = scalar_lea.vmem %s57, 128
  %v1867 = vld [vmem:[%s1866] sm:$0xff]
  %v1868 = vld [vmem:[%s1866 + $0x8] sm:$0xff]
  %v1869 = vld [vmem:[%s1866 + $0x10] sm:$0xff]
  %v1870 = vld [vmem:[%s1866 + $0x18] sm:$0xff]
  %v1871 = vunpack.c.l.bf16 %v1867
  %v1872 = vunpack.c.h.bf16 %v1867
  %v1873 = vunpack.c.l.bf16 %v1868
  %v1874 = vunpack.c.h.bf16 %v1868
  %v1875 = vunpack.c.l.bf16 %v1869
  %v1876 = vunpack.c.h.bf16 %v1869
  %v1877 = vunpack.c.l.bf16 %v1870
  %v1878 = vunpack.c.h.bf16 %v1870
  %v1879 = vadd.f32 %v1871, %v468
  %v1880 = vadd.f32 %v1872, %v472
  %v1881 = vadd.f32 %v1873, %v476
  %v1882 = vadd.f32 %v1874, %v480
  %v1883 = vadd.f32 %v1875, %v468
  %v1884 = vadd.f32 %v1876, %v472
  %v1885 = vadd.f32 %v1877, %v476
  %v1886 = vadd.f32 %v1878, %v480
  %v1887 = vld [vmem:[#allocation4] sm:$0xff]
  %v1888 = vld [vmem:[#allocation4 + $0x8] sm:$0xff]
  %v1889 = vpack.c.bf16 %v1888, %v1887
  %1890 = vmatprep.subr.bf16.mxu0 %v593
  %1891 = vmatpush1.bf16.msra.mxu0 %v592
  %1892 = vmatprep.subr.bf16.mxu0 %v597
  %1893 = vmatpush1.bf16.msra.mxu0 %v596
  %1894 = vmatprep.subr.bf16.mxu0 %v601
  %1895 = vmatpush1.bf16.msra.mxu0 %v600
  %1896 = vmatprep.subr.bf16.mxu0 %v605
  %1897 = vmatpush1.bf16.msra.mxu0 %v604
  %1898 = vmatprep.subr.bf16.mxu0 %v609
  %1899 = vmatpush1.bf16.msra.mxu0 %v608
  %1900 = vmatprep.subr.bf16.mxu0 %v613
  %1901 = vmatpush1.bf16.msra.mxu0 %v612
  %1902 = vmatprep.subr.bf16.mxu0 %v617
  %1903 = vmatpush1.bf16.msra.mxu0 %v616
  %1904 = vmatprep.subr.bf16.mxu0 %v621
  %1905 = vmatpush1.bf16.msra.mxu0 %v620
  %1906 = vmatprep.subr.bf16.mxu0 0
  %1907 = vmatpush1.bf16.msra.mxu0 0
  %1908 = vmatprep.subr.bf16.mxu0 0
  %1909 = vmatpush1.bf16.msra.mxu0 0
  %1910 = vmatprep.subr.bf16.mxu0 0
  %1911 = vmatpush1.bf16.msra.mxu0 0
  %1912 = vmatprep.subr.bf16.mxu0 0
  %1913 = vmatpush1.bf16.msra.mxu0 0
  %1914 = vmatprep.subr.bf16.mxu0 0
  %1915 = vmatpush1.bf16.msra.mxu0 0
  %1916 = vmatprep.subr.bf16.mxu0 0
  %1917 = vmatpush1.bf16.msra.mxu0 0
  %1918 = vmatprep.subr.bf16.mxu0 0
  %1919 = vmatpush1.bf16.msra.mxu0 0
  %1920 = vmatprep.subr.bf16.mxu0 0
  %1921 = vmatpush1.bf16.msra.mxu0 0
  %1922 = vmatprep.mubr.bf16.mxu0 0
  %1923 = vmatmul.mubr.bf16.gmra.mrb[0].mxu0 %v1889
  %v1924 = vpop.f32.mrb[0].mxu0
  %v1925 = vadd.f32 0.0, %v1924
  %v1926 = vpop.f32.mrb[0].mxu0
  %v1927 = vadd.f32 0.0, %v1926
  %v1928 = vpop.f32.mrb[0].mxu0
  %v1929 = vadd.f32 0.0, %v1928
  %v1930 = vpop.f32.mrb[0].mxu0
  %v1931 = vadd.f32 0.0, %v1930
  %1932 = vdwg.mxu0
  %1933 = vmatprep.subr.bf16.mxu0 %v595
  %1934 = vmatpush1.bf16.msra.mxu0 %v594
  %1935 = vmatprep.subr.bf16.mxu0 %v599
  %1936 = vmatpush1.bf16.msra.mxu0 %v598
  %1937 = vmatprep.subr.bf16.mxu0 %v603
  %1938 = vmatpush1.bf16.msra.mxu0 %v602
  %1939 = vmatprep.subr.bf16.mxu0 %v607
  %1940 = vmatpush1.bf16.msra.mxu0 %v606
  %1941 = vmatprep.subr.bf16.mxu0 %v611
  %1942 = vmatpush1.bf16.msra.mxu0 %v610
  %1943 = vmatprep.subr.bf16.mxu0 %v615
  %1944 = vmatpush1.bf16.msra.mxu0 %v614
  %1945 = vmatprep.subr.bf16.mxu0 %v619
  %1946 = vmatpush1.bf16.msra.mxu0 %v618
  %1947 = vmatprep.subr.bf16.mxu0 %v623
  %1948 = vmatpush1.bf16.msra.mxu0 %v622
  %1949 = vmatprep.subr.bf16.mxu0 0
  %1950 = vmatpush1.bf16.msra.mxu0 0
  %1951 = vmatprep.subr.bf16.mxu0 0
  %1952 = vmatpush1.bf16.msra.mxu0 0
  %1953 = vmatprep.subr.bf16.mxu0 0
  %1954 = vmatpush1.bf16.msra.mxu0 0
  %1955 = vmatprep.subr.bf16.mxu0 0
  %1956 = vmatpush1.bf16.msra.mxu0 0
  %1957 = vmatprep.subr.bf16.mxu0 0
  %1958 = vmatpush1.bf16.msra.mxu0 0
  %1959 = vmatprep.subr.bf16.mxu0 0
  %1960 = vmatpush1.bf16.msra.mxu0 0
  %1961 = vmatprep.subr.bf16.mxu0 0
  %1962 = vmatpush1.bf16.msra.mxu0 0
  %1963 = vmatprep.subr.bf16.mxu0 0
  %1964 = vmatpush1.bf16.msra.mxu0 0
  %1965 = vmatprep.mubr.bf16.mxu0 0
  %1966 = vmatmul.mubr.bf16.gmra.mrb[0].mxu0 %v1889
  %v1967 = vpop.f32.mrb[0].mxu0
  %v1968 = vadd.f32 0.0, %v1967
  %v1969 = vpop.f32.mrb[0].mxu0
  %v1970 = vadd.f32 0.0, %v1969
  %v1971 = vpop.f32.mrb[0].mxu0
  %v1972 = vadd.f32 0.0, %v1971
  %v1973 = vpop.f32.mrb[0].mxu0
  %v1974 = vadd.f32 0.0, %v1973
  %1975 = vdwg.mxu0
  %v1976 = vadd.f32 %v1879, %v1925
  %v1977 = vadd.f32 %v1880, %v1927
  %v1978 = vadd.f32 %v1881, %v1968
  %v1979 = vadd.f32 %v1882, %v1970
  %v1980 = vadd.f32 %v1883, %v1929
  %v1981 = vadd.f32 %v1884, %v1931
  %v1982 = vadd.f32 %v1885, %v1972
  %v1983 = vadd.f32 %v1886, %v1974
  %v1984 = vld [vmem:[#allocation3] sm:$0xff]
  %v1985 = vld [vmem:[#allocation3 + $0x8] sm:$0xff]
  %v1986 = vxor.u32 %v1858, 2147483648
  %v1987 = vxor.u32 %v1859, 2147483648
  %v1988 = vxor.u32 %v1860, 2147483648
  %v1989 = vxor.u32 %v1862, 2147483648
  %v1990 = vxor.u32 %v1863, 2147483648
  %v1991 = vxor.u32 %v1864, 2147483648
  %v1992 = vmul.f32 %v1986, 1.442695
  %v1993 = vpow.pop %v1992
  %v1994 = vmul.f32 %v1987, 1.442695
  %v1995 = vpow.pop %v1994
  %v1996 = vmul.f32 %v1988, 1.442695
  %v1997 = vpow.pop %v1996
  %v1998 = vmul.f32 %v1989, 1.442695
  %v1999 = vpow.pop %v1998
  %v2000 = vmul.f32 %v1990, 1.442695
  %v2001 = vpow.pop %v2000
  %v2002 = vmul.f32 %v1991, 1.442695
  %v2003 = vpow.pop %v2002
  %v2004 = vadd.f32 %v1993, 1.0
  %v2005 = vadd.f32 %v1995, 1.0
  %v2006 = vadd.f32 %v1997, 1.0
  %v2007 = vadd.f32 %v1999, 1.0
  %v2008 = vadd.f32 %v2001, 1.0
  %v2009 = vadd.f32 %v2003, 1.0
  %v2010 = vrcp.pop %v2004
  %v2011 = vmul.f32 1.0, %v2010
  %v2012 = vrcp.pop %v2005
  %v2013 = vmul.f32 1.0, %v2012
  %v2014 = vrcp.pop %v2006
  %v2015 = vmul.f32 1.0, %v2014
  %v2016 = vrcp.pop %v2007
  %v2017 = vmul.f32 1.0, %v2016
  %v2018 = vrcp.pop %v2008
  %v2019 = vmul.f32 1.0, %v2018
  %v2020 = vrcp.pop %v2009
  %v2021 = vmul.f32 1.0, %v2020
  %v2022 = vtanh.pop %v1861
  %v2023 = vtanh.pop %v1865
  %v2024 = vmul.f32 %v2013, %v1984
  %v2025 = vmul.f32 %v2019, %v1985
  %v2026 = vmul.f32 %v2011, %v2022
  %v2027 = vmul.f32 %v2017, %v2023
  %v2028 = vadd.f32 %v2024, %v2026
  %v2029 = vadd.f32 %v2025, %v2027
  %v2030 = vtanh.pop %v2028
  %v2031 = vtanh.pop %v2029
  %v2032 = vmul.f32 %v2015, %v2030
  %v2033 = vmul.f32 %v2021, %v2031
  %v2034 = vld [vmem:[#allocation5] sm:$0xff]
  %v2035 = vld [vmem:[#allocation5 + $0x8] sm:$0xff]
  %v2036 = vxor.u32 %v1976, 2147483648
  %v2037 = vxor.u32 %v1977, 2147483648
  %v2038 = vxor.u32 %v1978, 2147483648
  %v2039 = vxor.u32 %v1980, 2147483648
  %v2040 = vxor.u32 %v1981, 2147483648
  %v2041 = vxor.u32 %v1982, 2147483648
  %v2042 = vmul.f32 %v2036, 1.442695
  %v2043 = vpow.pop %v2042
  %v2044 = vmul.f32 %v2037, 1.442695
  %v2045 = vpow.pop %v2044
  %v2046 = vmul.f32 %v2038, 1.442695
  %v2047 = vpow.pop %v2046
  %v2048 = vmul.f32 %v2039, 1.442695
  %v2049 = vpow.pop %v2048
  %v2050 = vmul.f32 %v2040, 1.442695
  %v2051 = vpow.pop %v2050
  %v2052 = vmul.f32 %v2041, 1.442695
  %v2053 = vpow.pop %v2052
  %v2054 = vadd.f32 %v2043, 1.0
  %v2055 = vadd.f32 %v2045, 1.0
  %v2056 = vadd.f32 %v2047, 1.0
  %v2057 = vadd.f32 %v2049, 1.0
  %v2058 = vadd.f32 %v2051, 1.0
  %v2059 = vadd.f32 %v2053, 1.0
  %v2060 = vrcp.pop %v2054
  %v2061 = vmul.f32 1.0, %v2060
  %v2062 = vrcp.pop %v2055
  %v2063 = vmul.f32 1.0, %v2062
  %v2064 = vrcp.pop %v2056
  %v2065 = vmul.f32 1.0, %v2064
  %v2066 = vrcp.pop %v2057
  %v2067 = vmul.f32 1.0, %v2066
  %v2068 = vrcp.pop %v2058
  %v2069 = vmul.f32 1.0, %v2068
  %v2070 = vrcp.pop %v2059
  %v2071 = vmul.f32 1.0, %v2070
  %v2072 = vtanh.pop %v1979
  %v2073 = vtanh.pop %v1983
  %v2074 = vmul.f32 %v2063, %v2034
  %v2075 = vmul.f32 %v2069, %v2035
  %v2076 = vmul.f32 %v2061, %v2072
  %v2077 = vmul.f32 %v2067, %v2073
  %v2078 = vadd.f32 %v2074, %v2076
  %v2079 = vadd.f32 %v2075, %v2077
  %v2080 = vtanh.pop %v2078
  %v2081 = vtanh.pop %v2079
  %v2082 = vmul.f32 %v2065, %v2080
  %v2083 = vmul.f32 %v2071, %v2081
  %s2084 = sadd.s32 %s150, 3
  %v2085 = vstv %s2084
  %vm2086 = vcmp.lt.s32.totalorder %v2085, %v82
  %vm2087 = vcmp.lt.s32.totalorder %v2085, %v83
  %s2088 = sadd.s32 %s152, 4
  %v2089 = vstv %s2088
  %vm2090 = vcmp.lt.s32.totalorder %v2089, %v82
  %vm2091 = vcmp.lt.s32.totalorder %v2089, %v83
  %v2092 = vsel %vm2086, 1, 0
  %v2093 = vsel %vm2087, 1, 0
  %2094 = vset.pattern.permute.xlu0 0
  %2095 = vperm.xlu0 %2094, %v2092
  %v2096 = vpop.permute.xlu0 %2095
  %2097 = vset.pattern.permute.xlu0 0
  %2098 = vperm.xlu0 %2097, %v2093
  %v2099 = vpop.permute.xlu0 %2098
  %vm2100 = vcmp.eq.s32.totalorder %v2096, 1
  %vm2101 = vcmp.eq.s32.totalorder %v2099, 1
  %v2102 = vsel %vm2100, %v2032, %v1769
  %v2103 = vsel %vm2101, %v2033, %v1770
  %2104 = vst [vmem:[#allocation2] sm:$0xff] %v2102
  %2105 = vst [vmem:[#allocation2 + $0x8] sm:$0xff] %v2103
  %v2106 = vld [vmem:[#allocation3] sm:$0xff]
  %v2107 = vld [vmem:[#allocation3 + $0x8] sm:$0xff]
  %v2108 = vsel %vm2100, %v2028, %v2106
  %v2109 = vsel %vm2101, %v2029, %v2107
  %2110 = vst [vmem:[#allocation3] sm:$0xff] %v2108
  %2111 = vst [vmem:[#allocation3 + $0x8] sm:$0xff] %v2109
  %v2112 = vld [vmem:[#allocation4] sm:$0xff]
  %v2113 = vld [vmem:[#allocation4 + $0x8] sm:$0xff]
  %v2114 = vsel %vm2090, 1, 0
  %v2115 = vsel %vm2091, 1, 0
  %2116 = vset.pattern.permute.xlu0 0
  %2117 = vperm.xlu0 %2116, %v2114
  %v2118 = vpop.permute.xlu0 %2117
  %2119 = vset.pattern.permute.xlu0 0
  %2120 = vperm.xlu0 %2119, %v2115
  %v2121 = vpop.permute.xlu0 %2120
  %vm2122 = vcmp.eq.s32.totalorder %v2118, 1
  %vm2123 = vcmp.eq.s32.totalorder %v2121, 1
  %v2124 = vsel %vm2122, %v2082, %v2112
  %v2125 = vsel %vm2123, %v2083, %v2113
  %2126 = vst [vmem:[#allocation4] sm:$0xff] %v2124
  %2127 = vst [vmem:[#allocation4 + $0x8] sm:$0xff] %v2125
  %v2128 = vld [vmem:[#allocation5] sm:$0xff]
  %v2129 = vld [vmem:[#allocation5 + $0x8] sm:$0xff]
  %v2130 = vsel %vm2122, %v2078, %v2128
  %v2131 = vsel %vm2123, %v2079, %v2129
  %2132 = vst [vmem:[#allocation5] sm:$0xff] %v2130
  %2133 = vst [vmem:[#allocation5 + $0x8] sm:$0xff] %v2131
  %v2134 = vsel %vm2100, %v2032, 0.0
  %v2135 = vsel %vm2101, %v2033, 0.0
  %v2136 = vpack.c.bf16 %v2135, %v2134
  %v2138 = vunpack.c.l.b16 %v2136
  %v2139 = vunpack.c.h.b16 %v2136
  %v2140 = vpack.c.b16 %v2138, %v2138
  %v2141 = vpack.c.b16 %v2139, %v2139
  %s2144 = scalar_lea.vmem %s7, 24
  %2145 = vst [vmem:[%s2144] sm:$0xf] %v2140
  %2146 = vst [vmem:[%s2144 + $0x4] sm:$0xf] %v2141
  %v2147 = vsel %vm2122, %v2082, 0.0
  %v2148 = vsel %vm2123, %v2083, 0.0
  %v2149 = vpack.c.bf16 %v2148, %v2147
  %v2151 = vunpack.c.l.b16 %v2149
  %v2152 = vunpack.c.h.b16 %v2149
  %v2153 = vpack.c.b16 %v2151, %v2151
  %v2154 = vpack.c.b16 %v2152, %v2152
  %s2157 = scalar_lea.vmem %s66, 32
  %2158 = vst [vmem:[%s2157] sm:$0xf] %v2153
  %2159 = vst [vmem:[%s2157 + $0x4] sm:$0xf] %v2154
  %s2160 = scalar_lea.vmem %s1, 128
  %v2161 = vld [vmem:[%s2160] sm:$0xff]
  %v2162 = vld [vmem:[%s2160 + $0x8] sm:$0xff]
  %v2163 = vld [vmem:[%s2160 + $0x10] sm:$0xff]
  %v2164 = vld [vmem:[%s2160 + $0x18] sm:$0xff]
  %v2165 = vunpack.c.l.bf16 %v2161
  %v2166 = vunpack.c.h.bf16 %v2161
  %v2167 = vunpack.c.l.bf16 %v2162
  %v2168 = vunpack.c.h.bf16 %v2162
  %v2169 = vunpack.c.l.bf16 %v2163
  %v2170 = vunpack.c.h.bf16 %v2163
  %v2171 = vunpack.c.l.bf16 %v2164
  %v2172 = vunpack.c.h.bf16 %v2164
  %v2173 = vadd.f32 %v2165, %v169
  %v2174 = vadd.f32 %v2166, %v173
  %v2175 = vadd.f32 %v2167, %v177
  %v2176 = vadd.f32 %v2168, %v181
  %v2177 = vadd.f32 %v2169, %v169
  %v2178 = vadd.f32 %v2170, %v173
  %v2179 = vadd.f32 %v2171, %v177
  %v2180 = vadd.f32 %v2172, %v181
  %v2181 = vld [vmem:[#allocation2] sm:$0xff]
  %v2182 = vld [vmem:[#allocation2 + $0x8] sm:$0xff]
  %v2183 = vpack.c.bf16 %v2182, %v2181
  %2184 = vmatprep.subr.bf16.mxu0 %v294
  %2185 = vmatpush1.bf16.msra.mxu0 %v293
  %2186 = vmatprep.subr.bf16.mxu0 %v298
  %2187 = vmatpush1.bf16.msra.mxu0 %v297
  %2188 = vmatprep.subr.bf16.mxu0 %v302
  %2189 = vmatpush1.bf16.msra.mxu0 %v301
  %2190 = vmatprep.subr.bf16.mxu0 %v306
  %2191 = vmatpush1.bf16.msra.mxu0 %v305
  %2192 = vmatprep.subr.bf16.mxu0 %v310
  %2193 = vmatpush1.bf16.msra.mxu0 %v309
  %2194 = vmatprep.subr.bf16.mxu0 %v314
  %2195 = vmatpush1.bf16.msra.mxu0 %v313
  %2196 = vmatprep.subr.bf16.mxu0 %v318
  %2197 = vmatpush1.bf16.msra.mxu0 %v317
  %2198 = vmatprep.subr.bf16.mxu0 %v322
  %2199 = vmatpush1.bf16.msra.mxu0 %v321
  %2200 = vmatprep.subr.bf16.mxu0 0
  %2201 = vmatpush1.bf16.msra.mxu0 0
  %2202 = vmatprep.subr.bf16.mxu0 0
  %2203 = vmatpush1.bf16.msra.mxu0 0
  %2204 = vmatprep.subr.bf16.mxu0 0
  %2205 = vmatpush1.bf16.msra.mxu0 0
  %2206 = vmatprep.subr.bf16.mxu0 0
  %2207 = vmatpush1.bf16.msra.mxu0 0
  %2208 = vmatprep.subr.bf16.mxu0 0
  %2209 = vmatpush1.bf16.msra.mxu0 0
  %2210 = vmatprep.subr.bf16.mxu0 0
  %2211 = vmatpush1.bf16.msra.mxu0 0
  %2212 = vmatprep.subr.bf16.mxu0 0
  %2213 = vmatpush1.bf16.msra.mxu0 0
  %2214 = vmatprep.subr.bf16.mxu0 0
  %2215 = vmatpush1.bf16.msra.mxu0 0
  %2216 = vmatprep.mubr.bf16.mxu0 0
  %2217 = vmatmul.mubr.bf16.gmra.mrb[0].mxu0 %v2183
  %v2218 = vpop.f32.mrb[0].mxu0
  %v2219 = vadd.f32 0.0, %v2218
  %v2220 = vpop.f32.mrb[0].mxu0
  %v2221 = vadd.f32 0.0, %v2220
  %v2222 = vpop.f32.mrb[0].mxu0
  %v2223 = vadd.f32 0.0, %v2222
  %v2224 = vpop.f32.mrb[0].mxu0
  %v2225 = vadd.f32 0.0, %v2224
  %2226 = vdwg.mxu0
  %2227 = vmatprep.subr.bf16.mxu0 %v296
  %2228 = vmatpush1.bf16.msra.mxu0 %v295
  %2229 = vmatprep.subr.bf16.mxu0 %v300
  %2230 = vmatpush1.bf16.msra.mxu0 %v299
  %2231 = vmatprep.subr.bf16.mxu0 %v304
  %2232 = vmatpush1.bf16.msra.mxu0 %v303
  %2233 = vmatprep.subr.bf16.mxu0 %v308
  %2234 = vmatpush1.bf16.msra.mxu0 %v307
  %2235 = vmatprep.subr.bf16.mxu0 %v312
  %2236 = vmatpush1.bf16.msra.mxu0 %v311
  %2237 = vmatprep.subr.bf16.mxu0 %v316
  %2238 = vmatpush1.bf16.msra.mxu0 %v315
  %2239 = vmatprep.subr.bf16.mxu0 %v320
  %2240 = vmatpush1.bf16.msra.mxu0 %v319
  %2241 = vmatprep.subr.bf16.mxu0 %v324
  %2242 = vmatpush1.bf16.msra.mxu0 %v323
  %2243 = vmatprep.subr.bf16.mxu0 0
  %2244 = vmatpush1.bf16.msra.mxu0 0
  %2245 = vmatprep.subr.bf16.mxu0 0
  %2246 = vmatpush1.bf16.msra.mxu0 0
  %2247 = vmatprep.subr.bf16.mxu0 0
  %2248 = vmatpush1.bf16.msra.mxu0 0
  %2249 = vmatprep.subr.bf16.mxu0 0
  %2250 = vmatpush1.bf16.msra.mxu0 0
  %2251 = vmatprep.subr.bf16.mxu0 0
  %2252 = vmatpush1.bf16.msra.mxu0 0
  %2253 = vmatprep.subr.bf16.mxu0 0
  %2254 = vmatpush1.bf16.msra.mxu0 0
  %2255 = vmatprep.subr.bf16.mxu0 0
  %2256 = vmatpush1.bf16.msra.mxu0 0
  %2257 = vmatprep.subr.bf16.mxu0 0
  %2258 = vmatpush1.bf16.msra.mxu0 0
  %2259 = vmatprep.mubr.bf16.mxu0 0
  %2260 = vmatmul.mubr.bf16.gmra.mrb[0].mxu0 %v2183
  %v2261 = vpop.f32.mrb[0].mxu0
  %v2262 = vadd.f32 0.0, %v2261
  %v2263 = vpop.f32.mrb[0].mxu0
  %v2264 = vadd.f32 0.0, %v2263
  %v2265 = vpop.f32.mrb[0].mxu0
  %v2266 = vadd.f32 0.0, %v2265
  %v2267 = vpop.f32.mrb[0].mxu0
  %v2268 = vadd.f32 0.0, %v2267
  %2269 = vdwg.mxu0
  %v2270 = vadd.f32 %v2173, %v2219
  %v2271 = vadd.f32 %v2174, %v2221
  %v2272 = vadd.f32 %v2175, %v2262
  %v2273 = vadd.f32 %v2176, %v2264
  %v2274 = vadd.f32 %v2177, %v2223
  %v2275 = vadd.f32 %v2178, %v2225
  %v2276 = vadd.f32 %v2179, %v2266
  %v2277 = vadd.f32 %v2180, %v2268
  %s2278 = scalar_lea.vmem %s57, 96
  %v2279 = vld [vmem:[%s2278] sm:$0xff]
  %v2280 = vld [vmem:[%s2278 + $0x8] sm:$0xff]
  %v2281 = vld [vmem:[%s2278 + $0x10] sm:$0xff]
  %v2282 = vld [vmem:[%s2278 + $0x18] sm:$0xff]
  %v2283 = vunpack.c.l.bf16 %v2279
  %v2284 = vunpack.c.h.bf16 %v2279
  %v2285 = vunpack.c.l.bf16 %v2280
  %v2286 = vunpack.c.h.bf16 %v2280
  %v2287 = vunpack.c.l.bf16 %v2281
  %v2288 = vunpack.c.h.bf16 %v2281
  %v2289 = vunpack.c.l.bf16 %v2282
  %v2290 = vunpack.c.h.bf16 %v2282
  %v2291 = vadd.f32 %v2283, %v468
  %v2292 = vadd.f32 %v2284, %v472
  %v2293 = vadd.f32 %v2285, %v476
  %v2294 = vadd.f32 %v2286, %v480
  %v2295 = vadd.f32 %v2287, %v468
  %v2296 = vadd.f32 %v2288, %v472
  %v2297 = vadd.f32 %v2289, %v476
  %v2298 = vadd.f32 %v2290, %v480
  %v2299 = vld [vmem:[#allocation4] sm:$0xff]
  %v2300 = vld [vmem:[#allocation4 + $0x8] sm:$0xff]
  %v2301 = vpack.c.bf16 %v2300, %v2299
  %2302 = vmatprep.subr.bf16.mxu0 %v593
  %2303 = vmatpush1.bf16.msra.mxu0 %v592
  %2304 = vmatprep.subr.bf16.mxu0 %v597
  %2305 = vmatpush1.bf16.msra.mxu0 %v596
  %2306 = vmatprep.subr.bf16.mxu0 %v601
  %2307 = vmatpush1.bf16.msra.mxu0 %v600
  %2308 = vmatprep.subr.bf16.mxu0 %v605
  %2309 = vmatpush1.bf16.msra.mxu0 %v604
  %2310 = vmatprep.subr.bf16.mxu0 %v609
  %2311 = vmatpush1.bf16.msra.mxu0 %v608
  %2312 = vmatprep.subr.bf16.mxu0 %v613
  %2313 = vmatpush1.bf16.msra.mxu0 %v612
  %2314 = vmatprep.subr.bf16.mxu0 %v617
  %2315 = vmatpush1.bf16.msra.mxu0 %v616
  %2316 = vmatprep.subr.bf16.mxu0 %v621
  %2317 = vmatpush1.bf16.msra.mxu0 %v620
  %2318 = vmatprep.subr.bf16.mxu0 0
  %2319 = vmatpush1.bf16.msra.mxu0 0
  %2320 = vmatprep.subr.bf16.mxu0 0
  %2321 = vmatpush1.bf16.msra.mxu0 0
  %2322 = vmatprep.subr.bf16.mxu0 0
  %2323 = vmatpush1.bf16.msra.mxu0 0
  %2324 = vmatprep.subr.bf16.mxu0 0
  %2325 = vmatpush1.bf16.msra.mxu0 0
  %2326 = vmatprep.subr.bf16.mxu0 0
  %2327 = vmatpush1.bf16.msra.mxu0 0
  %2328 = vmatprep.subr.bf16.mxu0 0
  %2329 = vmatpush1.bf16.msra.mxu0 0
  %2330 = vmatprep.subr.bf16.mxu0 0
  %2331 = vmatpush1.bf16.msra.mxu0 0
  %2332 = vmatprep.subr.bf16.mxu0 0
  %2333 = vmatpush1.bf16.msra.mxu0 0
  %2334 = vmatprep.mubr.bf16.mxu0 0
  %2335 = vmatmul.mubr.bf16.gmra.mrb[0].mxu0 %v2301
  %v2336 = vpop.f32.mrb[0].mxu0
  %v2337 = vadd.f32 0.0, %v2336
  %v2338 = vpop.f32.mrb[0].mxu0
  %v2339 = vadd.f32 0.0, %v2338
  %v2340 = vpop.f32.mrb[0].mxu0
  %v2341 = vadd.f32 0.0, %v2340
  %v2342 = vpop.f32.mrb[0].mxu0
  %v2343 = vadd.f32 0.0, %v2342
  %2344 = vdwg.mxu0
  %2345 = vmatprep.subr.bf16.mxu0 %v595
  %2346 = vmatpush1.bf16.msra.mxu0 %v594
  %2347 = vmatprep.subr.bf16.mxu0 %v599
  %2348 = vmatpush1.bf16.msra.mxu0 %v598
  %2349 = vmatprep.subr.bf16.mxu0 %v603
  %2350 = vmatpush1.bf16.msra.mxu0 %v602
  %2351 = vmatprep.subr.bf16.mxu0 %v607
  %2352 = vmatpush1.bf16.msra.mxu0 %v606
  %2353 = vmatprep.subr.bf16.mxu0 %v611
  %2354 = vmatpush1.bf16.msra.mxu0 %v610
  %2355 = vmatprep.subr.bf16.mxu0 %v615
  %2356 = vmatpush1.bf16.msra.mxu0 %v614
  %2357 = vmatprep.subr.bf16.mxu0 %v619
  %2358 = vmatpush1.bf16.msra.mxu0 %v618
  %2359 = vmatprep.subr.bf16.mxu0 %v623
  %2360 = vmatpush1.bf16.msra.mxu0 %v622
  %2361 = vmatprep.subr.bf16.mxu0 0
  %2362 = vmatpush1.bf16.msra.mxu0 0
  %2363 = vmatprep.subr.bf16.mxu0 0
  %2364 = vmatpush1.bf16.msra.mxu0 0
  %2365 = vmatprep.subr.bf16.mxu0 0
  %2366 = vmatpush1.bf16.msra.mxu0 0
  %2367 = vmatprep.subr.bf16.mxu0 0
  %2368 = vmatpush1.bf16.msra.mxu0 0
  %2369 = vmatprep.subr.bf16.mxu0 0
  %2370 = vmatpush1.bf16.msra.mxu0 0
  %2371 = vmatprep.subr.bf16.mxu0 0
  %2372 = vmatpush1.bf16.msra.mxu0 0
  %2373 = vmatprep.subr.bf16.mxu0 0
  %2374 = vmatpush1.bf16.msra.mxu0 0
  %2375 = vmatprep.subr.bf16.mxu0 0
  %2376 = vmatpush1.bf16.msra.mxu0 0
  %2377 = vmatprep.mubr.bf16.mxu0 0
  %2378 = vmatmul.mubr.bf16.gmra.mrb[0].mxu0 %v2301
  %v2379 = vpop.f32.mrb[0].mxu0
  %v2380 = vadd.f32 0.0, %v2379
  %v2381 = vpop.f32.mrb[0].mxu0
  %v2382 = vadd.f32 0.0, %v2381
  %v2383 = vpop.f32.mrb[0].mxu0
  %v2384 = vadd.f32 0.0, %v2383
  %v2385 = vpop.f32.mrb[0].mxu0
  %v2386 = vadd.f32 0.0, %v2385
  %2387 = vdwg.mxu0
  %v2388 = vadd.f32 %v2291, %v2337
  %v2389 = vadd.f32 %v2292, %v2339
  %v2390 = vadd.f32 %v2293, %v2380
  %v2391 = vadd.f32 %v2294, %v2382
  %v2392 = vadd.f32 %v2295, %v2341
  %v2393 = vadd.f32 %v2296, %v2343
  %v2394 = vadd.f32 %v2297, %v2384
  %v2395 = vadd.f32 %v2298, %v2386
  %v2396 = vld [vmem:[#allocation3] sm:$0xff]
  %v2397 = vld [vmem:[#allocation3 + $0x8] sm:$0xff]
  %v2398 = vxor.u32 %v2270, 2147483648
  %v2399 = vxor.u32 %v2271, 2147483648
  %v2400 = vxor.u32 %v2272, 2147483648
  %v2401 = vxor.u32 %v2274, 2147483648
  %v2402 = vxor.u32 %v2275, 2147483648
  %v2403 = vxor.u32 %v2276, 2147483648
  %v2404 = vmul.f32 %v2398, 1.442695
  %v2405 = vpow.pop %v2404
  %v2406 = vmul.f32 %v2399, 1.442695
  %v2407 = vpow.pop %v2406
  %v2408 = vmul.f32 %v2400, 1.442695
  %v2409 = vpow.pop %v2408
  %v2410 = vmul.f32 %v2401, 1.442695
  %v2411 = vpow.pop %v2410
  %v2412 = vmul.f32 %v2402, 1.442695
  %v2413 = vpow.pop %v2412
  %v2414 = vmul.f32 %v2403, 1.442695
  %v2415 = vpow.pop %v2414
  %v2416 = vadd.f32 %v2405, 1.0
  %v2417 = vadd.f32 %v2407, 1.0
  %v2418 = vadd.f32 %v2409, 1.0
  %v2419 = vadd.f32 %v2411, 1.0
  %v2420 = vadd.f32 %v2413, 1.0
  %v2421 = vadd.f32 %v2415, 1.0
  %v2422 = vrcp.pop %v2416
  %v2423 = vmul.f32 1.0, %v2422
  %v2424 = vrcp.pop %v2417
  %v2425 = vmul.f32 1.0, %v2424
  %v2426 = vrcp.pop %v2418
  %v2427 = vmul.f32 1.0, %v2426
  %v2428 = vrcp.pop %v2419
  %v2429 = vmul.f32 1.0, %v2428
  %v2430 = vrcp.pop %v2420
  %v2431 = vmul.f32 1.0, %v2430
  %v2432 = vrcp.pop %v2421
  %v2433 = vmul.f32 1.0, %v2432
  %v2434 = vtanh.pop %v2273
  %v2435 = vtanh.pop %v2277
  %v2436 = vmul.f32 %v2425, %v2396
  %v2437 = vmul.f32 %v2431, %v2397
  %v2438 = vmul.f32 %v2423, %v2434
  %v2439 = vmul.f32 %v2429, %v2435
  %v2440 = vadd.f32 %v2436, %v2438
  %v2441 = vadd.f32 %v2437, %v2439
  %v2442 = vtanh.pop %v2440
  %v2443 = vtanh.pop %v2441
  %v2444 = vmul.f32 %v2427, %v2442
  %v2445 = vmul.f32 %v2433, %v2443
  %v2446 = vld [vmem:[#allocation5] sm:$0xff]
  %v2447 = vld [vmem:[#allocation5 + $0x8] sm:$0xff]
  %v2448 = vxor.u32 %v2388, 2147483648
  %v2449 = vxor.u32 %v2389, 2147483648
  %v2450 = vxor.u32 %v2390, 2147483648
  %v2451 = vxor.u32 %v2392, 2147483648
  %v2452 = vxor.u32 %v2393, 2147483648
  %v2453 = vxor.u32 %v2394, 2147483648
  %v2454 = vmul.f32 %v2448, 1.442695
  %v2455 = vpow.pop %v2454
  %v2456 = vmul.f32 %v2449, 1.442695
  %v2457 = vpow.pop %v2456
  %v2458 = vmul.f32 %v2450, 1.442695
  %v2459 = vpow.pop %v2458
  %v2460 = vmul.f32 %v2451, 1.442695
  %v2461 = vpow.pop %v2460
  %v2462 = vmul.f32 %v2452, 1.442695
  %v2463 = vpow.pop %v2462
  %v2464 = vmul.f32 %v2453, 1.442695
  %v2465 = vpow.pop %v2464
  %v2466 = vadd.f32 %v2455, 1.0
  %v2467 = vadd.f32 %v2457, 1.0
  %v2468 = vadd.f32 %v2459, 1.0
  %v2469 = vadd.f32 %v2461, 1.0
  %v2470 = vadd.f32 %v2463, 1.0
  %v2471 = vadd.f32 %v2465, 1.0
  %v2472 = vrcp.pop %v2466
  %v2473 = vmul.f32 1.0, %v2472
  %v2474 = vrcp.pop %v2467
  %v2475 = vmul.f32 1.0, %v2474
  %v2476 = vrcp.pop %v2468
  %v2477 = vmul.f32 1.0, %v2476
  %v2478 = vrcp.pop %v2469
  %v2479 = vmul.f32 1.0, %v2478
  %v2480 = vrcp.pop %v2470
  %v2481 = vmul.f32 1.0, %v2480
  %v2482 = vrcp.pop %v2471
  %v2483 = vmul.f32 1.0, %v2482
  %v2484 = vtanh.pop %v2391
  %v2485 = vtanh.pop %v2395
  %v2486 = vmul.f32 %v2475, %v2446
  %v2487 = vmul.f32 %v2481, %v2447
  %v2488 = vmul.f32 %v2473, %v2484
  %v2489 = vmul.f32 %v2479, %v2485
  %v2490 = vadd.f32 %v2486, %v2488
  %v2491 = vadd.f32 %v2487, %v2489
  %v2492 = vtanh.pop %v2490
  %v2493 = vtanh.pop %v2491
  %v2494 = vmul.f32 %v2477, %v2492
  %v2495 = vmul.f32 %v2483, %v2493
  %s2496 = sadd.s32 %s150, 4
  %v2497 = vstv %s2496
  %vm2498 = vcmp.lt.s32.totalorder %v2497, %v82
  %vm2499 = vcmp.lt.s32.totalorder %v2497, %v83
  %s2500 = sadd.s32 %s152, 3
  %v2501 = vstv %s2500
  %vm2502 = vcmp.lt.s32.totalorder %v2501, %v82
  %vm2503 = vcmp.lt.s32.totalorder %v2501, %v83
  %v2504 = vsel %vm2498, 1, 0
  %v2505 = vsel %vm2499, 1, 0
  %2506 = vset.pattern.permute.xlu0 0
  %2507 = vperm.xlu0 %2506, %v2504
  %v2508 = vpop.permute.xlu0 %2507
  %2509 = vset.pattern.permute.xlu0 0
  %2510 = vperm.xlu0 %2509, %v2505
  %v2511 = vpop.permute.xlu0 %2510
  %vm2512 = vcmp.eq.s32.totalorder %v2508, 1
  %vm2513 = vcmp.eq.s32.totalorder %v2511, 1
  %v2514 = vsel %vm2512, %v2444, %v2181
  %v2515 = vsel %vm2513, %v2445, %v2182
  %2516 = vst [vmem:[#allocation2] sm:$0xff] %v2514
  %2517 = vst [vmem:[#allocation2 + $0x8] sm:$0xff] %v2515
  %v2518 = vld [vmem:[#allocation3] sm:$0xff]
  %v2519 = vld [vmem:[#allocation3 + $0x8] sm:$0xff]
  %v2520 = vsel %vm2512, %v2440, %v2518
  %v2521 = vsel %vm2513, %v2441, %v2519
  %2522 = vst [vmem:[#allocation3] sm:$0xff] %v2520
  %2523 = vst [vmem:[#allocation3 + $0x8] sm:$0xff] %v2521
  %v2524 = vld [vmem:[#allocation4] sm:$0xff]
  %v2525 = vld [vmem:[#allocation4 + $0x8] sm:$0xff]
  %v2526 = vsel %vm2502, 1, 0
  %v2527 = vsel %vm2503, 1, 0
  %2528 = vset.pattern.permute.xlu0 0
  %2529 = vperm.xlu0 %2528, %v2526
  %v2530 = vpop.permute.xlu0 %2529
  %2531 = vset.pattern.permute.xlu0 0
  %2532 = vperm.xlu0 %2531, %v2527
  %v2533 = vpop.permute.xlu0 %2532
  %vm2534 = vcmp.eq.s32.totalorder %v2530, 1
  %vm2535 = vcmp.eq.s32.totalorder %v2533, 1
  %v2536 = vsel %vm2534, %v2494, %v2524
  %v2537 = vsel %vm2535, %v2495, %v2525
  %2538 = vst [vmem:[#allocation4] sm:$0xff] %v2536
  %2539 = vst [vmem:[#allocation4 + $0x8] sm:$0xff] %v2537
  %v2540 = vld [vmem:[#allocation5] sm:$0xff]
  %v2541 = vld [vmem:[#allocation5 + $0x8] sm:$0xff]
  %v2542 = vsel %vm2534, %v2490, %v2540
  %v2543 = vsel %vm2535, %v2491, %v2541
  %2544 = vst [vmem:[#allocation5] sm:$0xff] %v2542
  %2545 = vst [vmem:[#allocation5 + $0x8] sm:$0xff] %v2543
  %v2546 = vsel %vm2512, %v2444, 0.0
  %v2547 = vsel %vm2513, %v2445, 0.0
  %v2548 = vpack.c.bf16 %v2547, %v2546
  %v2550 = vunpack.c.l.b16 %v2548
  %v2551 = vunpack.c.h.b16 %v2548
  %v2552 = vpack.c.b16 %v2550, %v2550
  %v2553 = vpack.c.b16 %v2551, %v2551
  %s2556 = scalar_lea.vmem %s7, 32
  %2557 = vst [vmem:[%s2556] sm:$0xf] %v2552
  %2558 = vst [vmem:[%s2556 + $0x4] sm:$0xf] %v2553
  %v2559 = vsel %vm2534, %v2494, 0.0
  %v2560 = vsel %vm2535, %v2495, 0.0
  %v2561 = vpack.c.bf16 %v2560, %v2559
  %v2563 = vunpack.c.l.b16 %v2561
  %v2564 = vunpack.c.h.b16 %v2561
  %v2565 = vpack.c.b16 %v2563, %v2563
  %v2566 = vpack.c.b16 %v2564, %v2564
  %s2569 = scalar_lea.vmem %s66, 24
  %2570 = vst [vmem:[%s2569] sm:$0xf] %v2565
  %2571 = vst [vmem:[%s2569 + $0x4] sm:$0xf] %v2566
  %s2572 = scalar_lea.vmem %s1, 160
  %v2573 = vld [vmem:[%s2572] sm:$0xff]
  %v2574 = vld [vmem:[%s2572 + $0x8] sm:$0xff]
  %v2575 = vld [vmem:[%s2572 + $0x10] sm:$0xff]
  %v2576 = vld [vmem:[%s2572 + $0x18] sm:$0xff]
  %v2577 = vunpack.c.l.bf16 %v2573
  %v2578 = vunpack.c.h.bf16 %v2573
  %v2579 = vunpack.c.l.bf16 %v2574
  %v2580 = vunpack.c.h.bf16 %v2574
  %v2581 = vunpack.c.l.bf16 %v2575
  %v2582 = vunpack.c.h.bf16 %v2575
  %v2583 = vunpack.c.l.bf16 %v2576
  %v2584 = vunpack.c.h.bf16 %v2576
  %v2585 = vadd.f32 %v2577, %v169
  %v2586 = vadd.f32 %v2578, %v173
  %v2587 = vadd.f32 %v2579, %v177
  %v2588 = vadd.f32 %v2580, %v181
  %v2589 = vadd.f32 %v2581, %v169
  %v2590 = vadd.f32 %v2582, %v173
  %v2591 = vadd.f32 %v2583, %v177
  %v2592 = vadd.f32 %v2584, %v181
  %v2593 = vld [vmem:[#allocation2] sm:$0xff]
  %v2594 = vld [vmem:[#allocation2 + $0x8] sm:$0xff]
  %v2595 = vpack.c.bf16 %v2594, %v2593
  %2596 = vmatprep.subr.bf16.mxu0 %v294
  %2597 = vmatpush1.bf16.msra.mxu0 %v293
  %2598 = vmatprep.subr.bf16.mxu0 %v298
  %2599 = vmatpush1.bf16.msra.mxu0 %v297
  %2600 = vmatprep.subr.bf16.mxu0 %v302
  %2601 = vmatpush1.bf16.msra.mxu0 %v301
  %2602 = vmatprep.subr.bf16.mxu0 %v306
  %2603 = vmatpush1.bf16.msra.mxu0 %v305
  %2604 = vmatprep.subr.bf16.mxu0 %v310
  %2605 = vmatpush1.bf16.msra.mxu0 %v309
  %2606 = vmatprep.subr.bf16.mxu0 %v314
  %2607 = vmatpush1.bf16.msra.mxu0 %v313
  %2608 = vmatprep.subr.bf16.mxu0 %v318
  %2609 = vmatpush1.bf16.msra.mxu0 %v317
  %2610 = vmatprep.subr.bf16.mxu0 %v322
  %2611 = vmatpush1.bf16.msra.mxu0 %v321
  %2612 = vmatprep.subr.bf16.mxu0 0
  %2613 = vmatpush1.bf16.msra.mxu0 0
  %2614 = vmatprep.subr.bf16.mxu0 0
  %2615 = vmatpush1.bf16.msra.mxu0 0
  %2616 = vmatprep.subr.bf16.mxu0 0
  %2617 = vmatpush1.bf16.msra.mxu0 0
  %2618 = vmatprep.subr.bf16.mxu0 0
  %2619 = vmatpush1.bf16.msra.mxu0 0
  %2620 = vmatprep.subr.bf16.mxu0 0
  %2621 = vmatpush1.bf16.msra.mxu0 0
  %2622 = vmatprep.subr.bf16.mxu0 0
  %2623 = vmatpush1.bf16.msra.mxu0 0
  %2624 = vmatprep.subr.bf16.mxu0 0
  %2625 = vmatpush1.bf16.msra.mxu0 0
  %2626 = vmatprep.subr.bf16.mxu0 0
  %2627 = vmatpush1.bf16.msra.mxu0 0
  %2628 = vmatprep.mubr.bf16.mxu0 0
  %2629 = vmatmul.mubr.bf16.gmra.mrb[0].mxu0 %v2595
  %v2630 = vpop.f32.mrb[0].mxu0
  %v2631 = vadd.f32 0.0, %v2630
  %v2632 = vpop.f32.mrb[0].mxu0
  %v2633 = vadd.f32 0.0, %v2632
  %v2634 = vpop.f32.mrb[0].mxu0
  %v2635 = vadd.f32 0.0, %v2634
  %v2636 = vpop.f32.mrb[0].mxu0
  %v2637 = vadd.f32 0.0, %v2636
  %2638 = vdwg.mxu0
  %2639 = vmatprep.subr.bf16.mxu0 %v296
  %2640 = vmatpush1.bf16.msra.mxu0 %v295
  %2641 = vmatprep.subr.bf16.mxu0 %v300
  %2642 = vmatpush1.bf16.msra.mxu0 %v299
  %2643 = vmatprep.subr.bf16.mxu0 %v304
  %2644 = vmatpush1.bf16.msra.mxu0 %v303
  %2645 = vmatprep.subr.bf16.mxu0 %v308
  %2646 = vmatpush1.bf16.msra.mxu0 %v307
  %2647 = vmatprep.subr.bf16.mxu0 %v312
  %2648 = vmatpush1.bf16.msra.mxu0 %v311
  %2649 = vmatprep.subr.bf16.mxu0 %v316
  %2650 = vmatpush1.bf16.msra.mxu0 %v315
  %2651 = vmatprep.subr.bf16.mxu0 %v320
  %2652 = vmatpush1.bf16.msra.mxu0 %v319
  %2653 = vmatprep.subr.bf16.mxu0 %v324
  %2654 = vmatpush1.bf16.msra.mxu0 %v323
  %2655 = vmatprep.subr.bf16.mxu0 0
  %2656 = vmatpush1.bf16.msra.mxu0 0
  %2657 = vmatprep.subr.bf16.mxu0 0
  %2658 = vmatpush1.bf16.msra.mxu0 0
  %2659 = vmatprep.subr.bf16.mxu0 0
  %2660 = vmatpush1.bf16.msra.mxu0 0
  %2661 = vmatprep.subr.bf16.mxu0 0
  %2662 = vmatpush1.bf16.msra.mxu0 0
  %2663 = vmatprep.subr.bf16.mxu0 0
  %2664 = vmatpush1.bf16.msra.mxu0 0
  %2665 = vmatprep.subr.bf16.mxu0 0
  %2666 = vmatpush1.bf16.msra.mxu0 0
  %2667 = vmatprep.subr.bf16.mxu0 0
  %2668 = vmatpush1.bf16.msra.mxu0 0
  %2669 = vmatprep.subr.bf16.mxu0 0
  %2670 = vmatpush1.bf16.msra.mxu0 0
  %2671 = vmatprep.mubr.bf16.mxu0 0
  %2672 = vmatmul.mubr.bf16.gmra.mrb[0].mxu0 %v2595
  %v2673 = vpop.f32.mrb[0].mxu0
  %v2674 = vadd.f32 0.0, %v2673
  %v2675 = vpop.f32.mrb[0].mxu0
  %v2676 = vadd.f32 0.0, %v2675
  %v2677 = vpop.f32.mrb[0].mxu0
  %v2678 = vadd.f32 0.0, %v2677
  %v2679 = vpop.f32.mrb[0].mxu0
  %v2680 = vadd.f32 0.0, %v2679
  %2681 = vdwg.mxu0
  %v2682 = vadd.f32 %v2585, %v2631
  %v2683 = vadd.f32 %v2586, %v2633
  %v2684 = vadd.f32 %v2587, %v2674
  %v2685 = vadd.f32 %v2588, %v2676
  %v2686 = vadd.f32 %v2589, %v2635
  %v2687 = vadd.f32 %v2590, %v2637
  %v2688 = vadd.f32 %v2591, %v2678
  %v2689 = vadd.f32 %v2592, %v2680
  %s2690 = scalar_lea.vmem %s57, 64
  %v2691 = vld [vmem:[%s2690] sm:$0xff]
  %v2692 = vld [vmem:[%s2690 + $0x8] sm:$0xff]
  %v2693 = vld [vmem:[%s2690 + $0x10] sm:$0xff]
  %v2694 = vld [vmem:[%s2690 + $0x18] sm:$0xff]
  %v2695 = vunpack.c.l.bf16 %v2691
  %v2696 = vunpack.c.h.bf16 %v2691
  %v2697 = vunpack.c.l.bf16 %v2692
  %v2698 = vunpack.c.h.bf16 %v2692
  %v2699 = vunpack.c.l.bf16 %v2693
  %v2700 = vunpack.c.h.bf16 %v2693
  %v2701 = vunpack.c.l.bf16 %v2694
  %v2702 = vunpack.c.h.bf16 %v2694
  %v2703 = vadd.f32 %v2695, %v468
  %v2704 = vadd.f32 %v2696, %v472
  %v2705 = vadd.f32 %v2697, %v476
  %v2706 = vadd.f32 %v2698, %v480
  %v2707 = vadd.f32 %v2699, %v468
  %v2708 = vadd.f32 %v2700, %v472
  %v2709 = vadd.f32 %v2701, %v476
  %v2710 = vadd.f32 %v2702, %v480
  %v2711 = vld [vmem:[#allocation4] sm:$0xff]
  %v2712 = vld [vmem:[#allocation4 + $0x8] sm:$0xff]
  %v2713 = vpack.c.bf16 %v2712, %v2711
  %2714 = vmatprep.subr.bf16.mxu0 %v593
  %2715 = vmatpush1.bf16.msra.mxu0 %v592
  %2716 = vmatprep.subr.bf16.mxu0 %v597
  %2717 = vmatpush1.bf16.msra.mxu0 %v596
  %2718 = vmatprep.subr.bf16.mxu0 %v601
  %2719 = vmatpush1.bf16.msra.mxu0 %v600
  %2720 = vmatprep.subr.bf16.mxu0 %v605
  %2721 = vmatpush1.bf16.msra.mxu0 %v604
  %2722 = vmatprep.subr.bf16.mxu0 %v609
  %2723 = vmatpush1.bf16.msra.mxu0 %v608
  %2724 = vmatprep.subr.bf16.mxu0 %v613
  %2725 = vmatpush1.bf16.msra.mxu0 %v612
  %2726 = vmatprep.subr.bf16.mxu0 %v617
  %2727 = vmatpush1.bf16.msra.mxu0 %v616
  %2728 = vmatprep.subr.bf16.mxu0 %v621
  %2729 = vmatpush1.bf16.msra.mxu0 %v620
  %2730 = vmatprep.subr.bf16.mxu0 0
  %2731 = vmatpush1.bf16.msra.mxu0 0
  %2732 = vmatprep.subr.bf16.mxu0 0
  %2733 = vmatpush1.bf16.msra.mxu0 0
  %2734 = vmatprep.subr.bf16.mxu0 0
  %2735 = vmatpush1.bf16.msra.mxu0 0
  %2736 = vmatprep.subr.bf16.mxu0 0
  %2737 = vmatpush1.bf16.msra.mxu0 0
  %2738 = vmatprep.subr.bf16.mxu0 0
  %2739 = vmatpush1.bf16.msra.mxu0 0
  %2740 = vmatprep.subr.bf16.mxu0 0
  %2741 = vmatpush1.bf16.msra.mxu0 0
  %2742 = vmatprep.subr.bf16.mxu0 0
  %2743 = vmatpush1.bf16.msra.mxu0 0
  %2744 = vmatprep.subr.bf16.mxu0 0
  %2745 = vmatpush1.bf16.msra.mxu0 0
  %2746 = vmatprep.mubr.bf16.mxu0 0
  %2747 = vmatmul.mubr.bf16.gmra.mrb[0].mxu0 %v2713
  %v2748 = vpop.f32.mrb[0].mxu0
  %v2749 = vadd.f32 0.0, %v2748
  %v2750 = vpop.f32.mrb[0].mxu0
  %v2751 = vadd.f32 0.0, %v2750
  %v2752 = vpop.f32.mrb[0].mxu0
  %v2753 = vadd.f32 0.0, %v2752
  %v2754 = vpop.f32.mrb[0].mxu0
  %v2755 = vadd.f32 0.0, %v2754
  %2756 = vdwg.mxu0
  %2757 = vmatprep.subr.bf16.mxu0 %v595
  %2758 = vmatpush1.bf16.msra.mxu0 %v594
  %2759 = vmatprep.subr.bf16.mxu0 %v599
  %2760 = vmatpush1.bf16.msra.mxu0 %v598
  %2761 = vmatprep.subr.bf16.mxu0 %v603
  %2762 = vmatpush1.bf16.msra.mxu0 %v602
  %2763 = vmatprep.subr.bf16.mxu0 %v607
  %2764 = vmatpush1.bf16.msra.mxu0 %v606
  %2765 = vmatprep.subr.bf16.mxu0 %v611
  %2766 = vmatpush1.bf16.msra.mxu0 %v610
  %2767 = vmatprep.subr.bf16.mxu0 %v615
  %2768 = vmatpush1.bf16.msra.mxu0 %v614
  %2769 = vmatprep.subr.bf16.mxu0 %v619
  %2770 = vmatpush1.bf16.msra.mxu0 %v618
  %2771 = vmatprep.subr.bf16.mxu0 %v623
  %2772 = vmatpush1.bf16.msra.mxu0 %v622
  %2773 = vmatprep.subr.bf16.mxu0 0
  %2774 = vmatpush1.bf16.msra.mxu0 0
  %2775 = vmatprep.subr.bf16.mxu0 0
  %2776 = vmatpush1.bf16.msra.mxu0 0
  %2777 = vmatprep.subr.bf16.mxu0 0
  %2778 = vmatpush1.bf16.msra.mxu0 0
  %2779 = vmatprep.subr.bf16.mxu0 0
  %2780 = vmatpush1.bf16.msra.mxu0 0
  %2781 = vmatprep.subr.bf16.mxu0 0
  %2782 = vmatpush1.bf16.msra.mxu0 0
  %2783 = vmatprep.subr.bf16.mxu0 0
  %2784 = vmatpush1.bf16.msra.mxu0 0
  %2785 = vmatprep.subr.bf16.mxu0 0
  %2786 = vmatpush1.bf16.msra.mxu0 0
  %2787 = vmatprep.subr.bf16.mxu0 0
  %2788 = vmatpush1.bf16.msra.mxu0 0
  %2789 = vmatprep.mubr.bf16.mxu0 0
  %2790 = vmatmul.mubr.bf16.gmra.mrb[0].mxu0 %v2713
  %v2791 = vpop.f32.mrb[0].mxu0
  %v2792 = vadd.f32 0.0, %v2791
  %v2793 = vpop.f32.mrb[0].mxu0
  %v2794 = vadd.f32 0.0, %v2793
  %v2795 = vpop.f32.mrb[0].mxu0
  %v2796 = vadd.f32 0.0, %v2795
  %v2797 = vpop.f32.mrb[0].mxu0
  %v2798 = vadd.f32 0.0, %v2797
  %2799 = vdwg.mxu0
  %v2800 = vadd.f32 %v2703, %v2749
  %v2801 = vadd.f32 %v2704, %v2751
  %v2802 = vadd.f32 %v2705, %v2792
  %v2803 = vadd.f32 %v2706, %v2794
  %v2804 = vadd.f32 %v2707, %v2753
  %v2805 = vadd.f32 %v2708, %v2755
  %v2806 = vadd.f32 %v2709, %v2796
  %v2807 = vadd.f32 %v2710, %v2798
  %v2808 = vld [vmem:[#allocation3] sm:$0xff]
  %v2809 = vld [vmem:[#allocation3 + $0x8] sm:$0xff]
  %v2810 = vxor.u32 %v2682, 2147483648
  %v2811 = vxor.u32 %v2683, 2147483648
  %v2812 = vxor.u32 %v2684, 2147483648
  %v2813 = vxor.u32 %v2686, 2147483648
  %v2814 = vxor.u32 %v2687, 2147483648
  %v2815 = vxor.u32 %v2688, 2147483648
  %v2816 = vmul.f32 %v2810, 1.442695
  %v2817 = vpow.pop %v2816
  %v2818 = vmul.f32 %v2811, 1.442695
  %v2819 = vpow.pop %v2818
  %v2820 = vmul.f32 %v2812, 1.442695
  %v2821 = vpow.pop %v2820
  %v2822 = vmul.f32 %v2813, 1.442695
  %v2823 = vpow.pop %v2822
  %v2824 = vmul.f32 %v2814, 1.442695
  %v2825 = vpow.pop %v2824
  %v2826 = vmul.f32 %v2815, 1.442695
  %v2827 = vpow.pop %v2826
  %v2828 = vadd.f32 %v2817, 1.0
  %v2829 = vadd.f32 %v2819, 1.0
  %v2830 = vadd.f32 %v2821, 1.0
  %v2831 = vadd.f32 %v2823, 1.0
  %v2832 = vadd.f32 %v2825, 1.0
  %v2833 = vadd.f32 %v2827, 1.0
  %v2834 = vrcp.pop %v2828
  %v2835 = vmul.f32 1.0, %v2834
  %v2836 = vrcp.pop %v2829
  %v2837 = vmul.f32 1.0, %v2836
  %v2838 = vrcp.pop %v2830
  %v2839 = vmul.f32 1.0, %v2838
  %v2840 = vrcp.pop %v2831
  %v2841 = vmul.f32 1.0, %v2840
  %v2842 = vrcp.pop %v2832
  %v2843 = vmul.f32 1.0, %v2842
  %v2844 = vrcp.pop %v2833
  %v2845 = vmul.f32 1.0, %v2844
  %v2846 = vtanh.pop %v2685
  %v2847 = vtanh.pop %v2689
  %v2848 = vmul.f32 %v2837, %v2808
  %v2849 = vmul.f32 %v2843, %v2809
  %v2850 = vmul.f32 %v2835, %v2846
  %v2851 = vmul.f32 %v2841, %v2847
  %v2852 = vadd.f32 %v2848, %v2850
  %v2853 = vadd.f32 %v2849, %v2851
  %v2854 = vtanh.pop %v2852
  %v2855 = vtanh.pop %v2853
  %v2856 = vmul.f32 %v2839, %v2854
  %v2857 = vmul.f32 %v2845, %v2855
  %v2858 = vld [vmem:[#allocation5] sm:$0xff]
  %v2859 = vld [vmem:[#allocation5 + $0x8] sm:$0xff]
  %v2860 = vxor.u32 %v2800, 2147483648
  %v2861 = vxor.u32 %v2801, 2147483648
  %v2862 = vxor.u32 %v2802, 2147483648
  %v2863 = vxor.u32 %v2804, 2147483648
  %v2864 = vxor.u32 %v2805, 2147483648
  %v2865 = vxor.u32 %v2806, 2147483648
  %v2866 = vmul.f32 %v2860, 1.442695
  %v2867 = vpow.pop %v2866
  %v2868 = vmul.f32 %v2861, 1.442695
  %v2869 = vpow.pop %v2868
  %v2870 = vmul.f32 %v2862, 1.442695
  %v2871 = vpow.pop %v2870
  %v2872 = vmul.f32 %v2863, 1.442695
  %v2873 = vpow.pop %v2872
  %v2874 = vmul.f32 %v2864, 1.442695
  %v2875 = vpow.pop %v2874
  %v2876 = vmul.f32 %v2865, 1.442695
  %v2877 = vpow.pop %v2876
  %v2878 = vadd.f32 %v2867, 1.0
  %v2879 = vadd.f32 %v2869, 1.0
  %v2880 = vadd.f32 %v2871, 1.0
  %v2881 = vadd.f32 %v2873, 1.0
  %v2882 = vadd.f32 %v2875, 1.0
  %v2883 = vadd.f32 %v2877, 1.0
  %v2884 = vrcp.pop %v2878
  %v2885 = vmul.f32 1.0, %v2884
  %v2886 = vrcp.pop %v2879
  %v2887 = vmul.f32 1.0, %v2886
  %v2888 = vrcp.pop %v2880
  %v2889 = vmul.f32 1.0, %v2888
  %v2890 = vrcp.pop %v2881
  %v2891 = vmul.f32 1.0, %v2890
  %v2892 = vrcp.pop %v2882
  %v2893 = vmul.f32 1.0, %v2892
  %v2894 = vrcp.pop %v2883
  %v2895 = vmul.f32 1.0, %v2894
  %v2896 = vtanh.pop %v2803
  %v2897 = vtanh.pop %v2807
  %v2898 = vmul.f32 %v2887, %v2858
  %v2899 = vmul.f32 %v2893, %v2859
  %v2900 = vmul.f32 %v2885, %v2896
  %v2901 = vmul.f32 %v2891, %v2897
  %v2902 = vadd.f32 %v2898, %v2900
  %v2903 = vadd.f32 %v2899, %v2901
  %v2904 = vtanh.pop %v2902
  %v2905 = vtanh.pop %v2903
  %v2906 = vmul.f32 %v2889, %v2904
  %v2907 = vmul.f32 %v2895, %v2905
  %s2908 = sadd.s32 %s150, 5
  %v2909 = vstv %s2908
  %vm2910 = vcmp.lt.s32.totalorder %v2909, %v82
  %vm2911 = vcmp.lt.s32.totalorder %v2909, %v83
  %s2912 = sadd.s32 %s152, 2
  %v2913 = vstv %s2912
  %vm2914 = vcmp.lt.s32.totalorder %v2913, %v82
  %vm2915 = vcmp.lt.s32.totalorder %v2913, %v83
  %v2916 = vsel %vm2910, 1, 0
  %v2917 = vsel %vm2911, 1, 0
  %2918 = vset.pattern.permute.xlu0 0
  %2919 = vperm.xlu0 %2918, %v2916
  %v2920 = vpop.permute.xlu0 %2919
  %2921 = vset.pattern.permute.xlu0 0
  %2922 = vperm.xlu0 %2921, %v2917
  %v2923 = vpop.permute.xlu0 %2922
  %vm2924 = vcmp.eq.s32.totalorder %v2920, 1
  %vm2925 = vcmp.eq.s32.totalorder %v2923, 1
  %v2926 = vsel %vm2924, %v2856, %v2593
  %v2927 = vsel %vm2925, %v2857, %v2594
  %2928 = vst [vmem:[#allocation2] sm:$0xff] %v2926
  %2929 = vst [vmem:[#allocation2 + $0x8] sm:$0xff] %v2927
  %v2930 = vld [vmem:[#allocation3] sm:$0xff]
  %v2931 = vld [vmem:[#allocation3 + $0x8] sm:$0xff]
  %v2932 = vsel %vm2924, %v2852, %v2930
  %v2933 = vsel %vm2925, %v2853, %v2931
  %2934 = vst [vmem:[#allocation3] sm:$0xff] %v2932
  %2935 = vst [vmem:[#allocation3 + $0x8] sm:$0xff] %v2933
  %v2936 = vld [vmem:[#allocation4] sm:$0xff]
  %v2937 = vld [vmem:[#allocation4 + $0x8] sm:$0xff]
  %v2938 = vsel %vm2914, 1, 0
  %v2939 = vsel %vm2915, 1, 0
  %2940 = vset.pattern.permute.xlu0 0
  %2941 = vperm.xlu0 %2940, %v2938
  %v2942 = vpop.permute.xlu0 %2941
  %2943 = vset.pattern.permute.xlu0 0
  %2944 = vperm.xlu0 %2943, %v2939
  %v2945 = vpop.permute.xlu0 %2944
  %vm2946 = vcmp.eq.s32.totalorder %v2942, 1
  %vm2947 = vcmp.eq.s32.totalorder %v2945, 1
  %v2948 = vsel %vm2946, %v2906, %v2936
  %v2949 = vsel %vm2947, %v2907, %v2937
  %2950 = vst [vmem:[#allocation4] sm:$0xff] %v2948
  %2951 = vst [vmem:[#allocation4 + $0x8] sm:$0xff] %v2949
  %v2952 = vld [vmem:[#allocation5] sm:$0xff]
  %v2953 = vld [vmem:[#allocation5 + $0x8] sm:$0xff]
  %v2954 = vsel %vm2946, %v2902, %v2952
  %v2955 = vsel %vm2947, %v2903, %v2953
  %2956 = vst [vmem:[#allocation5] sm:$0xff] %v2954
  %2957 = vst [vmem:[#allocation5 + $0x8] sm:$0xff] %v2955
  %v2958 = vsel %vm2924, %v2856, 0.0
  %v2959 = vsel %vm2925, %v2857, 0.0
  %v2960 = vpack.c.bf16 %v2959, %v2958
  %v2962 = vunpack.c.l.b16 %v2960
  %v2963 = vunpack.c.h.b16 %v2960
  %v2964 = vpack.c.b16 %v2962, %v2962
  %v2965 = vpack.c.b16 %v2963, %v2963
  %s2968 = scalar_lea.vmem %s7, 40
  %2969 = vst [vmem:[%s2968] sm:$0xf] %v2964
  %2970 = vst [vmem:[%s2968 + $0x4] sm:$0xf] %v2965
  %v2971 = vsel %vm2946, %v2906, 0.0
  %v2972 = vsel %vm2947, %v2907, 0.0
  %v2973 = vpack.c.bf16 %v2972, %v2971
  %v2975 = vunpack.c.l.b16 %v2973
  %v2976 = vunpack.c.h.b16 %v2973
  %v2977 = vpack.c.b16 %v2975, %v2975
  %v2978 = vpack.c.b16 %v2976, %v2976
  %s2981 = scalar_lea.vmem %s66, 16
  %2982 = vst [vmem:[%s2981] sm:$0xf] %v2977
  %2983 = vst [vmem:[%s2981 + $0x4] sm:$0xf] %v2978
  %s2984 = scalar_lea.vmem %s1, 192
  %v2985 = vld [vmem:[%s2984] sm:$0xff]
  %v2986 = vld [vmem:[%s2984 + $0x8] sm:$0xff]
  %v2987 = vld [vmem:[%s2984 + $0x10] sm:$0xff]
  %v2988 = vld [vmem:[%s2984 + $0x18] sm:$0xff]
  %v2989 = vunpack.c.l.bf16 %v2985
  %v2990 = vunpack.c.h.bf16 %v2985
  %v2991 = vunpack.c.l.bf16 %v2986
  %v2992 = vunpack.c.h.bf16 %v2986
  %v2993 = vunpack.c.l.bf16 %v2987
  %v2994 = vunpack.c.h.bf16 %v2987
  %v2995 = vunpack.c.l.bf16 %v2988
  %v2996 = vunpack.c.h.bf16 %v2988
  %v2997 = vadd.f32 %v2989, %v169
  %v2998 = vadd.f32 %v2990, %v173
  %v2999 = vadd.f32 %v2991, %v177
  %v3000 = vadd.f32 %v2992, %v181
  %v3001 = vadd.f32 %v2993, %v169
  %v3002 = vadd.f32 %v2994, %v173
  %v3003 = vadd.f32 %v2995, %v177
  %v3004 = vadd.f32 %v2996, %v181
  %v3005 = vld [vmem:[#allocation2] sm:$0xff]
  %v3006 = vld [vmem:[#allocation2 + $0x8] sm:$0xff]
  %v3007 = vpack.c.bf16 %v3006, %v3005
  %3008 = vmatprep.subr.bf16.mxu0 %v294
  %3009 = vmatpush1.bf16.msra.mxu0 %v293
  %3010 = vmatprep.subr.bf16.mxu0 %v298
  %3011 = vmatpush1.bf16.msra.mxu0 %v297
  %3012 = vmatprep.subr.bf16.mxu0 %v302
  %3013 = vmatpush1.bf16.msra.mxu0 %v301
  %3014 = vmatprep.subr.bf16.mxu0 %v306
  %3015 = vmatpush1.bf16.msra.mxu0 %v305
  %3016 = vmatprep.subr.bf16.mxu0 %v310
  %3017 = vmatpush1.bf16.msra.mxu0 %v309
  %3018 = vmatprep.subr.bf16.mxu0 %v314
  %3019 = vmatpush1.bf16.msra.mxu0 %v313
  %3020 = vmatprep.subr.bf16.mxu0 %v318
  %3021 = vmatpush1.bf16.msra.mxu0 %v317
  %3022 = vmatprep.subr.bf16.mxu0 %v322
  %3023 = vmatpush1.bf16.msra.mxu0 %v321
  %3024 = vmatprep.subr.bf16.mxu0 0
  %3025 = vmatpush1.bf16.msra.mxu0 0
  %3026 = vmatprep.subr.bf16.mxu0 0
  %3027 = vmatpush1.bf16.msra.mxu0 0
  %3028 = vmatprep.subr.bf16.mxu0 0
  %3029 = vmatpush1.bf16.msra.mxu0 0
  %3030 = vmatprep.subr.bf16.mxu0 0
  %3031 = vmatpush1.bf16.msra.mxu0 0
  %3032 = vmatprep.subr.bf16.mxu0 0
  %3033 = vmatpush1.bf16.msra.mxu0 0
  %3034 = vmatprep.subr.bf16.mxu0 0
  %3035 = vmatpush1.bf16.msra.mxu0 0
  %3036 = vmatprep.subr.bf16.mxu0 0
  %3037 = vmatpush1.bf16.msra.mxu0 0
  %3038 = vmatprep.subr.bf16.mxu0 0
  %3039 = vmatpush1.bf16.msra.mxu0 0
  %3040 = vmatprep.mubr.bf16.mxu0 0
  %3041 = vmatmul.mubr.bf16.gmra.mrb[0].mxu0 %v3007
  %v3042 = vpop.f32.mrb[0].mxu0
  %v3043 = vadd.f32 0.0, %v3042
  %v3044 = vpop.f32.mrb[0].mxu0
  %v3045 = vadd.f32 0.0, %v3044
  %v3046 = vpop.f32.mrb[0].mxu0
  %v3047 = vadd.f32 0.0, %v3046
  %v3048 = vpop.f32.mrb[0].mxu0
  %v3049 = vadd.f32 0.0, %v3048
  %3050 = vdwg.mxu0
  %3051 = vmatprep.subr.bf16.mxu0 %v296
  %3052 = vmatpush1.bf16.msra.mxu0 %v295
  %3053 = vmatprep.subr.bf16.mxu0 %v300
  %3054 = vmatpush1.bf16.msra.mxu0 %v299
  %3055 = vmatprep.subr.bf16.mxu0 %v304
  %3056 = vmatpush1.bf16.msra.mxu0 %v303
  %3057 = vmatprep.subr.bf16.mxu0 %v308
  %3058 = vmatpush1.bf16.msra.mxu0 %v307
  %3059 = vmatprep.subr.bf16.mxu0 %v312
  %3060 = vmatpush1.bf16.msra.mxu0 %v311
  %3061 = vmatprep.subr.bf16.mxu0 %v316
  %3062 = vmatpush1.bf16.msra.mxu0 %v315
  %3063 = vmatprep.subr.bf16.mxu0 %v320
  %3064 = vmatpush1.bf16.msra.mxu0 %v319
  %3065 = vmatprep.subr.bf16.mxu0 %v324
  %3066 = vmatpush1.bf16.msra.mxu0 %v323
  %3067 = vmatprep.subr.bf16.mxu0 0
  %3068 = vmatpush1.bf16.msra.mxu0 0
  %3069 = vmatprep.subr.bf16.mxu0 0
  %3070 = vmatpush1.bf16.msra.mxu0 0
  %3071 = vmatprep.subr.bf16.mxu0 0
  %3072 = vmatpush1.bf16.msra.mxu0 0
  %3073 = vmatprep.subr.bf16.mxu0 0
  %3074 = vmatpush1.bf16.msra.mxu0 0
  %3075 = vmatprep.subr.bf16.mxu0 0
  %3076 = vmatpush1.bf16.msra.mxu0 0
  %3077 = vmatprep.subr.bf16.mxu0 0
  %3078 = vmatpush1.bf16.msra.mxu0 0
  %3079 = vmatprep.subr.bf16.mxu0 0
  %3080 = vmatpush1.bf16.msra.mxu0 0
  %3081 = vmatprep.subr.bf16.mxu0 0
  %3082 = vmatpush1.bf16.msra.mxu0 0
  %3083 = vmatprep.mubr.bf16.mxu0 0
  %3084 = vmatmul.mubr.bf16.gmra.mrb[0].mxu0 %v3007
  %v3085 = vpop.f32.mrb[0].mxu0
  %v3086 = vadd.f32 0.0, %v3085
  %v3087 = vpop.f32.mrb[0].mxu0
  %v3088 = vadd.f32 0.0, %v3087
  %v3089 = vpop.f32.mrb[0].mxu0
  %v3090 = vadd.f32 0.0, %v3089
  %v3091 = vpop.f32.mrb[0].mxu0
  %v3092 = vadd.f32 0.0, %v3091
  %3093 = vdwg.mxu0
  %v3094 = vadd.f32 %v2997, %v3043
  %v3095 = vadd.f32 %v2998, %v3045
  %v3096 = vadd.f32 %v2999, %v3086
  %v3097 = vadd.f32 %v3000, %v3088
  %v3098 = vadd.f32 %v3001, %v3047
  %v3099 = vadd.f32 %v3002, %v3049
  %v3100 = vadd.f32 %v3003, %v3090
  %v3101 = vadd.f32 %v3004, %v3092
  %s3102 = scalar_lea.vmem %s57, 32
  %v3103 = vld [vmem:[%s3102] sm:$0xff]
  %v3104 = vld [vmem:[%s3102 + $0x8] sm:$0xff]
  %v3105 = vld [vmem:[%s3102 + $0x10] sm:$0xff]
  %v3106 = vld [vmem:[%s3102 + $0x18] sm:$0xff]
  %v3107 = vunpack.c.l.bf16 %v3103
  %v3108 = vunpack.c.h.bf16 %v3103
  %v3109 = vunpack.c.l.bf16 %v3104
  %v3110 = vunpack.c.h.bf16 %v3104
  %v3111 = vunpack.c.l.bf16 %v3105
  %v3112 = vunpack.c.h.bf16 %v3105
  %v3113 = vunpack.c.l.bf16 %v3106
  %v3114 = vunpack.c.h.bf16 %v3106
  %v3115 = vadd.f32 %v3107, %v468
  %v3116 = vadd.f32 %v3108, %v472
  %v3117 = vadd.f32 %v3109, %v476
  %v3118 = vadd.f32 %v3110, %v480
  %v3119 = vadd.f32 %v3111, %v468
  %v3120 = vadd.f32 %v3112, %v472
  %v3121 = vadd.f32 %v3113, %v476
  %v3122 = vadd.f32 %v3114, %v480
  %v3123 = vld [vmem:[#allocation4] sm:$0xff]
  %v3124 = vld [vmem:[#allocation4 + $0x8] sm:$0xff]
  %v3125 = vpack.c.bf16 %v3124, %v3123
  %3126 = vmatprep.subr.bf16.mxu0 %v593
  %3127 = vmatpush1.bf16.msra.mxu0 %v592
  %3128 = vmatprep.subr.bf16.mxu0 %v597
  %3129 = vmatpush1.bf16.msra.mxu0 %v596
  %3130 = vmatprep.subr.bf16.mxu0 %v601
  %3131 = vmatpush1.bf16.msra.mxu0 %v600
  %3132 = vmatprep.subr.bf16.mxu0 %v605
  %3133 = vmatpush1.bf16.msra.mxu0 %v604
  %3134 = vmatprep.subr.bf16.mxu0 %v609
  %3135 = vmatpush1.bf16.msra.mxu0 %v608
  %3136 = vmatprep.subr.bf16.mxu0 %v613
  %3137 = vmatpush1.bf16.msra.mxu0 %v612
  %3138 = vmatprep.subr.bf16.mxu0 %v617
  %3139 = vmatpush1.bf16.msra.mxu0 %v616
  %3140 = vmatprep.subr.bf16.mxu0 %v621
  %3141 = vmatpush1.bf16.msra.mxu0 %v620
  %3142 = vmatprep.subr.bf16.mxu0 0
  %3143 = vmatpush1.bf16.msra.mxu0 0
  %3144 = vmatprep.subr.bf16.mxu0 0
  %3145 = vmatpush1.bf16.msra.mxu0 0
  %3146 = vmatprep.subr.bf16.mxu0 0
  %3147 = vmatpush1.bf16.msra.mxu0 0
  %3148 = vmatprep.subr.bf16.mxu0 0
  %3149 = vmatpush1.bf16.msra.mxu0 0
  %3150 = vmatprep.subr.bf16.mxu0 0
  %3151 = vmatpush1.bf16.msra.mxu0 0
  %3152 = vmatprep.subr.bf16.mxu0 0
  %3153 = vmatpush1.bf16.msra.mxu0 0
  %3154 = vmatprep.subr.bf16.mxu0 0
  %3155 = vmatpush1.bf16.msra.mxu0 0
  %3156 = vmatprep.subr.bf16.mxu0 0
  %3157 = vmatpush1.bf16.msra.mxu0 0
  %3158 = vmatprep.mubr.bf16.mxu0 0
  %3159 = vmatmul.mubr.bf16.gmra.mrb[0].mxu0 %v3125
  %v3160 = vpop.f32.mrb[0].mxu0
  %v3161 = vadd.f32 0.0, %v3160
  %v3162 = vpop.f32.mrb[0].mxu0
  %v3163 = vadd.f32 0.0, %v3162
  %v3164 = vpop.f32.mrb[0].mxu0
  %v3165 = vadd.f32 0.0, %v3164
  %v3166 = vpop.f32.mrb[0].mxu0
  %v3167 = vadd.f32 0.0, %v3166
  %3168 = vdwg.mxu0
  %3169 = vmatprep.subr.bf16.mxu0 %v595
  %3170 = vmatpush1.bf16.msra.mxu0 %v594
  %3171 = vmatprep.subr.bf16.mxu0 %v599
  %3172 = vmatpush1.bf16.msra.mxu0 %v598
  %3173 = vmatprep.subr.bf16.mxu0 %v603
  %3174 = vmatpush1.bf16.msra.mxu0 %v602
  %3175 = vmatprep.subr.bf16.mxu0 %v607
  %3176 = vmatpush1.bf16.msra.mxu0 %v606
  %3177 = vmatprep.subr.bf16.mxu0 %v611
  %3178 = vmatpush1.bf16.msra.mxu0 %v610
  %3179 = vmatprep.subr.bf16.mxu0 %v615
  %3180 = vmatpush1.bf16.msra.mxu0 %v614
  %3181 = vmatprep.subr.bf16.mxu0 %v619
  %3182 = vmatpush1.bf16.msra.mxu0 %v618
  %3183 = vmatprep.subr.bf16.mxu0 %v623
  %3184 = vmatpush1.bf16.msra.mxu0 %v622
  %3185 = vmatprep.subr.bf16.mxu0 0
  %3186 = vmatpush1.bf16.msra.mxu0 0
  %3187 = vmatprep.subr.bf16.mxu0 0
  %3188 = vmatpush1.bf16.msra.mxu0 0
  %3189 = vmatprep.subr.bf16.mxu0 0
  %3190 = vmatpush1.bf16.msra.mxu0 0
  %3191 = vmatprep.subr.bf16.mxu0 0
  %3192 = vmatpush1.bf16.msra.mxu0 0
  %3193 = vmatprep.subr.bf16.mxu0 0
  %3194 = vmatpush1.bf16.msra.mxu0 0
  %3195 = vmatprep.subr.bf16.mxu0 0
  %3196 = vmatpush1.bf16.msra.mxu0 0
  %3197 = vmatprep.subr.bf16.mxu0 0
  %3198 = vmatpush1.bf16.msra.mxu0 0
  %3199 = vmatprep.subr.bf16.mxu0 0
  %3200 = vmatpush1.bf16.msra.mxu0 0
  %3201 = vmatprep.mubr.bf16.mxu0 0
  %3202 = vmatmul.mubr.bf16.gmra.mrb[0].mxu0 %v3125
  %v3203 = vpop.f32.mrb[0].mxu0
  %v3204 = vadd.f32 0.0, %v3203
  %v3205 = vpop.f32.mrb[0].mxu0
  %v3206 = vadd.f32 0.0, %v3205
  %v3207 = vpop.f32.mrb[0].mxu0
  %v3208 = vadd.f32 0.0, %v3207
  %v3209 = vpop.f32.mrb[0].mxu0
  %v3210 = vadd.f32 0.0, %v3209
  %3211 = vdwg.mxu0
  %v3212 = vadd.f32 %v3115, %v3161
  %v3213 = vadd.f32 %v3116, %v3163
  %v3214 = vadd.f32 %v3117, %v3204
  %v3215 = vadd.f32 %v3118, %v3206
  %v3216 = vadd.f32 %v3119, %v3165
  %v3217 = vadd.f32 %v3120, %v3167
  %v3218 = vadd.f32 %v3121, %v3208
  %v3219 = vadd.f32 %v3122, %v3210
  %v3220 = vld [vmem:[#allocation3] sm:$0xff]
  %v3221 = vld [vmem:[#allocation3 + $0x8] sm:$0xff]
  %v3222 = vxor.u32 %v3094, 2147483648
  %v3223 = vxor.u32 %v3095, 2147483648
  %v3224 = vxor.u32 %v3096, 2147483648
  %v3225 = vxor.u32 %v3098, 2147483648
  %v3226 = vxor.u32 %v3099, 2147483648
  %v3227 = vxor.u32 %v3100, 2147483648
  %v3228 = vmul.f32 %v3222, 1.442695
  %v3229 = vpow.pop %v3228
  %v3230 = vmul.f32 %v3223, 1.442695
  %v3231 = vpow.pop %v3230
  %v3232 = vmul.f32 %v3224, 1.442695
  %v3233 = vpow.pop %v3232
  %v3234 = vmul.f32 %v3225, 1.442695
  %v3235 = vpow.pop %v3234
  %v3236 = vmul.f32 %v3226, 1.442695
  %v3237 = vpow.pop %v3236
  %v3238 = vmul.f32 %v3227, 1.442695
  %v3239 = vpow.pop %v3238
  %v3240 = vadd.f32 %v3229, 1.0
  %v3241 = vadd.f32 %v3231, 1.0
  %v3242 = vadd.f32 %v3233, 1.0
  %v3243 = vadd.f32 %v3235, 1.0
  %v3244 = vadd.f32 %v3237, 1.0
  %v3245 = vadd.f32 %v3239, 1.0
  %v3246 = vrcp.pop %v3240
  %v3247 = vmul.f32 1.0, %v3246
  %v3248 = vrcp.pop %v3241
  %v3249 = vmul.f32 1.0, %v3248
  %v3250 = vrcp.pop %v3242
  %v3251 = vmul.f32 1.0, %v3250
  %v3252 = vrcp.pop %v3243
  %v3253 = vmul.f32 1.0, %v3252
  %v3254 = vrcp.pop %v3244
  %v3255 = vmul.f32 1.0, %v3254
  %v3256 = vrcp.pop %v3245
  %v3257 = vmul.f32 1.0, %v3256
  %v3258 = vtanh.pop %v3097
  %v3259 = vtanh.pop %v3101
  %v3260 = vmul.f32 %v3249, %v3220
  %v3261 = vmul.f32 %v3255, %v3221
  %v3262 = vmul.f32 %v3247, %v3258
  %v3263 = vmul.f32 %v3253, %v3259
  %v3264 = vadd.f32 %v3260, %v3262
  %v3265 = vadd.f32 %v3261, %v3263
  %v3266 = vtanh.pop %v3264
  %v3267 = vtanh.pop %v3265
  %v3268 = vmul.f32 %v3251, %v3266
  %v3269 = vmul.f32 %v3257, %v3267
  %v3270 = vld [vmem:[#allocation5] sm:$0xff]
  %v3271 = vld [vmem:[#allocation5 + $0x8] sm:$0xff]
  %v3272 = vxor.u32 %v3212, 2147483648
  %v3273 = vxor.u32 %v3213, 2147483648
  %v3274 = vxor.u32 %v3214, 2147483648
  %v3275 = vxor.u32 %v3216, 2147483648
  %v3276 = vxor.u32 %v3217, 2147483648
  %v3277 = vxor.u32 %v3218, 2147483648
  %v3278 = vmul.f32 %v3272, 1.442695
  %v3279 = vpow.pop %v3278
  %v3280 = vmul.f32 %v3273, 1.442695
  %v3281 = vpow.pop %v3280
  %v3282 = vmul.f32 %v3274, 1.442695
  %v3283 = vpow.pop %v3282
  %v3284 = vmul.f32 %v3275, 1.442695
  %v3285 = vpow.pop %v3284
  %v3286 = vmul.f32 %v3276, 1.442695
  %v3287 = vpow.pop %v3286
  %v3288 = vmul.f32 %v3277, 1.442695
  %v3289 = vpow.pop %v3288
  %v3290 = vadd.f32 %v3279, 1.0
  %v3291 = vadd.f32 %v3281, 1.0
  %v3292 = vadd.f32 %v3283, 1.0
  %v3293 = vadd.f32 %v3285, 1.0
  %v3294 = vadd.f32 %v3287, 1.0
  %v3295 = vadd.f32 %v3289, 1.0
  %v3296 = vrcp.pop %v3290
  %v3297 = vmul.f32 1.0, %v3296
  %v3298 = vrcp.pop %v3291
  %v3299 = vmul.f32 1.0, %v3298
  %v3300 = vrcp.pop %v3292
  %v3301 = vmul.f32 1.0, %v3300
  %v3302 = vrcp.pop %v3293
  %v3303 = vmul.f32 1.0, %v3302
  %v3304 = vrcp.pop %v3294
  %v3305 = vmul.f32 1.0, %v3304
  %v3306 = vrcp.pop %v3295
  %v3307 = vmul.f32 1.0, %v3306
  %v3308 = vtanh.pop %v3215
  %v3309 = vtanh.pop %v3219
  %v3310 = vmul.f32 %v3299, %v3270
  %v3311 = vmul.f32 %v3305, %v3271
  %v3312 = vmul.f32 %v3297, %v3308
  %v3313 = vmul.f32 %v3303, %v3309
  %v3314 = vadd.f32 %v3310, %v3312
  %v3315 = vadd.f32 %v3311, %v3313
  %v3316 = vtanh.pop %v3314
  %v3317 = vtanh.pop %v3315
  %v3318 = vmul.f32 %v3301, %v3316
  %v3319 = vmul.f32 %v3307, %v3317
  %s3320 = sadd.s32 %s150, 6
  %v3321 = vstv %s3320
  %vm3322 = vcmp.lt.s32.totalorder %v3321, %v82
  %vm3323 = vcmp.lt.s32.totalorder %v3321, %v83
  %s3324 = sadd.s32 %s152, 1
  %v3325 = vstv %s3324
  %vm3326 = vcmp.lt.s32.totalorder %v3325, %v82
  %vm3327 = vcmp.lt.s32.totalorder %v3325, %v83
  %v3328 = vsel %vm3322, 1, 0
  %v3329 = vsel %vm3323, 1, 0
  %3330 = vset.pattern.permute.xlu0 0
  %3331 = vperm.xlu0 %3330, %v3328
  %v3332 = vpop.permute.xlu0 %3331
  %3333 = vset.pattern.permute.xlu0 0
  %3334 = vperm.xlu0 %3333, %v3329
  %v3335 = vpop.permute.xlu0 %3334
  %vm3336 = vcmp.eq.s32.totalorder %v3332, 1
  %vm3337 = vcmp.eq.s32.totalorder %v3335, 1
  %v3338 = vsel %vm3336, %v3268, %v3005
  %v3339 = vsel %vm3337, %v3269, %v3006
  %3340 = vst [vmem:[#allocation2] sm:$0xff] %v3338
  %3341 = vst [vmem:[#allocation2 + $0x8] sm:$0xff] %v3339
  %v3342 = vld [vmem:[#allocation3] sm:$0xff]
  %v3343 = vld [vmem:[#allocation3 + $0x8] sm:$0xff]
  %v3344 = vsel %vm3336, %v3264, %v3342
  %v3345 = vsel %vm3337, %v3265, %v3343
  %3346 = vst [vmem:[#allocation3] sm:$0xff] %v3344
  %3347 = vst [vmem:[#allocation3 + $0x8] sm:$0xff] %v3345
  %v3348 = vld [vmem:[#allocation4] sm:$0xff]
  %v3349 = vld [vmem:[#allocation4 + $0x8] sm:$0xff]
  %v3350 = vsel %vm3326, 1, 0
  %v3351 = vsel %vm3327, 1, 0
  %3352 = vset.pattern.permute.xlu0 0
  %3353 = vperm.xlu0 %3352, %v3350
  %v3354 = vpop.permute.xlu0 %3353
  %3355 = vset.pattern.permute.xlu0 0
  %3356 = vperm.xlu0 %3355, %v3351
  %v3357 = vpop.permute.xlu0 %3356
  %vm3358 = vcmp.eq.s32.totalorder %v3354, 1
  %vm3359 = vcmp.eq.s32.totalorder %v3357, 1
  %v3360 = vsel %vm3358, %v3318, %v3348
  %v3361 = vsel %vm3359, %v3319, %v3349
  %3362 = vst [vmem:[#allocation4] sm:$0xff] %v3360
  %3363 = vst [vmem:[#allocation4 + $0x8] sm:$0xff] %v3361
  %v3364 = vld [vmem:[#allocation5] sm:$0xff]
  %v3365 = vld [vmem:[#allocation5 + $0x8] sm:$0xff]
  %v3366 = vsel %vm3358, %v3314, %v3364
  %v3367 = vsel %vm3359, %v3315, %v3365
  %3368 = vst [vmem:[#allocation5] sm:$0xff] %v3366
  %3369 = vst [vmem:[#allocation5 + $0x8] sm:$0xff] %v3367
  %v3370 = vsel %vm3336, %v3268, 0.0
  %v3371 = vsel %vm3337, %v3269, 0.0
  %v3372 = vpack.c.bf16 %v3371, %v3370
  %v3374 = vunpack.c.l.b16 %v3372
  %v3375 = vunpack.c.h.b16 %v3372
  %v3376 = vpack.c.b16 %v3374, %v3374
  %v3377 = vpack.c.b16 %v3375, %v3375
  %s3380 = scalar_lea.vmem %s7, 48
  %3381 = vst [vmem:[%s3380] sm:$0xf] %v3376
  %3382 = vst [vmem:[%s3380 + $0x4] sm:$0xf] %v3377
  %v3383 = vsel %vm3358, %v3318, 0.0
  %v3384 = vsel %vm3359, %v3319, 0.0
  %v3385 = vpack.c.bf16 %v3384, %v3383
  %v3387 = vunpack.c.l.b16 %v3385
  %v3388 = vunpack.c.h.b16 %v3385
  %v3389 = vpack.c.b16 %v3387, %v3387
  %v3390 = vpack.c.b16 %v3388, %v3388
  %s3393 = scalar_lea.vmem %s66, 8
  %3394 = vst [vmem:[%s3393] sm:$0xf] %v3389
  %3395 = vst [vmem:[%s3393 + $0x4] sm:$0xf] %v3390
  %s3396 = scalar_lea.vmem %s1, 224
  %v3397 = vld [vmem:[%s3396] sm:$0xff]
  %v3398 = vld [vmem:[%s3396 + $0x8] sm:$0xff]
  %v3399 = vld [vmem:[%s3396 + $0x10] sm:$0xff]
  %v3400 = vld [vmem:[%s3396 + $0x18] sm:$0xff]
  %v3401 = vunpack.c.l.bf16 %v3397
  %v3402 = vunpack.c.h.bf16 %v3397
  %v3403 = vunpack.c.l.bf16 %v3398
  %v3404 = vunpack.c.h.bf16 %v3398
  %v3405 = vunpack.c.l.bf16 %v3399
  %v3406 = vunpack.c.h.bf16 %v3399
  %v3407 = vunpack.c.l.bf16 %v3400
  %v3408 = vunpack.c.h.bf16 %v3400
  %v3409 = vadd.f32 %v3401, %v169
  %v3410 = vadd.f32 %v3402, %v173
  %v3411 = vadd.f32 %v3403, %v177
  %v3412 = vadd.f32 %v3404, %v181
  %v3413 = vadd.f32 %v3405, %v169
  %v3414 = vadd.f32 %v3406, %v173
  %v3415 = vadd.f32 %v3407, %v177
  %v3416 = vadd.f32 %v3408, %v181
  %v3417 = vld [vmem:[#allocation2] sm:$0xff]
  %v3418 = vld [vmem:[#allocation2 + $0x8] sm:$0xff]
  %v3419 = vpack.c.bf16 %v3418, %v3417
  %3420 = vmatprep.subr.bf16.mxu0 %v294
  %3421 = vmatpush1.bf16.msra.mxu0 %v293
  %3422 = vmatprep.subr.bf16.mxu0 %v298
  %3423 = vmatpush1.bf16.msra.mxu0 %v297
  %3424 = vmatprep.subr.bf16.mxu0 %v302
  %3425 = vmatpush1.bf16.msra.mxu0 %v301
  %3426 = vmatprep.subr.bf16.mxu0 %v306
  %3427 = vmatpush1.bf16.msra.mxu0 %v305
  %3428 = vmatprep.subr.bf16.mxu0 %v310
  %3429 = vmatpush1.bf16.msra.mxu0 %v309
  %3430 = vmatprep.subr.bf16.mxu0 %v314
  %3431 = vmatpush1.bf16.msra.mxu0 %v313
  %3432 = vmatprep.subr.bf16.mxu0 %v318
  %3433 = vmatpush1.bf16.msra.mxu0 %v317
  %3434 = vmatprep.subr.bf16.mxu0 %v322
  %3435 = vmatpush1.bf16.msra.mxu0 %v321
  %3436 = vmatprep.subr.bf16.mxu0 0
  %3437 = vmatpush1.bf16.msra.mxu0 0
  %3438 = vmatprep.subr.bf16.mxu0 0
  %3439 = vmatpush1.bf16.msra.mxu0 0
  %3440 = vmatprep.subr.bf16.mxu0 0
  %3441 = vmatpush1.bf16.msra.mxu0 0
  %3442 = vmatprep.subr.bf16.mxu0 0
  %3443 = vmatpush1.bf16.msra.mxu0 0
  %3444 = vmatprep.subr.bf16.mxu0 0
  %3445 = vmatpush1.bf16.msra.mxu0 0
  %3446 = vmatprep.subr.bf16.mxu0 0
  %3447 = vmatpush1.bf16.msra.mxu0 0
  %3448 = vmatprep.subr.bf16.mxu0 0
  %3449 = vmatpush1.bf16.msra.mxu0 0
  %3450 = vmatprep.subr.bf16.mxu0 0
  %3451 = vmatpush1.bf16.msra.mxu0 0
  %3452 = vmatprep.mubr.bf16.mxu0 0
  %3453 = vmatmul.mubr.bf16.gmra.mrb[0].mxu0 %v3419
  %v3454 = vpop.f32.mrb[0].mxu0
  %v3455 = vadd.f32 0.0, %v3454
  %v3456 = vpop.f32.mrb[0].mxu0
  %v3457 = vadd.f32 0.0, %v3456
  %v3458 = vpop.f32.mrb[0].mxu0
  %v3459 = vadd.f32 0.0, %v3458
  %v3460 = vpop.f32.mrb[0].mxu0
  %v3461 = vadd.f32 0.0, %v3460
  %3462 = vdwg.mxu0
  %3463 = vmatprep.subr.bf16.mxu0 %v296
  %3464 = vmatpush1.bf16.msra.mxu0 %v295
  %3465 = vmatprep.subr.bf16.mxu0 %v300
  %3466 = vmatpush1.bf16.msra.mxu0 %v299
  %3467 = vmatprep.subr.bf16.mxu0 %v304
  %3468 = vmatpush1.bf16.msra.mxu0 %v303
  %3469 = vmatprep.subr.bf16.mxu0 %v308
  %3470 = vmatpush1.bf16.msra.mxu0 %v307
  %3471 = vmatprep.subr.bf16.mxu0 %v312
  %3472 = vmatpush1.bf16.msra.mxu0 %v311
  %3473 = vmatprep.subr.bf16.mxu0 %v316
  %3474 = vmatpush1.bf16.msra.mxu0 %v315
  %3475 = vmatprep.subr.bf16.mxu0 %v320
  %3476 = vmatpush1.bf16.msra.mxu0 %v319
  %3477 = vmatprep.subr.bf16.mxu0 %v324
  %3478 = vmatpush1.bf16.msra.mxu0 %v323
  %3479 = vmatprep.subr.bf16.mxu0 0
  %3480 = vmatpush1.bf16.msra.mxu0 0
  %3481 = vmatprep.subr.bf16.mxu0 0
  %3482 = vmatpush1.bf16.msra.mxu0 0
  %3483 = vmatprep.subr.bf16.mxu0 0
  %3484 = vmatpush1.bf16.msra.mxu0 0
  %3485 = vmatprep.subr.bf16.mxu0 0
  %3486 = vmatpush1.bf16.msra.mxu0 0
  %3487 = vmatprep.subr.bf16.mxu0 0
  %3488 = vmatpush1.bf16.msra.mxu0 0
  %3489 = vmatprep.subr.bf16.mxu0 0
  %3490 = vmatpush1.bf16.msra.mxu0 0
  %3491 = vmatprep.subr.bf16.mxu0 0
  %3492 = vmatpush1.bf16.msra.mxu0 0
  %3493 = vmatprep.subr.bf16.mxu0 0
  %3494 = vmatpush1.bf16.msra.mxu0 0
  %3495 = vmatprep.mubr.bf16.mxu0 0
  %3496 = vmatmul.mubr.bf16.gmra.mrb[0].mxu0 %v3419
  %v3497 = vpop.f32.mrb[0].mxu0
  %v3498 = vadd.f32 0.0, %v3497
  %v3499 = vpop.f32.mrb[0].mxu0
  %v3500 = vadd.f32 0.0, %v3499
  %v3501 = vpop.f32.mrb[0].mxu0
  %v3502 = vadd.f32 0.0, %v3501
  %v3503 = vpop.f32.mrb[0].mxu0
  %v3504 = vadd.f32 0.0, %v3503
  %3505 = vdwg.mxu0
  %v3506 = vadd.f32 %v3409, %v3455
  %v3507 = vadd.f32 %v3410, %v3457
  %v3508 = vadd.f32 %v3411, %v3498
  %v3509 = vadd.f32 %v3412, %v3500
  %v3510 = vadd.f32 %v3413, %v3459
  %v3511 = vadd.f32 %v3414, %v3461
  %v3512 = vadd.f32 %v3415, %v3502
  %v3513 = vadd.f32 %v3416, %v3504
  %v3514 = vld [vmem:[%s57] sm:$0xff]
  %v3515 = vld [vmem:[%s57 + $0x8] sm:$0xff]
  %v3516 = vld [vmem:[%s57 + $0x10] sm:$0xff]
  %v3517 = vld [vmem:[%s57 + $0x18] sm:$0xff]
  %v3518 = vunpack.c.l.bf16 %v3514
  %v3519 = vunpack.c.h.bf16 %v3514
  %v3520 = vunpack.c.l.bf16 %v3515
  %v3521 = vunpack.c.h.bf16 %v3515
  %v3522 = vunpack.c.l.bf16 %v3516
  %v3523 = vunpack.c.h.bf16 %v3516
  %v3524 = vunpack.c.l.bf16 %v3517
  %v3525 = vunpack.c.h.bf16 %v3517
  %v3526 = vadd.f32 %v3518, %v468
  %v3527 = vadd.f32 %v3519, %v472
  %v3528 = vadd.f32 %v3520, %v476
  %v3529 = vadd.f32 %v3521, %v480
  %v3530 = vadd.f32 %v3522, %v468
  %v3531 = vadd.f32 %v3523, %v472
  %v3532 = vadd.f32 %v3524, %v476
  %v3533 = vadd.f32 %v3525, %v480
  %v3534 = vld [vmem:[#allocation4] sm:$0xff]
  %v3535 = vld [vmem:[#allocation4 + $0x8] sm:$0xff]
  %v3536 = vpack.c.bf16 %v3535, %v3534
  %3537 = vmatprep.subr.bf16.mxu0 %v593
  %3538 = vmatpush1.bf16.msra.mxu0 %v592
  %3539 = vmatprep.subr.bf16.mxu0 %v597
  %3540 = vmatpush1.bf16.msra.mxu0 %v596
  %3541 = vmatprep.subr.bf16.mxu0 %v601
  %3542 = vmatpush1.bf16.msra.mxu0 %v600
  %3543 = vmatprep.subr.bf16.mxu0 %v605
  %3544 = vmatpush1.bf16.msra.mxu0 %v604
  %3545 = vmatprep.subr.bf16.mxu0 %v609
  %3546 = vmatpush1.bf16.msra.mxu0 %v608
  %3547 = vmatprep.subr.bf16.mxu0 %v613
  %3548 = vmatpush1.bf16.msra.mxu0 %v612
  %3549 = vmatprep.subr.bf16.mxu0 %v617
  %3550 = vmatpush1.bf16.msra.mxu0 %v616
  %3551 = vmatprep.subr.bf16.mxu0 %v621
  %3552 = vmatpush1.bf16.msra.mxu0 %v620
  %3553 = vmatprep.subr.bf16.mxu0 0
  %3554 = vmatpush1.bf16.msra.mxu0 0
  %3555 = vmatprep.subr.bf16.mxu0 0
  %3556 = vmatpush1.bf16.msra.mxu0 0
  %3557 = vmatprep.subr.bf16.mxu0 0
  %3558 = vmatpush1.bf16.msra.mxu0 0
  %3559 = vmatprep.subr.bf16.mxu0 0
  %3560 = vmatpush1.bf16.msra.mxu0 0
  %3561 = vmatprep.subr.bf16.mxu0 0
  %3562 = vmatpush1.bf16.msra.mxu0 0
  %3563 = vmatprep.subr.bf16.mxu0 0
  %3564 = vmatpush1.bf16.msra.mxu0 0
  %3565 = vmatprep.subr.bf16.mxu0 0
  %3566 = vmatpush1.bf16.msra.mxu0 0
  %3567 = vmatprep.subr.bf16.mxu0 0
  %3568 = vmatpush1.bf16.msra.mxu0 0
  %3569 = vmatprep.mubr.bf16.mxu0 0
  %3570 = vmatmul.mubr.bf16.gmra.mrb[0].mxu0 %v3536
  %v3571 = vpop.f32.mrb[0].mxu0
  %v3572 = vadd.f32 0.0, %v3571
  %v3573 = vpop.f32.mrb[0].mxu0
  %v3574 = vadd.f32 0.0, %v3573
  %v3575 = vpop.f32.mrb[0].mxu0
  %v3576 = vadd.f32 0.0, %v3575
  %v3577 = vpop.f32.mrb[0].mxu0
  %v3578 = vadd.f32 0.0, %v3577
  %3579 = vdwg.mxu0
  %3580 = vmatprep.subr.bf16.mxu0 %v595
  %3581 = vmatpush1.bf16.msra.mxu0 %v594
  %3582 = vmatprep.subr.bf16.mxu0 %v599
  %3583 = vmatpush1.bf16.msra.mxu0 %v598
  %3584 = vmatprep.subr.bf16.mxu0 %v603
  %3585 = vmatpush1.bf16.msra.mxu0 %v602
  %3586 = vmatprep.subr.bf16.mxu0 %v607
  %3587 = vmatpush1.bf16.msra.mxu0 %v606
  %3588 = vmatprep.subr.bf16.mxu0 %v611
  %3589 = vmatpush1.bf16.msra.mxu0 %v610
  %3590 = vmatprep.subr.bf16.mxu0 %v615
  %3591 = vmatpush1.bf16.msra.mxu0 %v614
  %3592 = vmatprep.subr.bf16.mxu0 %v619
  %3593 = vmatpush1.bf16.msra.mxu0 %v618
  %3594 = vmatprep.subr.bf16.mxu0 %v623
  %3595 = vmatpush1.bf16.msra.mxu0 %v622
  %3596 = vmatprep.subr.bf16.mxu0 0
  %3597 = vmatpush1.bf16.msra.mxu0 0
  %3598 = vmatprep.subr.bf16.mxu0 0
  %3599 = vmatpush1.bf16.msra.mxu0 0
  %3600 = vmatprep.subr.bf16.mxu0 0
  %3601 = vmatpush1.bf16.msra.mxu0 0
  %3602 = vmatprep.subr.bf16.mxu0 0
  %3603 = vmatpush1.bf16.msra.mxu0 0
  %3604 = vmatprep.subr.bf16.mxu0 0
  %3605 = vmatpush1.bf16.msra.mxu0 0
  %3606 = vmatprep.subr.bf16.mxu0 0
  %3607 = vmatpush1.bf16.msra.mxu0 0
  %3608 = vmatprep.subr.bf16.mxu0 0
  %3609 = vmatpush1.bf16.msra.mxu0 0
  %3610 = vmatprep.subr.bf16.mxu0 0
  %3611 = vmatpush1.bf16.msra.mxu0 0
  %3612 = vmatprep.mubr.bf16.mxu0 0
  %3613 = vmatmul.mubr.bf16.gmra.mrb[0].mxu0 %v3536
  %v3614 = vpop.f32.mrb[0].mxu0
  %v3615 = vadd.f32 0.0, %v3614
  %v3616 = vpop.f32.mrb[0].mxu0
  %v3617 = vadd.f32 0.0, %v3616
  %v3618 = vpop.f32.mrb[0].mxu0
  %v3619 = vadd.f32 0.0, %v3618
  %v3620 = vpop.f32.mrb[0].mxu0
  %v3621 = vadd.f32 0.0, %v3620
  %3622 = vdwg.mxu0
  %v3623 = vadd.f32 %v3526, %v3572
  %v3624 = vadd.f32 %v3527, %v3574
  %v3625 = vadd.f32 %v3528, %v3615
  %v3626 = vadd.f32 %v3529, %v3617
  %v3627 = vadd.f32 %v3530, %v3576
  %v3628 = vadd.f32 %v3531, %v3578
  %v3629 = vadd.f32 %v3532, %v3619
  %v3630 = vadd.f32 %v3533, %v3621
  %v3631 = vld [vmem:[#allocation3] sm:$0xff]
  %v3632 = vld [vmem:[#allocation3 + $0x8] sm:$0xff]
  %v3633 = vxor.u32 %v3506, 2147483648
  %v3634 = vxor.u32 %v3507, 2147483648
  %v3635 = vxor.u32 %v3508, 2147483648
  %v3636 = vxor.u32 %v3510, 2147483648
  %v3637 = vxor.u32 %v3511, 2147483648
  %v3638 = vxor.u32 %v3512, 2147483648
  %v3639 = vmul.f32 %v3633, 1.442695
  %v3640 = vpow.pop %v3639
  %v3641 = vmul.f32 %v3634, 1.442695
  %v3642 = vpow.pop %v3641
  %v3643 = vmul.f32 %v3635, 1.442695
  %v3644 = vpow.pop %v3643
  %v3645 = vmul.f32 %v3636, 1.442695
  %v3646 = vpow.pop %v3645
  %v3647 = vmul.f32 %v3637, 1.442695
  %v3648 = vpow.pop %v3647
  %v3649 = vmul.f32 %v3638, 1.442695
  %v3650 = vpow.pop %v3649
  %v3651 = vadd.f32 %v3640, 1.0
  %v3652 = vadd.f32 %v3642, 1.0
  %v3653 = vadd.f32 %v3644, 1.0
  %v3654 = vadd.f32 %v3646, 1.0
  %v3655 = vadd.f32 %v3648, 1.0
  %v3656 = vadd.f32 %v3650, 1.0
  %v3657 = vrcp.pop %v3651
  %v3658 = vmul.f32 1.0, %v3657
  %v3659 = vrcp.pop %v3652
  %v3660 = vmul.f32 1.0, %v3659
  %v3661 = vrcp.pop %v3653
  %v3662 = vmul.f32 1.0, %v3661
  %v3663 = vrcp.pop %v3654
  %v3664 = vmul.f32 1.0, %v3663
  %v3665 = vrcp.pop %v3655
  %v3666 = vmul.f32 1.0, %v3665
  %v3667 = vrcp.pop %v3656
  %v3668 = vmul.f32 1.0, %v3667
  %v3669 = vtanh.pop %v3509
  %v3670 = vtanh.pop %v3513
  %v3671 = vmul.f32 %v3660, %v3631
  %v3672 = vmul.f32 %v3666, %v3632
  %v3673 = vmul.f32 %v3658, %v3669
  %v3674 = vmul.f32 %v3664, %v3670
  %v3675 = vadd.f32 %v3671, %v3673
  %v3676 = vadd.f32 %v3672, %v3674
  %v3677 = vtanh.pop %v3675
  %v3678 = vtanh.pop %v3676
  %v3679 = vmul.f32 %v3662, %v3677
  %v3680 = vmul.f32 %v3668, %v3678
  %v3681 = vld [vmem:[#allocation5] sm:$0xff]
  %v3682 = vld [vmem:[#allocation5 + $0x8] sm:$0xff]
  %v3683 = vxor.u32 %v3623, 2147483648
  %v3684 = vxor.u32 %v3624, 2147483648
  %v3685 = vxor.u32 %v3625, 2147483648
  %v3686 = vxor.u32 %v3627, 2147483648
  %v3687 = vxor.u32 %v3628, 2147483648
  %v3688 = vxor.u32 %v3629, 2147483648
  %v3689 = vmul.f32 %v3683, 1.442695
  %v3690 = vpow.pop %v3689
  %v3691 = vmul.f32 %v3684, 1.442695
  %v3692 = vpow.pop %v3691
  %v3693 = vmul.f32 %v3685, 1.442695
  %v3694 = vpow.pop %v3693
  %v3695 = vmul.f32 %v3686, 1.442695
  %v3696 = vpow.pop %v3695
  %v3697 = vmul.f32 %v3687, 1.442695
  %v3698 = vpow.pop %v3697
  %v3699 = vmul.f32 %v3688, 1.442695
  %v3700 = vpow.pop %v3699
  %v3701 = vadd.f32 %v3690, 1.0
  %v3702 = vadd.f32 %v3692, 1.0
  %v3703 = vadd.f32 %v3694, 1.0
  %v3704 = vadd.f32 %v3696, 1.0
  %v3705 = vadd.f32 %v3698, 1.0
  %v3706 = vadd.f32 %v3700, 1.0
  %v3707 = vrcp.pop %v3701
  %v3708 = vmul.f32 1.0, %v3707
  %v3709 = vrcp.pop %v3702
  %v3710 = vmul.f32 1.0, %v3709
  %v3711 = vrcp.pop %v3703
  %v3712 = vmul.f32 1.0, %v3711
  %v3713 = vrcp.pop %v3704
  %v3714 = vmul.f32 1.0, %v3713
  %v3715 = vrcp.pop %v3705
  %v3716 = vmul.f32 1.0, %v3715
  %v3717 = vrcp.pop %v3706
  %v3718 = vmul.f32 1.0, %v3717
  %v3719 = vtanh.pop %v3626
  %v3720 = vtanh.pop %v3630
  %v3721 = vmul.f32 %v3710, %v3681
  %v3722 = vmul.f32 %v3716, %v3682
  %v3723 = vmul.f32 %v3708, %v3719
  %v3724 = vmul.f32 %v3714, %v3720
  %v3725 = vadd.f32 %v3721, %v3723
  %v3726 = vadd.f32 %v3722, %v3724
  %v3727 = vtanh.pop %v3725
  %v3728 = vtanh.pop %v3726
  %v3729 = vmul.f32 %v3712, %v3727
  %v3730 = vmul.f32 %v3718, %v3728
  %s3731 = sadd.s32 %s150, 7
  %v3732 = vstv %s3731
  %vm3733 = vcmp.lt.s32.totalorder %v3732, %v82
  %vm3734 = vcmp.lt.s32.totalorder %v3732, %v83
  %v3735 = vstv %s152
  %vm3736 = vcmp.lt.s32.totalorder %v3735, %v82
  %vm3737 = vcmp.lt.s32.totalorder %v3735, %v83
  %v3738 = vsel %vm3733, 1, 0
  %v3739 = vsel %vm3734, 1, 0
  %3740 = vset.pattern.permute.xlu0 0
  %3741 = vperm.xlu0 %3740, %v3738
  %v3742 = vpop.permute.xlu0 %3741
  %3743 = vset.pattern.permute.xlu0 0
  %3744 = vperm.xlu0 %3743, %v3739
  %v3745 = vpop.permute.xlu0 %3744
  %vm3746 = vcmp.eq.s32.totalorder %v3742, 1
  %vm3747 = vcmp.eq.s32.totalorder %v3745, 1
  %v3748 = vsel %vm3746, %v3679, %v3417
  %v3749 = vsel %vm3747, %v3680, %v3418
  %3750 = vst [vmem:[#allocation2] sm:$0xff] %v3748
  %3751 = vst [vmem:[#allocation2 + $0x8] sm:$0xff] %v3749
  %v3752 = vld [vmem:[#allocation3] sm:$0xff]
  %v3753 = vld [vmem:[#allocation3 + $0x8] sm:$0xff]
  %v3754 = vsel %vm3746, %v3675, %v3752
  %v3755 = vsel %vm3747, %v3676, %v3753
  %3756 = vst [vmem:[#allocation3] sm:$0xff] %v3754
  %3757 = vst [vmem:[#allocation3 + $0x8] sm:$0xff] %v3755
  %v3758 = vld [vmem:[#allocation4] sm:$0xff]
  %v3759 = vld [vmem:[#allocation4 + $0x8] sm:$0xff]
  %v3760 = vsel %vm3736, 1, 0
  %v3761 = vsel %vm3737, 1, 0
  %3762 = vset.pattern.permute.xlu0 0
  %3763 = vperm.xlu0 %3762, %v3760
  %v3764 = vpop.permute.xlu0 %3763
  %3765 = vset.pattern.permute.xlu0 0
  %3766 = vperm.xlu0 %3765, %v3761
  %v3767 = vpop.permute.xlu0 %3766
  %vm3768 = vcmp.eq.s32.totalorder %v3764, 1
  %vm3769 = vcmp.eq.s32.totalorder %v3767, 1
  %v3770 = vsel %vm3768, %v3729, %v3758
  %v3771 = vsel %vm3769, %v3730, %v3759
  %3772 = vst [vmem:[#allocation4] sm:$0xff] %v3770
  %3773 = vst [vmem:[#allocation4 + $0x8] sm:$0xff] %v3771
  %v3774 = vld [vmem:[#allocation5] sm:$0xff]
  %v3775 = vld [vmem:[#allocation5 + $0x8] sm:$0xff]
  %v3776 = vsel %vm3768, %v3725, %v3774
  %v3777 = vsel %vm3769, %v3726, %v3775
  %3778 = vst [vmem:[#allocation5] sm:$0xff] %v3776
  %3779 = vst [vmem:[#allocation5 + $0x8] sm:$0xff] %v3777
  %v3780 = vsel %vm3746, %v3679, 0.0
  %v3781 = vsel %vm3747, %v3680, 0.0
  %v3782 = vpack.c.bf16 %v3781, %v3780
  %v3784 = vunpack.c.l.b16 %v3782
  %v3785 = vunpack.c.h.b16 %v3782
  %v3786 = vpack.c.b16 %v3784, %v3784
  %v3787 = vpack.c.b16 %v3785, %v3785
  %s3790 = scalar_lea.vmem %s7, 56
  %3791 = vst [vmem:[%s3790] sm:$0xf] %v3786
  %3792 = vst [vmem:[%s3790 + $0x4] sm:$0xf] %v3787
  %v3793 = vsel %vm3768, %v3729, 0.0
  %v3794 = vsel %vm3769, %v3730, 0.0
  %v3795 = vpack.c.bf16 %v3794, %v3793
  %v3797 = vunpack.c.l.b16 %v3795
  %v3798 = vunpack.c.h.b16 %v3795
  %v3799 = vpack.c.b16 %v3797, %v3797
  %v3800 = vpack.c.b16 %v3798, %v3798
  %3803 = vst [vmem:[%s66] sm:$0xf] %v3799
  %3804 = vst [vmem:[%s66 + $0x4] sm:$0xf] %v3800
  %s3805 = ssub.s32 0, 0
  %s3806 = smul.u32 8, %s3805
  %p3807 = scmp.lt.s32.totalorder %s3806, 7
  %s3808 = scalar_select %p3807, %s3806, 7
  %s3809 = smul.addr %s3808, 2
  %s3810 = smul.addr %s3809, 4
  %s3811 = scalar_lea.vmem %s8, %s3810
  // Predicated region
  $region34: #{rnn_encoder_forward.3} parent=0 // pred_check
    _
  $region35: #{rnn_encoder_forward.3} parent=0 // pred_check_branch
    %3813 = sbr.rel (0) target = $region37
  $region36: #{rnn_encoder_forward.3} parent=0 // pred_region
    _
  $region37: #{rnn_encoder_forward.3} parent=0 // pred_fallthru
    _
  // Predicated region
  $region38: #{rnn_encoder_forward.3} parent=0 // pred_check
    _
  $region39: #{rnn_encoder_forward.3} parent=0 // pred_check_branch
    %3815 = sbr.rel (0) target = $region41
  $region40: #{rnn_encoder_forward.3} parent=0 // pred_region
    %s3816 = ssub.s32 0, 0
    %s3817 = smul.u32 8, %s3816
  $region41: #{rnn_encoder_forward.3} parent=0 // pred_fallthru
    _
  // Predicated region
  $region42: #{rnn_encoder_forward.3} parent=0 // pred_check
    _
  $region43: #{rnn_encoder_forward.3} parent=0 // pred_check_branch
    %3819 = sbr.rel (0) target = $region45
  $region44: #{rnn_encoder_forward.3} parent=0 // pred_region
    _
  $region45: #{rnn_encoder_forward.3} parent=0 // pred_fallthru
    _
  // Predicated region
  $region46: #{rnn_encoder_forward.3} parent=0 // pred_check
    _
  $region47: #{rnn_encoder_forward.3} parent=0 // pred_check_branch
    %3821 = sbr.rel (0) target = $region49
  $region48: #{rnn_encoder_forward.3} parent=0 // pred_region
    %s3822 = ssub.s32 0, 0
    %s3823 = smul.u32 8, %s3822
    %p3824 = scmp.lt.s32.totalorder %s3823, 7
    %s3825 = scalar_select %p3824, %s3823, 7
    %s3826 = smul.addr %s3825, 2
    %s3827 = smul.addr %s3826, 4
    %s3828 = scalar_lea.vmem %s8, %s3827
  $region49: #{rnn_encoder_forward.3} parent=0 // pred_fallthru
    _

</llo_original>
